<compile_context>
chip_gen: v5e
topology: v5e:2x2
jax: 0.10.0
libtpu: 0.0.40
codegen_flags: <defaults>
</compile_context>

<pallas_src>
import functools

import jax
import jax.numpy as jnp
from jax.experimental import pallas as pl
from jax.experimental.pallas import tpu as pltpu

EPS = 1e-5
K = 5                      # conv kernel size
PAD = 2                    # conv padding
LANE = 128                 # TPU lane width
SMALL_C_MAX = 8            # C <= this -> length-on-lanes VPU path
DEEP_IM2COL_MAX_CP = 128   # Cp <= this -> single deep im2col matmul, else per-tap
MAX_TILE_ROWS_CONV = 1024  # row tile for the conv passes
MAX_TILE_ROWS_AXPY = 4096  # row tile for the pure-affine pass 3


def _round_up(x, m):
    return (x + m - 1) // m * m


def _default_vmem_limit():
    # v5e/v6e have 128 MiB VMEM per core, v7x 64 MiB: adapt, with a safe fallback.
    try:
        cap = int(pltpu.get_tpu_info().vmem_capacity_bytes)
        return min(cap * 3 // 4, 112 * 1024 * 1024)
    except Exception:
        return 48 * 1024 * 1024


_VMEM_LIMIT = _default_vmem_limit()


def _cparams():
    return pltpu.CompilerParams(dimension_semantics=("parallel",),
                                vmem_limit_bytes=_VMEM_LIMIT)


# =============================================================================
# Small-C path (C <= SMALL_C_MAX): native (N, C, L) layout, L on lanes.
# =============================================================================
def _lane_masks(seq_len):
    """valid[d][0, l] == True iff lane l+d is inside [0, seq_len)."""
    lane = jax.lax.broadcasted_iota(jnp.int32, (1, seq_len), 1)
    return {d: jnp.logical_and(lane + d >= 0, lane + d < seq_len)
            for d in range(-PAD, PAD + 1) if d != 0}


def _conv_small(chans, w_ref, b_ref, c, masks):
    """chans: list of C arrays (nb, L) f32 (input channels).
    w_ref: SMEM f32[C*C*K], flattened PyTorch order [(c_out*C + c_in)*K + k].
    b_ref: SMEM f32[C].  Returns list of C arrays (nb, L): conv1d(k=5,p=2)+bias."""
    shifted = []
    for i in range(c):
        per_k = []
        for k in range(K):
            d = k - PAD
            if d == 0:
                per_k.append(chans[i])
            else:
                # rolled[l] = chans[i][(l + d) % L]; mask kills wrapped lanes.
                r = jnp.roll(chans[i], -d, axis=1)
                per_k.append(jnp.where(masks[d], r, 0.0))
        shifted.append(per_k)
    outs = []
    for o in range(c):
        acc = None
        for i in range(c):
            for k in range(K):
                term = w_ref[(o * c + i) * K + k] * shifted[i][k]
                acc = term if acc is None else acc + term
        outs.append(acc + b_ref[o])
    return outs


def _small_stats(chans, st_ref, c):
    """st_ref block (1, 2C, L): rows 0..C-1 = per-channel sum over the tile's
    batch rows, rows C..2C-1 = sum of squares (lane reduction done by XLA)."""
    rows = []
    for o in range(c):
        rows.append(jnp.sum(chans[o], axis=0, keepdims=True))
    for o in range(c):
        rows.append(jnp.sum(chans[o] * chans[o], axis=0, keepdims=True))
    st_ref[...] = jnp.concatenate(rows, axis=0).reshape(st_ref.shape)


def _small_stats1_kernel(x_ref, w1_ref, b1_ref, st_ref, *, c, seq_len):
    masks = _lane_masks(seq_len)
    xs = [x_ref[:, i, :].astype(jnp.float32) for i in range(c)]
    h1 = _conv_small(xs, w1_ref, b1_ref, c, masks)
    _small_stats(h1, st_ref, c)


def _small_stats2_kernel(x_ref, w1_ref, b1_ref, sc1_ref, sh1_ref, w2_ref,
                         b2_ref, st_ref, *, c, seq_len):
    masks = _lane_masks(seq_len)
    xs = [x_ref[:, i, :].astype(jnp.float32) for i in range(c)]
    h1 = _conv_small(xs, w1_ref, b1_ref, c, masks)
    a = [jnp.maximum(h1[i] * sc1_ref[i] + sh1_ref[i], 0.0) for i in range(c)]
    h2 = _conv_small(a, w2_ref, b2_ref, c, masks)
    _small_stats(h2, st_ref, c)


def _small_out_kernel(x_ref, w1_ref, b1_ref, sc1_ref, sh1_ref, w2_ref, b2_ref,
                      sc2_ref, sh2_ref, y_ref, *, c, seq_len):
    masks = _lane_masks(seq_len)
    xs = [x_ref[:, i, :].astype(jnp.float32) for i in range(c)]
    h1 = _conv_small(xs, w1_ref, b1_ref, c, masks)
    a = [jnp.maximum(h1[i] * sc1_ref[i] + sh1_ref[i], 0.0) for i in range(c)]
    h2 = _conv_small(a, w2_ref, b2_ref, c, masks)
    for o in range(c):
        y_ref[:, o, :] = (h2[o] * sc2_ref[o] + sh2_ref[o]).astype(y_ref.dtype)


def _bn_scale_shift_from_rows(stats, gamma, beta, count):
    """stats: (T, 2C, L) f32 partial sums -> per-channel BN scale/shift (f32).
    Train-mode biased variance over N*L samples."""
    # TODO(synk): single-pass sumsq/count - mean^2 can cancel for huge N*L;
    # switch to per-tile centered stats + Chan combine if that regime matters.
    per = jnp.sum(stats, axis=(0, 2))                   # (2C,)
    c = gamma.shape[0]
    total, total_sq = per[:c], per[c:]
    mean = total / count
    var = jnp.maximum(total_sq / count - mean * mean, 0.0)
    inv_std = jax.lax.rsqrt(var + EPS)
    scale = gamma.astype(jnp.float32) * inv_std
    shift = beta.astype(jnp.float32) - mean * scale
    return scale, shift


def _pick_small_batch_tile(n, c, l, budget_bytes=8 << 20):
    per = max(1, c * l * 4)
    upper = min(n, max(1, budget_bytes // per))
    if n >= 2:
        upper = max(1, min(upper, n // 2))   # >=2 grid steps: pipeline + megacore
    for nb in range(upper, 0, -1):
        if n % nb == 0:
            return nb
    return n


def _forward_small_c(x_ncl, params):
    n, c, l = x_ncl.shape
    x = x_ncl.astype(jnp.float32)
    nb = _pick_small_batch_tile(n, c, l)
    t = n // nb
    count = n * l

    w1 = params['w1'].astype(jnp.float32).reshape(-1)
    w2 = params['w2'].astype(jnp.float32).reshape(-1)
    b1 = params['b1'].astype(jnp.float32).reshape(-1)
    b2 = params['b2'].astype(jnp.float32).reshape(-1)

    x_spec = pl.BlockSpec((nb, c, l), lambda i: (i, 0, 0))
    st_spec = pl.BlockSpec((1, 2 * c, l), lambda i: (i, 0, 0))
    smem = pl.BlockSpec(memory_space=pltpu.MemorySpace.SMEM)
    st_shape = jax.ShapeDtypeStruct((t, 2 * c, l), jnp.float32)
    comp = _cparams()

    st1 = pl.pallas_call(
        functools.partial(_small_stats1_kernel, c=c, seq_len=l),
        grid=(t,),
        in_specs=[x_spec, smem, smem],
        out_specs=st_spec,
        out_shape=st_shape,
        compiler_params=comp,
    )(x, w1, b1)
    sc1, sh1 = _bn_scale_shift_from_rows(st1, params['g1'], params['be1'], count)

    st2 = pl.pallas_call(
        functools.partial(_small_stats2_kernel, c=c, seq_len=l),
        grid=(t,),
        in_specs=[x_spec, smem, smem, smem, smem, smem, smem],
        out_specs=st_spec,
        out_shape=st_shape,
        compiler_params=comp,
    )(x, w1, b1, sc1, sh1, w2, b2)
    sc2, sh2 = _bn_scale_shift_from_rows(st2, params['g2'], params['be2'], count)

    y = pl.pallas_call(
        functools.partial(_small_out_kernel, c=c, seq_len=l),
        grid=(t,),
        in_specs=[x_spec, smem, smem, smem, smem, smem, smem, smem, smem],
        out_specs=x_spec,
        out_shape=jax.ShapeDtypeStruct((n, c, l), jnp.float32),
        compiler_params=comp,
    )(x, w1, b1, sc1, sh1, w2, b2, sc2, sh2)
    return y


# =============================================================================
# Large-C path (C > SMALL_C_MAX): lane-dense (N*L, Cp) rows, MXU im2col matmul,
# bf16 storage / f32 accumulation.
# =============================================================================
def _pick_batch_tile(n, l, max_rows, row_align):
    """Largest batch-tile nb dividing n with nb*l <= max_rows and nb*l a
    multiple of row_align (sublane packing).  Falls back to the full array
    (block shape == array shape is always legal)."""
    upper = min(n, max(1, max_rows // l))
    for nb in range(upper, 0, -1):
        if n % nb == 0 and (nb * l) % row_align == 0:
            return nb
    return n


def _shifted_rows(x, d, lpos, seq_len):
    """out[r] = x[r + d] if (r % L) + d stays inside the same sequence, else 0."""
    if d == 0:
        return x
    rolled = jnp.roll(x, -d, axis=0)                  # rolled[r] = x[(r+d) % R]
    valid = jnp.logical_and(lpos + d >= 0, lpos + d < seq_len)   # (rows, 1)
    return jnp.where(valid, rolled, 0.0)


def _conv_rows(x, w_ref, b_row, seq_len, cp, deep):
    """1-D conv (k=5, pad=2) over lane-dense rows (N*L, Cp); f32 result."""
    rows = x.shape[0]
    lpos = jax.lax.broadcasted_iota(jnp.int32, (rows, 1), 0) % seq_len
    if deep:
        patches = jnp.concatenate(
            [_shifted_rows(x, k - PAD, lpos, seq_len) for k in range(K)], axis=1)
        out = jnp.dot(patches, w_ref[...], preferred_element_type=jnp.float32)
    else:
        # Per-tap accumulation: no (rows, 5*Cp) im2col temporary (v7x VMEM).
        out = jnp.zeros((rows, cp), jnp.float32)
        for k in range(K):
            out = out + jnp.dot(_shifted_rows(x, k - PAD, lpos, seq_len),
                                w_ref[pl.ds(k * cp, cp), :],
                                preferred_element_type=jnp.float32)
    return out + b_row


def _write_stats(st_ref, h):
    st_ref[0:1, :] = jnp.sum(h, axis=0, keepdims=True)
    st_ref[1:2, :] = jnp.sum(h * h, axis=0, keepdims=True)
    st_ref[2:8, :] = jnp.zeros((6, h.shape[1]), jnp.float32)


def _conv_stats_kernel(x_ref, w_ref, b_ref, h_ref, st_ref, *, seq_len, cp, deep):
    h = _conv_rows(x_ref[...], w_ref, b_ref[...], seq_len, cp, deep)
    h_ref[...] = h.astype(h_ref.dtype)
    _write_stats(st_ref, h)


def _bn_relu_conv_stats_kernel(h1_ref, sc_ref, sh_ref, w_ref, b_ref,
                               h2_ref, st_ref, *, seq_len, cp, deep):
    a = jnp.maximum(h1_ref[...].astype(jnp.float32) * sc_ref[...] + sh_ref[...],
                    0.0)
    h = _conv_rows(a.astype(h2_ref.dtype), w_ref, b_ref[...], seq_len, cp, deep)
    h2_ref[...] = h.astype(h2_ref.dtype)
    _write_stats(st_ref, h)


def _bn_kernel(h_ref, sc_ref, sh_ref, o_ref):
    o_ref[...] = (h_ref[...].astype(jnp.float32) * sc_ref[...]
                  + sh_ref[...]).astype(o_ref.dtype)


def _im2col_weight(w_oik, cp):
    """PyTorch (C_out, C_in, K) -> (K*Cp, Cp) bf16 with row index k*Cp + c_in."""
    c_out, c_in, k = w_oik.shape
    w = jnp.transpose(w_oik.astype(jnp.float32), (2, 1, 0))       # (K, Ci, Co)
    w = jnp.pad(w, ((0, 0), (0, cp - c_in), (0, cp - c_out)))
    return w.reshape(k * cp, cp).astype(jnp.bfloat16)


def _pad_row(v, cp):
    v = v.astype(jnp.float32).reshape(-1)
    return jnp.pad(v, (0, cp - v.shape[0])).reshape(1, cp)


def _bn_scale_shift_padded(stats, gamma, beta, c, cp, count):
    st = stats.reshape(-1, 8, cp)
    total = jnp.sum(st[:, 0, :], axis=0)
    total_sq = jnp.sum(st[:, 1, :], axis=0)
    mean = total / count
    var = jnp.maximum(total_sq / count - mean * mean, 0.0)
    inv_std = jax.lax.rsqrt(var + EPS)
    gamma_p = jnp.pad(gamma.astype(jnp.float32), (0, cp - c))
    beta_p = jnp.pad(beta.astype(jnp.float32), (0, cp - c))
    scale = gamma_p * inv_std
    shift = beta_p - mean * scale
    return scale.reshape(1, cp), shift.reshape(1, cp)


def _forward_large_c(x_ncl, params):
    n, c, l = x_ncl.shape
    cp = _round_up(c, LANE)
    rows = n * l
    deep = cp <= DEEP_IM2COL_MAX_CP
    max_rows = MAX_TILE_ROWS_CONV if deep else MAX_TILE_ROWS_CONV // 2
    nb = _pick_batch_tile(n, l, max_rows, 16)        # bf16 sublane packing
    rb, t = nb * l, n // nb
    nb3 = _pick_batch_tile(n, l, MAX_TILE_ROWS_AXPY, 16)
    rb3, t3 = nb3 * l, n // nb3

    # Layout prep (fused by XLA): NCL -> lane-dense bf16 (N*L, Cp) rows.
    x = jnp.transpose(x_ncl, (0, 2, 1)).astype(jnp.bfloat16)       # (N, L, C)
    x = jnp.pad(x, ((0, 0), (0, 0), (0, cp - c))).reshape(rows, cp)

    w1 = _im2col_weight(params['w1'], cp)     # (K*Cp, Cp) bf16
    w2 = _im2col_weight(params['w2'], cp)
    b1 = _pad_row(params['b1'], cp)           # (1, Cp) f32
    b2 = _pad_row(params['b2'], cp)

    row_spec = pl.BlockSpec((rb, cp), lambda i: (i, 0))
    row3_spec = pl.BlockSpec((rb3, cp), lambda i: (i, 0))
    stat_spec = pl.BlockSpec((8, cp), lambda i: (i, 0))
    w_spec = pl.BlockSpec((K * cp, cp), lambda i: (0, 0))
    vec_spec = pl.BlockSpec((1, cp), lambda i: (0, 0))
    comp = _cparams()

    # pass 1: conv1 + partial BN1 stats
    h1, st1 = pl.pallas_call(
        functools.partial(_conv_stats_kernel, seq_len=l, cp=cp, deep=deep),
        grid=(t,),
        in_specs=[row_spec, w_spec, vec_spec],
        out_specs=(row_spec, stat_spec),
        out_shape=(jax.ShapeDtypeStruct((rows, cp), jnp.bfloat16),
                   jax.ShapeDtypeStruct((t * 8, cp), jnp.float32)),
        compiler_params=comp,
    )(x, w1, b1)
    sc1, sh1 = _bn_scale_shift_padded(st1, params['g1'], params['be1'],
                                      c, cp, rows)

    # pass 2: bn1 + relu + conv2 + partial BN2 stats
    h2, st2 = pl.pallas_call(
        functools.partial(_bn_relu_conv_stats_kernel, seq_len=l, cp=cp,
                          deep=deep),
        grid=(t,),
        in_specs=[row_spec, vec_spec, vec_spec, w_spec, vec_spec],
        out_specs=(row_spec, stat_spec),
        out_shape=(jax.ShapeDtypeStruct((rows, cp), jnp.bfloat16),
                   jax.ShapeDtypeStruct((t * 8, cp), jnp.float32)),
        compiler_params=comp,
    )(h1, sc1, sh1, w2, b2)
    sc2, sh2 = _bn_scale_shift_padded(st2, params['g2'], params['be2'],
                                      c, cp, rows)

    # pass 3: bn2 (pure affine stream -> its own bigger row tile)
    y = pl.pallas_call(
        _bn_kernel,
        grid=(t3,),
        in_specs=[row3_spec, vec_spec, vec_spec],
        out_specs=row3_spec,
        out_shape=jax.ShapeDtypeStruct((rows, cp), jnp.float32),
        compiler_params=comp,
    )(h2, sc2, sh2)

    return jnp.transpose(y.reshape(n, l, cp)[:, :, :c], (0, 2, 1))


# =============================================================================
# Entry point
# =============================================================================
def _resblock_forward_impl(x_ncl, params):
    _, c, _ = x_ncl.shape
    if c <= SMALL_C_MAX:
        return _forward_small_c(x_ncl, params)
    return _forward_large_c(x_ncl, params)


resblock_forward = jax.jit(_resblock_forward_impl)


# ---------------------------------------------------------------------------
# Pure-JAX reference (lax conv + train-mode batchnorm) for verification
# ---------------------------------------------------------------------------
def _reference_forward(x_ncl, params):
    def conv(x, w, b):
        y = jax.lax.conv_general_dilated(
            x, w, window_strides=(1,), padding=[(PAD, PAD)],
            dimension_numbers=('NCH', 'OIH', 'NCH'),
            precision=jax.lax.Precision.HIGHEST)
        return y + b[None, :, None]

    def bn(x, g, be):
        mean = jnp.mean(x, axis=(0, 2), keepdims=True)
        var = jnp.mean(jnp.square(x - mean), axis=(0, 2), keepdims=True)
        return (x - mean) * jax.lax.rsqrt(var + EPS) * g[None, :, None] \
            + be[None, :, None]

    h = conv(x_ncl, params['w1'], params['b1'])
    h = bn(h, params['g1'], params['be1'])
    h = jnp.maximum(h, 0.0)
    h = conv(h, params['w2'], params['b2'])
    h = bn(h, params['g2'], params['be2'])
    return h


def _make_params(key, c):
    ks = jax.random.split(key, 8)
    return {
        'w1': 0.1 * jax.random.normal(ks[0], (c, c, K), dtype=jnp.float32),
        'b1': 0.1 * jax.random.normal(ks[1], (c,), dtype=jnp.float32),
        'g1': 1.0 + 0.1 * jax.random.normal(ks[2], (c,), dtype=jnp.float32),
        'be1': 0.1 * jax.random.normal(ks[3], (c,), dtype=jnp.float32),
        'w2': 0.1 * jax.random.normal(ks[4], (c, c, K), dtype=jnp.float32),
        'b2': 0.1 * jax.random.normal(ks[5], (c,), dtype=jnp.float32),
        'g2': 1.0 + 0.1 * jax.random.normal(ks[6], (c,), dtype=jnp.float32),
        'be2': 0.1 * jax.random.normal(ks[7], (c,), dtype=jnp.float32),
    }


if __name__ == "__main__":
    key = jax.random.PRNGKey(0)
    k1, k2, k3, k4 = jax.random.split(key, 4)

    # 1) Small-channel case (the module's typical use): VPU path, f32, exact.
    N, C, L = 2, 4, 16
    x = jax.random.normal(k1, (N, C, L), dtype=jnp.float32)
    params = _make_params(k2, C)
    out = jax.block_until_ready(resblock_forward(x, params))
    ref = _reference_forward(x, params)
    assert out.shape == (N, C, L)
    assert jnp.allclose(out, ref, rtol=5e-4, atol=1e-4), \
        "small-C Pallas output mismatch vs reference"

    # 2) Wide-channel case: MXU im2col path, bf16 storage / f32 accumulation.
    N2, C2, L2 = 2, 128, 16
    x2 = jax.random.normal(k3, (N2, C2, L2), dtype=jnp.float32)
    params2 = _make_params(k4, C2)
    out2 = jax.block_until_ready(resblock_forward(x2, params2))
    ref2 = _reference_forward(x2, params2)
    assert out2.shape == (N2, C2, L2)
    assert jnp.allclose(out2, ref2, rtol=8e-2, atol=8e-2), \
        "large-C Pallas output mismatch vs reference"

    print("KERNEL_OK")
</pallas_src>

<mosaic_0001>
module attributes {stable_mosaic.version = 11 : i64} {
  func.func @_small_stats1_kernel(%arg0: i32, %arg1: memref<1x4x16xf32, #tpu.memory_space<vmem>>, %arg2: memref<80xf32, #tpu.memory_space<smem>>, %arg3: memref<4xf32, #tpu.memory_space<smem>>, %arg4: memref<1x8x16xf32, #tpu.memory_space<vmem>>) attributes {dimension_semantics = [#tpu.dimension_semantics<parallel>], iteration_bounds = array<i64: 2>, scalar_prefetch = 0 : i64, scratch_operands = 0 : i64, tpu.core_type = #tpu.core_type<tc>, window_params = [{transform_indices = @transform_0, window_bounds = array<i64: 1, 4, 16>}, {transform_indices = @transform_1, window_bounds = array<i64: 80>}, {transform_indices = @transform_2, window_bounds = array<i64: 4>}, {transform_indices = @transform_3, window_bounds = array<i64: 1, 8, 16>}]} {
    %0 = tpu.iota {dimensions = array<i32: 1>} : vector<1x16xi32>
    %c-2_i32 = arith.constant -2 : i32
    %1 = vector.broadcast %c-2_i32 : i32 to vector<1x16xi32>
    %2 = arith.addi %0, %1 : vector<1x16xi32>
    %c0_i32 = arith.constant 0 : i32
    %3 = vector.broadcast %c0_i32 : i32 to vector<1x16xi32>
    %4 = arith.cmpi sge, %2, %3 : vector<1x16xi32>
    %c-2_i32_0 = arith.constant -2 : i32
    %5 = vector.broadcast %c-2_i32_0 : i32 to vector<1x16xi32>
    %6 = arith.addi %0, %5 : vector<1x16xi32>
    %c16_i32 = arith.constant 16 : i32
    %7 = vector.broadcast %c16_i32 : i32 to vector<1x16xi32>
    %8 = arith.cmpi slt, %6, %7 : vector<1x16xi32>
    %9 = arith.andi %4, %8 : vector<1x16xi1>
    %c-1_i32 = arith.constant -1 : i32
    %10 = vector.broadcast %c-1_i32 : i32 to vector<1x16xi32>
    %11 = arith.addi %0, %10 : vector<1x16xi32>
    %c0_i32_1 = arith.constant 0 : i32
    %12 = vector.broadcast %c0_i32_1 : i32 to vector<1x16xi32>
    %13 = arith.cmpi sge, %11, %12 : vector<1x16xi32>
    %c-1_i32_2 = arith.constant -1 : i32
    %14 = vector.broadcast %c-1_i32_2 : i32 to vector<1x16xi32>
    %15 = arith.addi %0, %14 : vector<1x16xi32>
    %c16_i32_3 = arith.constant 16 : i32
    %16 = vector.broadcast %c16_i32_3 : i32 to vector<1x16xi32>
    %17 = arith.cmpi slt, %15, %16 : vector<1x16xi32>
    %18 = arith.andi %13, %17 : vector<1x16xi1>
    %c1_i32 = arith.constant 1 : i32
    %19 = vector.broadcast %c1_i32 : i32 to vector<1x16xi32>
    %20 = arith.addi %0, %19 : vector<1x16xi32>
    %c0_i32_4 = arith.constant 0 : i32
    %21 = vector.broadcast %c0_i32_4 : i32 to vector<1x16xi32>
    %22 = arith.cmpi sge, %20, %21 : vector<1x16xi32>
    %c1_i32_5 = arith.constant 1 : i32
    %23 = vector.broadcast %c1_i32_5 : i32 to vector<1x16xi32>
    %24 = arith.addi %0, %23 : vector<1x16xi32>
    %c16_i32_6 = arith.constant 16 : i32
    %25 = vector.broadcast %c16_i32_6 : i32 to vector<1x16xi32>
    %26 = arith.cmpi slt, %24, %25 : vector<1x16xi32>
    %27 = arith.andi %22, %26 : vector<1x16xi1>
    %c2_i32 = arith.constant 2 : i32
    %28 = vector.broadcast %c2_i32 : i32 to vector<1x16xi32>
    %29 = arith.addi %0, %28 : vector<1x16xi32>
    %c0_i32_7 = arith.constant 0 : i32
    %30 = vector.broadcast %c0_i32_7 : i32 to vector<1x16xi32>
    %31 = arith.cmpi sge, %29, %30 : vector<1x16xi32>
    %c2_i32_8 = arith.constant 2 : i32
    %32 = vector.broadcast %c2_i32_8 : i32 to vector<1x16xi32>
    %33 = arith.addi %0, %32 : vector<1x16xi32>
    %c16_i32_9 = arith.constant 16 : i32
    %34 = vector.broadcast %c16_i32_9 : i32 to vector<1x16xi32>
    %35 = arith.cmpi slt, %33, %34 : vector<1x16xi32>
    %36 = arith.andi %31, %35 : vector<1x16xi1>
    %c0 = arith.constant 0 : index
    %c0_10 = arith.constant 0 : index
    %c0_11 = arith.constant 0 : index
    %37 = vector.load %arg1[%c0, %c0_10, %c0_11] : memref<1x4x16xf32, #tpu.memory_space<vmem>>, vector<1x1x16xf32>
    %38 = vector.shape_cast %37 : vector<1x1x16xf32> to vector<1x16xf32>
    %c0_12 = arith.constant 0 : index
    %c1 = arith.constant 1 : index
    %c0_13 = arith.constant 0 : index
    %39 = vector.load %arg1[%c0_12, %c1, %c0_13] : memref<1x4x16xf32, #tpu.memory_space<vmem>>, vector<1x1x16xf32>
    %40 = vector.shape_cast %39 : vector<1x1x16xf32> to vector<1x16xf32>
    %c0_14 = arith.constant 0 : index
    %c2 = arith.constant 2 : index
    %c0_15 = arith.constant 0 : index
    %41 = vector.load %arg1[%c0_14, %c2, %c0_15] : memref<1x4x16xf32, #tpu.memory_space<vmem>>, vector<1x1x16xf32>
    %42 = vector.shape_cast %41 : vector<1x1x16xf32> to vector<1x16xf32>
    %c0_16 = arith.constant 0 : index
    %c3 = arith.constant 3 : index
    %c0_17 = arith.constant 0 : index
    %43 = vector.load %arg1[%c0_16, %c3, %c0_17] : memref<1x4x16xf32, #tpu.memory_space<vmem>>, vector<1x1x16xf32>
    %44 = vector.shape_cast %43 : vector<1x1x16xf32> to vector<1x16xf32>
    %45 = vector.extract_strided_slice %38 {offsets = [0, 14], sizes = [1, 2], strides = [1, 1]} : vector<1x16xf32> to vector<1x2xf32>
    %46 = vector.extract_strided_slice %38 {offsets = [0, 0], sizes = [1, 14], strides = [1, 1]} : vector<1x16xf32> to vector<1x14xf32>
    %47 = tpu.concatenate %45, %46 in 1 : vector<1x2xf32>, vector<1x14xf32> -> vector<1x16xf32>
    %cst = arith.constant 0.000000e+00 : f32
    %48 = vector.broadcast %cst : f32 to vector<1x16xf32>
    %49 = arith.select %9, %47, %48 : vector<1x16xi1>, vector<1x16xf32>
    %50 = vector.extract_strided_slice %38 {offsets = [0, 15], sizes = [1, 1], strides = [1, 1]} : vector<1x16xf32> to vector<1x1xf32>
    %51 = vector.extract_strided_slice %38 {offsets = [0, 0], sizes = [1, 15], strides = [1, 1]} : vector<1x16xf32> to vector<1x15xf32>
    %52 = tpu.concatenate %50, %51 in 1 : vector<1x1xf32>, vector<1x15xf32> -> vector<1x16xf32>
    %cst_18 = arith.constant 0.000000e+00 : f32
    %53 = vector.broadcast %cst_18 : f32 to vector<1x16xf32>
    %54 = arith.select %18, %52, %53 : vector<1x16xi1>, vector<1x16xf32>
    %55 = vector.extract_strided_slice %38 {offsets = [0, 1], sizes = [1, 15], strides = [1, 1]} : vector<1x16xf32> to vector<1x15xf32>
    %56 = vector.extract_strided_slice %38 {offsets = [0, 0], sizes = [1, 1], strides = [1, 1]} : vector<1x16xf32> to vector<1x1xf32>
    %57 = tpu.concatenate %55, %56 in 1 : vector<1x15xf32>, vector<1x1xf32> -> vector<1x16xf32>
    %cst_19 = arith.constant 0.000000e+00 : f32
    %58 = vector.broadcast %cst_19 : f32 to vector<1x16xf32>
    %59 = arith.select %27, %57, %58 : vector<1x16xi1>, vector<1x16xf32>
    %60 = vector.extract_strided_slice %38 {offsets = [0, 2], sizes = [1, 14], strides = [1, 1]} : vector<1x16xf32> to vector<1x14xf32>
    %61 = vector.extract_strided_slice %38 {offsets = [0, 0], sizes = [1, 2], strides = [1, 1]} : vector<1x16xf32> to vector<1x2xf32>
    %62 = tpu.concatenate %60, %61 in 1 : vector<1x14xf32>, vector<1x2xf32> -> vector<1x16xf32>
    %cst_20 = arith.constant 0.000000e+00 : f32
    %63 = vector.broadcast %cst_20 : f32 to vector<1x16xf32>
    %64 = arith.select %36, %62, %63 : vector<1x16xi1>, vector<1x16xf32>
    %65 = vector.extract_strided_slice %40 {offsets = [0, 14], sizes = [1, 2], strides = [1, 1]} : vector<1x16xf32> to vector<1x2xf32>
    %66 = vector.extract_strided_slice %40 {offsets = [0, 0], sizes = [1, 14], strides = [1, 1]} : vector<1x16xf32> to vector<1x14xf32>
    %67 = tpu.concatenate %65, %66 in 1 : vector<1x2xf32>, vector<1x14xf32> -> vector<1x16xf32>
    %cst_21 = arith.constant 0.000000e+00 : f32
    %68 = vector.broadcast %cst_21 : f32 to vector<1x16xf32>
    %69 = arith.select %9, %67, %68 : vector<1x16xi1>, vector<1x16xf32>
    %70 = vector.extract_strided_slice %40 {offsets = [0, 15], sizes = [1, 1], strides = [1, 1]} : vector<1x16xf32> to vector<1x1xf32>
    %71 = vector.extract_strided_slice %40 {offsets = [0, 0], sizes = [1, 15], strides = [1, 1]} : vector<1x16xf32> to vector<1x15xf32>
    %72 = tpu.concatenate %70, %71 in 1 : vector<1x1xf32>, vector<1x15xf32> -> vector<1x16xf32>
    %cst_22 = arith.constant 0.000000e+00 : f32
    %73 = vector.broadcast %cst_22 : f32 to vector<1x16xf32>
    %74 = arith.select %18, %72, %73 : vector<1x16xi1>, vector<1x16xf32>
    %75 = vector.extract_strided_slice %40 {offsets = [0, 1], sizes = [1, 15], strides = [1, 1]} : vector<1x16xf32> to vector<1x15xf32>
    %76 = vector.extract_strided_slice %40 {offsets = [0, 0], sizes = [1, 1], strides = [1, 1]} : vector<1x16xf32> to vector<1x1xf32>
    %77 = tpu.concatenate %75, %76 in 1 : vector<1x15xf32>, vector<1x1xf32> -> vector<1x16xf32>
    %cst_23 = arith.constant 0.000000e+00 : f32
    %78 = vector.broadcast %cst_23 : f32 to vector<1x16xf32>
    %79 = arith.select %27, %77, %78 : vector<1x16xi1>, vector<1x16xf32>
    %80 = vector.extract_strided_slice %40 {offsets = [0, 2], sizes = [1, 14], strides = [1, 1]} : vector<1x16xf32> to vector<1x14xf32>
    %81 = vector.extract_strided_slice %40 {offsets = [0, 0], sizes = [1, 2], strides = [1, 1]} : vector<1x16xf32> to vector<1x2xf32>
    %82 = tpu.concatenate %80, %81 in 1 : vector<1x14xf32>, vector<1x2xf32> -> vector<1x16xf32>
    %cst_24 = arith.constant 0.000000e+00 : f32
    %83 = vector.broadcast %cst_24 : f32 to vector<1x16xf32>
    %84 = arith.select %36, %82, %83 : vector<1x16xi1>, vector<1x16xf32>
    %85 = vector.extract_strided_slice %42 {offsets = [0, 14], sizes = [1, 2], strides = [1, 1]} : vector<1x16xf32> to vector<1x2xf32>
    %86 = vector.extract_strided_slice %42 {offsets = [0, 0], sizes = [1, 14], strides = [1, 1]} : vector<1x16xf32> to vector<1x14xf32>
    %87 = tpu.concatenate %85, %86 in 1 : vector<1x2xf32>, vector<1x14xf32> -> vector<1x16xf32>
    %cst_25 = arith.constant 0.000000e+00 : f32
    %88 = vector.broadcast %cst_25 : f32 to vector<1x16xf32>
    %89 = arith.select %9, %87, %88 : vector<1x16xi1>, vector<1x16xf32>
    %90 = vector.extract_strided_slice %42 {offsets = [0, 15], sizes = [1, 1], strides = [1, 1]} : vector<1x16xf32> to vector<1x1xf32>
    %91 = vector.extract_strided_slice %42 {offsets = [0, 0], sizes = [1, 15], strides = [1, 1]} : vector<1x16xf32> to vector<1x15xf32>
    %92 = tpu.concatenate %90, %91 in 1 : vector<1x1xf32>, vector<1x15xf32> -> vector<1x16xf32>
    %cst_26 = arith.constant 0.000000e+00 : f32
    %93 = vector.broadcast %cst_26 : f32 to vector<1x16xf32>
    %94 = arith.select %18, %92, %93 : vector<1x16xi1>, vector<1x16xf32>
    %95 = vector.extract_strided_slice %42 {offsets = [0, 1], sizes = [1, 15], strides = [1, 1]} : vector<1x16xf32> to vector<1x15xf32>
    %96 = vector.extract_strided_slice %42 {offsets = [0, 0], sizes = [1, 1], strides = [1, 1]} : vector<1x16xf32> to vector<1x1xf32>
    %97 = tpu.concatenate %95, %96 in 1 : vector<1x15xf32>, vector<1x1xf32> -> vector<1x16xf32>
    %cst_27 = arith.constant 0.000000e+00 : f32
    %98 = vector.broadcast %cst_27 : f32 to vector<1x16xf32>
    %99 = arith.select %27, %97, %98 : vector<1x16xi1>, vector<1x16xf32>
    %100 = vector.extract_strided_slice %42 {offsets = [0, 2], sizes = [1, 14], strides = [1, 1]} : vector<1x16xf32> to vector<1x14xf32>
    %101 = vector.extract_strided_slice %42 {offsets = [0, 0], sizes = [1, 2], strides = [1, 1]} : vector<1x16xf32> to vector<1x2xf32>
    %102 = tpu.concatenate %100, %101 in 1 : vector<1x14xf32>, vector<1x2xf32> -> vector<1x16xf32>
    %cst_28 = arith.constant 0.000000e+00 : f32
    %103 = vector.broadcast %cst_28 : f32 to vector<1x16xf32>
    %104 = arith.select %36, %102, %103 : vector<1x16xi1>, vector<1x16xf32>
    %105 = vector.extract_strided_slice %44 {offsets = [0, 14], sizes = [1, 2], strides = [1, 1]} : vector<1x16xf32> to vector<1x2xf32>
    %106 = vector.extract_strided_slice %44 {offsets = [0, 0], sizes = [1, 14], strides = [1, 1]} : vector<1x16xf32> to vector<1x14xf32>
    %107 = tpu.concatenate %105, %106 in 1 : vector<1x2xf32>, vector<1x14xf32> -> vector<1x16xf32>
    %cst_29 = arith.constant 0.000000e+00 : f32
    %108 = vector.broadcast %cst_29 : f32 to vector<1x16xf32>
    %109 = arith.select %9, %107, %108 : vector<1x16xi1>, vector<1x16xf32>
    %110 = vector.extract_strided_slice %44 {offsets = [0, 15], sizes = [1, 1], strides = [1, 1]} : vector<1x16xf32> to vector<1x1xf32>
    %111 = vector.extract_strided_slice %44 {offsets = [0, 0], sizes = [1, 15], strides = [1, 1]} : vector<1x16xf32> to vector<1x15xf32>
    %112 = tpu.concatenate %110, %111 in 1 : vector<1x1xf32>, vector<1x15xf32> -> vector<1x16xf32>
    %cst_30 = arith.constant 0.000000e+00 : f32
    %113 = vector.broadcast %cst_30 : f32 to vector<1x16xf32>
    %114 = arith.select %18, %112, %113 : vector<1x16xi1>, vector<1x16xf32>
    %115 = vector.extract_strided_slice %44 {offsets = [0, 1], sizes = [1, 15], strides = [1, 1]} : vector<1x16xf32> to vector<1x15xf32>
    %116 = vector.extract_strided_slice %44 {offsets = [0, 0], sizes = [1, 1], strides = [1, 1]} : vector<1x16xf32> to vector<1x1xf32>
    %117 = tpu.concatenate %115, %116 in 1 : vector<1x15xf32>, vector<1x1xf32> -> vector<1x16xf32>
    %cst_31 = arith.constant 0.000000e+00 : f32
    %118 = vector.broadcast %cst_31 : f32 to vector<1x16xf32>
    %119 = arith.select %27, %117, %118 : vector<1x16xi1>, vector<1x16xf32>
    %120 = vector.extract_strided_slice %44 {offsets = [0, 2], sizes = [1, 14], strides = [1, 1]} : vector<1x16xf32> to vector<1x14xf32>
    %121 = vector.extract_strided_slice %44 {offsets = [0, 0], sizes = [1, 2], strides = [1, 1]} : vector<1x16xf32> to vector<1x2xf32>
    %122 = tpu.concatenate %120, %121 in 1 : vector<1x14xf32>, vector<1x2xf32> -> vector<1x16xf32>
    %cst_32 = arith.constant 0.000000e+00 : f32
    %123 = vector.broadcast %cst_32 : f32 to vector<1x16xf32>
    %124 = arith.select %36, %122, %123 : vector<1x16xi1>, vector<1x16xf32>
    %c0_33 = arith.constant 0 : index
    %125 = memref.load %arg2[%c0_33] : memref<80xf32, #tpu.memory_space<smem>>
    %126 = vector.broadcast %125 : f32 to vector<1x16xf32>
    %127 = arith.mulf %126, %49 : vector<1x16xf32>
    %c1_34 = arith.constant 1 : index
    %128 = memref.load %arg2[%c1_34] : memref<80xf32, #tpu.memory_space<smem>>
    %129 = vector.broadcast %128 : f32 to vector<1x16xf32>
    %130 = arith.mulf %129, %54 : vector<1x16xf32>
    %131 = arith.addf %127, %130 : vector<1x16xf32>
    %c2_35 = arith.constant 2 : index
    %132 = memref.load %arg2[%c2_35] : memref<80xf32, #tpu.memory_space<smem>>
    %133 = vector.broadcast %132 : f32 to vector<1x16xf32>
    %134 = arith.mulf %133, %38 : vector<1x16xf32>
    %135 = arith.addf %131, %134 : vector<1x16xf32>
    %c3_36 = arith.constant 3 : index
    %136 = memref.load %arg2[%c3_36] : memref<80xf32, #tpu.memory_space<smem>>
    %137 = vector.broadcast %136 : f32 to vector<1x16xf32>
    %138 = arith.mulf %137, %59 : vector<1x16xf32>
    %139 = arith.addf %135, %138 : vector<1x16xf32>
    %c4 = arith.constant 4 : index
    %140 = memref.load %arg2[%c4] : memref<80xf32, #tpu.memory_space<smem>>
    %141 = vector.broadcast %140 : f32 to vector<1x16xf32>
    %142 = arith.mulf %141, %64 : vector<1x16xf32>
    %143 = arith.addf %139, %142 : vector<1x16xf32>
    %c5 = arith.constant 5 : index
    %144 = memref.load %arg2[%c5] : memref<80xf32, #tpu.memory_space<smem>>
    %145 = vector.broadcast %144 : f32 to vector<1x16xf32>
    %146 = arith.mulf %145, %69 : vector<1x16xf32>
    %147 = arith.addf %143, %146 : vector<1x16xf32>
    %c6 = arith.constant 6 : index
    %148 = memref.load %arg2[%c6] : memref<80xf32, #tpu.memory_space<smem>>
    %149 = vector.broadcast %148 : f32 to vector<1x16xf32>
    %150 = arith.mulf %149, %74 : vector<1x16xf32>
    %151 = arith.addf %147, %150 : vector<1x16xf32>
    %c7 = arith.constant 7 : index
    %152 = memref.load %arg2[%c7] : memref<80xf32, #tpu.memory_space<smem>>
    %153 = vector.broadcast %152 : f32 to vector<1x16xf32>
    %154 = arith.mulf %153, %40 : vector<1x16xf32>
    %155 = arith.addf %151, %154 : vector<1x16xf32>
    %c8 = arith.constant 8 : index
    %156 = memref.load %arg2[%c8] : memref<80xf32, #tpu.memory_space<smem>>
    %157 = vector.broadcast %156 : f32 to vector<1x16xf32>
    %158 = arith.mulf %157, %79 : vector<1x16xf32>
    %159 = arith.addf %155, %158 : vector<1x16xf32>
    %c9 = arith.constant 9 : index
    %160 = memref.load %arg2[%c9] : memref<80xf32, #tpu.memory_space<smem>>
    %161 = vector.broadcast %160 : f32 to vector<1x16xf32>
    %162 = arith.mulf %161, %84 : vector<1x16xf32>
    %163 = arith.addf %159, %162 : vector<1x16xf32>
    %c10 = arith.constant 10 : index
    %164 = memref.load %arg2[%c10] : memref<80xf32, #tpu.memory_space<smem>>
    %165 = vector.broadcast %164 : f32 to vector<1x16xf32>
    %166 = arith.mulf %165, %89 : vector<1x16xf32>
    %167 = arith.addf %163, %166 : vector<1x16xf32>
    %c11 = arith.constant 11 : index
    %168 = memref.load %arg2[%c11] : memref<80xf32, #tpu.memory_space<smem>>
    %169 = vector.broadcast %168 : f32 to vector<1x16xf32>
    %170 = arith.mulf %169, %94 : vector<1x16xf32>
    %171 = arith.addf %167, %170 : vector<1x16xf32>
    %c12 = arith.constant 12 : index
    %172 = memref.load %arg2[%c12] : memref<80xf32, #tpu.memory_space<smem>>
    %173 = vector.broadcast %172 : f32 to vector<1x16xf32>
    %174 = arith.mulf %173, %42 : vector<1x16xf32>
    %175 = arith.addf %171, %174 : vector<1x16xf32>
    %c13 = arith.constant 13 : index
    %176 = memref.load %arg2[%c13] : memref<80xf32, #tpu.memory_space<smem>>
    %177 = vector.broadcast %176 : f32 to vector<1x16xf32>
    %178 = arith.mulf %177, %99 : vector<1x16xf32>
    %179 = arith.addf %175, %178 : vector<1x16xf32>
    %c14 = arith.constant 14 : index
    %180 = memref.load %arg2[%c14] : memref<80xf32, #tpu.memory_space<smem>>
    %181 = vector.broadcast %180 : f32 to vector<1x16xf32>
    %182 = arith.mulf %181, %104 : vector<1x16xf32>
    %183 = arith.addf %179, %182 : vector<1x16xf32>
    %c15 = arith.constant 15 : index
    %184 = memref.load %arg2[%c15] : memref<80xf32, #tpu.memory_space<smem>>
    %185 = vector.broadcast %184 : f32 to vector<1x16xf32>
    %186 = arith.mulf %185, %109 : vector<1x16xf32>
    %187 = arith.addf %183, %186 : vector<1x16xf32>
    %c16 = arith.constant 16 : index
    %188 = memref.load %arg2[%c16] : memref<80xf32, #tpu.memory_space<smem>>
    %189 = vector.broadcast %188 : f32 to vector<1x16xf32>
    %190 = arith.mulf %189, %114 : vector<1x16xf32>
    %191 = arith.addf %187, %190 : vector<1x16xf32>
    %c17 = arith.constant 17 : index
    %192 = memref.load %arg2[%c17] : memref<80xf32, #tpu.memory_space<smem>>
    %193 = vector.broadcast %192 : f32 to vector<1x16xf32>
    %194 = arith.mulf %193, %44 : vector<1x16xf32>
    %195 = arith.addf %191, %194 : vector<1x16xf32>
    %c18 = arith.constant 18 : index
    %196 = memref.load %arg2[%c18] : memref<80xf32, #tpu.memory_space<smem>>
    %197 = vector.broadcast %196 : f32 to vector<1x16xf32>
    %198 = arith.mulf %197, %119 : vector<1x16xf32>
    %199 = arith.addf %195, %198 : vector<1x16xf32>
    %c19 = arith.constant 19 : index
    %200 = memref.load %arg2[%c19] : memref<80xf32, #tpu.memory_space<smem>>
    %201 = vector.broadcast %200 : f32 to vector<1x16xf32>
    %202 = arith.mulf %201, %124 : vector<1x16xf32>
    %203 = arith.addf %199, %202 : vector<1x16xf32>
    %c0_37 = arith.constant 0 : index
    %204 = memref.load %arg3[%c0_37] : memref<4xf32, #tpu.memory_space<smem>>
    %205 = vector.broadcast %204 : f32 to vector<1x16xf32>
    %206 = arith.addf %203, %205 : vector<1x16xf32>
    %c20 = arith.constant 20 : index
    %207 = memref.load %arg2[%c20] : memref<80xf32, #tpu.memory_space<smem>>
    %208 = vector.broadcast %207 : f32 to vector<1x16xf32>
    %209 = arith.mulf %208, %49 : vector<1x16xf32>
    %c21 = arith.constant 21 : index
    %210 = memref.load %arg2[%c21] : memref<80xf32, #tpu.memory_space<smem>>
    %211 = vector.broadcast %210 : f32 to vector<1x16xf32>
    %212 = arith.mulf %211, %54 : vector<1x16xf32>
    %213 = arith.addf %209, %212 : vector<1x16xf32>
    %c22 = arith.constant 22 : index
    %214 = memref.load %arg2[%c22] : memref<80xf32, #tpu.memory_space<smem>>
    %215 = vector.broadcast %214 : f32 to vector<1x16xf32>
    %216 = arith.mulf %215, %38 : vector<1x16xf32>
    %217 = arith.addf %213, %216 : vector<1x16xf32>
    %c23 = arith.constant 23 : index
    %218 = memref.load %arg2[%c23] : memref<80xf32, #tpu.memory_space<smem>>
    %219 = vector.broadcast %218 : f32 to vector<1x16xf32>
    %220 = arith.mulf %219, %59 : vector<1x16xf32>
    %221 = arith.addf %217, %220 : vector<1x16xf32>
    %c24 = arith.constant 24 : index
    %222 = memref.load %arg2[%c24] : memref<80xf32, #tpu.memory_space<smem>>
    %223 = vector.broadcast %222 : f32 to vector<1x16xf32>
    %224 = arith.mulf %223, %64 : vector<1x16xf32>
    %225 = arith.addf %221, %224 : vector<1x16xf32>
    %c25 = arith.constant 25 : index
    %226 = memref.load %arg2[%c25] : memref<80xf32, #tpu.memory_space<smem>>
    %227 = vector.broadcast %226 : f32 to vector<1x16xf32>
    %228 = arith.mulf %227, %69 : vector<1x16xf32>
    %229 = arith.addf %225, %228 : vector<1x16xf32>
    %c26 = arith.constant 26 : index
    %230 = memref.load %arg2[%c26] : memref<80xf32, #tpu.memory_space<smem>>
    %231 = vector.broadcast %230 : f32 to vector<1x16xf32>
    %232 = arith.mulf %231, %74 : vector<1x16xf32>
    %233 = arith.addf %229, %232 : vector<1x16xf32>
    %c27 = arith.constant 27 : index
    %234 = memref.load %arg2[%c27] : memref<80xf32, #tpu.memory_space<smem>>
    %235 = vector.broadcast %234 : f32 to vector<1x16xf32>
    %236 = arith.mulf %235, %40 : vector<1x16xf32>
    %237 = arith.addf %233, %236 : vector<1x16xf32>
    %c28 = arith.constant 28 : index
    %238 = memref.load %arg2[%c28] : memref<80xf32, #tpu.memory_space<smem>>
    %239 = vector.broadcast %238 : f32 to vector<1x16xf32>
    %240 = arith.mulf %239, %79 : vector<1x16xf32>
    %241 = arith.addf %237, %240 : vector<1x16xf32>
    %c29 = arith.constant 29 : index
    %242 = memref.load %arg2[%c29] : memref<80xf32, #tpu.memory_space<smem>>
    %243 = vector.broadcast %242 : f32 to vector<1x16xf32>
    %244 = arith.mulf %243, %84 : vector<1x16xf32>
    %245 = arith.addf %241, %244 : vector<1x16xf32>
    %c30 = arith.constant 30 : index
    %246 = memref.load %arg2[%c30] : memref<80xf32, #tpu.memory_space<smem>>
    %247 = vector.broadcast %246 : f32 to vector<1x16xf32>
    %248 = arith.mulf %247, %89 : vector<1x16xf32>
    %249 = arith.addf %245, %248 : vector<1x16xf32>
    %c31 = arith.constant 31 : index
    %250 = memref.load %arg2[%c31] : memref<80xf32, #tpu.memory_space<smem>>
    %251 = vector.broadcast %250 : f32 to vector<1x16xf32>
    %252 = arith.mulf %251, %94 : vector<1x16xf32>
    %253 = arith.addf %249, %252 : vector<1x16xf32>
    %c32 = arith.constant 32 : index
    %254 = memref.load %arg2[%c32] : memref<80xf32, #tpu.memory_space<smem>>
    %255 = vector.broadcast %254 : f32 to vector<1x16xf32>
    %256 = arith.mulf %255, %42 : vector<1x16xf32>
    %257 = arith.addf %253, %256 : vector<1x16xf32>
    %c33 = arith.constant 33 : index
    %258 = memref.load %arg2[%c33] : memref<80xf32, #tpu.memory_space<smem>>
    %259 = vector.broadcast %258 : f32 to vector<1x16xf32>
    %260 = arith.mulf %259, %99 : vector<1x16xf32>
    %261 = arith.addf %257, %260 : vector<1x16xf32>
    %c34 = arith.constant 34 : index
    %262 = memref.load %arg2[%c34] : memref<80xf32, #tpu.memory_space<smem>>
    %263 = vector.broadcast %262 : f32 to vector<1x16xf32>
    %264 = arith.mulf %263, %104 : vector<1x16xf32>
    %265 = arith.addf %261, %264 : vector<1x16xf32>
    %c35 = arith.constant 35 : index
    %266 = memref.load %arg2[%c35] : memref<80xf32, #tpu.memory_space<smem>>
    %267 = vector.broadcast %266 : f32 to vector<1x16xf32>
    %268 = arith.mulf %267, %109 : vector<1x16xf32>
    %269 = arith.addf %265, %268 : vector<1x16xf32>
    %c36 = arith.constant 36 : index
    %270 = memref.load %arg2[%c36] : memref<80xf32, #tpu.memory_space<smem>>
    %271 = vector.broadcast %270 : f32 to vector<1x16xf32>
    %272 = arith.mulf %271, %114 : vector<1x16xf32>
    %273 = arith.addf %269, %272 : vector<1x16xf32>
    %c37 = arith.constant 37 : index
    %274 = memref.load %arg2[%c37] : memref<80xf32, #tpu.memory_space<smem>>
    %275 = vector.broadcast %274 : f32 to vector<1x16xf32>
    %276 = arith.mulf %275, %44 : vector<1x16xf32>
    %277 = arith.addf %273, %276 : vector<1x16xf32>
    %c38 = arith.constant 38 : index
    %278 = memref.load %arg2[%c38] : memref<80xf32, #tpu.memory_space<smem>>
    %279 = vector.broadcast %278 : f32 to vector<1x16xf32>
    %280 = arith.mulf %279, %119 : vector<1x16xf32>
    %281 = arith.addf %277, %280 : vector<1x16xf32>
    %c39 = arith.constant 39 : index
    %282 = memref.load %arg2[%c39] : memref<80xf32, #tpu.memory_space<smem>>
    %283 = vector.broadcast %282 : f32 to vector<1x16xf32>
    %284 = arith.mulf %283, %124 : vector<1x16xf32>
    %285 = arith.addf %281, %284 : vector<1x16xf32>
    %c1_38 = arith.constant 1 : index
    %286 = memref.load %arg3[%c1_38] : memref<4xf32, #tpu.memory_space<smem>>
    %287 = vector.broadcast %286 : f32 to vector<1x16xf32>
    %288 = arith.addf %285, %287 : vector<1x16xf32>
    %c40 = arith.constant 40 : index
    %289 = memref.load %arg2[%c40] : memref<80xf32, #tpu.memory_space<smem>>
    %290 = vector.broadcast %289 : f32 to vector<1x16xf32>
    %291 = arith.mulf %290, %49 : vector<1x16xf32>
    %c41 = arith.constant 41 : index
    %292 = memref.load %arg2[%c41] : memref<80xf32, #tpu.memory_space<smem>>
    %293 = vector.broadcast %292 : f32 to vector<1x16xf32>
    %294 = arith.mulf %293, %54 : vector<1x16xf32>
    %295 = arith.addf %291, %294 : vector<1x16xf32>
    %c42 = arith.constant 42 : index
    %296 = memref.load %arg2[%c42] : memref<80xf32, #tpu.memory_space<smem>>
    %297 = vector.broadcast %296 : f32 to vector<1x16xf32>
    %298 = arith.mulf %297, %38 : vector<1x16xf32>
    %299 = arith.addf %295, %298 : vector<1x16xf32>
    %c43 = arith.constant 43 : index
    %300 = memref.load %arg2[%c43] : memref<80xf32, #tpu.memory_space<smem>>
    %301 = vector.broadcast %300 : f32 to vector<1x16xf32>
    %302 = arith.mulf %301, %59 : vector<1x16xf32>
    %303 = arith.addf %299, %302 : vector<1x16xf32>
    %c44 = arith.constant 44 : index
    %304 = memref.load %arg2[%c44] : memref<80xf32, #tpu.memory_space<smem>>
    %305 = vector.broadcast %304 : f32 to vector<1x16xf32>
    %306 = arith.mulf %305, %64 : vector<1x16xf32>
    %307 = arith.addf %303, %306 : vector<1x16xf32>
    %c45 = arith.constant 45 : index
    %308 = memref.load %arg2[%c45] : memref<80xf32, #tpu.memory_space<smem>>
    %309 = vector.broadcast %308 : f32 to vector<1x16xf32>
    %310 = arith.mulf %309, %69 : vector<1x16xf32>
    %311 = arith.addf %307, %310 : vector<1x16xf32>
    %c46 = arith.constant 46 : index
    %312 = memref.load %arg2[%c46] : memref<80xf32, #tpu.memory_space<smem>>
    %313 = vector.broadcast %312 : f32 to vector<1x16xf32>
    %314 = arith.mulf %313, %74 : vector<1x16xf32>
    %315 = arith.addf %311, %314 : vector<1x16xf32>
    %c47 = arith.constant 47 : index
    %316 = memref.load %arg2[%c47] : memref<80xf32, #tpu.memory_space<smem>>
    %317 = vector.broadcast %316 : f32 to vector<1x16xf32>
    %318 = arith.mulf %317, %40 : vector<1x16xf32>
    %319 = arith.addf %315, %318 : vector<1x16xf32>
    %c48 = arith.constant 48 : index
    %320 = memref.load %arg2[%c48] : memref<80xf32, #tpu.memory_space<smem>>
    %321 = vector.broadcast %320 : f32 to vector<1x16xf32>
    %322 = arith.mulf %321, %79 : vector<1x16xf32>
    %323 = arith.addf %319, %322 : vector<1x16xf32>
    %c49 = arith.constant 49 : index
    %324 = memref.load %arg2[%c49] : memref<80xf32, #tpu.memory_space<smem>>
    %325 = vector.broadcast %324 : f32 to vector<1x16xf32>
    %326 = arith.mulf %325, %84 : vector<1x16xf32>
    %327 = arith.addf %323, %326 : vector<1x16xf32>
    %c50 = arith.constant 50 : index
    %328 = memref.load %arg2[%c50] : memref<80xf32, #tpu.memory_space<smem>>
    %329 = vector.broadcast %328 : f32 to vector<1x16xf32>
    %330 = arith.mulf %329, %89 : vector<1x16xf32>
    %331 = arith.addf %327, %330 : vector<1x16xf32>
    %c51 = arith.constant 51 : index
    %332 = memref.load %arg2[%c51] : memref<80xf32, #tpu.memory_space<smem>>
    %333 = vector.broadcast %332 : f32 to vector<1x16xf32>
    %334 = arith.mulf %333, %94 : vector<1x16xf32>
    %335 = arith.addf %331, %334 : vector<1x16xf32>
    %c52 = arith.constant 52 : index
    %336 = memref.load %arg2[%c52] : memref<80xf32, #tpu.memory_space<smem>>
    %337 = vector.broadcast %336 : f32 to vector<1x16xf32>
    %338 = arith.mulf %337, %42 : vector<1x16xf32>
    %339 = arith.addf %335, %338 : vector<1x16xf32>
    %c53 = arith.constant 53 : index
    %340 = memref.load %arg2[%c53] : memref<80xf32, #tpu.memory_space<smem>>
    %341 = vector.broadcast %340 : f32 to vector<1x16xf32>
    %342 = arith.mulf %341, %99 : vector<1x16xf32>
    %343 = arith.addf %339, %342 : vector<1x16xf32>
    %c54 = arith.constant 54 : index
    %344 = memref.load %arg2[%c54] : memref<80xf32, #tpu.memory_space<smem>>
    %345 = vector.broadcast %344 : f32 to vector<1x16xf32>
    %346 = arith.mulf %345, %104 : vector<1x16xf32>
    %347 = arith.addf %343, %346 : vector<1x16xf32>
    %c55 = arith.constant 55 : index
    %348 = memref.load %arg2[%c55] : memref<80xf32, #tpu.memory_space<smem>>
    %349 = vector.broadcast %348 : f32 to vector<1x16xf32>
    %350 = arith.mulf %349, %109 : vector<1x16xf32>
    %351 = arith.addf %347, %350 : vector<1x16xf32>
    %c56 = arith.constant 56 : index
    %352 = memref.load %arg2[%c56] : memref<80xf32, #tpu.memory_space<smem>>
    %353 = vector.broadcast %352 : f32 to vector<1x16xf32>
    %354 = arith.mulf %353, %114 : vector<1x16xf32>
    %355 = arith.addf %351, %354 : vector<1x16xf32>
    %c57 = arith.constant 57 : index
    %356 = memref.load %arg2[%c57] : memref<80xf32, #tpu.memory_space<smem>>
    %357 = vector.broadcast %356 : f32 to vector<1x16xf32>
    %358 = arith.mulf %357, %44 : vector<1x16xf32>
    %359 = arith.addf %355, %358 : vector<1x16xf32>
    %c58 = arith.constant 58 : index
    %360 = memref.load %arg2[%c58] : memref<80xf32, #tpu.memory_space<smem>>
    %361 = vector.broadcast %360 : f32 to vector<1x16xf32>
    %362 = arith.mulf %361, %119 : vector<1x16xf32>
    %363 = arith.addf %359, %362 : vector<1x16xf32>
    %c59 = arith.constant 59 : index
    %364 = memref.load %arg2[%c59] : memref<80xf32, #tpu.memory_space<smem>>
    %365 = vector.broadcast %364 : f32 to vector<1x16xf32>
    %366 = arith.mulf %365, %124 : vector<1x16xf32>
    %367 = arith.addf %363, %366 : vector<1x16xf32>
    %c2_39 = arith.constant 2 : index
    %368 = memref.load %arg3[%c2_39] : memref<4xf32, #tpu.memory_space<smem>>
    %369 = vector.broadcast %368 : f32 to vector<1x16xf32>
    %370 = arith.addf %367, %369 : vector<1x16xf32>
    %c60 = arith.constant 60 : index
    %371 = memref.load %arg2[%c60] : memref<80xf32, #tpu.memory_space<smem>>
    %372 = vector.broadcast %371 : f32 to vector<1x16xf32>
    %373 = arith.mulf %372, %49 : vector<1x16xf32>
    %c61 = arith.constant 61 : index
    %374 = memref.load %arg2[%c61] : memref<80xf32, #tpu.memory_space<smem>>
    %375 = vector.broadcast %374 : f32 to vector<1x16xf32>
    %376 = arith.mulf %375, %54 : vector<1x16xf32>
    %377 = arith.addf %373, %376 : vector<1x16xf32>
    %c62 = arith.constant 62 : index
    %378 = memref.load %arg2[%c62] : memref<80xf32, #tpu.memory_space<smem>>
    %379 = vector.broadcast %378 : f32 to vector<1x16xf32>
    %380 = arith.mulf %379, %38 : vector<1x16xf32>
    %381 = arith.addf %377, %380 : vector<1x16xf32>
    %c63 = arith.constant 63 : index
    %382 = memref.load %arg2[%c63] : memref<80xf32, #tpu.memory_space<smem>>
    %383 = vector.broadcast %382 : f32 to vector<1x16xf32>
    %384 = arith.mulf %383, %59 : vector<1x16xf32>
    %385 = arith.addf %381, %384 : vector<1x16xf32>
    %c64 = arith.constant 64 : index
    %386 = memref.load %arg2[%c64] : memref<80xf32, #tpu.memory_space<smem>>
    %387 = vector.broadcast %386 : f32 to vector<1x16xf32>
    %388 = arith.mulf %387, %64 : vector<1x16xf32>
    %389 = arith.addf %385, %388 : vector<1x16xf32>
    %c65 = arith.constant 65 : index
    %390 = memref.load %arg2[%c65] : memref<80xf32, #tpu.memory_space<smem>>
    %391 = vector.broadcast %390 : f32 to vector<1x16xf32>
    %392 = arith.mulf %391, %69 : vector<1x16xf32>
    %393 = arith.addf %389, %392 : vector<1x16xf32>
    %c66 = arith.constant 66 : index
    %394 = memref.load %arg2[%c66] : memref<80xf32, #tpu.memory_space<smem>>
    %395 = vector.broadcast %394 : f32 to vector<1x16xf32>
    %396 = arith.mulf %395, %74 : vector<1x16xf32>
    %397 = arith.addf %393, %396 : vector<1x16xf32>
    %c67 = arith.constant 67 : index
    %398 = memref.load %arg2[%c67] : memref<80xf32, #tpu.memory_space<smem>>
    %399 = vector.broadcast %398 : f32 to vector<1x16xf32>
    %400 = arith.mulf %399, %40 : vector<1x16xf32>
    %401 = arith.addf %397, %400 : vector<1x16xf32>
    %c68 = arith.constant 68 : index
    %402 = memref.load %arg2[%c68] : memref<80xf32, #tpu.memory_space<smem>>
    %403 = vector.broadcast %402 : f32 to vector<1x16xf32>
    %404 = arith.mulf %403, %79 : vector<1x16xf32>
    %405 = arith.addf %401, %404 : vector<1x16xf32>
    %c69 = arith.constant 69 : index
    %406 = memref.load %arg2[%c69] : memref<80xf32, #tpu.memory_space<smem>>
    %407 = vector.broadcast %406 : f32 to vector<1x16xf32>
    %408 = arith.mulf %407, %84 : vector<1x16xf32>
    %409 = arith.addf %405, %408 : vector<1x16xf32>
    %c70 = arith.constant 70 : index
    %410 = memref.load %arg2[%c70] : memref<80xf32, #tpu.memory_space<smem>>
    %411 = vector.broadcast %410 : f32 to vector<1x16xf32>
    %412 = arith.mulf %411, %89 : vector<1x16xf32>
    %413 = arith.addf %409, %412 : vector<1x16xf32>
    %c71 = arith.constant 71 : index
    %414 = memref.load %arg2[%c71] : memref<80xf32, #tpu.memory_space<smem>>
    %415 = vector.broadcast %414 : f32 to vector<1x16xf32>
    %416 = arith.mulf %415, %94 : vector<1x16xf32>
    %417 = arith.addf %413, %416 : vector<1x16xf32>
    %c72 = arith.constant 72 : index
    %418 = memref.load %arg2[%c72] : memref<80xf32, #tpu.memory_space<smem>>
    %419 = vector.broadcast %418 : f32 to vector<1x16xf32>
    %420 = arith.mulf %419, %42 : vector<1x16xf32>
    %421 = arith.addf %417, %420 : vector<1x16xf32>
    %c73 = arith.constant 73 : index
    %422 = memref.load %arg2[%c73] : memref<80xf32, #tpu.memory_space<smem>>
    %423 = vector.broadcast %422 : f32 to vector<1x16xf32>
    %424 = arith.mulf %423, %99 : vector<1x16xf32>
    %425 = arith.addf %421, %424 : vector<1x16xf32>
    %c74 = arith.constant 74 : index
    %426 = memref.load %arg2[%c74] : memref<80xf32, #tpu.memory_space<smem>>
    %427 = vector.broadcast %426 : f32 to vector<1x16xf32>
    %428 = arith.mulf %427, %104 : vector<1x16xf32>
    %429 = arith.addf %425, %428 : vector<1x16xf32>
    %c75 = arith.constant 75 : index
    %430 = memref.load %arg2[%c75] : memref<80xf32, #tpu.memory_space<smem>>
    %431 = vector.broadcast %430 : f32 to vector<1x16xf32>
    %432 = arith.mulf %431, %109 : vector<1x16xf32>
    %433 = arith.addf %429, %432 : vector<1x16xf32>
    %c76 = arith.constant 76 : index
    %434 = memref.load %arg2[%c76] : memref<80xf32, #tpu.memory_space<smem>>
    %435 = vector.broadcast %434 : f32 to vector<1x16xf32>
    %436 = arith.mulf %435, %114 : vector<1x16xf32>
    %437 = arith.addf %433, %436 : vector<1x16xf32>
    %c77 = arith.constant 77 : index
    %438 = memref.load %arg2[%c77] : memref<80xf32, #tpu.memory_space<smem>>
    %439 = vector.broadcast %438 : f32 to vector<1x16xf32>
    %440 = arith.mulf %439, %44 : vector<1x16xf32>
    %441 = arith.addf %437, %440 : vector<1x16xf32>
    %c78 = arith.constant 78 : index
    %442 = memref.load %arg2[%c78] : memref<80xf32, #tpu.memory_space<smem>>
    %443 = vector.broadcast %442 : f32 to vector<1x16xf32>
    %444 = arith.mulf %443, %119 : vector<1x16xf32>
    %445 = arith.addf %441, %444 : vector<1x16xf32>
    %c79 = arith.constant 79 : index
    %446 = memref.load %arg2[%c79] : memref<80xf32, #tpu.memory_space<smem>>
    %447 = vector.broadcast %446 : f32 to vector<1x16xf32>
    %448 = arith.mulf %447, %124 : vector<1x16xf32>
    %449 = arith.addf %445, %448 : vector<1x16xf32>
    %c3_40 = arith.constant 3 : index
    %450 = memref.load %arg3[%c3_40] : memref<4xf32, #tpu.memory_space<smem>>
    %451 = vector.broadcast %450 : f32 to vector<1x16xf32>
    %452 = arith.addf %449, %451 : vector<1x16xf32>
    %cst_41 = arith.constant dense<0.000000e+00> : vector<16xf32>
    %453 = vector.multi_reduction <add>, %206, %cst_41 [0] : vector<1x16xf32> to vector<16xf32>
    %454 = vector.shape_cast %453 : vector<16xf32> to vector<1x16xf32>
    %cst_42 = arith.constant dense<0.000000e+00> : vector<16xf32>
    %455 = vector.multi_reduction <add>, %288, %cst_42 [0] : vector<1x16xf32> to vector<16xf32>
    %456 = vector.shape_cast %455 : vector<16xf32> to vector<1x16xf32>
    %cst_43 = arith.constant dense<0.000000e+00> : vector<16xf32>
    %457 = vector.multi_reduction <add>, %370, %cst_43 [0] : vector<1x16xf32> to vector<16xf32>
    %458 = vector.shape_cast %457 : vector<16xf32> to vector<1x16xf32>
    %cst_44 = arith.constant dense<0.000000e+00> : vector<16xf32>
    %459 = vector.multi_reduction <add>, %452, %cst_44 [0] : vector<1x16xf32> to vector<16xf32>
    %460 = vector.shape_cast %459 : vector<16xf32> to vector<1x16xf32>
    %461 = arith.mulf %206, %206 : vector<1x16xf32>
    %cst_45 = arith.constant dense<0.000000e+00> : vector<16xf32>
    %462 = vector.multi_reduction <add>, %461, %cst_45 [0] : vector<1x16xf32> to vector<16xf32>
    %463 = vector.shape_cast %462 : vector<16xf32> to vector<1x16xf32>
    %464 = arith.mulf %288, %288 : vector<1x16xf32>
    %cst_46 = arith.constant dense<0.000000e+00> : vector<16xf32>
    %465 = vector.multi_reduction <add>, %464, %cst_46 [0] : vector<1x16xf32> to vector<16xf32>
    %466 = vector.shape_cast %465 : vector<16xf32> to vector<1x16xf32>
    %467 = arith.mulf %370, %370 : vector<1x16xf32>
    %cst_47 = arith.constant dense<0.000000e+00> : vector<16xf32>
    %468 = vector.multi_reduction <add>, %467, %cst_47 [0] : vector<1x16xf32> to vector<16xf32>
    %469 = vector.shape_cast %468 : vector<16xf32> to vector<1x16xf32>
    %470 = arith.mulf %452, %452 : vector<1x16xf32>
    %cst_48 = arith.constant dense<0.000000e+00> : vector<16xf32>
    %471 = vector.multi_reduction <add>, %470, %cst_48 [0] : vector<1x16xf32> to vector<16xf32>
    %472 = vector.shape_cast %471 : vector<16xf32> to vector<1x16xf32>
    %473 = tpu.concatenate %454, %456, %458, %460, %463, %466, %469, %472 in 0 : vector<1x16xf32>, vector<1x16xf32>, vector<1x16xf32>, vector<1x16xf32>, vector<1x16xf32>, vector<1x16xf32>, vector<1x16xf32>, vector<1x16xf32> -> vector<8x16xf32>
    %474 = vector.shape_cast %473 : vector<8x16xf32> to vector<1x8x16xf32>
    %c0_49 = arith.constant 0 : index
    %c0_50 = arith.constant 0 : index
    %c0_51 = arith.constant 0 : index
    %475 = vector.load %arg4[%c0_49, %c0_50, %c0_51] : memref<1x8x16xf32, #tpu.memory_space<vmem>>, vector<1x8x16xf32>
    tpu.vector_store %arg4[%c0_49, %c0_50, %c0_51], %474 {strides = array<i32>} : memref<1x8x16xf32, #tpu.memory_space<vmem>>, vector<1x8x16xf32>,
    return
  }
  func.func @transform_0(%arg0: i32) -> (i32, i32, i32) {
    %c0_i32 = arith.constant 0 : i32
    %c0_i32_0 = arith.constant 0 : i32
    %c0_i32_1 = arith.constant 0 : i32
    return %arg0, %c0_i32, %c0_i32_0 : i32, i32, i32
  }
  func.func @transform_1(%arg0: i32) -> i32 {
    %c0_i32 = arith.constant 0 : i32
    %c0_i32_0 = arith.constant 0 : i32
    return %c0_i32 : i32
  }
  func.func @transform_2(%arg0: i32) -> i32 {
    %c0_i32 = arith.constant 0 : i32
    %c0_i32_0 = arith.constant 0 : i32
    return %c0_i32 : i32
  }
  func.func @transform_3(%arg0: i32) -> (i32, i32, i32) {
    %c0_i32 = arith.constant 0 : i32
    %c0_i32_0 = arith.constant 0 : i32
    %c0_i32_1 = arith.constant 0 : i32
    return %arg0, %c0_i32, %c0_i32_0 : i32, i32, i32
  }
}

module attributes {stable_mosaic.version = 11 : i64} {
  func.func @_small_out_kernel(%arg0: i32, %arg1: memref<1x4x16xf32, #tpu.memory_space<vmem>>, %arg2: memref<80xf32, #tpu.memory_space<smem>>, %arg3: memref<4xf32, #tpu.memory_space<smem>>, %arg4: memref<4xf32, #tpu.memory_space<smem>>, %arg5: memref<4xf32, #tpu.memory_space<smem>>, %arg6: memref<80xf32, #tpu.memory_space<smem>>, %arg7: memref<4xf32, #tpu.memory_space<smem>>, %arg8: memref<4xf32, #tpu.memory_space<smem>>, %arg9: memref<4xf32, #tpu.memory_space<smem>>, %arg10: memref<1x4x16xf32, #tpu.memory_space<vmem>>) attributes {dimension_semantics = [#tpu.dimension_semantics<parallel>], iteration_bounds = array<i64: 2>, scalar_prefetch = 0 : i64, scratch_operands = 0 : i64, tpu.core_type = #tpu.core_type<tc>, window_params = [{transform_indices = @transform_0, window_bounds = array<i64: 1, 4, 16>}, {transform_indices = @transform_1, window_bounds = array<i64: 80>}, {transform_indices = @transform_2, window_bounds = array<i64: 4>}, {transform_indices = @transform_3, window_bounds = array<i64: 4>}, {transform_indices = @transform_4, window_bounds = array<i64: 4>}, {transform_indices = @transform_5, window_bounds = array<i64: 80>}, {transform_indices = @transform_6, window_bounds = array<i64: 4>}, {transform_indices = @transform_7, window_bounds = array<i64: 4>}, {transform_indices = @transform_8, window_bounds = array<i64: 4>}, {transform_indices = @transform_9, window_bounds = array<i64: 1, 4, 16>}]} {
    %0 = tpu.iota {dimensions = array<i32: 1>} : vector<1x16xi32>
    %c-2_i32 = arith.constant -2 : i32
    %1 = vector.broadcast %c-2_i32 : i32 to vector<1x16xi32>
    %2 = arith.addi %0, %1 : vector<1x16xi32>
    %c0_i32 = arith.constant 0 : i32
    %3 = vector.broadcast %c0_i32 : i32 to vector<1x16xi32>
    %4 = arith.cmpi sge, %2, %3 : vector<1x16xi32>
    %c-2_i32_0 = arith.constant -2 : i32
    %5 = vector.broadcast %c-2_i32_0 : i32 to vector<1x16xi32>
    %6 = arith.addi %0, %5 : vector<1x16xi32>
    %c16_i32 = arith.constant 16 : i32
    %7 = vector.broadcast %c16_i32 : i32 to vector<1x16xi32>
    %8 = arith.cmpi slt, %6, %7 : vector<1x16xi32>
    %9 = arith.andi %4, %8 : vector<1x16xi1>
    %c-1_i32 = arith.constant -1 : i32
    %10 = vector.broadcast %c-1_i32 : i32 to vector<1x16xi32>
    %11 = arith.addi %0, %10 : vector<1x16xi32>
    %c0_i32_1 = arith.constant 0 : i32
    %12 = vector.broadcast %c0_i32_1 : i32 to vector<1x16xi32>
    %13 = arith.cmpi sge, %11, %12 : vector<1x16xi32>
    %c-1_i32_2 = arith.constant -1 : i32
    %14 = vector.broadcast %c-1_i32_2 : i32 to vector<1x16xi32>
    %15 = arith.addi %0, %14 : vector<1x16xi32>
    %c16_i32_3 = arith.constant 16 : i32
    %16 = vector.broadcast %c16_i32_3 : i32 to vector<1x16xi32>
    %17 = arith.cmpi slt, %15, %16 : vector<1x16xi32>
    %18 = arith.andi %13, %17 : vector<1x16xi1>
    %c1_i32 = arith.constant 1 : i32
    %19 = vector.broadcast %c1_i32 : i32 to vector<1x16xi32>
    %20 = arith.addi %0, %19 : vector<1x16xi32>
    %c0_i32_4 = arith.constant 0 : i32
    %21 = vector.broadcast %c0_i32_4 : i32 to vector<1x16xi32>
    %22 = arith.cmpi sge, %20, %21 : vector<1x16xi32>
    %c1_i32_5 = arith.constant 1 : i32
    %23 = vector.broadcast %c1_i32_5 : i32 to vector<1x16xi32>
    %24 = arith.addi %0, %23 : vector<1x16xi32>
    %c16_i32_6 = arith.constant 16 : i32
    %25 = vector.broadcast %c16_i32_6 : i32 to vector<1x16xi32>
    %26 = arith.cmpi slt, %24, %25 : vector<1x16xi32>
    %27 = arith.andi %22, %26 : vector<1x16xi1>
    %c2_i32 = arith.constant 2 : i32
    %28 = vector.broadcast %c2_i32 : i32 to vector<1x16xi32>
    %29 = arith.addi %0, %28 : vector<1x16xi32>
    %c0_i32_7 = arith.constant 0 : i32
    %30 = vector.broadcast %c0_i32_7 : i32 to vector<1x16xi32>
    %31 = arith.cmpi sge, %29, %30 : vector<1x16xi32>
    %c2_i32_8 = arith.constant 2 : i32
    %32 = vector.broadcast %c2_i32_8 : i32 to vector<1x16xi32>
    %33 = arith.addi %0, %32 : vector<1x16xi32>
    %c16_i32_9 = arith.constant 16 : i32
    %34 = vector.broadcast %c16_i32_9 : i32 to vector<1x16xi32>
    %35 = arith.cmpi slt, %33, %34 : vector<1x16xi32>
    %36 = arith.andi %31, %35 : vector<1x16xi1>
    %c0 = arith.constant 0 : index
    %c0_10 = arith.constant 0 : index
    %c0_11 = arith.constant 0 : index
    %37 = vector.load %arg1[%c0, %c0_10, %c0_11] : memref<1x4x16xf32, #tpu.memory_space<vmem>>, vector<1x1x16xf32>
    %38 = vector.shape_cast %37 : vector<1x1x16xf32> to vector<1x16xf32>
    %c0_12 = arith.constant 0 : index
    %c1 = arith.constant 1 : index
    %c0_13 = arith.constant 0 : index
    %39 = vector.load %arg1[%c0_12, %c1, %c0_13] : memref<1x4x16xf32, #tpu.memory_space<vmem>>, vector<1x1x16xf32>
    %40 = vector.shape_cast %39 : vector<1x1x16xf32> to vector<1x16xf32>
    %c0_14 = arith.constant 0 : index
    %c2 = arith.constant 2 : index
    %c0_15 = arith.constant 0 : index
    %41 = vector.load %arg1[%c0_14, %c2, %c0_15] : memref<1x4x16xf32, #tpu.memory_space<vmem>>, vector<1x1x16xf32>
    %42 = vector.shape_cast %41 : vector<1x1x16xf32> to vector<1x16xf32>
    %c0_16 = arith.constant 0 : index
    %c3 = arith.constant 3 : index
    %c0_17 = arith.constant 0 : index
    %43 = vector.load %arg1[%c0_16, %c3, %c0_17] : memref<1x4x16xf32, #tpu.memory_space<vmem>>, vector<1x1x16xf32>
    %44 = vector.shape_cast %43 : vector<1x1x16xf32> to vector<1x16xf32>
    %45 = vector.extract_strided_slice %38 {offsets = [0, 14], sizes = [1, 2], strides = [1, 1]} : vector<1x16xf32> to vector<1x2xf32>
    %46 = vector.extract_strided_slice %38 {offsets = [0, 0], sizes = [1, 14], strides = [1, 1]} : vector<1x16xf32> to vector<1x14xf32>
    %47 = tpu.concatenate %45, %46 in 1 : vector<1x2xf32>, vector<1x14xf32> -> vector<1x16xf32>
    %cst = arith.constant 0.000000e+00 : f32
    %48 = vector.broadcast %cst : f32 to vector<1x16xf32>
    %49 = arith.select %9, %47, %48 : vector<1x16xi1>, vector<1x16xf32>
    %50 = vector.extract_strided_slice %38 {offsets = [0, 15], sizes = [1, 1], strides = [1, 1]} : vector<1x16xf32> to vector<1x1xf32>
    %51 = vector.extract_strided_slice %38 {offsets = [0, 0], sizes = [1, 15], strides = [1, 1]} : vector<1x16xf32> to vector<1x15xf32>
    %52 = tpu.concatenate %50, %51 in 1 : vector<1x1xf32>, vector<1x15xf32> -> vector<1x16xf32>
    %cst_18 = arith.constant 0.000000e+00 : f32
    %53 = vector.broadcast %cst_18 : f32 to vector<1x16xf32>
    %54 = arith.select %18, %52, %53 : vector<1x16xi1>, vector<1x16xf32>
    %55 = vector.extract_strided_slice %38 {offsets = [0, 1], sizes = [1, 15], strides = [1, 1]} : vector<1x16xf32> to vector<1x15xf32>
    %56 = vector.extract_strided_slice %38 {offsets = [0, 0], sizes = [1, 1], strides = [1, 1]} : vector<1x16xf32> to vector<1x1xf32>
    %57 = tpu.concatenate %55, %56 in 1 : vector<1x15xf32>, vector<1x1xf32> -> vector<1x16xf32>
    %cst_19 = arith.constant 0.000000e+00 : f32
    %58 = vector.broadcast %cst_19 : f32 to vector<1x16xf32>
    %59 = arith.select %27, %57, %58 : vector<1x16xi1>, vector<1x16xf32>
    %60 = vector.extract_strided_slice %38 {offsets = [0, 2], sizes = [1, 14], strides = [1, 1]} : vector<1x16xf32> to vector<1x14xf32>
    %61 = vector.extract_strided_slice %38 {offsets = [0, 0], sizes = [1, 2], strides = [1, 1]} : vector<1x16xf32> to vector<1x2xf32>
    %62 = tpu.concatenate %60, %61 in 1 : vector<1x14xf32>, vector<1x2xf32> -> vector<1x16xf32>
    %cst_20 = arith.constant 0.000000e+00 : f32
    %63 = vector.broadcast %cst_20 : f32 to vector<1x16xf32>
    %64 = arith.select %36, %62, %63 : vector<1x16xi1>, vector<1x16xf32>
    %65 = vector.extract_strided_slice %40 {offsets = [0, 14], sizes = [1, 2], strides = [1, 1]} : vector<1x16xf32> to vector<1x2xf32>
    %66 = vector.extract_strided_slice %40 {offsets = [0, 0], sizes = [1, 14], strides = [1, 1]} : vector<1x16xf32> to vector<1x14xf32>
    %67 = tpu.concatenate %65, %66 in 1 : vector<1x2xf32>, vector<1x14xf32> -> vector<1x16xf32>
    %cst_21 = arith.constant 0.000000e+00 : f32
    %68 = vector.broadcast %cst_21 : f32 to vector<1x16xf32>
    %69 = arith.select %9, %67, %68 : vector<1x16xi1>, vector<1x16xf32>
    %70 = vector.extract_strided_slice %40 {offsets = [0, 15], sizes = [1, 1], strides = [1, 1]} : vector<1x16xf32> to vector<1x1xf32>
    %71 = vector.extract_strided_slice %40 {offsets = [0, 0], sizes = [1, 15], strides = [1, 1]} : vector<1x16xf32> to vector<1x15xf32>
    %72 = tpu.concatenate %70, %71 in 1 : vector<1x1xf32>, vector<1x15xf32> -> vector<1x16xf32>
    %cst_22 = arith.constant 0.000000e+00 : f32
    %73 = vector.broadcast %cst_22 : f32 to vector<1x16xf32>
    %74 = arith.select %18, %72, %73 : vector<1x16xi1>, vector<1x16xf32>
    %75 = vector.extract_strided_slice %40 {offsets = [0, 1], sizes = [1, 15], strides = [1, 1]} : vector<1x16xf32> to vector<1x15xf32>
    %76 = vector.extract_strided_slice %40 {offsets = [0, 0], sizes = [1, 1], strides = [1, 1]} : vector<1x16xf32> to vector<1x1xf32>
    %77 = tpu.concatenate %75, %76 in 1 : vector<1x15xf32>, vector<1x1xf32> -> vector<1x16xf32>
    %cst_23 = arith.constant 0.000000e+00 : f32
    %78 = vector.broadcast %cst_23 : f32 to vector<1x16xf32>
    %79 = arith.select %27, %77, %78 : vector<1x16xi1>, vector<1x16xf32>
    %80 = vector.extract_strided_slice %40 {offsets = [0, 2], sizes = [1, 14], strides = [1, 1]} : vector<1x16xf32> to vector<1x14xf32>
    %81 = vector.extract_strided_slice %40 {offsets = [0, 0], sizes = [1, 2], strides = [1, 1]} : vector<1x16xf32> to vector<1x2xf32>
    %82 = tpu.concatenate %80, %81 in 1 : vector<1x14xf32>, vector<1x2xf32> -> vector<1x16xf32>
    %cst_24 = arith.constant 0.000000e+00 : f32
    %83 = vector.broadcast %cst_24 : f32 to vector<1x16xf32>
    %84 = arith.select %36, %82, %83 : vector<1x16xi1>, vector<1x16xf32>
    %85 = vector.extract_strided_slice %42 {offsets = [0, 14], sizes = [1, 2], strides = [1, 1]} : vector<1x16xf32> to vector<1x2xf32>
    %86 = vector.extract_strided_slice %42 {offsets = [0, 0], sizes = [1, 14], strides = [1, 1]} : vector<1x16xf32> to vector<1x14xf32>
    %87 = tpu.concatenate %85, %86 in 1 : vector<1x2xf32>, vector<1x14xf32> -> vector<1x16xf32>
    %cst_25 = arith.constant 0.000000e+00 : f32
    %88 = vector.broadcast %cst_25 : f32 to vector<1x16xf32>
    %89 = arith.select %9, %87, %88 : vector<1x16xi1>, vector<1x16xf32>
    %90 = vector.extract_strided_slice %42 {offsets = [0, 15], sizes = [1, 1], strides = [1, 1]} : vector<1x16xf32> to vector<1x1xf32>
    %91 = vector.extract_strided_slice %42 {offsets = [0, 0], sizes = [1, 15], strides = [1, 1]} : vector<1x16xf32> to vector<1x15xf32>
    %92 = tpu.concatenate %90, %91 in 1 : vector<1x1xf32>, vector<1x15xf32> -> vector<1x16xf32>
    %cst_26 = arith.constant 0.000000e+00 : f32
    %93 = vector.broadcast %cst_26 : f32 to vector<1x16xf32>
    %94 = arith.select %18, %92, %93 : vector<1x16xi1>, vector<1x16xf32>
    %95 = vector.extract_strided_slice %42 {offsets = [0, 1], sizes = [1, 15], strides = [1, 1]} : vector<1x16xf32> to vector<1x15xf32>
    %96 = vector.extract_strided_slice %42 {offsets = [0, 0], sizes = [1, 1], strides = [1, 1]} : vector<1x16xf32> to vector<1x1xf32>
    %97 = tpu.concatenate %95, %96 in 1 : vector<1x15xf32>, vector<1x1xf32> -> vector<1x16xf32>
    %cst_27 = arith.constant 0.000000e+00 : f32
    %98 = vector.broadcast %cst_27 : f32 to vector<1x16xf32>
    %99 = arith.select %27, %97, %98 : vector<1x16xi1>, vector<1x16xf32>
    %100 = vector.extract_strided_slice %42 {offsets = [0, 2], sizes = [1, 14], strides = [1, 1]} : vector<1x16xf32> to vector<1x14xf32>
    %101 = vector.extract_strided_slice %42 {offsets = [0, 0], sizes = [1, 2], strides = [1, 1]} : vector<1x16xf32> to vector<1x2xf32>
    %102 = tpu.concatenate %100, %101 in 1 : vector<1x14xf32>, vector<1x2xf32> -> vector<1x16xf32>
    %cst_28 = arith.constant 0.000000e+00 : f32
    %103 = vector.broadcast %cst_28 : f32 to vector<1x16xf32>
    %104 = arith.select %36, %102, %103 : vector<1x16xi1>, vector<1x16xf32>
    %105 = vector.extract_strided_slice %44 {offsets = [0, 14], sizes = [1, 2], strides = [1, 1]} : vector<1x16xf32> to vector<1x2xf32>
    %106 = vector.extract_strided_slice %44 {offsets = [0, 0], sizes = [1, 14], strides = [1, 1]} : vector<1x16xf32> to vector<1x14xf32>
    %107 = tpu.concatenate %105, %106 in 1 : vector<1x2xf32>, vector<1x14xf32> -> vector<1x16xf32>
    %cst_29 = arith.constant 0.000000e+00 : f32
    %108 = vector.broadcast %cst_29 : f32 to vector<1x16xf32>
    %109 = arith.select %9, %107, %108 : vector<1x16xi1>, vector<1x16xf32>
    %110 = vector.extract_strided_slice %44 {offsets = [0, 15], sizes = [1, 1], strides = [1, 1]} : vector<1x16xf32> to vector<1x1xf32>
    %111 = vector.extract_strided_slice %44 {offsets = [0, 0], sizes = [1, 15], strides = [1, 1]} : vector<1x16xf32> to vector<1x15xf32>
    %112 = tpu.concatenate %110, %111 in 1 : vector<1x1xf32>, vector<1x15xf32> -> vector<1x16xf32>
    %cst_30 = arith.constant 0.000000e+00 : f32
    %113 = vector.broadcast %cst_30 : f32 to vector<1x16xf32>
    %114 = arith.select %18, %112, %113 : vector<1x16xi1>, vector<1x16xf32>
    %115 = vector.extract_strided_slice %44 {offsets = [0, 1], sizes = [1, 15], strides = [1, 1]} : vector<1x16xf32> to vector<1x15xf32>
    %116 = vector.extract_strided_slice %44 {offsets = [0, 0], sizes = [1, 1], strides = [1, 1]} : vector<1x16xf32> to vector<1x1xf32>
    %117 = tpu.concatenate %115, %116 in 1 : vector<1x15xf32>, vector<1x1xf32> -> vector<1x16xf32>
    %cst_31 = arith.constant 0.000000e+00 : f32
    %118 = vector.broadcast %cst_31 : f32 to vector<1x16xf32>
    %119 = arith.select %27, %117, %118 : vector<1x16xi1>, vector<1x16xf32>
    %120 = vector.extract_strided_slice %44 {offsets = [0, 2], sizes = [1, 14], strides = [1, 1]} : vector<1x16xf32> to vector<1x14xf32>
    %121 = vector.extract_strided_slice %44 {offsets = [0, 0], sizes = [1, 2], strides = [1, 1]} : vector<1x16xf32> to vector<1x2xf32>
    %122 = tpu.concatenate %120, %121 in 1 : vector<1x14xf32>, vector<1x2xf32> -> vector<1x16xf32>
    %cst_32 = arith.constant 0.000000e+00 : f32
    %123 = vector.broadcast %cst_32 : f32 to vector<1x16xf32>
    %124 = arith.select %36, %122, %123 : vector<1x16xi1>, vector<1x16xf32>
    %c0_33 = arith.constant 0 : index
    %125 = memref.load %arg2[%c0_33] : memref<80xf32, #tpu.memory_space<smem>>
    %126 = vector.broadcast %125 : f32 to vector<1x16xf32>
    %127 = arith.mulf %126, %49 : vector<1x16xf32>
    %c1_34 = arith.constant 1 : index
    %128 = memref.load %arg2[%c1_34] : memref<80xf32, #tpu.memory_space<smem>>
    %129 = vector.broadcast %128 : f32 to vector<1x16xf32>
    %130 = arith.mulf %129, %54 : vector<1x16xf32>
    %131 = arith.addf %127, %130 : vector<1x16xf32>
    %c2_35 = arith.constant 2 : index
    %132 = memref.load %arg2[%c2_35] : memref<80xf32, #tpu.memory_space<smem>>
    %133 = vector.broadcast %132 : f32 to vector<1x16xf32>
    %134 = arith.mulf %133, %38 : vector<1x16xf32>
    %135 = arith.addf %131, %134 : vector<1x16xf32>
    %c3_36 = arith.constant 3 : index
    %136 = memref.load %arg2[%c3_36] : memref<80xf32, #tpu.memory_space<smem>>
    %137 = vector.broadcast %136 : f32 to vector<1x16xf32>
    %138 = arith.mulf %137, %59 : vector<1x16xf32>
    %139 = arith.addf %135, %138 : vector<1x16xf32>
    %c4 = arith.constant 4 : index
    %140 = memref.load %arg2[%c4] : memref<80xf32, #tpu.memory_space<smem>>
    %141 = vector.broadcast %140 : f32 to vector<1x16xf32>
    %142 = arith.mulf %141, %64 : vector<1x16xf32>
    %143 = arith.addf %139, %142 : vector<1x16xf32>
    %c5 = arith.constant 5 : index
    %144 = memref.load %arg2[%c5] : memref<80xf32, #tpu.memory_space<smem>>
    %145 = vector.broadcast %144 : f32 to vector<1x16xf32>
    %146 = arith.mulf %145, %69 : vector<1x16xf32>
    %147 = arith.addf %143, %146 : vector<1x16xf32>
    %c6 = arith.constant 6 : index
    %148 = memref.load %arg2[%c6] : memref<80xf32, #tpu.memory_space<smem>>
    %149 = vector.broadcast %148 : f32 to vector<1x16xf32>
    %150 = arith.mulf %149, %74 : vector<1x16xf32>
    %151 = arith.addf %147, %150 : vector<1x16xf32>
    %c7 = arith.constant 7 : index
    %152 = memref.load %arg2[%c7] : memref<80xf32, #tpu.memory_space<smem>>
    %153 = vector.broadcast %152 : f32 to vector<1x16xf32>
    %154 = arith.mulf %153, %40 : vector<1x16xf32>
    %155 = arith.addf %151, %154 : vector<1x16xf32>
    %c8 = arith.constant 8 : index
    %156 = memref.load %arg2[%c8] : memref<80xf32, #tpu.memory_space<smem>>
    %157 = vector.broadcast %156 : f32 to vector<1x16xf32>
    %158 = arith.mulf %157, %79 : vector<1x16xf32>
    %159 = arith.addf %155, %158 : vector<1x16xf32>
    %c9 = arith.constant 9 : index
    %160 = memref.load %arg2[%c9] : memref<80xf32, #tpu.memory_space<smem>>
    %161 = vector.broadcast %160 : f32 to vector<1x16xf32>
    %162 = arith.mulf %161, %84 : vector<1x16xf32>
    %163 = arith.addf %159, %162 : vector<1x16xf32>
    %c10 = arith.constant 10 : index
    %164 = memref.load %arg2[%c10] : memref<80xf32, #tpu.memory_space<smem>>
    %165 = vector.broadcast %164 : f32 to vector<1x16xf32>
    %166 = arith.mulf %165, %89 : vector<1x16xf32>
    %167 = arith.addf %163, %166 : vector<1x16xf32>
    %c11 = arith.constant 11 : index
    %168 = memref.load %arg2[%c11] : memref<80xf32, #tpu.memory_space<smem>>
    %169 = vector.broadcast %168 : f32 to vector<1x16xf32>
    %170 = arith.mulf %169, %94 : vector<1x16xf32>
    %171 = arith.addf %167, %170 : vector<1x16xf32>
    %c12 = arith.constant 12 : index
    %172 = memref.load %arg2[%c12] : memref<80xf32, #tpu.memory_space<smem>>
    %173 = vector.broadcast %172 : f32 to vector<1x16xf32>
    %174 = arith.mulf %173, %42 : vector<1x16xf32>
    %175 = arith.addf %171, %174 : vector<1x16xf32>
    %c13 = arith.constant 13 : index
    %176 = memref.load %arg2[%c13] : memref<80xf32, #tpu.memory_space<smem>>
    %177 = vector.broadcast %176 : f32 to vector<1x16xf32>
    %178 = arith.mulf %177, %99 : vector<1x16xf32>
    %179 = arith.addf %175, %178 : vector<1x16xf32>
    %c14 = arith.constant 14 : index
    %180 = memref.load %arg2[%c14] : memref<80xf32, #tpu.memory_space<smem>>
    %181 = vector.broadcast %180 : f32 to vector<1x16xf32>
    %182 = arith.mulf %181, %104 : vector<1x16xf32>
    %183 = arith.addf %179, %182 : vector<1x16xf32>
    %c15 = arith.constant 15 : index
    %184 = memref.load %arg2[%c15] : memref<80xf32, #tpu.memory_space<smem>>
    %185 = vector.broadcast %184 : f32 to vector<1x16xf32>
    %186 = arith.mulf %185, %109 : vector<1x16xf32>
    %187 = arith.addf %183, %186 : vector<1x16xf32>
    %c16 = arith.constant 16 : index
    %188 = memref.load %arg2[%c16] : memref<80xf32, #tpu.memory_space<smem>>
    %189 = vector.broadcast %188 : f32 to vector<1x16xf32>
    %190 = arith.mulf %189, %114 : vector<1x16xf32>
    %191 = arith.addf %187, %190 : vector<1x16xf32>
    %c17 = arith.constant 17 : index
    %192 = memref.load %arg2[%c17] : memref<80xf32, #tpu.memory_space<smem>>
    %193 = vector.broadcast %192 : f32 to vector<1x16xf32>
    %194 = arith.mulf %193, %44 : vector<1x16xf32>
    %195 = arith.addf %191, %194 : vector<1x16xf32>
    %c18 = arith.constant 18 : index
    %196 = memref.load %arg2[%c18] : memref<80xf32, #tpu.memory_space<smem>>
    %197 = vector.broadcast %196 : f32 to vector<1x16xf32>
    %198 = arith.mulf %197, %119 : vector<1x16xf32>
    %199 = arith.addf %195, %198 : vector<1x16xf32>
    %c19 = arith.constant 19 : index
    %200 = memref.load %arg2[%c19] : memref<80xf32, #tpu.memory_space<smem>>
    %201 = vector.broadcast %200 : f32 to vector<1x16xf32>
    %202 = arith.mulf %201, %124 : vector<1x16xf32>
    %203 = arith.addf %199, %202 : vector<1x16xf32>
    %c0_37 = arith.constant 0 : index
    %204 = memref.load %arg3[%c0_37] : memref<4xf32, #tpu.memory_space<smem>>
    %205 = vector.broadcast %204 : f32 to vector<1x16xf32>
    %206 = arith.addf %203, %205 : vector<1x16xf32>
    %c20 = arith.constant 20 : index
    %207 = memref.load %arg2[%c20] : memref<80xf32, #tpu.memory_space<smem>>
    %208 = vector.broadcast %207 : f32 to vector<1x16xf32>
    %209 = arith.mulf %208, %49 : vector<1x16xf32>
    %c21 = arith.constant 21 : index
    %210 = memref.load %arg2[%c21] : memref<80xf32, #tpu.memory_space<smem>>
    %211 = vector.broadcast %210 : f32 to vector<1x16xf32>
    %212 = arith.mulf %211, %54 : vector<1x16xf32>
    %213 = arith.addf %209, %212 : vector<1x16xf32>
    %c22 = arith.constant 22 : index
    %214 = memref.load %arg2[%c22] : memref<80xf32, #tpu.memory_space<smem>>
    %215 = vector.broadcast %214 : f32 to vector<1x16xf32>
    %216 = arith.mulf %215, %38 : vector<1x16xf32>
    %217 = arith.addf %213, %216 : vector<1x16xf32>
    %c23 = arith.constant 23 : index
    %218 = memref.load %arg2[%c23] : memref<80xf32, #tpu.memory_space<smem>>
    %219 = vector.broadcast %218 : f32 to vector<1x16xf32>
    %220 = arith.mulf %219, %59 : vector<1x16xf32>
    %221 = arith.addf %217, %220 : vector<1x16xf32>
    %c24 = arith.constant 24 : index
    %222 = memref.load %arg2[%c24] : memref<80xf32, #tpu.memory_space<smem>>
    %223 = vector.broadcast %222 : f32 to vector<1x16xf32>
    %224 = arith.mulf %223, %64 : vector<1x16xf32>
    %225 = arith.addf %221, %224 : vector<1x16xf32>
    %c25 = arith.constant 25 : index
    %226 = memref.load %arg2[%c25] : memref<80xf32, #tpu.memory_space<smem>>
    %227 = vector.broadcast %226 : f32 to vector<1x16xf32>
    %228 = arith.mulf %227, %69 : vector<1x16xf32>
    %229 = arith.addf %225, %228 : vector<1x16xf32>
    %c26 = arith.constant 26 : index
    %230 = memref.load %arg2[%c26] : memref<80xf32, #tpu.memory_space<smem>>
    %231 = vector.broadcast %230 : f32 to vector<1x16xf32>
    %232 = arith.mulf %231, %74 : vector<1x16xf32>
    %233 = arith.addf %229, %232 : vector<1x16xf32>
    %c27 = arith.constant 27 : index
    %234 = memref.load %arg2[%c27] : memref<80xf32, #tpu.memory_space<smem>>
    %235 = vector.broadcast %234 : f32 to vector<1x16xf32>
    %236 = arith.mulf %235, %40 : vector<1x16xf32>
    %237 = arith.addf %233, %236 : vector<1x16xf32>
    %c28 = arith.constant 28 : index
    %238 = memref.load %arg2[%c28] : memref<80xf32, #tpu.memory_space<smem>>
    %239 = vector.broadcast %238 : f32 to vector<1x16xf32>
    %240 = arith.mulf %239, %79 : vector<1x16xf32>
    %241 = arith.addf %237, %240 : vector<1x16xf32>
    %c29 = arith.constant 29 : index
    %242 = memref.load %arg2[%c29] : memref<80xf32, #tpu.memory_space<smem>>
    %243 = vector.broadcast %242 : f32 to vector<1x16xf32>
    %244 = arith.mulf %243, %84 : vector<1x16xf32>
    %245 = arith.addf %241, %244 : vector<1x16xf32>
    %c30 = arith.constant 30 : index
    %246 = memref.load %arg2[%c30] : memref<80xf32, #tpu.memory_space<smem>>
    %247 = vector.broadcast %246 : f32 to vector<1x16xf32>
    %248 = arith.mulf %247, %89 : vector<1x16xf32>
    %249 = arith.addf %245, %248 : vector<1x16xf32>
    %c31 = arith.constant 31 : index
    %250 = memref.load %arg2[%c31] : memref<80xf32, #tpu.memory_space<smem>>
    %251 = vector.broadcast %250 : f32 to vector<1x16xf32>
    %252 = arith.mulf %251, %94 : vector<1x16xf32>
    %253 = arith.addf %249, %252 : vector<1x16xf32>
    %c32 = arith.constant 32 : index
    %254 = memref.load %arg2[%c32] : memref<80xf32, #tpu.memory_space<smem>>
    %255 = vector.broadcast %254 : f32 to vector<1x16xf32>
    %256 = arith.mulf %255, %42 : vector<1x16xf32>
    %257 = arith.addf %253, %256 : vector<1x16xf32>
    %c33 = arith.constant 33 : index
    %258 = memref.load %arg2[%c33] : memref<80xf32, #tpu.memory_space<smem>>
    %259 = vector.broadcast %258 : f32 to vector<1x16xf32>
    %260 = arith.mulf %259, %99 : vector<1x16xf32>
    %261 = arith.addf %257, %260 : vector<1x16xf32>
    %c34 = arith.constant 34 : index
    %262 = memref.load %arg2[%c34] : memref<80xf32, #tpu.memory_space<smem>>
    %263 = vector.broadcast %262 : f32 to vector<1x16xf32>
    %264 = arith.mulf %263, %104 : vector<1x16xf32>
    %265 = arith.addf %261, %264 : vector<1x16xf32>
    %c35 = arith.constant 35 : index
    %266 = memref.load %arg2[%c35] : memref<80xf32, #tpu.memory_space<smem>>
    %267 = vector.broadcast %266 : f32 to vector<1x16xf32>
    %268 = arith.mulf %267, %109 : vector<1x16xf32>
    %269 = arith.addf %265, %268 : vector<1x16xf32>
    %c36 = arith.constant 36 : index
    %270 = memref.load %arg2[%c36] : memref<80xf32, #tpu.memory_space<smem>>
    %271 = vector.broadcast %270 : f32 to vector<1x16xf32>
    %272 = arith.mulf %271, %114 : vector<1x16xf32>
    %273 = arith.addf %269, %272 : vector<1x16xf32>
    %c37 = arith.constant 37 : index
    %274 = memref.load %arg2[%c37] : memref<80xf32, #tpu.memory_space<smem>>
    %275 = vector.broadcast %274 : f32 to vector<1x16xf32>
    %276 = arith.mulf %275, %44 : vector<1x16xf32>
    %277 = arith.addf %273, %276 : vector<1x16xf32>
    %c38 = arith.constant 38 : index
    %278 = memref.load %arg2[%c38] : memref<80xf32, #tpu.memory_space<smem>>
    %279 = vector.broadcast %278 : f32 to vector<1x16xf32>
    %280 = arith.mulf %279, %119 : vector<1x16xf32>
    %281 = arith.addf %277, %280 : vector<1x16xf32>
    %c39 = arith.constant 39 : index
    %282 = memref.load %arg2[%c39] : memref<80xf32, #tpu.memory_space<smem>>
    %283 = vector.broadcast %282 : f32 to vector<1x16xf32>
    %284 = arith.mulf %283, %124 : vector<1x16xf32>
    %285 = arith.addf %281, %284 : vector<1x16xf32>
    %c1_38 = arith.constant 1 : index
    %286 = memref.load %arg3[%c1_38] : memref<4xf32, #tpu.memory_space<smem>>
    %287 = vector.broadcast %286 : f32 to vector<1x16xf32>
    %288 = arith.addf %285, %287 : vector<1x16xf32>
    %c40 = arith.constant 40 : index
    %289 = memref.load %arg2[%c40] : memref<80xf32, #tpu.memory_space<smem>>
    %290 = vector.broadcast %289 : f32 to vector<1x16xf32>
    %291 = arith.mulf %290, %49 : vector<1x16xf32>
    %c41 = arith.constant 41 : index
    %292 = memref.load %arg2[%c41] : memref<80xf32, #tpu.memory_space<smem>>
    %293 = vector.broadcast %292 : f32 to vector<1x16xf32>
    %294 = arith.mulf %293, %54 : vector<1x16xf32>
    %295 = arith.addf %291, %294 : vector<1x16xf32>
    %c42 = arith.constant 42 : index
    %296 = memref.load %arg2[%c42] : memref<80xf32, #tpu.memory_space<smem>>
    %297 = vector.broadcast %296 : f32 to vector<1x16xf32>
    %298 = arith.mulf %297, %38 : vector<1x16xf32>
    %299 = arith.addf %295, %298 : vector<1x16xf32>
    %c43 = arith.constant 43 : index
    %300 = memref.load %arg2[%c43] : memref<80xf32, #tpu.memory_space<smem>>
    %301 = vector.broadcast %300 : f32 to vector<1x16xf32>
    %302 = arith.mulf %301, %59 : vector<1x16xf32>
    %303 = arith.addf %299, %302 : vector<1x16xf32>
    %c44 = arith.constant 44 : index
    %304 = memref.load %arg2[%c44] : memref<80xf32, #tpu.memory_space<smem>>
    %305 = vector.broadcast %304 : f32 to vector<1x16xf32>
    %306 = arith.mulf %305, %64 : vector<1x16xf32>
    %307 = arith.addf %303, %306 : vector<1x16xf32>
    %c45 = arith.constant 45 : index
    %308 = memref.load %arg2[%c45] : memref<80xf32, #tpu.memory_space<smem>>
    %309 = vector.broadcast %308 : f32 to vector<1x16xf32>
    %310 = arith.mulf %309, %69 : vector<1x16xf32>
    %311 = arith.addf %307, %310 : vector<1x16xf32>
    %c46 = arith.constant 46 : index
    %312 = memref.load %arg2[%c46] : memref<80xf32, #tpu.memory_space<smem>>
    %313 = vector.broadcast %312 : f32 to vector<1x16xf32>
    %314 = arith.mulf %313, %74 : vector<1x16xf32>
    %315 = arith.addf %311, %314 : vector<1x16xf32>
    %c47 = arith.constant 47 : index
    %316 = memref.load %arg2[%c47] : memref<80xf32, #tpu.memory_space<smem>>
    %317 = vector.broadcast %316 : f32 to vector<1x16xf32>
    %318 = arith.mulf %317, %40 : vector<1x16xf32>
    %319 = arith.addf %315, %318 : vector<1x16xf32>
    %c48 = arith.constant 48 : index
    %320 = memref.load %arg2[%c48] : memref<80xf32, #tpu.memory_space<smem>>
    %321 = vector.broadcast %320 : f32 to vector<1x16xf32>
    %322 = arith.mulf %321, %79 : vector<1x16xf32>
    %323 = arith.addf %319, %322 : vector<1x16xf32>
    %c49 = arith.constant 49 : index
    %324 = memref.load %arg2[%c49] : memref<80xf32, #tpu.memory_space<smem>>
    %325 = vector.broadcast %324 : f32 to vector<1x16xf32>
    %326 = arith.mulf %325, %84 : vector<1x16xf32>
    %327 = arith.addf %323, %326 : vector<1x16xf32>
    %c50 = arith.constant 50 : index
    %328 = memref.load %arg2[%c50] : memref<80xf32, #tpu.memory_space<smem>>
    %329 = vector.broadcast %328 : f32 to vector<1x16xf32>
    %330 = arith.mulf %329, %89 : vector<1x16xf32>
    %331 = arith.addf %327, %330 : vector<1x16xf32>
    %c51 = arith.constant 51 : index
    %332 = memref.load %arg2[%c51] : memref<80xf32, #tpu.memory_space<smem>>
    %333 = vector.broadcast %332 : f32 to vector<1x16xf32>
    %334 = arith.mulf %333, %94 : vector<1x16xf32>
    %335 = arith.addf %331, %334 : vector<1x16xf32>
    %c52 = arith.constant 52 : index
    %336 = memref.load %arg2[%c52] : memref<80xf32, #tpu.memory_space<smem>>
    %337 = vector.broadcast %336 : f32 to vector<1x16xf32>
    %338 = arith.mulf %337, %42 : vector<1x16xf32>
    %339 = arith.addf %335, %338 : vector<1x16xf32>
    %c53 = arith.constant 53 : index
    %340 = memref.load %arg2[%c53] : memref<80xf32, #tpu.memory_space<smem>>
    %341 = vector.broadcast %340 : f32 to vector<1x16xf32>
    %342 = arith.mulf %341, %99 : vector<1x16xf32>
    %343 = arith.addf %339, %342 : vector<1x16xf32>
    %c54 = arith.constant 54 : index
    %344 = memref.load %arg2[%c54] : memref<80xf32, #tpu.memory_space<smem>>
    %345 = vector.broadcast %344 : f32 to vector<1x16xf32>
    %346 = arith.mulf %345, %104 : vector<1x16xf32>
    %347 = arith.addf %343, %346 : vector<1x16xf32>
    %c55 = arith.constant 55 : index
    %348 = memref.load %arg2[%c55] : memref<80xf32, #tpu.memory_space<smem>>
    %349 = vector.broadcast %348 : f32 to vector<1x16xf32>
    %350 = arith.mulf %349, %109 : vector<1x16xf32>
    %351 = arith.addf %347, %350 : vector<1x16xf32>
    %c56 = arith.constant 56 : index
    %352 = memref.load %arg2[%c56] : memref<80xf32, #tpu.memory_space<smem>>
    %353 = vector.broadcast %352 : f32 to vector<1x16xf32>
    %354 = arith.mulf %353, %114 : vector<1x16xf32>
    %355 = arith.addf %351, %354 : vector<1x16xf32>
    %c57 = arith.constant 57 : index
    %356 = memref.load %arg2[%c57] : memref<80xf32, #tpu.memory_space<smem>>
    %357 = vector.broadcast %356 : f32 to vector<1x16xf32>
    %358 = arith.mulf %357, %44 : vector<1x16xf32>
    %359 = arith.addf %355, %358 : vector<1x16xf32>
    %c58 = arith.constant 58 : index
    %360 = memref.load %arg2[%c58] : memref<80xf32, #tpu.memory_space<smem>>
    %361 = vector.broadcast %360 : f32 to vector<1x16xf32>
    %362 = arith.mulf %361, %119 : vector<1x16xf32>
    %363 = arith.addf %359, %362 : vector<1x16xf32>
    %c59 = arith.constant 59 : index
    %364 = memref.load %arg2[%c59] : memref<80xf32, #tpu.memory_space<smem>>
    %365 = vector.broadcast %364 : f32 to vector<1x16xf32>
    %366 = arith.mulf %365, %124 : vector<1x16xf32>
    %367 = arith.addf %363, %366 : vector<1x16xf32>
    %c2_39 = arith.constant 2 : index
    %368 = memref.load %arg3[%c2_39] : memref<4xf32, #tpu.memory_space<smem>>
    %369 = vector.broadcast %368 : f32 to vector<1x16xf32>
    %370 = arith.addf %367, %369 : vector<1x16xf32>
    %c60 = arith.constant 60 : index
    %371 = memref.load %arg2[%c60] : memref<80xf32, #tpu.memory_space<smem>>
    %372 = vector.broadcast %371 : f32 to vector<1x16xf32>
    %373 = arith.mulf %372, %49 : vector<1x16xf32>
    %c61 = arith.constant 61 : index
    %374 = memref.load %arg2[%c61] : memref<80xf32, #tpu.memory_space<smem>>
    %375 = vector.broadcast %374 : f32 to vector<1x16xf32>
    %376 = arith.mulf %375, %54 : vector<1x16xf32>
    %377 = arith.addf %373, %376 : vector<1x16xf32>
    %c62 = arith.constant 62 : index
    %378 = memref.load %arg2[%c62] : memref<80xf32, #tpu.memory_space<smem>>
    %379 = vector.broadcast %378 : f32 to vector<1x16xf32>
    %380 = arith.mulf %379, %38 : vector<1x16xf32>
    %381 = arith.addf %377, %380 : vector<1x16xf32>
    %c63 = arith.constant 63 : index
    %382 = memref.load %arg2[%c63] : memref<80xf32, #tpu.memory_space<smem>>
    %383 = vector.broadcast %382 : f32 to vector<1x16xf32>
    %384 = arith.mulf %383, %59 : vector<1x16xf32>
    %385 = arith.addf %381, %384 : vector<1x16xf32>
    %c64 = arith.constant 64 : index
    %386 = memref.load %arg2[%c64] : memref<80xf32, #tpu.memory_space<smem>>
    %387 = vector.broadcast %386 : f32 to vector<1x16xf32>
    %388 = arith.mulf %387, %64 : vector<1x16xf32>
    %389 = arith.addf %385, %388 : vector<1x16xf32>
    %c65 = arith.constant 65 : index
    %390 = memref.load %arg2[%c65] : memref<80xf32, #tpu.memory_space<smem>>
    %391 = vector.broadcast %390 : f32 to vector<1x16xf32>
    %392 = arith.mulf %391, %69 : vector<1x16xf32>
    %393 = arith.addf %389, %392 : vector<1x16xf32>
    %c66 = arith.constant 66 : index
    %394 = memref.load %arg2[%c66] : memref<80xf32, #tpu.memory_space<smem>>
    %395 = vector.broadcast %394 : f32 to vector<1x16xf32>
    %396 = arith.mulf %395, %74 : vector<1x16xf32>
    %397 = arith.addf %393, %396 : vector<1x16xf32>
    %c67 = arith.constant 67 : index
    %398 = memref.load %arg2[%c67] : memref<80xf32, #tpu.memory_space<smem>>
    %399 = vector.broadcast %398 : f32 to vector<1x16xf32>
    %400 = arith.mulf %399, %40 : vector<1x16xf32>
    %401 = arith.addf %397, %400 : vector<1x16xf32>
    %c68 = arith.constant 68 : index
    %402 = memref.load %arg2[%c68] : memref<80xf32, #tpu.memory_space<smem>>
    %403 = vector.broadcast %402 : f32 to vector<1x16xf32>
    %404 = arith.mulf %403, %79 : vector<1x16xf32>
    %405 = arith.addf %401, %404 : vector<1x16xf32>
    %c69 = arith.constant 69 : index
    %406 = memref.load %arg2[%c69] : memref<80xf32, #tpu.memory_space<smem>>
    %407 = vector.broadcast %406 : f32 to vector<1x16xf32>
    %408 = arith.mulf %407, %84 : vector<1x16xf32>
    %409 = arith.addf %405, %408 : vector<1x16xf32>
    %c70 = arith.constant 70 : index
    %410 = memref.load %arg2[%c70] : memref<80xf32, #tpu.memory_space<smem>>
    %411 = vector.broadcast %410 : f32 to vector<1x16xf32>
    %412 = arith.mulf %411, %89 : vector<1x16xf32>
    %413 = arith.addf %409, %412 : vector<1x16xf32>
    %c71 = arith.constant 71 : index
    %414 = memref.load %arg2[%c71] : memref<80xf32, #tpu.memory_space<smem>>
    %415 = vector.broadcast %414 : f32 to vector<1x16xf32>
    %416 = arith.mulf %415, %94 : vector<1x16xf32>
    %417 = arith.addf %413, %416 : vector<1x16xf32>
    %c72 = arith.constant 72 : index
    %418 = memref.load %arg2[%c72] : memref<80xf32, #tpu.memory_space<smem>>
    %419 = vector.broadcast %418 : f32 to vector<1x16xf32>
    %420 = arith.mulf %419, %42 : vector<1x16xf32>
    %421 = arith.addf %417, %420 : vector<1x16xf32>
    %c73 = arith.constant 73 : index
    %422 = memref.load %arg2[%c73] : memref<80xf32, #tpu.memory_space<smem>>
    %423 = vector.broadcast %422 : f32 to vector<1x16xf32>
    %424 = arith.mulf %423, %99 : vector<1x16xf32>
    %425 = arith.addf %421, %424 : vector<1x16xf32>
    %c74 = arith.constant 74 : index
    %426 = memref.load %arg2[%c74] : memref<80xf32, #tpu.memory_space<smem>>
    %427 = vector.broadcast %426 : f32 to vector<1x16xf32>
    %428 = arith.mulf %427, %104 : vector<1x16xf32>
    %429 = arith.addf %425, %428 : vector<1x16xf32>
    %c75 = arith.constant 75 : index
    %430 = memref.load %arg2[%c75] : memref<80xf32, #tpu.memory_space<smem>>
    %431 = vector.broadcast %430 : f32 to vector<1x16xf32>
    %432 = arith.mulf %431, %109 : vector<1x16xf32>
    %433 = arith.addf %429, %432 : vector<1x16xf32>
    %c76 = arith.constant 76 : index
    %434 = memref.load %arg2[%c76] : memref<80xf32, #tpu.memory_space<smem>>
    %435 = vector.broadcast %434 : f32 to vector<1x16xf32>
    %436 = arith.mulf %435, %114 : vector<1x16xf32>
    %437 = arith.addf %433, %436 : vector<1x16xf32>
    %c77 = arith.constant 77 : index
    %438 = memref.load %arg2[%c77] : memref<80xf32, #tpu.memory_space<smem>>
    %439 = vector.broadcast %438 : f32 to vector<1x16xf32>
    %440 = arith.mulf %439, %44 : vector<1x16xf32>
    %441 = arith.addf %437, %440 : vector<1x16xf32>
    %c78 = arith.constant 78 : index
    %442 = memref.load %arg2[%c78] : memref<80xf32, #tpu.memory_space<smem>>
    %443 = vector.broadcast %442 : f32 to vector<1x16xf32>
    %444 = arith.mulf %443, %119 : vector<1x16xf32>
    %445 = arith.addf %441, %444 : vector<1x16xf32>
    %c79 = arith.constant 79 : index
    %446 = memref.load %arg2[%c79] : memref<80xf32, #tpu.memory_space<smem>>
    %447 = vector.broadcast %446 : f32 to vector<1x16xf32>
    %448 = arith.mulf %447, %124 : vector<1x16xf32>
    %449 = arith.addf %445, %448 : vector<1x16xf32>
    %c3_40 = arith.constant 3 : index
    %450 = memref.load %arg3[%c3_40] : memref<4xf32, #tpu.memory_space<smem>>
    %451 = vector.broadcast %450 : f32 to vector<1x16xf32>
    %452 = arith.addf %449, %451 : vector<1x16xf32>
    %c0_41 = arith.constant 0 : index
    %453 = memref.load %arg4[%c0_41] : memref<4xf32, #tpu.memory_space<smem>>
    %454 = vector.broadcast %453 : f32 to vector<1x16xf32>
    %455 = arith.mulf %206, %454 : vector<1x16xf32>
    %c0_42 = arith.constant 0 : index
    %456 = memref.load %arg5[%c0_42] : memref<4xf32, #tpu.memory_space<smem>>
    %457 = vector.broadcast %456 : f32 to vector<1x16xf32>
    %458 = arith.addf %455, %457 : vector<1x16xf32>
    %cst_43 = arith.constant 0.000000e+00 : f32
    %459 = vector.broadcast %cst_43 : f32 to vector<1x16xf32>
    %460 = arith.maximumf %458, %459 : vector<1x16xf32>
    %c1_44 = arith.constant 1 : index
    %461 = memref.load %arg4[%c1_44] : memref<4xf32, #tpu.memory_space<smem>>
    %462 = vector.broadcast %461 : f32 to vector<1x16xf32>
    %463 = arith.mulf %288, %462 : vector<1x16xf32>
    %c1_45 = arith.constant 1 : index
    %464 = memref.load %arg5[%c1_45] : memref<4xf32, #tpu.memory_space<smem>>
    %465 = vector.broadcast %464 : f32 to vector<1x16xf32>
    %466 = arith.addf %463, %465 : vector<1x16xf32>
    %cst_46 = arith.constant 0.000000e+00 : f32
    %467 = vector.broadcast %cst_46 : f32 to vector<1x16xf32>
    %468 = arith.maximumf %466, %467 : vector<1x16xf32>
    %c2_47 = arith.constant 2 : index
    %469 = memref.load %arg4[%c2_47] : memref<4xf32, #tpu.memory_space<smem>>
    %470 = vector.broadcast %469 : f32 to vector<1x16xf32>
    %471 = arith.mulf %370, %470 : vector<1x16xf32>
    %c2_48 = arith.constant 2 : index
    %472 = memref.load %arg5[%c2_48] : memref<4xf32, #tpu.memory_space<smem>>
    %473 = vector.broadcast %472 : f32 to vector<1x16xf32>
    %474 = arith.addf %471, %473 : vector<1x16xf32>
    %cst_49 = arith.constant 0.000000e+00 : f32
    %475 = vector.broadcast %cst_49 : f32 to vector<1x16xf32>
    %476 = arith.maximumf %474, %475 : vector<1x16xf32>
    %c3_50 = arith.constant 3 : index
    %477 = memref.load %arg4[%c3_50] : memref<4xf32, #tpu.memory_space<smem>>
    %478 = vector.broadcast %477 : f32 to vector<1x16xf32>
    %479 = arith.mulf %452, %478 : vector<1x16xf32>
    %c3_51 = arith.constant 3 : index
    %480 = memref.load %arg5[%c3_51] : memref<4xf32, #tpu.memory_space<smem>>
    %481 = vector.broadcast %480 : f32 to vector<1x16xf32>
    %482 = arith.addf %479, %481 : vector<1x16xf32>
    %cst_52 = arith.constant 0.000000e+00 : f32
    %483 = vector.broadcast %cst_52 : f32 to vector<1x16xf32>
    %484 = arith.maximumf %482, %483 : vector<1x16xf32>
    %485 = vector.extract_strided_slice %460 {offsets = [0, 14], sizes = [1, 2], strides = [1, 1]} : vector<1x16xf32> to vector<1x2xf32>
    %486 = vector.extract_strided_slice %460 {offsets = [0, 0], sizes = [1, 14], strides = [1, 1]} : vector<1x16xf32> to vector<1x14xf32>
    %487 = tpu.concatenate %485, %486 in 1 : vector<1x2xf32>, vector<1x14xf32> -> vector<1x16xf32>
    %cst_53 = arith.constant 0.000000e+00 : f32
    %488 = vector.broadcast %cst_53 : f32 to vector<1x16xf32>
    %489 = arith.select %9, %487, %488 : vector<1x16xi1>, vector<1x16xf32>
    %490 = vector.extract_strided_slice %460 {offsets = [0, 15], sizes = [1, 1], strides = [1, 1]} : vector<1x16xf32> to vector<1x1xf32>
    %491 = vector.extract_strided_slice %460 {offsets = [0, 0], sizes = [1, 15], strides = [1, 1]} : vector<1x16xf32> to vector<1x15xf32>
    %492 = tpu.concatenate %490, %491 in 1 : vector<1x1xf32>, vector<1x15xf32> -> vector<1x16xf32>
    %cst_54 = arith.constant 0.000000e+00 : f32
    %493 = vector.broadcast %cst_54 : f32 to vector<1x16xf32>
    %494 = arith.select %18, %492, %493 : vector<1x16xi1>, vector<1x16xf32>
    %495 = vector.extract_strided_slice %460 {offsets = [0, 1], sizes = [1, 15], strides = [1, 1]} : vector<1x16xf32> to vector<1x15xf32>
    %496 = vector.extract_strided_slice %460 {offsets = [0, 0], sizes = [1, 1], strides = [1, 1]} : vector<1x16xf32> to vector<1x1xf32>
    %497 = tpu.concatenate %495, %496 in 1 : vector<1x15xf32>, vector<1x1xf32> -> vector<1x16xf32>
    %cst_55 = arith.constant 0.000000e+00 : f32
    %498 = vector.broadcast %cst_55 : f32 to vector<1x16xf32>
    %499 = arith.select %27, %497, %498 : vector<1x16xi1>, vector<1x16xf32>
    %500 = vector.extract_strided_slice %460 {offsets = [0, 2], sizes = [1, 14], strides = [1, 1]} : vector<1x16xf32> to vector<1x14xf32>
    %501 = vector.extract_strided_slice %460 {offsets = [0, 0], sizes = [1, 2], strides = [1, 1]} : vector<1x16xf32> to vector<1x2xf32>
    %502 = tpu.concatenate %500, %501 in 1 : vector<1x14xf32>, vector<1x2xf32> -> vector<1x16xf32>
    %cst_56 = arith.constant 0.000000e+00 : f32
    %503 = vector.broadcast %cst_56 : f32 to vector<1x16xf32>
    %504 = arith.select %36, %502, %503 : vector<1x16xi1>, vector<1x16xf32>
    %505 = vector.extract_strided_slice %468 {offsets = [0, 14], sizes = [1, 2], strides = [1, 1]} : vector<1x16xf32> to vector<1x2xf32>
    %506 = vector.extract_strided_slice %468 {offsets = [0, 0], sizes = [1, 14], strides = [1, 1]} : vector<1x16xf32> to vector<1x14xf32>
    %507 = tpu.concatenate %505, %506 in 1 : vector<1x2xf32>, vector<1x14xf32> -> vector<1x16xf32>
    %cst_57 = arith.constant 0.000000e+00 : f32
    %508 = vector.broadcast %cst_57 : f32 to vector<1x16xf32>
    %509 = arith.select %9, %507, %508 : vector<1x16xi1>, vector<1x16xf32>
    %510 = vector.extract_strided_slice %468 {offsets = [0, 15], sizes = [1, 1], strides = [1, 1]} : vector<1x16xf32> to vector<1x1xf32>
    %511 = vector.extract_strided_slice %468 {offsets = [0, 0], sizes = [1, 15], strides = [1, 1]} : vector<1x16xf32> to vector<1x15xf32>
    %512 = tpu.concatenate %510, %511 in 1 : vector<1x1xf32>, vector<1x15xf32> -> vector<1x16xf32>
    %cst_58 = arith.constant 0.000000e+00 : f32
    %513 = vector.broadcast %cst_58 : f32 to vector<1x16xf32>
    %514 = arith.select %18, %512, %513 : vector<1x16xi1>, vector<1x16xf32>
    %515 = vector.extract_strided_slice %468 {offsets = [0, 1], sizes = [1, 15], strides = [1, 1]} : vector<1x16xf32> to vector<1x15xf32>
    %516 = vector.extract_strided_slice %468 {offsets = [0, 0], sizes = [1, 1], strides = [1, 1]} : vector<1x16xf32> to vector<1x1xf32>
    %517 = tpu.concatenate %515, %516 in 1 : vector<1x15xf32>, vector<1x1xf32> -> vector<1x16xf32>
    %cst_59 = arith.constant 0.000000e+00 : f32
    %518 = vector.broadcast %cst_59 : f32 to vector<1x16xf32>
    %519 = arith.select %27, %517, %518 : vector<1x16xi1>, vector<1x16xf32>
    %520 = vector.extract_strided_slice %468 {offsets = [0, 2], sizes = [1, 14], strides = [1, 1]} : vector<1x16xf32> to vector<1x14xf32>
    %521 = vector.extract_strided_slice %468 {offsets = [0, 0], sizes = [1, 2], strides = [1, 1]} : vector<1x16xf32> to vector<1x2xf32>
    %522 = tpu.concatenate %520, %521 in 1 : vector<1x14xf32>, vector<1x2xf32> -> vector<1x16xf32>
    %cst_60 = arith.constant 0.000000e+00 : f32
    %523 = vector.broadcast %cst_60 : f32 to vector<1x16xf32>
    %524 = arith.select %36, %522, %523 : vector<1x16xi1>, vector<1x16xf32>
    %525 = vector.extract_strided_slice %476 {offsets = [0, 14], sizes = [1, 2], strides = [1, 1]} : vector<1x16xf32> to vector<1x2xf32>
    %526 = vector.extract_strided_slice %476 {offsets = [0, 0], sizes = [1, 14], strides = [1, 1]} : vector<1x16xf32> to vector<1x14xf32>
    %527 = tpu.concatenate %525, %526 in 1 : vector<1x2xf32>, vector<1x14xf32> -> vector<1x16xf32>
    %cst_61 = arith.constant 0.000000e+00 : f32
    %528 = vector.broadcast %cst_61 : f32 to vector<1x16xf32>
    %529 = arith.select %9, %527, %528 : vector<1x16xi1>, vector<1x16xf32>
    %530 = vector.extract_strided_slice %476 {offsets = [0, 15], sizes = [1, 1], strides = [1, 1]} : vector<1x16xf32> to vector<1x1xf32>
    %531 = vector.extract_strided_slice %476 {offsets = [0, 0], sizes = [1, 15], strides = [1, 1]} : vector<1x16xf32> to vector<1x15xf32>
    %532 = tpu.concatenate %530, %531 in 1 : vector<1x1xf32>, vector<1x15xf32> -> vector<1x16xf32>
    %cst_62 = arith.constant 0.000000e+00 : f32
    %533 = vector.broadcast %cst_62 : f32 to vector<1x16xf32>
    %534 = arith.select %18, %532, %533 : vector<1x16xi1>, vector<1x16xf32>
    %535 = vector.extract_strided_slice %476 {offsets = [0, 1], sizes = [1, 15], strides = [1, 1]} : vector<1x16xf32> to vector<1x15xf32>
    %536 = vector.extract_strided_slice %476 {offsets = [0, 0], sizes = [1, 1], strides = [1, 1]} : vector<1x16xf32> to vector<1x1xf32>
    %537 = tpu.concatenate %535, %536 in 1 : vector<1x15xf32>, vector<1x1xf32> -> vector<1x16xf32>
    %cst_63 = arith.constant 0.000000e+00 : f32
    %538 = vector.broadcast %cst_63 : f32 to vector<1x16xf32>
    %539 = arith.select %27, %537, %538 : vector<1x16xi1>, vector<1x16xf32>
    %540 = vector.extract_strided_slice %476 {offsets = [0, 2], sizes = [1, 14], strides = [1, 1]} : vector<1x16xf32> to vector<1x14xf32>
    %541 = vector.extract_strided_slice %476 {offsets = [0, 0], sizes = [1, 2], strides = [1, 1]} : vector<1x16xf32> to vector<1x2xf32>
    %542 = tpu.concatenate %540, %541 in 1 : vector<1x14xf32>, vector<1x2xf32> -> vector<1x16xf32>
    %cst_64 = arith.constant 0.000000e+00 : f32
    %543 = vector.broadcast %cst_64 : f32 to vector<1x16xf32>
    %544 = arith.select %36, %542, %543 : vector<1x16xi1>, vector<1x16xf32>
    %545 = vector.extract_strided_slice %484 {offsets = [0, 14], sizes = [1, 2], strides = [1, 1]} : vector<1x16xf32> to vector<1x2xf32>
    %546 = vector.extract_strided_slice %484 {offsets = [0, 0], sizes = [1, 14], strides = [1, 1]} : vector<1x16xf32> to vector<1x14xf32>
    %547 = tpu.concatenate %545, %546 in 1 : vector<1x2xf32>, vector<1x14xf32> -> vector<1x16xf32>
    %cst_65 = arith.constant 0.000000e+00 : f32
    %548 = vector.broadcast %cst_65 : f32 to vector<1x16xf32>
    %549 = arith.select %9, %547, %548 : vector<1x16xi1>, vector<1x16xf32>
    %550 = vector.extract_strided_slice %484 {offsets = [0, 15], sizes = [1, 1], strides = [1, 1]} : vector<1x16xf32> to vector<1x1xf32>
    %551 = vector.extract_strided_slice %484 {offsets = [0, 0], sizes = [1, 15], strides = [1, 1]} : vector<1x16xf32> to vector<1x15xf32>
    %552 = tpu.concatenate %550, %551 in 1 : vector<1x1xf32>, vector<1x15xf32> -> vector<1x16xf32>
    %cst_66 = arith.constant 0.000000e+00 : f32
    %553 = vector.broadcast %cst_66 : f32 to vector<1x16xf32>
    %554 = arith.select %18, %552, %553 : vector<1x16xi1>, vector<1x16xf32>
    %555 = vector.extract_strided_slice %484 {offsets = [0, 1], sizes = [1, 15], strides = [1, 1]} : vector<1x16xf32> to vector<1x15xf32>
    %556 = vector.extract_strided_slice %484 {offsets = [0, 0], sizes = [1, 1], strides = [1, 1]} : vector<1x16xf32> to vector<1x1xf32>
    %557 = tpu.concatenate %555, %556 in 1 : vector<1x15xf32>, vector<1x1xf32> -> vector<1x16xf32>
    %cst_67 = arith.constant 0.000000e+00 : f32
    %558 = vector.broadcast %cst_67 : f32 to vector<1x16xf32>
    %559 = arith.select %27, %557, %558 : vector<1x16xi1>, vector<1x16xf32>
    %560 = vector.extract_strided_slice %484 {offsets = [0, 2], sizes = [1, 14], strides = [1, 1]} : vector<1x16xf32> to vector<1x14xf32>
    %561 = vector.extract_strided_slice %484 {offsets = [0, 0], sizes = [1, 2], strides = [1, 1]} : vector<1x16xf32> to vector<1x2xf32>
    %562 = tpu.concatenate %560, %561 in 1 : vector<1x14xf32>, vector<1x2xf32> -> vector<1x16xf32>
    %cst_68 = arith.constant 0.000000e+00 : f32
    %563 = vector.broadcast %cst_68 : f32 to vector<1x16xf32>
    %564 = arith.select %36, %562, %563 : vector<1x16xi1>, vector<1x16xf32>
    %c0_69 = arith.constant 0 : index
    %565 = memref.load %arg6[%c0_69] : memref<80xf32, #tpu.memory_space<smem>>
    %566 = vector.broadcast %565 : f32 to vector<1x16xf32>
    %567 = arith.mulf %566, %489 : vector<1x16xf32>
    %c1_70 = arith.constant 1 : index
    %568 = memref.load %arg6[%c1_70] : memref<80xf32, #tpu.memory_space<smem>>
    %569 = vector.broadcast %568 : f32 to vector<1x16xf32>
    %570 = arith.mulf %569, %494 : vector<1x16xf32>
    %571 = arith.addf %567, %570 : vector<1x16xf32>
    %c2_71 = arith.constant 2 : index
    %572 = memref.load %arg6[%c2_71] : memref<80xf32, #tpu.memory_space<smem>>
    %573 = vector.broadcast %572 : f32 to vector<1x16xf32>
    %574 = arith.mulf %573, %460 : vector<1x16xf32>
    %575 = arith.addf %571, %574 : vector<1x16xf32>
    %c3_72 = arith.constant 3 : index
    %576 = memref.load %arg6[%c3_72] : memref<80xf32, #tpu.memory_space<smem>>
    %577 = vector.broadcast %576 : f32 to vector<1x16xf32>
    %578 = arith.mulf %577, %499 : vector<1x16xf32>
    %579 = arith.addf %575, %578 : vector<1x16xf32>
    %c4_73 = arith.constant 4 : index
    %580 = memref.load %arg6[%c4_73] : memref<80xf32, #tpu.memory_space<smem>>
    %581 = vector.broadcast %580 : f32 to vector<1x16xf32>
    %582 = arith.mulf %581, %504 : vector<1x16xf32>
    %583 = arith.addf %579, %582 : vector<1x16xf32>
    %c5_74 = arith.constant 5 : index
    %584 = memref.load %arg6[%c5_74] : memref<80xf32, #tpu.memory_space<smem>>
    %585 = vector.broadcast %584 : f32 to vector<1x16xf32>
    %586 = arith.mulf %585, %509 : vector<1x16xf32>
    %587 = arith.addf %583, %586 : vector<1x16xf32>
    %c6_75 = arith.constant 6 : index
    %588 = memref.load %arg6[%c6_75] : memref<80xf32, #tpu.memory_space<smem>>
    %589 = vector.broadcast %588 : f32 to vector<1x16xf32>
    %590 = arith.mulf %589, %514 : vector<1x16xf32>
    %591 = arith.addf %587, %590 : vector<1x16xf32>
    %c7_76 = arith.constant 7 : index
    %592 = memref.load %arg6[%c7_76] : memref<80xf32, #tpu.memory_space<smem>>
    %593 = vector.broadcast %592 : f32 to vector<1x16xf32>
    %594 = arith.mulf %593, %468 : vector<1x16xf32>
    %595 = arith.addf %591, %594 : vector<1x16xf32>
    %c8_77 = arith.constant 8 : index
    %596 = memref.load %arg6[%c8_77] : memref<80xf32, #tpu.memory_space<smem>>
    %597 = vector.broadcast %596 : f32 to vector<1x16xf32>
    %598 = arith.mulf %597, %519 : vector<1x16xf32>
    %599 = arith.addf %595, %598 : vector<1x16xf32>
    %c9_78 = arith.constant 9 : index
    %600 = memref.load %arg6[%c9_78] : memref<80xf32, #tpu.memory_space<smem>>
    %601 = vector.broadcast %600 : f32 to vector<1x16xf32>
    %602 = arith.mulf %601, %524 : vector<1x16xf32>
    %603 = arith.addf %599, %602 : vector<1x16xf32>
    %c10_79 = arith.constant 10 : index
    %604 = memref.load %arg6[%c10_79] : memref<80xf32, #tpu.memory_space<smem>>
    %605 = vector.broadcast %604 : f32 to vector<1x16xf32>
    %606 = arith.mulf %605, %529 : vector<1x16xf32>
    %607 = arith.addf %603, %606 : vector<1x16xf32>
    %c11_80 = arith.constant 11 : index
    %608 = memref.load %arg6[%c11_80] : memref<80xf32, #tpu.memory_space<smem>>
    %609 = vector.broadcast %608 : f32 to vector<1x16xf32>
    %610 = arith.mulf %609, %534 : vector<1x16xf32>
    %611 = arith.addf %607, %610 : vector<1x16xf32>
    %c12_81 = arith.constant 12 : index
    %612 = memref.load %arg6[%c12_81] : memref<80xf32, #tpu.memory_space<smem>>
    %613 = vector.broadcast %612 : f32 to vector<1x16xf32>
    %614 = arith.mulf %613, %476 : vector<1x16xf32>
    %615 = arith.addf %611, %614 : vector<1x16xf32>
    %c13_82 = arith.constant 13 : index
    %616 = memref.load %arg6[%c13_82] : memref<80xf32, #tpu.memory_space<smem>>
    %617 = vector.broadcast %616 : f32 to vector<1x16xf32>
    %618 = arith.mulf %617, %539 : vector<1x16xf32>
    %619 = arith.addf %615, %618 : vector<1x16xf32>
    %c14_83 = arith.constant 14 : index
    %620 = memref.load %arg6[%c14_83] : memref<80xf32, #tpu.memory_space<smem>>
    %621 = vector.broadcast %620 : f32 to vector<1x16xf32>
    %622 = arith.mulf %621, %544 : vector<1x16xf32>
    %623 = arith.addf %619, %622 : vector<1x16xf32>
    %c15_84 = arith.constant 15 : index
    %624 = memref.load %arg6[%c15_84] : memref<80xf32, #tpu.memory_space<smem>>
    %625 = vector.broadcast %624 : f32 to vector<1x16xf32>
    %626 = arith.mulf %625, %549 : vector<1x16xf32>
    %627 = arith.addf %623, %626 : vector<1x16xf32>
    %c16_85 = arith.constant 16 : index
    %628 = memref.load %arg6[%c16_85] : memref<80xf32, #tpu.memory_space<smem>>
    %629 = vector.broadcast %628 : f32 to vector<1x16xf32>
    %630 = arith.mulf %629, %554 : vector<1x16xf32>
    %631 = arith.addf %627, %630 : vector<1x16xf32>
    %c17_86 = arith.constant 17 : index
    %632 = memref.load %arg6[%c17_86] : memref<80xf32, #tpu.memory_space<smem>>
    %633 = vector.broadcast %632 : f32 to vector<1x16xf32>
    %634 = arith.mulf %633, %484 : vector<1x16xf32>
    %635 = arith.addf %631, %634 : vector<1x16xf32>
    %c18_87 = arith.constant 18 : index
    %636 = memref.load %arg6[%c18_87] : memref<80xf32, #tpu.memory_space<smem>>
    %637 = vector.broadcast %636 : f32 to vector<1x16xf32>
    %638 = arith.mulf %637, %559 : vector<1x16xf32>
    %639 = arith.addf %635, %638 : vector<1x16xf32>
    %c19_88 = arith.constant 19 : index
    %640 = memref.load %arg6[%c19_88] : memref<80xf32, #tpu.memory_space<smem>>
    %641 = vector.broadcast %640 : f32 to vector<1x16xf32>
    %642 = arith.mulf %641, %564 : vector<1x16xf32>
    %643 = arith.addf %639, %642 : vector<1x16xf32>
    %c0_89 = arith.constant 0 : index
    %644 = memref.load %arg7[%c0_89] : memref<4xf32, #tpu.memory_space<smem>>
    %645 = vector.broadcast %644 : f32 to vector<1x16xf32>
    %646 = arith.addf %643, %645 : vector<1x16xf32>
    %c20_90 = arith.constant 20 : index
    %647 = memref.load %arg6[%c20_90] : memref<80xf32, #tpu.memory_space<smem>>
    %648 = vector.broadcast %647 : f32 to vector<1x16xf32>
    %649 = arith.mulf %648, %489 : vector<1x16xf32>
    %c21_91 = arith.constant 21 : index
    %650 = memref.load %arg6[%c21_91] : memref<80xf32, #tpu.memory_space<smem>>
    %651 = vector.broadcast %650 : f32 to vector<1x16xf32>
    %652 = arith.mulf %651, %494 : vector<1x16xf32>
    %653 = arith.addf %649, %652 : vector<1x16xf32>
    %c22_92 = arith.constant 22 : index
    %654 = memref.load %arg6[%c22_92] : memref<80xf32, #tpu.memory_space<smem>>
    %655 = vector.broadcast %654 : f32 to vector<1x16xf32>
    %656 = arith.mulf %655, %460 : vector<1x16xf32>
    %657 = arith.addf %653, %656 : vector<1x16xf32>
    %c23_93 = arith.constant 23 : index
    %658 = memref.load %arg6[%c23_93] : memref<80xf32, #tpu.memory_space<smem>>
    %659 = vector.broadcast %658 : f32 to vector<1x16xf32>
    %660 = arith.mulf %659, %499 : vector<1x16xf32>
    %661 = arith.addf %657, %660 : vector<1x16xf32>
    %c24_94 = arith.constant 24 : index
    %662 = memref.load %arg6[%c24_94] : memref<80xf32, #tpu.memory_space<smem>>
    %663 = vector.broadcast %662 : f32 to vector<1x16xf32>
    %664 = arith.mulf %663, %504 : vector<1x16xf32>
    %665 = arith.addf %661, %664 : vector<1x16xf32>
    %c25_95 = arith.constant 25 : index
    %666 = memref.load %arg6[%c25_95] : memref<80xf32, #tpu.memory_space<smem>>
    %667 = vector.broadcast %666 : f32 to vector<1x16xf32>
    %668 = arith.mulf %667, %509 : vector<1x16xf32>
    %669 = arith.addf %665, %668 : vector<1x16xf32>
    %c26_96 = arith.constant 26 : index
    %670 = memref.load %arg6[%c26_96] : memref<80xf32, #tpu.memory_space<smem>>
    %671 = vector.broadcast %670 : f32 to vector<1x16xf32>
    %672 = arith.mulf %671, %514 : vector<1x16xf32>
    %673 = arith.addf %669, %672 : vector<1x16xf32>
    %c27_97 = arith.constant 27 : index
    %674 = memref.load %arg6[%c27_97] : memref<80xf32, #tpu.memory_space<smem>>
    %675 = vector.broadcast %674 : f32 to vector<1x16xf32>
    %676 = arith.mulf %675, %468 : vector<1x16xf32>
    %677 = arith.addf %673, %676 : vector<1x16xf32>
    %c28_98 = arith.constant 28 : index
    %678 = memref.load %arg6[%c28_98] : memref<80xf32, #tpu.memory_space<smem>>
    %679 = vector.broadcast %678 : f32 to vector<1x16xf32>
    %680 = arith.mulf %679, %519 : vector<1x16xf32>
    %681 = arith.addf %677, %680 : vector<1x16xf32>
    %c29_99 = arith.constant 29 : index
    %682 = memref.load %arg6[%c29_99] : memref<80xf32, #tpu.memory_space<smem>>
    %683 = vector.broadcast %682 : f32 to vector<1x16xf32>
    %684 = arith.mulf %683, %524 : vector<1x16xf32>
    %685 = arith.addf %681, %684 : vector<1x16xf32>
    %c30_100 = arith.constant 30 : index
    %686 = memref.load %arg6[%c30_100] : memref<80xf32, #tpu.memory_space<smem>>
    %687 = vector.broadcast %686 : f32 to vector<1x16xf32>
    %688 = arith.mulf %687, %529 : vector<1x16xf32>
    %689 = arith.addf %685, %688 : vector<1x16xf32>
    %c31_101 = arith.constant 31 : index
    %690 = memref.load %arg6[%c31_101] : memref<80xf32, #tpu.memory_space<smem>>
    %691 = vector.broadcast %690 : f32 to vector<1x16xf32>
    %692 = arith.mulf %691, %534 : vector<1x16xf32>
    %693 = arith.addf %689, %692 : vector<1x16xf32>
    %c32_102 = arith.constant 32 : index
    %694 = memref.load %arg6[%c32_102] : memref<80xf32, #tpu.memory_space<smem>>
    %695 = vector.broadcast %694 : f32 to vector<1x16xf32>
    %696 = arith.mulf %695, %476 : vector<1x16xf32>
    %697 = arith.addf %693, %696 : vector<1x16xf32>
    %c33_103 = arith.constant 33 : index
    %698 = memref.load %arg6[%c33_103] : memref<80xf32, #tpu.memory_space<smem>>
    %699 = vector.broadcast %698 : f32 to vector<1x16xf32>
    %700 = arith.mulf %699, %539 : vector<1x16xf32>
    %701 = arith.addf %697, %700 : vector<1x16xf32>
    %c34_104 = arith.constant 34 : index
    %702 = memref.load %arg6[%c34_104] : memref<80xf32, #tpu.memory_space<smem>>
    %703 = vector.broadcast %702 : f32 to vector<1x16xf32>
    %704 = arith.mulf %703, %544 : vector<1x16xf32>
    %705 = arith.addf %701, %704 : vector<1x16xf32>
    %c35_105 = arith.constant 35 : index
    %706 = memref.load %arg6[%c35_105] : memref<80xf32, #tpu.memory_space<smem>>
    %707 = vector.broadcast %706 : f32 to vector<1x16xf32>
    %708 = arith.mulf %707, %549 : vector<1x16xf32>
    %709 = arith.addf %705, %708 : vector<1x16xf32>
    %c36_106 = arith.constant 36 : index
    %710 = memref.load %arg6[%c36_106] : memref<80xf32, #tpu.memory_space<smem>>
    %711 = vector.broadcast %710 : f32 to vector<1x16xf32>
    %712 = arith.mulf %711, %554 : vector<1x16xf32>
    %713 = arith.addf %709, %712 : vector<1x16xf32>
    %c37_107 = arith.constant 37 : index
    %714 = memref.load %arg6[%c37_107] : memref<80xf32, #tpu.memory_space<smem>>
    %715 = vector.broadcast %714 : f32 to vector<1x16xf32>
    %716 = arith.mulf %715, %484 : vector<1x16xf32>
    %717 = arith.addf %713, %716 : vector<1x16xf32>
    %c38_108 = arith.constant 38 : index
    %718 = memref.load %arg6[%c38_108] : memref<80xf32, #tpu.memory_space<smem>>
    %719 = vector.broadcast %718 : f32 to vector<1x16xf32>
    %720 = arith.mulf %719, %559 : vector<1x16xf32>
    %721 = arith.addf %717, %720 : vector<1x16xf32>
    %c39_109 = arith.constant 39 : index
    %722 = memref.load %arg6[%c39_109] : memref<80xf32, #tpu.memory_space<smem>>
    %723 = vector.broadcast %722 : f32 to vector<1x16xf32>
    %724 = arith.mulf %723, %564 : vector<1x16xf32>
    %725 = arith.addf %721, %724 : vector<1x16xf32>
    %c1_110 = arith.constant 1 : index
    %726 = memref.load %arg7[%c1_110] : memref<4xf32, #tpu.memory_space<smem>>
    %727 = vector.broadcast %726 : f32 to vector<1x16xf32>
    %728 = arith.addf %725, %727 : vector<1x16xf32>
    %c40_111 = arith.constant 40 : index
    %729 = memref.load %arg6[%c40_111] : memref<80xf32, #tpu.memory_space<smem>>
    %730 = vector.broadcast %729 : f32 to vector<1x16xf32>
    %731 = arith.mulf %730, %489 : vector<1x16xf32>
    %c41_112 = arith.constant 41 : index
    %732 = memref.load %arg6[%c41_112] : memref<80xf32, #tpu.memory_space<smem>>
    %733 = vector.broadcast %732 : f32 to vector<1x16xf32>
    %734 = arith.mulf %733, %494 : vector<1x16xf32>
    %735 = arith.addf %731, %734 : vector<1x16xf32>
    %c42_113 = arith.constant 42 : index
    %736 = memref.load %arg6[%c42_113] : memref<80xf32, #tpu.memory_space<smem>>
    %737 = vector.broadcast %736 : f32 to vector<1x16xf32>
    %738 = arith.mulf %737, %460 : vector<1x16xf32>
    %739 = arith.addf %735, %738 : vector<1x16xf32>
    %c43_114 = arith.constant 43 : index
    %740 = memref.load %arg6[%c43_114] : memref<80xf32, #tpu.memory_space<smem>>
    %741 = vector.broadcast %740 : f32 to vector<1x16xf32>
    %742 = arith.mulf %741, %499 : vector<1x16xf32>
    %743 = arith.addf %739, %742 : vector<1x16xf32>
    %c44_115 = arith.constant 44 : index
    %744 = memref.load %arg6[%c44_115] : memref<80xf32, #tpu.memory_space<smem>>
    %745 = vector.broadcast %744 : f32 to vector<1x16xf32>
    %746 = arith.mulf %745, %504 : vector<1x16xf32>
    %747 = arith.addf %743, %746 : vector<1x16xf32>
    %c45_116 = arith.constant 45 : index
    %748 = memref.load %arg6[%c45_116] : memref<80xf32, #tpu.memory_space<smem>>
    %749 = vector.broadcast %748 : f32 to vector<1x16xf32>
    %750 = arith.mulf %749, %509 : vector<1x16xf32>
    %751 = arith.addf %747, %750 : vector<1x16xf32>
    %c46_117 = arith.constant 46 : index
    %752 = memref.load %arg6[%c46_117] : memref<80xf32, #tpu.memory_space<smem>>
    %753 = vector.broadcast %752 : f32 to vector<1x16xf32>
    %754 = arith.mulf %753, %514 : vector<1x16xf32>
    %755 = arith.addf %751, %754 : vector<1x16xf32>
    %c47_118 = arith.constant 47 : index
    %756 = memref.load %arg6[%c47_118] : memref<80xf32, #tpu.memory_space<smem>>
    %757 = vector.broadcast %756 : f32 to vector<1x16xf32>
    %758 = arith.mulf %757, %468 : vector<1x16xf32>
    %759 = arith.addf %755, %758 : vector<1x16xf32>
    %c48_119 = arith.constant 48 : index
    %760 = memref.load %arg6[%c48_119] : memref<80xf32, #tpu.memory_space<smem>>
    %761 = vector.broadcast %760 : f32 to vector<1x16xf32>
    %762 = arith.mulf %761, %519 : vector<1x16xf32>
    %763 = arith.addf %759, %762 : vector<1x16xf32>
    %c49_120 = arith.constant 49 : index
    %764 = memref.load %arg6[%c49_120] : memref<80xf32, #tpu.memory_space<smem>>
    %765 = vector.broadcast %764 : f32 to vector<1x16xf32>
    %766 = arith.mulf %765, %524 : vector<1x16xf32>
    %767 = arith.addf %763, %766 : vector<1x16xf32>
    %c50_121 = arith.constant 50 : index
    %768 = memref.load %arg6[%c50_121] : memref<80xf32, #tpu.memory_space<smem>>
    %769 = vector.broadcast %768 : f32 to vector<1x16xf32>
    %770 = arith.mulf %769, %529 : vector<1x16xf32>
    %771 = arith.addf %767, %770 : vector<1x16xf32>
    %c51_122 = arith.constant 51 : index
    %772 = memref.load %arg6[%c51_122] : memref<80xf32, #tpu.memory_space<smem>>
    %773 = vector.broadcast %772 : f32 to vector<1x16xf32>
    %774 = arith.mulf %773, %534 : vector<1x16xf32>
    %775 = arith.addf %771, %774 : vector<1x16xf32>
    %c52_123 = arith.constant 52 : index
    %776 = memref.load %arg6[%c52_123] : memref<80xf32, #tpu.memory_space<smem>>
    %777 = vector.broadcast %776 : f32 to vector<1x16xf32>
    %778 = arith.mulf %777, %476 : vector<1x16xf32>
    %779 = arith.addf %775, %778 : vector<1x16xf32>
    %c53_124 = arith.constant 53 : index
    %780 = memref.load %arg6[%c53_124] : memref<80xf32, #tpu.memory_space<smem>>
    %781 = vector.broadcast %780 : f32 to vector<1x16xf32>
    %782 = arith.mulf %781, %539 : vector<1x16xf32>
    %783 = arith.addf %779, %782 : vector<1x16xf32>
    %c54_125 = arith.constant 54 : index
    %784 = memref.load %arg6[%c54_125] : memref<80xf32, #tpu.memory_space<smem>>
    %785 = vector.broadcast %784 : f32 to vector<1x16xf32>
    %786 = arith.mulf %785, %544 : vector<1x16xf32>
    %787 = arith.addf %783, %786 : vector<1x16xf32>
    %c55_126 = arith.constant 55 : index
    %788 = memref.load %arg6[%c55_126] : memref<80xf32, #tpu.memory_space<smem>>
    %789 = vector.broadcast %788 : f32 to vector<1x16xf32>
    %790 = arith.mulf %789, %549 : vector<1x16xf32>
    %791 = arith.addf %787, %790 : vector<1x16xf32>
    %c56_127 = arith.constant 56 : index
    %792 = memref.load %arg6[%c56_127] : memref<80xf32, #tpu.memory_space<smem>>
    %793 = vector.broadcast %792 : f32 to vector<1x16xf32>
    %794 = arith.mulf %793, %554 : vector<1x16xf32>
    %795 = arith.addf %791, %794 : vector<1x16xf32>
    %c57_128 = arith.constant 57 : index
    %796 = memref.load %arg6[%c57_128] : memref<80xf32, #tpu.memory_space<smem>>
    %797 = vector.broadcast %796 : f32 to vector<1x16xf32>
    %798 = arith.mulf %797, %484 : vector<1x16xf32>
    %799 = arith.addf %795, %798 : vector<1x16xf32>
    %c58_129 = arith.constant 58 : index
    %800 = memref.load %arg6[%c58_129] : memref<80xf32, #tpu.memory_space<smem>>
    %801 = vector.broadcast %800 : f32 to vector<1x16xf32>
    %802 = arith.mulf %801, %559 : vector<1x16xf32>
    %803 = arith.addf %799, %802 : vector<1x16xf32>
    %c59_130 = arith.constant 59 : index
    %804 = memref.load %arg6[%c59_130] : memref<80xf32, #tpu.memory_space<smem>>
    %805 = vector.broadcast %804 : f32 to vector<1x16xf32>
    %806 = arith.mulf %805, %564 : vector<1x16xf32>
    %807 = arith.addf %803, %806 : vector<1x16xf32>
    %c2_131 = arith.constant 2 : index
    %808 = memref.load %arg7[%c2_131] : memref<4xf32, #tpu.memory_space<smem>>
    %809 = vector.broadcast %808 : f32 to vector<1x16xf32>
    %810 = arith.addf %807, %809 : vector<1x16xf32>
    %c60_132 = arith.constant 60 : index
    %811 = memref.load %arg6[%c60_132] : memref<80xf32, #tpu.memory_space<smem>>
    %812 = vector.broadcast %811 : f32 to vector<1x16xf32>
    %813 = arith.mulf %812, %489 : vector<1x16xf32>
    %c61_133 = arith.constant 61 : index
    %814 = memref.load %arg6[%c61_133] : memref<80xf32, #tpu.memory_space<smem>>
    %815 = vector.broadcast %814 : f32 to vector<1x16xf32>
    %816 = arith.mulf %815, %494 : vector<1x16xf32>
    %817 = arith.addf %813, %816 : vector<1x16xf32>
    %c62_134 = arith.constant 62 : index
    %818 = memref.load %arg6[%c62_134] : memref<80xf32, #tpu.memory_space<smem>>
    %819 = vector.broadcast %818 : f32 to vector<1x16xf32>
    %820 = arith.mulf %819, %460 : vector<1x16xf32>
    %821 = arith.addf %817, %820 : vector<1x16xf32>
    %c63_135 = arith.constant 63 : index
    %822 = memref.load %arg6[%c63_135] : memref<80xf32, #tpu.memory_space<smem>>
    %823 = vector.broadcast %822 : f32 to vector<1x16xf32>
    %824 = arith.mulf %823, %499 : vector<1x16xf32>
    %825 = arith.addf %821, %824 : vector<1x16xf32>
    %c64_136 = arith.constant 64 : index
    %826 = memref.load %arg6[%c64_136] : memref<80xf32, #tpu.memory_space<smem>>
    %827 = vector.broadcast %826 : f32 to vector<1x16xf32>
    %828 = arith.mulf %827, %504 : vector<1x16xf32>
    %829 = arith.addf %825, %828 : vector<1x16xf32>
    %c65_137 = arith.constant 65 : index
    %830 = memref.load %arg6[%c65_137] : memref<80xf32, #tpu.memory_space<smem>>
    %831 = vector.broadcast %830 : f32 to vector<1x16xf32>
    %832 = arith.mulf %831, %509 : vector<1x16xf32>
    %833 = arith.addf %829, %832 : vector<1x16xf32>
    %c66_138 = arith.constant 66 : index
    %834 = memref.load %arg6[%c66_138] : memref<80xf32, #tpu.memory_space<smem>>
    %835 = vector.broadcast %834 : f32 to vector<1x16xf32>
    %836 = arith.mulf %835, %514 : vector<1x16xf32>
    %837 = arith.addf %833, %836 : vector<1x16xf32>
    %c67_139 = arith.constant 67 : index
    %838 = memref.load %arg6[%c67_139] : memref<80xf32, #tpu.memory_space<smem>>
    %839 = vector.broadcast %838 : f32 to vector<1x16xf32>
    %840 = arith.mulf %839, %468 : vector<1x16xf32>
    %841 = arith.addf %837, %840 : vector<1x16xf32>
    %c68_140 = arith.constant 68 : index
    %842 = memref.load %arg6[%c68_140] : memref<80xf32, #tpu.memory_space<smem>>
    %843 = vector.broadcast %842 : f32 to vector<1x16xf32>
    %844 = arith.mulf %843, %519 : vector<1x16xf32>
    %845 = arith.addf %841, %844 : vector<1x16xf32>
    %c69_141 = arith.constant 69 : index
    %846 = memref.load %arg6[%c69_141] : memref<80xf32, #tpu.memory_space<smem>>
    %847 = vector.broadcast %846 : f32 to vector<1x16xf32>
    %848 = arith.mulf %847, %524 : vector<1x16xf32>
    %849 = arith.addf %845, %848 : vector<1x16xf32>
    %c70_142 = arith.constant 70 : index
    %850 = memref.load %arg6[%c70_142] : memref<80xf32, #tpu.memory_space<smem>>
    %851 = vector.broadcast %850 : f32 to vector<1x16xf32>
    %852 = arith.mulf %851, %529 : vector<1x16xf32>
    %853 = arith.addf %849, %852 : vector<1x16xf32>
    %c71_143 = arith.constant 71 : index
    %854 = memref.load %arg6[%c71_143] : memref<80xf32, #tpu.memory_space<smem>>
    %855 = vector.broadcast %854 : f32 to vector<1x16xf32>
    %856 = arith.mulf %855, %534 : vector<1x16xf32>
    %857 = arith.addf %853, %856 : vector<1x16xf32>
    %c72_144 = arith.constant 72 : index
    %858 = memref.load %arg6[%c72_144] : memref<80xf32, #tpu.memory_space<smem>>
    %859 = vector.broadcast %858 : f32 to vector<1x16xf32>
    %860 = arith.mulf %859, %476 : vector<1x16xf32>
    %861 = arith.addf %857, %860 : vector<1x16xf32>
    %c73_145 = arith.constant 73 : index
    %862 = memref.load %arg6[%c73_145] : memref<80xf32, #tpu.memory_space<smem>>
    %863 = vector.broadcast %862 : f32 to vector<1x16xf32>
    %864 = arith.mulf %863, %539 : vector<1x16xf32>
    %865 = arith.addf %861, %864 : vector<1x16xf32>
    %c74_146 = arith.constant 74 : index
    %866 = memref.load %arg6[%c74_146] : memref<80xf32, #tpu.memory_space<smem>>
    %867 = vector.broadcast %866 : f32 to vector<1x16xf32>
    %868 = arith.mulf %867, %544 : vector<1x16xf32>
    %869 = arith.addf %865, %868 : vector<1x16xf32>
    %c75_147 = arith.constant 75 : index
    %870 = memref.load %arg6[%c75_147] : memref<80xf32, #tpu.memory_space<smem>>
    %871 = vector.broadcast %870 : f32 to vector<1x16xf32>
    %872 = arith.mulf %871, %549 : vector<1x16xf32>
    %873 = arith.addf %869, %872 : vector<1x16xf32>
    %c76_148 = arith.constant 76 : index
    %874 = memref.load %arg6[%c76_148] : memref<80xf32, #tpu.memory_space<smem>>
    %875 = vector.broadcast %874 : f32 to vector<1x16xf32>
    %876 = arith.mulf %875, %554 : vector<1x16xf32>
    %877 = arith.addf %873, %876 : vector<1x16xf32>
    %c77_149 = arith.constant 77 : index
    %878 = memref.load %arg6[%c77_149] : memref<80xf32, #tpu.memory_space<smem>>
    %879 = vector.broadcast %878 : f32 to vector<1x16xf32>
    %880 = arith.mulf %879, %484 : vector<1x16xf32>
    %881 = arith.addf %877, %880 : vector<1x16xf32>
    %c78_150 = arith.constant 78 : index
    %882 = memref.load %arg6[%c78_150] : memref<80xf32, #tpu.memory_space<smem>>
    %883 = vector.broadcast %882 : f32 to vector<1x16xf32>
    %884 = arith.mulf %883, %559 : vector<1x16xf32>
    %885 = arith.addf %881, %884 : vector<1x16xf32>
    %c79_151 = arith.constant 79 : index
    %886 = memref.load %arg6[%c79_151] : memref<80xf32, #tpu.memory_space<smem>>
    %887 = vector.broadcast %886 : f32 to vector<1x16xf32>
    %888 = arith.mulf %887, %564 : vector<1x16xf32>
    %889 = arith.addf %885, %888 : vector<1x16xf32>
    %c3_152 = arith.constant 3 : index
    %890 = memref.load %arg7[%c3_152] : memref<4xf32, #tpu.memory_space<smem>>
    %891 = vector.broadcast %890 : f32 to vector<1x16xf32>
    %892 = arith.addf %889, %891 : vector<1x16xf32>
    %c0_153 = arith.constant 0 : index
    %893 = memref.load %arg8[%c0_153] : memref<4xf32, #tpu.memory_space<smem>>
    %894 = vector.broadcast %893 : f32 to vector<1x16xf32>
    %895 = arith.mulf %646, %894 : vector<1x16xf32>
    %c0_154 = arith.constant 0 : index
    %896 = memref.load %arg9[%c0_154] : memref<4xf32, #tpu.memory_space<smem>>
    %897 = vector.broadcast %896 : f32 to vector<1x16xf32>
    %898 = arith.addf %895, %897 : vector<1x16xf32>
    %c0_155 = arith.constant 0 : index
    %c0_156 = arith.constant 0 : index
    %c0_157 = arith.constant 0 : index
    %899 = vector.load %arg10[%c0_155, %c0_156, %c0_157] : memref<1x4x16xf32, #tpu.memory_space<vmem>>, vector<1x1x16xf32>
    %900 = vector.shape_cast %899 : vector<1x1x16xf32> to vector<1x16xf32>
    %901 = vector.shape_cast %898 : vector<1x16xf32> to vector<1x1x16xf32>
    tpu.vector_store %arg10[%c0_155, %c0_156, %c0_157], %901 {strides = array<i32>} : memref<1x4x16xf32, #tpu.memory_space<vmem>>, vector<1x1x16xf32>,
    %c1_158 = arith.constant 1 : index
    %902 = memref.load %arg8[%c1_158] : memref<4xf32, #tpu.memory_space<smem>>
    %903 = vector.broadcast %902 : f32 to vector<1x16xf32>
    %904 = arith.mulf %728, %903 : vector<1x16xf32>
    %c1_159 = arith.constant 1 : index
    %905 = memref.load %arg9[%c1_159] : memref<4xf32, #tpu.memory_space<smem>>
    %906 = vector.broadcast %905 : f32 to vector<1x16xf32>
    %907 = arith.addf %904, %906 : vector<1x16xf32>
    %c0_160 = arith.constant 0 : index
    %c1_161 = arith.constant 1 : index
    %c0_162 = arith.constant 0 : index
    %908 = vector.load %arg10[%c0_160, %c1_161, %c0_162] : memref<1x4x16xf32, #tpu.memory_space<vmem>>, vector<1x1x16xf32>
    %909 = vector.shape_cast %908 : vector<1x1x16xf32> to vector<1x16xf32>
    %910 = vector.shape_cast %907 : vector<1x16xf32> to vector<1x1x16xf32>
    tpu.vector_store %arg10[%c0_160, %c1_161, %c0_162], %910 {strides = array<i32>} : memref<1x4x16xf32, #tpu.memory_space<vmem>>, vector<1x1x16xf32>,
    %c2_163 = arith.constant 2 : index
    %911 = memref.load %arg8[%c2_163] : memref<4xf32, #tpu.memory_space<smem>>
    %912 = vector.broadcast %911 : f32 to vector<1x16xf32>
    %913 = arith.mulf %810, %912 : vector<1x16xf32>
    %c2_164 = arith.constant 2 : index
    %914 = memref.load %arg9[%c2_164] : memref<4xf32, #tpu.memory_space<smem>>
    %915 = vector.broadcast %914 : f32 to vector<1x16xf32>
    %916 = arith.addf %913, %915 : vector<1x16xf32>
    %c0_165 = arith.constant 0 : index
    %c2_166 = arith.constant 2 : index
    %c0_167 = arith.constant 0 : index
    %917 = vector.load %arg10[%c0_165, %c2_166, %c0_167] : memref<1x4x16xf32, #tpu.memory_space<vmem>>, vector<1x1x16xf32>
    %918 = vector.shape_cast %917 : vector<1x1x16xf32> to vector<1x16xf32>
    %919 = vector.shape_cast %916 : vector<1x16xf32> to vector<1x1x16xf32>
    tpu.vector_store %arg10[%c0_165, %c2_166, %c0_167], %919 {strides = array<i32>} : memref<1x4x16xf32, #tpu.memory_space<vmem>>, vector<1x1x16xf32>,
    %c3_168 = arith.constant 3 : index
    %920 = memref.load %arg8[%c3_168] : memref<4xf32, #tpu.memory_space<smem>>
    %921 = vector.broadcast %920 : f32 to vector<1x16xf32>
    %922 = arith.mulf %892, %921 : vector<1x16xf32>
    %c3_169 = arith.constant 3 : index
    %923 = memref.load %arg9[%c3_169] : memref<4xf32, #tpu.memory_space<smem>>
    %924 = vector.broadcast %923 : f32 to vector<1x16xf32>
    %925 = arith.addf %922, %924 : vector<1x16xf32>
    %c0_170 = arith.constant 0 : index
    %c3_171 = arith.constant 3 : index
    %c0_172 = arith.constant 0 : index
    %926 = vector.load %arg10[%c0_170, %c3_171, %c0_172] : memref<1x4x16xf32, #tpu.memory_space<vmem>>, vector<1x1x16xf32>
    %927 = vector.shape_cast %926 : vector<1x1x16xf32> to vector<1x16xf32>
    %928 = vector.shape_cast %925 : vector<1x16xf32> to vector<1x1x16xf32>
    tpu.vector_store %arg10[%c0_170, %c3_171, %c0_172], %928 {strides = array<i32>} : memref<1x4x16xf32, #tpu.memory_space<vmem>>, vector<1x1x16xf32>,
    return
  }
  func.func @transform_0(%arg0: i32) -> (i32, i32, i32) {
    %c0_i32 = arith.constant 0 : i32
    %c0_i32_0 = arith.constant 0 : i32
    %c0_i32_1 = arith.constant 0 : i32
    return %arg0, %c0_i32, %c0_i32_0 : i32, i32, i32
  }
  func.func @transform_1(%arg0: i32) -> i32 {
    %c0_i32 = arith.constant 0 : i32
    %c0_i32_0 = arith.constant 0 : i32
    return %c0_i32 : i32
  }
  func.func @transform_2(%arg0: i32) -> i32 {
    %c0_i32 = arith.constant 0 : i32
    %c0_i32_0 = arith.constant 0 : i32
    return %c0_i32 : i32
  }
  func.func @transform_3(%arg0: i32) -> i32 {
    %c0_i32 = arith.constant 0 : i32
    %c0_i32_0 = arith.constant 0 : i32
    return %c0_i32 : i32
  }
  func.func @transform_4(%arg0: i32) -> i32 {
    %c0_i32 = arith.constant 0 : i32
    %c0_i32_0 = arith.constant 0 : i32
    return %c0_i32 : i32
  }
  func.func @transform_5(%arg0: i32) -> i32 {
    %c0_i32 = arith.constant 0 : i32
    %c0_i32_0 = arith.constant 0 : i32
    return %c0_i32 : i32
  }
  func.func @transform_6(%arg0: i32) -> i32 {
    %c0_i32 = arith.constant 0 : i32
    %c0_i32_0 = arith.constant 0 : i32
    return %c0_i32 : i32
  }
  func.func @transform_7(%arg0: i32) -> i32 {
    %c0_i32 = arith.constant 0 : i32
    %c0_i32_0 = arith.constant 0 : i32
    return %c0_i32 : i32
  }
  func.func @transform_8(%arg0: i32) -> i32 {
    %c0_i32 = arith.constant 0 : i32
    %c0_i32_0 = arith.constant 0 : i32
    return %c0_i32 : i32
  }
  func.func @transform_9(%arg0: i32) -> (i32, i32, i32) {
    %c0_i32 = arith.constant 0 : i32
    %c0_i32_0 = arith.constant 0 : i32
    %c0_i32_1 = arith.constant 0 : i32
    return %arg0, %c0_i32, %c0_i32_0 : i32, i32, i32
  }
}

module attributes {stable_mosaic.version = 11 : i64} {
  func.func @_small_stats2_kernel(%arg0: i32, %arg1: memref<1x4x16xf32, #tpu.memory_space<vmem>>, %arg2: memref<80xf32, #tpu.memory_space<smem>>, %arg3: memref<4xf32, #tpu.memory_space<smem>>, %arg4: memref<4xf32, #tpu.memory_space<smem>>, %arg5: memref<4xf32, #tpu.memory_space<smem>>, %arg6: memref<80xf32, #tpu.memory_space<smem>>, %arg7: memref<4xf32, #tpu.memory_space<smem>>, %arg8: memref<1x8x16xf32, #tpu.memory_space<vmem>>) attributes {dimension_semantics = [#tpu.dimension_semantics<parallel>], iteration_bounds = array<i64: 2>, scalar_prefetch = 0 : i64, scratch_operands = 0 : i64, tpu.core_type = #tpu.core_type<tc>, window_params = [{transform_indices = @transform_0, window_bounds = array<i64: 1, 4, 16>}, {transform_indices = @transform_1, window_bounds = array<i64: 80>}, {transform_indices = @transform_2, window_bounds = array<i64: 4>}, {transform_indices = @transform_3, window_bounds = array<i64: 4>}, {transform_indices = @transform_4, window_bounds = array<i64: 4>}, {transform_indices = @transform_5, window_bounds = array<i64: 80>}, {transform_indices = @transform_6, window_bounds = array<i64: 4>}, {transform_indices = @transform_7, window_bounds = array<i64: 1, 8, 16>}]} {
    %0 = tpu.iota {dimensions = array<i32: 1>} : vector<1x16xi32>
    %c-2_i32 = arith.constant -2 : i32
    %1 = vector.broadcast %c-2_i32 : i32 to vector<1x16xi32>
    %2 = arith.addi %0, %1 : vector<1x16xi32>
    %c0_i32 = arith.constant 0 : i32
    %3 = vector.broadcast %c0_i32 : i32 to vector<1x16xi32>
    %4 = arith.cmpi sge, %2, %3 : vector<1x16xi32>
    %c-2_i32_0 = arith.constant -2 : i32
    %5 = vector.broadcast %c-2_i32_0 : i32 to vector<1x16xi32>
    %6 = arith.addi %0, %5 : vector<1x16xi32>
    %c16_i32 = arith.constant 16 : i32
    %7 = vector.broadcast %c16_i32 : i32 to vector<1x16xi32>
    %8 = arith.cmpi slt, %6, %7 : vector<1x16xi32>
    %9 = arith.andi %4, %8 : vector<1x16xi1>
    %c-1_i32 = arith.constant -1 : i32
    %10 = vector.broadcast %c-1_i32 : i32 to vector<1x16xi32>
    %11 = arith.addi %0, %10 : vector<1x16xi32>
    %c0_i32_1 = arith.constant 0 : i32
    %12 = vector.broadcast %c0_i32_1 : i32 to vector<1x16xi32>
    %13 = arith.cmpi sge, %11, %12 : vector<1x16xi32>
    %c-1_i32_2 = arith.constant -1 : i32
    %14 = vector.broadcast %c-1_i32_2 : i32 to vector<1x16xi32>
    %15 = arith.addi %0, %14 : vector<1x16xi32>
    %c16_i32_3 = arith.constant 16 : i32
    %16 = vector.broadcast %c16_i32_3 : i32 to vector<1x16xi32>
    %17 = arith.cmpi slt, %15, %16 : vector<1x16xi32>
    %18 = arith.andi %13, %17 : vector<1x16xi1>
    %c1_i32 = arith.constant 1 : i32
    %19 = vector.broadcast %c1_i32 : i32 to vector<1x16xi32>
    %20 = arith.addi %0, %19 : vector<1x16xi32>
    %c0_i32_4 = arith.constant 0 : i32
    %21 = vector.broadcast %c0_i32_4 : i32 to vector<1x16xi32>
    %22 = arith.cmpi sge, %20, %21 : vector<1x16xi32>
    %c1_i32_5 = arith.constant 1 : i32
    %23 = vector.broadcast %c1_i32_5 : i32 to vector<1x16xi32>
    %24 = arith.addi %0, %23 : vector<1x16xi32>
    %c16_i32_6 = arith.constant 16 : i32
    %25 = vector.broadcast %c16_i32_6 : i32 to vector<1x16xi32>
    %26 = arith.cmpi slt, %24, %25 : vector<1x16xi32>
    %27 = arith.andi %22, %26 : vector<1x16xi1>
    %c2_i32 = arith.constant 2 : i32
    %28 = vector.broadcast %c2_i32 : i32 to vector<1x16xi32>
    %29 = arith.addi %0, %28 : vector<1x16xi32>
    %c0_i32_7 = arith.constant 0 : i32
    %30 = vector.broadcast %c0_i32_7 : i32 to vector<1x16xi32>
    %31 = arith.cmpi sge, %29, %30 : vector<1x16xi32>
    %c2_i32_8 = arith.constant 2 : i32
    %32 = vector.broadcast %c2_i32_8 : i32 to vector<1x16xi32>
    %33 = arith.addi %0, %32 : vector<1x16xi32>
    %c16_i32_9 = arith.constant 16 : i32
    %34 = vector.broadcast %c16_i32_9 : i32 to vector<1x16xi32>
    %35 = arith.cmpi slt, %33, %34 : vector<1x16xi32>
    %36 = arith.andi %31, %35 : vector<1x16xi1>
    %c0 = arith.constant 0 : index
    %c0_10 = arith.constant 0 : index
    %c0_11 = arith.constant 0 : index
    %37 = vector.load %arg1[%c0, %c0_10, %c0_11] : memref<1x4x16xf32, #tpu.memory_space<vmem>>, vector<1x1x16xf32>
    %38 = vector.shape_cast %37 : vector<1x1x16xf32> to vector<1x16xf32>
    %c0_12 = arith.constant 0 : index
    %c1 = arith.constant 1 : index
    %c0_13 = arith.constant 0 : index
    %39 = vector.load %arg1[%c0_12, %c1, %c0_13] : memref<1x4x16xf32, #tpu.memory_space<vmem>>, vector<1x1x16xf32>
    %40 = vector.shape_cast %39 : vector<1x1x16xf32> to vector<1x16xf32>
    %c0_14 = arith.constant 0 : index
    %c2 = arith.constant 2 : index
    %c0_15 = arith.constant 0 : index
    %41 = vector.load %arg1[%c0_14, %c2, %c0_15] : memref<1x4x16xf32, #tpu.memory_space<vmem>>, vector<1x1x16xf32>
    %42 = vector.shape_cast %41 : vector<1x1x16xf32> to vector<1x16xf32>
    %c0_16 = arith.constant 0 : index
    %c3 = arith.constant 3 : index
    %c0_17 = arith.constant 0 : index
    %43 = vector.load %arg1[%c0_16, %c3, %c0_17] : memref<1x4x16xf32, #tpu.memory_space<vmem>>, vector<1x1x16xf32>
    %44 = vector.shape_cast %43 : vector<1x1x16xf32> to vector<1x16xf32>
    %45 = vector.extract_strided_slice %38 {offsets = [0, 14], sizes = [1, 2], strides = [1, 1]} : vector<1x16xf32> to vector<1x2xf32>
    %46 = vector.extract_strided_slice %38 {offsets = [0, 0], sizes = [1, 14], strides = [1, 1]} : vector<1x16xf32> to vector<1x14xf32>
    %47 = tpu.concatenate %45, %46 in 1 : vector<1x2xf32>, vector<1x14xf32> -> vector<1x16xf32>
    %cst = arith.constant 0.000000e+00 : f32
    %48 = vector.broadcast %cst : f32 to vector<1x16xf32>
    %49 = arith.select %9, %47, %48 : vector<1x16xi1>, vector<1x16xf32>
    %50 = vector.extract_strided_slice %38 {offsets = [0, 15], sizes = [1, 1], strides = [1, 1]} : vector<1x16xf32> to vector<1x1xf32>
    %51 = vector.extract_strided_slice %38 {offsets = [0, 0], sizes = [1, 15], strides = [1, 1]} : vector<1x16xf32> to vector<1x15xf32>
    %52 = tpu.concatenate %50, %51 in 1 : vector<1x1xf32>, vector<1x15xf32> -> vector<1x16xf32>
    %cst_18 = arith.constant 0.000000e+00 : f32
    %53 = vector.broadcast %cst_18 : f32 to vector<1x16xf32>
    %54 = arith.select %18, %52, %53 : vector<1x16xi1>, vector<1x16xf32>
    %55 = vector.extract_strided_slice %38 {offsets = [0, 1], sizes = [1, 15], strides = [1, 1]} : vector<1x16xf32> to vector<1x15xf32>
    %56 = vector.extract_strided_slice %38 {offsets = [0, 0], sizes = [1, 1], strides = [1, 1]} : vector<1x16xf32> to vector<1x1xf32>
    %57 = tpu.concatenate %55, %56 in 1 : vector<1x15xf32>, vector<1x1xf32> -> vector<1x16xf32>
    %cst_19 = arith.constant 0.000000e+00 : f32
    %58 = vector.broadcast %cst_19 : f32 to vector<1x16xf32>
    %59 = arith.select %27, %57, %58 : vector<1x16xi1>, vector<1x16xf32>
    %60 = vector.extract_strided_slice %38 {offsets = [0, 2], sizes = [1, 14], strides = [1, 1]} : vector<1x16xf32> to vector<1x14xf32>
    %61 = vector.extract_strided_slice %38 {offsets = [0, 0], sizes = [1, 2], strides = [1, 1]} : vector<1x16xf32> to vector<1x2xf32>
    %62 = tpu.concatenate %60, %61 in 1 : vector<1x14xf32>, vector<1x2xf32> -> vector<1x16xf32>
    %cst_20 = arith.constant 0.000000e+00 : f32
    %63 = vector.broadcast %cst_20 : f32 to vector<1x16xf32>
    %64 = arith.select %36, %62, %63 : vector<1x16xi1>, vector<1x16xf32>
    %65 = vector.extract_strided_slice %40 {offsets = [0, 14], sizes = [1, 2], strides = [1, 1]} : vector<1x16xf32> to vector<1x2xf32>
    %66 = vector.extract_strided_slice %40 {offsets = [0, 0], sizes = [1, 14], strides = [1, 1]} : vector<1x16xf32> to vector<1x14xf32>
    %67 = tpu.concatenate %65, %66 in 1 : vector<1x2xf32>, vector<1x14xf32> -> vector<1x16xf32>
    %cst_21 = arith.constant 0.000000e+00 : f32
    %68 = vector.broadcast %cst_21 : f32 to vector<1x16xf32>
    %69 = arith.select %9, %67, %68 : vector<1x16xi1>, vector<1x16xf32>
    %70 = vector.extract_strided_slice %40 {offsets = [0, 15], sizes = [1, 1], strides = [1, 1]} : vector<1x16xf32> to vector<1x1xf32>
    %71 = vector.extract_strided_slice %40 {offsets = [0, 0], sizes = [1, 15], strides = [1, 1]} : vector<1x16xf32> to vector<1x15xf32>
    %72 = tpu.concatenate %70, %71 in 1 : vector<1x1xf32>, vector<1x15xf32> -> vector<1x16xf32>
    %cst_22 = arith.constant 0.000000e+00 : f32
    %73 = vector.broadcast %cst_22 : f32 to vector<1x16xf32>
    %74 = arith.select %18, %72, %73 : vector<1x16xi1>, vector<1x16xf32>
    %75 = vector.extract_strided_slice %40 {offsets = [0, 1], sizes = [1, 15], strides = [1, 1]} : vector<1x16xf32> to vector<1x15xf32>
    %76 = vector.extract_strided_slice %40 {offsets = [0, 0], sizes = [1, 1], strides = [1, 1]} : vector<1x16xf32> to vector<1x1xf32>
    %77 = tpu.concatenate %75, %76 in 1 : vector<1x15xf32>, vector<1x1xf32> -> vector<1x16xf32>
    %cst_23 = arith.constant 0.000000e+00 : f32
    %78 = vector.broadcast %cst_23 : f32 to vector<1x16xf32>
    %79 = arith.select %27, %77, %78 : vector<1x16xi1>, vector<1x16xf32>
    %80 = vector.extract_strided_slice %40 {offsets = [0, 2], sizes = [1, 14], strides = [1, 1]} : vector<1x16xf32> to vector<1x14xf32>
    %81 = vector.extract_strided_slice %40 {offsets = [0, 0], sizes = [1, 2], strides = [1, 1]} : vector<1x16xf32> to vector<1x2xf32>
    %82 = tpu.concatenate %80, %81 in 1 : vector<1x14xf32>, vector<1x2xf32> -> vector<1x16xf32>
    %cst_24 = arith.constant 0.000000e+00 : f32
    %83 = vector.broadcast %cst_24 : f32 to vector<1x16xf32>
    %84 = arith.select %36, %82, %83 : vector<1x16xi1>, vector<1x16xf32>
    %85 = vector.extract_strided_slice %42 {offsets = [0, 14], sizes = [1, 2], strides = [1, 1]} : vector<1x16xf32> to vector<1x2xf32>
    %86 = vector.extract_strided_slice %42 {offsets = [0, 0], sizes = [1, 14], strides = [1, 1]} : vector<1x16xf32> to vector<1x14xf32>
    %87 = tpu.concatenate %85, %86 in 1 : vector<1x2xf32>, vector<1x14xf32> -> vector<1x16xf32>
    %cst_25 = arith.constant 0.000000e+00 : f32
    %88 = vector.broadcast %cst_25 : f32 to vector<1x16xf32>
    %89 = arith.select %9, %87, %88 : vector<1x16xi1>, vector<1x16xf32>
    %90 = vector.extract_strided_slice %42 {offsets = [0, 15], sizes = [1, 1], strides = [1, 1]} : vector<1x16xf32> to vector<1x1xf32>
    %91 = vector.extract_strided_slice %42 {offsets = [0, 0], sizes = [1, 15], strides = [1, 1]} : vector<1x16xf32> to vector<1x15xf32>
    %92 = tpu.concatenate %90, %91 in 1 : vector<1x1xf32>, vector<1x15xf32> -> vector<1x16xf32>
    %cst_26 = arith.constant 0.000000e+00 : f32
    %93 = vector.broadcast %cst_26 : f32 to vector<1x16xf32>
    %94 = arith.select %18, %92, %93 : vector<1x16xi1>, vector<1x16xf32>
    %95 = vector.extract_strided_slice %42 {offsets = [0, 1], sizes = [1, 15], strides = [1, 1]} : vector<1x16xf32> to vector<1x15xf32>
    %96 = vector.extract_strided_slice %42 {offsets = [0, 0], sizes = [1, 1], strides = [1, 1]} : vector<1x16xf32> to vector<1x1xf32>
    %97 = tpu.concatenate %95, %96 in 1 : vector<1x15xf32>, vector<1x1xf32> -> vector<1x16xf32>
    %cst_27 = arith.constant 0.000000e+00 : f32
    %98 = vector.broadcast %cst_27 : f32 to vector<1x16xf32>
    %99 = arith.select %27, %97, %98 : vector<1x16xi1>, vector<1x16xf32>
    %100 = vector.extract_strided_slice %42 {offsets = [0, 2], sizes = [1, 14], strides = [1, 1]} : vector<1x16xf32> to vector<1x14xf32>
    %101 = vector.extract_strided_slice %42 {offsets = [0, 0], sizes = [1, 2], strides = [1, 1]} : vector<1x16xf32> to vector<1x2xf32>
    %102 = tpu.concatenate %100, %101 in 1 : vector<1x14xf32>, vector<1x2xf32> -> vector<1x16xf32>
    %cst_28 = arith.constant 0.000000e+00 : f32
    %103 = vector.broadcast %cst_28 : f32 to vector<1x16xf32>
    %104 = arith.select %36, %102, %103 : vector<1x16xi1>, vector<1x16xf32>
    %105 = vector.extract_strided_slice %44 {offsets = [0, 14], sizes = [1, 2], strides = [1, 1]} : vector<1x16xf32> to vector<1x2xf32>
    %106 = vector.extract_strided_slice %44 {offsets = [0, 0], sizes = [1, 14], strides = [1, 1]} : vector<1x16xf32> to vector<1x14xf32>
    %107 = tpu.concatenate %105, %106 in 1 : vector<1x2xf32>, vector<1x14xf32> -> vector<1x16xf32>
    %cst_29 = arith.constant 0.000000e+00 : f32
    %108 = vector.broadcast %cst_29 : f32 to vector<1x16xf32>
    %109 = arith.select %9, %107, %108 : vector<1x16xi1>, vector<1x16xf32>
    %110 = vector.extract_strided_slice %44 {offsets = [0, 15], sizes = [1, 1], strides = [1, 1]} : vector<1x16xf32> to vector<1x1xf32>
    %111 = vector.extract_strided_slice %44 {offsets = [0, 0], sizes = [1, 15], strides = [1, 1]} : vector<1x16xf32> to vector<1x15xf32>
    %112 = tpu.concatenate %110, %111 in 1 : vector<1x1xf32>, vector<1x15xf32> -> vector<1x16xf32>
    %cst_30 = arith.constant 0.000000e+00 : f32
    %113 = vector.broadcast %cst_30 : f32 to vector<1x16xf32>
    %114 = arith.select %18, %112, %113 : vector<1x16xi1>, vector<1x16xf32>
    %115 = vector.extract_strided_slice %44 {offsets = [0, 1], sizes = [1, 15], strides = [1, 1]} : vector<1x16xf32> to vector<1x15xf32>
    %116 = vector.extract_strided_slice %44 {offsets = [0, 0], sizes = [1, 1], strides = [1, 1]} : vector<1x16xf32> to vector<1x1xf32>
    %117 = tpu.concatenate %115, %116 in 1 : vector<1x15xf32>, vector<1x1xf32> -> vector<1x16xf32>
    %cst_31 = arith.constant 0.000000e+00 : f32
    %118 = vector.broadcast %cst_31 : f32 to vector<1x16xf32>
    %119 = arith.select %27, %117, %118 : vector<1x16xi1>, vector<1x16xf32>
    %120 = vector.extract_strided_slice %44 {offsets = [0, 2], sizes = [1, 14], strides = [1, 1]} : vector<1x16xf32> to vector<1x14xf32>
    %121 = vector.extract_strided_slice %44 {offsets = [0, 0], sizes = [1, 2], strides = [1, 1]} : vector<1x16xf32> to vector<1x2xf32>
    %122 = tpu.concatenate %120, %121 in 1 : vector<1x14xf32>, vector<1x2xf32> -> vector<1x16xf32>
    %cst_32 = arith.constant 0.000000e+00 : f32
    %123 = vector.broadcast %cst_32 : f32 to vector<1x16xf32>
    %124 = arith.select %36, %122, %123 : vector<1x16xi1>, vector<1x16xf32>
    %c0_33 = arith.constant 0 : index
    %125 = memref.load %arg2[%c0_33] : memref<80xf32, #tpu.memory_space<smem>>
    %126 = vector.broadcast %125 : f32 to vector<1x16xf32>
    %127 = arith.mulf %126, %49 : vector<1x16xf32>
    %c1_34 = arith.constant 1 : index
    %128 = memref.load %arg2[%c1_34] : memref<80xf32, #tpu.memory_space<smem>>
    %129 = vector.broadcast %128 : f32 to vector<1x16xf32>
    %130 = arith.mulf %129, %54 : vector<1x16xf32>
    %131 = arith.addf %127, %130 : vector<1x16xf32>
    %c2_35 = arith.constant 2 : index
    %132 = memref.load %arg2[%c2_35] : memref<80xf32, #tpu.memory_space<smem>>
    %133 = vector.broadcast %132 : f32 to vector<1x16xf32>
    %134 = arith.mulf %133, %38 : vector<1x16xf32>
    %135 = arith.addf %131, %134 : vector<1x16xf32>
    %c3_36 = arith.constant 3 : index
    %136 = memref.load %arg2[%c3_36] : memref<80xf32, #tpu.memory_space<smem>>
    %137 = vector.broadcast %136 : f32 to vector<1x16xf32>
    %138 = arith.mulf %137, %59 : vector<1x16xf32>
    %139 = arith.addf %135, %138 : vector<1x16xf32>
    %c4 = arith.constant 4 : index
    %140 = memref.load %arg2[%c4] : memref<80xf32, #tpu.memory_space<smem>>
    %141 = vector.broadcast %140 : f32 to vector<1x16xf32>
    %142 = arith.mulf %141, %64 : vector<1x16xf32>
    %143 = arith.addf %139, %142 : vector<1x16xf32>
    %c5 = arith.constant 5 : index
    %144 = memref.load %arg2[%c5] : memref<80xf32, #tpu.memory_space<smem>>
    %145 = vector.broadcast %144 : f32 to vector<1x16xf32>
    %146 = arith.mulf %145, %69 : vector<1x16xf32>
    %147 = arith.addf %143, %146 : vector<1x16xf32>
    %c6 = arith.constant 6 : index
    %148 = memref.load %arg2[%c6] : memref<80xf32, #tpu.memory_space<smem>>
    %149 = vector.broadcast %148 : f32 to vector<1x16xf32>
    %150 = arith.mulf %149, %74 : vector<1x16xf32>
    %151 = arith.addf %147, %150 : vector<1x16xf32>
    %c7 = arith.constant 7 : index
    %152 = memref.load %arg2[%c7] : memref<80xf32, #tpu.memory_space<smem>>
    %153 = vector.broadcast %152 : f32 to vector<1x16xf32>
    %154 = arith.mulf %153, %40 : vector<1x16xf32>
    %155 = arith.addf %151, %154 : vector<1x16xf32>
    %c8 = arith.constant 8 : index
    %156 = memref.load %arg2[%c8] : memref<80xf32, #tpu.memory_space<smem>>
    %157 = vector.broadcast %156 : f32 to vector<1x16xf32>
    %158 = arith.mulf %157, %79 : vector<1x16xf32>
    %159 = arith.addf %155, %158 : vector<1x16xf32>
    %c9 = arith.constant 9 : index
    %160 = memref.load %arg2[%c9] : memref<80xf32, #tpu.memory_space<smem>>
    %161 = vector.broadcast %160 : f32 to vector<1x16xf32>
    %162 = arith.mulf %161, %84 : vector<1x16xf32>
    %163 = arith.addf %159, %162 : vector<1x16xf32>
    %c10 = arith.constant 10 : index
    %164 = memref.load %arg2[%c10] : memref<80xf32, #tpu.memory_space<smem>>
    %165 = vector.broadcast %164 : f32 to vector<1x16xf32>
    %166 = arith.mulf %165, %89 : vector<1x16xf32>
    %167 = arith.addf %163, %166 : vector<1x16xf32>
    %c11 = arith.constant 11 : index
    %168 = memref.load %arg2[%c11] : memref<80xf32, #tpu.memory_space<smem>>
    %169 = vector.broadcast %168 : f32 to vector<1x16xf32>
    %170 = arith.mulf %169, %94 : vector<1x16xf32>
    %171 = arith.addf %167, %170 : vector<1x16xf32>
    %c12 = arith.constant 12 : index
    %172 = memref.load %arg2[%c12] : memref<80xf32, #tpu.memory_space<smem>>
    %173 = vector.broadcast %172 : f32 to vector<1x16xf32>
    %174 = arith.mulf %173, %42 : vector<1x16xf32>
    %175 = arith.addf %171, %174 : vector<1x16xf32>
    %c13 = arith.constant 13 : index
    %176 = memref.load %arg2[%c13] : memref<80xf32, #tpu.memory_space<smem>>
    %177 = vector.broadcast %176 : f32 to vector<1x16xf32>
    %178 = arith.mulf %177, %99 : vector<1x16xf32>
    %179 = arith.addf %175, %178 : vector<1x16xf32>
    %c14 = arith.constant 14 : index
    %180 = memref.load %arg2[%c14] : memref<80xf32, #tpu.memory_space<smem>>
    %181 = vector.broadcast %180 : f32 to vector<1x16xf32>
    %182 = arith.mulf %181, %104 : vector<1x16xf32>
    %183 = arith.addf %179, %182 : vector<1x16xf32>
    %c15 = arith.constant 15 : index
    %184 = memref.load %arg2[%c15] : memref<80xf32, #tpu.memory_space<smem>>
    %185 = vector.broadcast %184 : f32 to vector<1x16xf32>
    %186 = arith.mulf %185, %109 : vector<1x16xf32>
    %187 = arith.addf %183, %186 : vector<1x16xf32>
    %c16 = arith.constant 16 : index
    %188 = memref.load %arg2[%c16] : memref<80xf32, #tpu.memory_space<smem>>
    %189 = vector.broadcast %188 : f32 to vector<1x16xf32>
    %190 = arith.mulf %189, %114 : vector<1x16xf32>
    %191 = arith.addf %187, %190 : vector<1x16xf32>
    %c17 = arith.constant 17 : index
    %192 = memref.load %arg2[%c17] : memref<80xf32, #tpu.memory_space<smem>>
    %193 = vector.broadcast %192 : f32 to vector<1x16xf32>
    %194 = arith.mulf %193, %44 : vector<1x16xf32>
    %195 = arith.addf %191, %194 : vector<1x16xf32>
    %c18 = arith.constant 18 : index
    %196 = memref.load %arg2[%c18] : memref<80xf32, #tpu.memory_space<smem>>
    %197 = vector.broadcast %196 : f32 to vector<1x16xf32>
    %198 = arith.mulf %197, %119 : vector<1x16xf32>
    %199 = arith.addf %195, %198 : vector<1x16xf32>
    %c19 = arith.constant 19 : index
    %200 = memref.load %arg2[%c19] : memref<80xf32, #tpu.memory_space<smem>>
    %201 = vector.broadcast %200 : f32 to vector<1x16xf32>
    %202 = arith.mulf %201, %124 : vector<1x16xf32>
    %203 = arith.addf %199, %202 : vector<1x16xf32>
    %c0_37 = arith.constant 0 : index
    %204 = memref.load %arg3[%c0_37] : memref<4xf32, #tpu.memory_space<smem>>
    %205 = vector.broadcast %204 : f32 to vector<1x16xf32>
    %206 = arith.addf %203, %205 : vector<1x16xf32>
    %c20 = arith.constant 20 : index
    %207 = memref.load %arg2[%c20] : memref<80xf32, #tpu.memory_space<smem>>
    %208 = vector.broadcast %207 : f32 to vector<1x16xf32>
    %209 = arith.mulf %208, %49 : vector<1x16xf32>
    %c21 = arith.constant 21 : index
    %210 = memref.load %arg2[%c21] : memref<80xf32, #tpu.memory_space<smem>>
    %211 = vector.broadcast %210 : f32 to vector<1x16xf32>
    %212 = arith.mulf %211, %54 : vector<1x16xf32>
    %213 = arith.addf %209, %212 : vector<1x16xf32>
    %c22 = arith.constant 22 : index
    %214 = memref.load %arg2[%c22] : memref<80xf32, #tpu.memory_space<smem>>
    %215 = vector.broadcast %214 : f32 to vector<1x16xf32>
    %216 = arith.mulf %215, %38 : vector<1x16xf32>
    %217 = arith.addf %213, %216 : vector<1x16xf32>
    %c23 = arith.constant 23 : index
    %218 = memref.load %arg2[%c23] : memref<80xf32, #tpu.memory_space<smem>>
    %219 = vector.broadcast %218 : f32 to vector<1x16xf32>
    %220 = arith.mulf %219, %59 : vector<1x16xf32>
    %221 = arith.addf %217, %220 : vector<1x16xf32>
    %c24 = arith.constant 24 : index
    %222 = memref.load %arg2[%c24] : memref<80xf32, #tpu.memory_space<smem>>
    %223 = vector.broadcast %222 : f32 to vector<1x16xf32>
    %224 = arith.mulf %223, %64 : vector<1x16xf32>
    %225 = arith.addf %221, %224 : vector<1x16xf32>
    %c25 = arith.constant 25 : index
    %226 = memref.load %arg2[%c25] : memref<80xf32, #tpu.memory_space<smem>>
    %227 = vector.broadcast %226 : f32 to vector<1x16xf32>
    %228 = arith.mulf %227, %69 : vector<1x16xf32>
    %229 = arith.addf %225, %228 : vector<1x16xf32>
    %c26 = arith.constant 26 : index
    %230 = memref.load %arg2[%c26] : memref<80xf32, #tpu.memory_space<smem>>
    %231 = vector.broadcast %230 : f32 to vector<1x16xf32>
    %232 = arith.mulf %231, %74 : vector<1x16xf32>
    %233 = arith.addf %229, %232 : vector<1x16xf32>
    %c27 = arith.constant 27 : index
    %234 = memref.load %arg2[%c27] : memref<80xf32, #tpu.memory_space<smem>>
    %235 = vector.broadcast %234 : f32 to vector<1x16xf32>
    %236 = arith.mulf %235, %40 : vector<1x16xf32>
    %237 = arith.addf %233, %236 : vector<1x16xf32>
    %c28 = arith.constant 28 : index
    %238 = memref.load %arg2[%c28] : memref<80xf32, #tpu.memory_space<smem>>
    %239 = vector.broadcast %238 : f32 to vector<1x16xf32>
    %240 = arith.mulf %239, %79 : vector<1x16xf32>
    %241 = arith.addf %237, %240 : vector<1x16xf32>
    %c29 = arith.constant 29 : index
    %242 = memref.load %arg2[%c29] : memref<80xf32, #tpu.memory_space<smem>>
    %243 = vector.broadcast %242 : f32 to vector<1x16xf32>
    %244 = arith.mulf %243, %84 : vector<1x16xf32>
    %245 = arith.addf %241, %244 : vector<1x16xf32>
    %c30 = arith.constant 30 : index
    %246 = memref.load %arg2[%c30] : memref<80xf32, #tpu.memory_space<smem>>
    %247 = vector.broadcast %246 : f32 to vector<1x16xf32>
    %248 = arith.mulf %247, %89 : vector<1x16xf32>
    %249 = arith.addf %245, %248 : vector<1x16xf32>
    %c31 = arith.constant 31 : index
    %250 = memref.load %arg2[%c31] : memref<80xf32, #tpu.memory_space<smem>>
    %251 = vector.broadcast %250 : f32 to vector<1x16xf32>
    %252 = arith.mulf %251, %94 : vector<1x16xf32>
    %253 = arith.addf %249, %252 : vector<1x16xf32>
    %c32 = arith.constant 32 : index
    %254 = memref.load %arg2[%c32] : memref<80xf32, #tpu.memory_space<smem>>
    %255 = vector.broadcast %254 : f32 to vector<1x16xf32>
    %256 = arith.mulf %255, %42 : vector<1x16xf32>
    %257 = arith.addf %253, %256 : vector<1x16xf32>
    %c33 = arith.constant 33 : index
    %258 = memref.load %arg2[%c33] : memref<80xf32, #tpu.memory_space<smem>>
    %259 = vector.broadcast %258 : f32 to vector<1x16xf32>
    %260 = arith.mulf %259, %99 : vector<1x16xf32>
    %261 = arith.addf %257, %260 : vector<1x16xf32>
    %c34 = arith.constant 34 : index
    %262 = memref.load %arg2[%c34] : memref<80xf32, #tpu.memory_space<smem>>
    %263 = vector.broadcast %262 : f32 to vector<1x16xf32>
    %264 = arith.mulf %263, %104 : vector<1x16xf32>
    %265 = arith.addf %261, %264 : vector<1x16xf32>
    %c35 = arith.constant 35 : index
    %266 = memref.load %arg2[%c35] : memref<80xf32, #tpu.memory_space<smem>>
    %267 = vector.broadcast %266 : f32 to vector<1x16xf32>
    %268 = arith.mulf %267, %109 : vector<1x16xf32>
    %269 = arith.addf %265, %268 : vector<1x16xf32>
    %c36 = arith.constant 36 : index
    %270 = memref.load %arg2[%c36] : memref<80xf32, #tpu.memory_space<smem>>
    %271 = vector.broadcast %270 : f32 to vector<1x16xf32>
    %272 = arith.mulf %271, %114 : vector<1x16xf32>
    %273 = arith.addf %269, %272 : vector<1x16xf32>
    %c37 = arith.constant 37 : index
    %274 = memref.load %arg2[%c37] : memref<80xf32, #tpu.memory_space<smem>>
    %275 = vector.broadcast %274 : f32 to vector<1x16xf32>
    %276 = arith.mulf %275, %44 : vector<1x16xf32>
    %277 = arith.addf %273, %276 : vector<1x16xf32>
    %c38 = arith.constant 38 : index
    %278 = memref.load %arg2[%c38] : memref<80xf32, #tpu.memory_space<smem>>
    %279 = vector.broadcast %278 : f32 to vector<1x16xf32>
    %280 = arith.mulf %279, %119 : vector<1x16xf32>
    %281 = arith.addf %277, %280 : vector<1x16xf32>
    %c39 = arith.constant 39 : index
    %282 = memref.load %arg2[%c39] : memref<80xf32, #tpu.memory_space<smem>>
    %283 = vector.broadcast %282 : f32 to vector<1x16xf32>
    %284 = arith.mulf %283, %124 : vector<1x16xf32>
    %285 = arith.addf %281, %284 : vector<1x16xf32>
    %c1_38 = arith.constant 1 : index
    %286 = memref.load %arg3[%c1_38] : memref<4xf32, #tpu.memory_space<smem>>
    %287 = vector.broadcast %286 : f32 to vector<1x16xf32>
    %288 = arith.addf %285, %287 : vector<1x16xf32>
    %c40 = arith.constant 40 : index
    %289 = memref.load %arg2[%c40] : memref<80xf32, #tpu.memory_space<smem>>
    %290 = vector.broadcast %289 : f32 to vector<1x16xf32>
    %291 = arith.mulf %290, %49 : vector<1x16xf32>
    %c41 = arith.constant 41 : index
    %292 = memref.load %arg2[%c41] : memref<80xf32, #tpu.memory_space<smem>>
    %293 = vector.broadcast %292 : f32 to vector<1x16xf32>
    %294 = arith.mulf %293, %54 : vector<1x16xf32>
    %295 = arith.addf %291, %294 : vector<1x16xf32>
    %c42 = arith.constant 42 : index
    %296 = memref.load %arg2[%c42] : memref<80xf32, #tpu.memory_space<smem>>
    %297 = vector.broadcast %296 : f32 to vector<1x16xf32>
    %298 = arith.mulf %297, %38 : vector<1x16xf32>
    %299 = arith.addf %295, %298 : vector<1x16xf32>
    %c43 = arith.constant 43 : index
    %300 = memref.load %arg2[%c43] : memref<80xf32, #tpu.memory_space<smem>>
    %301 = vector.broadcast %300 : f32 to vector<1x16xf32>
    %302 = arith.mulf %301, %59 : vector<1x16xf32>
    %303 = arith.addf %299, %302 : vector<1x16xf32>
    %c44 = arith.constant 44 : index
    %304 = memref.load %arg2[%c44] : memref<80xf32, #tpu.memory_space<smem>>
    %305 = vector.broadcast %304 : f32 to vector<1x16xf32>
    %306 = arith.mulf %305, %64 : vector<1x16xf32>
    %307 = arith.addf %303, %306 : vector<1x16xf32>
    %c45 = arith.constant 45 : index
    %308 = memref.load %arg2[%c45] : memref<80xf32, #tpu.memory_space<smem>>
    %309 = vector.broadcast %308 : f32 to vector<1x16xf32>
    %310 = arith.mulf %309, %69 : vector<1x16xf32>
    %311 = arith.addf %307, %310 : vector<1x16xf32>
    %c46 = arith.constant 46 : index
    %312 = memref.load %arg2[%c46] : memref<80xf32, #tpu.memory_space<smem>>
    %313 = vector.broadcast %312 : f32 to vector<1x16xf32>
    %314 = arith.mulf %313, %74 : vector<1x16xf32>
    %315 = arith.addf %311, %314 : vector<1x16xf32>
    %c47 = arith.constant 47 : index
    %316 = memref.load %arg2[%c47] : memref<80xf32, #tpu.memory_space<smem>>
    %317 = vector.broadcast %316 : f32 to vector<1x16xf32>
    %318 = arith.mulf %317, %40 : vector<1x16xf32>
    %319 = arith.addf %315, %318 : vector<1x16xf32>
    %c48 = arith.constant 48 : index
    %320 = memref.load %arg2[%c48] : memref<80xf32, #tpu.memory_space<smem>>
    %321 = vector.broadcast %320 : f32 to vector<1x16xf32>
    %322 = arith.mulf %321, %79 : vector<1x16xf32>
    %323 = arith.addf %319, %322 : vector<1x16xf32>
    %c49 = arith.constant 49 : index
    %324 = memref.load %arg2[%c49] : memref<80xf32, #tpu.memory_space<smem>>
    %325 = vector.broadcast %324 : f32 to vector<1x16xf32>
    %326 = arith.mulf %325, %84 : vector<1x16xf32>
    %327 = arith.addf %323, %326 : vector<1x16xf32>
    %c50 = arith.constant 50 : index
    %328 = memref.load %arg2[%c50] : memref<80xf32, #tpu.memory_space<smem>>
    %329 = vector.broadcast %328 : f32 to vector<1x16xf32>
    %330 = arith.mulf %329, %89 : vector<1x16xf32>
    %331 = arith.addf %327, %330 : vector<1x16xf32>
    %c51 = arith.constant 51 : index
    %332 = memref.load %arg2[%c51] : memref<80xf32, #tpu.memory_space<smem>>
    %333 = vector.broadcast %332 : f32 to vector<1x16xf32>
    %334 = arith.mulf %333, %94 : vector<1x16xf32>
    %335 = arith.addf %331, %334 : vector<1x16xf32>
    %c52 = arith.constant 52 : index
    %336 = memref.load %arg2[%c52] : memref<80xf32, #tpu.memory_space<smem>>
    %337 = vector.broadcast %336 : f32 to vector<1x16xf32>
    %338 = arith.mulf %337, %42 : vector<1x16xf32>
    %339 = arith.addf %335, %338 : vector<1x16xf32>
    %c53 = arith.constant 53 : index
    %340 = memref.load %arg2[%c53] : memref<80xf32, #tpu.memory_space<smem>>
    %341 = vector.broadcast %340 : f32 to vector<1x16xf32>
    %342 = arith.mulf %341, %99 : vector<1x16xf32>
    %343 = arith.addf %339, %342 : vector<1x16xf32>
    %c54 = arith.constant 54 : index
    %344 = memref.load %arg2[%c54] : memref<80xf32, #tpu.memory_space<smem>>
    %345 = vector.broadcast %344 : f32 to vector<1x16xf32>
    %346 = arith.mulf %345, %104 : vector<1x16xf32>
    %347 = arith.addf %343, %346 : vector<1x16xf32>
    %c55 = arith.constant 55 : index
    %348 = memref.load %arg2[%c55] : memref<80xf32, #tpu.memory_space<smem>>
    %349 = vector.broadcast %348 : f32 to vector<1x16xf32>
    %350 = arith.mulf %349, %109 : vector<1x16xf32>
    %351 = arith.addf %347, %350 : vector<1x16xf32>
    %c56 = arith.constant 56 : index
    %352 = memref.load %arg2[%c56] : memref<80xf32, #tpu.memory_space<smem>>
    %353 = vector.broadcast %352 : f32 to vector<1x16xf32>
    %354 = arith.mulf %353, %114 : vector<1x16xf32>
    %355 = arith.addf %351, %354 : vector<1x16xf32>
    %c57 = arith.constant 57 : index
    %356 = memref.load %arg2[%c57] : memref<80xf32, #tpu.memory_space<smem>>
    %357 = vector.broadcast %356 : f32 to vector<1x16xf32>
    %358 = arith.mulf %357, %44 : vector<1x16xf32>
    %359 = arith.addf %355, %358 : vector<1x16xf32>
    %c58 = arith.constant 58 : index
    %360 = memref.load %arg2[%c58] : memref<80xf32, #tpu.memory_space<smem>>
    %361 = vector.broadcast %360 : f32 to vector<1x16xf32>
    %362 = arith.mulf %361, %119 : vector<1x16xf32>
    %363 = arith.addf %359, %362 : vector<1x16xf32>
    %c59 = arith.constant 59 : index
    %364 = memref.load %arg2[%c59] : memref<80xf32, #tpu.memory_space<smem>>
    %365 = vector.broadcast %364 : f32 to vector<1x16xf32>
    %366 = arith.mulf %365, %124 : vector<1x16xf32>
    %367 = arith.addf %363, %366 : vector<1x16xf32>
    %c2_39 = arith.constant 2 : index
    %368 = memref.load %arg3[%c2_39] : memref<4xf32, #tpu.memory_space<smem>>
    %369 = vector.broadcast %368 : f32 to vector<1x16xf32>
    %370 = arith.addf %367, %369 : vector<1x16xf32>
    %c60 = arith.constant 60 : index
    %371 = memref.load %arg2[%c60] : memref<80xf32, #tpu.memory_space<smem>>
    %372 = vector.broadcast %371 : f32 to vector<1x16xf32>
    %373 = arith.mulf %372, %49 : vector<1x16xf32>
    %c61 = arith.constant 61 : index
    %374 = memref.load %arg2[%c61] : memref<80xf32, #tpu.memory_space<smem>>
    %375 = vector.broadcast %374 : f32 to vector<1x16xf32>
    %376 = arith.mulf %375, %54 : vector<1x16xf32>
    %377 = arith.addf %373, %376 : vector<1x16xf32>
    %c62 = arith.constant 62 : index
    %378 = memref.load %arg2[%c62] : memref<80xf32, #tpu.memory_space<smem>>
    %379 = vector.broadcast %378 : f32 to vector<1x16xf32>
    %380 = arith.mulf %379, %38 : vector<1x16xf32>
    %381 = arith.addf %377, %380 : vector<1x16xf32>
    %c63 = arith.constant 63 : index
    %382 = memref.load %arg2[%c63] : memref<80xf32, #tpu.memory_space<smem>>
    %383 = vector.broadcast %382 : f32 to vector<1x16xf32>
    %384 = arith.mulf %383, %59 : vector<1x16xf32>
    %385 = arith.addf %381, %384 : vector<1x16xf32>
    %c64 = arith.constant 64 : index
    %386 = memref.load %arg2[%c64] : memref<80xf32, #tpu.memory_space<smem>>
    %387 = vector.broadcast %386 : f32 to vector<1x16xf32>
    %388 = arith.mulf %387, %64 : vector<1x16xf32>
    %389 = arith.addf %385, %388 : vector<1x16xf32>
    %c65 = arith.constant 65 : index
    %390 = memref.load %arg2[%c65] : memref<80xf32, #tpu.memory_space<smem>>
    %391 = vector.broadcast %390 : f32 to vector<1x16xf32>
    %392 = arith.mulf %391, %69 : vector<1x16xf32>
    %393 = arith.addf %389, %392 : vector<1x16xf32>
    %c66 = arith.constant 66 : index
    %394 = memref.load %arg2[%c66] : memref<80xf32, #tpu.memory_space<smem>>
    %395 = vector.broadcast %394 : f32 to vector<1x16xf32>
    %396 = arith.mulf %395, %74 : vector<1x16xf32>
    %397 = arith.addf %393, %396 : vector<1x16xf32>
    %c67 = arith.constant 67 : index
    %398 = memref.load %arg2[%c67] : memref<80xf32, #tpu.memory_space<smem>>
    %399 = vector.broadcast %398 : f32 to vector<1x16xf32>
    %400 = arith.mulf %399, %40 : vector<1x16xf32>
    %401 = arith.addf %397, %400 : vector<1x16xf32>
    %c68 = arith.constant 68 : index
    %402 = memref.load %arg2[%c68] : memref<80xf32, #tpu.memory_space<smem>>
    %403 = vector.broadcast %402 : f32 to vector<1x16xf32>
    %404 = arith.mulf %403, %79 : vector<1x16xf32>
    %405 = arith.addf %401, %404 : vector<1x16xf32>
    %c69 = arith.constant 69 : index
    %406 = memref.load %arg2[%c69] : memref<80xf32, #tpu.memory_space<smem>>
    %407 = vector.broadcast %406 : f32 to vector<1x16xf32>
    %408 = arith.mulf %407, %84 : vector<1x16xf32>
    %409 = arith.addf %405, %408 : vector<1x16xf32>
    %c70 = arith.constant 70 : index
    %410 = memref.load %arg2[%c70] : memref<80xf32, #tpu.memory_space<smem>>
    %411 = vector.broadcast %410 : f32 to vector<1x16xf32>
    %412 = arith.mulf %411, %89 : vector<1x16xf32>
    %413 = arith.addf %409, %412 : vector<1x16xf32>
    %c71 = arith.constant 71 : index
    %414 = memref.load %arg2[%c71] : memref<80xf32, #tpu.memory_space<smem>>
    %415 = vector.broadcast %414 : f32 to vector<1x16xf32>
    %416 = arith.mulf %415, %94 : vector<1x16xf32>
    %417 = arith.addf %413, %416 : vector<1x16xf32>
    %c72 = arith.constant 72 : index
    %418 = memref.load %arg2[%c72] : memref<80xf32, #tpu.memory_space<smem>>
    %419 = vector.broadcast %418 : f32 to vector<1x16xf32>
    %420 = arith.mulf %419, %42 : vector<1x16xf32>
    %421 = arith.addf %417, %420 : vector<1x16xf32>
    %c73 = arith.constant 73 : index
    %422 = memref.load %arg2[%c73] : memref<80xf32, #tpu.memory_space<smem>>
    %423 = vector.broadcast %422 : f32 to vector<1x16xf32>
    %424 = arith.mulf %423, %99 : vector<1x16xf32>
    %425 = arith.addf %421, %424 : vector<1x16xf32>
    %c74 = arith.constant 74 : index
    %426 = memref.load %arg2[%c74] : memref<80xf32, #tpu.memory_space<smem>>
    %427 = vector.broadcast %426 : f32 to vector<1x16xf32>
    %428 = arith.mulf %427, %104 : vector<1x16xf32>
    %429 = arith.addf %425, %428 : vector<1x16xf32>
    %c75 = arith.constant 75 : index
    %430 = memref.load %arg2[%c75] : memref<80xf32, #tpu.memory_space<smem>>
    %431 = vector.broadcast %430 : f32 to vector<1x16xf32>
    %432 = arith.mulf %431, %109 : vector<1x16xf32>
    %433 = arith.addf %429, %432 : vector<1x16xf32>
    %c76 = arith.constant 76 : index
    %434 = memref.load %arg2[%c76] : memref<80xf32, #tpu.memory_space<smem>>
    %435 = vector.broadcast %434 : f32 to vector<1x16xf32>
    %436 = arith.mulf %435, %114 : vector<1x16xf32>
    %437 = arith.addf %433, %436 : vector<1x16xf32>
    %c77 = arith.constant 77 : index
    %438 = memref.load %arg2[%c77] : memref<80xf32, #tpu.memory_space<smem>>
    %439 = vector.broadcast %438 : f32 to vector<1x16xf32>
    %440 = arith.mulf %439, %44 : vector<1x16xf32>
    %441 = arith.addf %437, %440 : vector<1x16xf32>
    %c78 = arith.constant 78 : index
    %442 = memref.load %arg2[%c78] : memref<80xf32, #tpu.memory_space<smem>>
    %443 = vector.broadcast %442 : f32 to vector<1x16xf32>
    %444 = arith.mulf %443, %119 : vector<1x16xf32>
    %445 = arith.addf %441, %444 : vector<1x16xf32>
    %c79 = arith.constant 79 : index
    %446 = memref.load %arg2[%c79] : memref<80xf32, #tpu.memory_space<smem>>
    %447 = vector.broadcast %446 : f32 to vector<1x16xf32>
    %448 = arith.mulf %447, %124 : vector<1x16xf32>
    %449 = arith.addf %445, %448 : vector<1x16xf32>
    %c3_40 = arith.constant 3 : index
    %450 = memref.load %arg3[%c3_40] : memref<4xf32, #tpu.memory_space<smem>>
    %451 = vector.broadcast %450 : f32 to vector<1x16xf32>
    %452 = arith.addf %449, %451 : vector<1x16xf32>
    %c0_41 = arith.constant 0 : index
    %453 = memref.load %arg4[%c0_41] : memref<4xf32, #tpu.memory_space<smem>>
    %454 = vector.broadcast %453 : f32 to vector<1x16xf32>
    %455 = arith.mulf %206, %454 : vector<1x16xf32>
    %c0_42 = arith.constant 0 : index
    %456 = memref.load %arg5[%c0_42] : memref<4xf32, #tpu.memory_space<smem>>
    %457 = vector.broadcast %456 : f32 to vector<1x16xf32>
    %458 = arith.addf %455, %457 : vector<1x16xf32>
    %cst_43 = arith.constant 0.000000e+00 : f32
    %459 = vector.broadcast %cst_43 : f32 to vector<1x16xf32>
    %460 = arith.maximumf %458, %459 : vector<1x16xf32>
    %c1_44 = arith.constant 1 : index
    %461 = memref.load %arg4[%c1_44] : memref<4xf32, #tpu.memory_space<smem>>
    %462 = vector.broadcast %461 : f32 to vector<1x16xf32>
    %463 = arith.mulf %288, %462 : vector<1x16xf32>
    %c1_45 = arith.constant 1 : index
    %464 = memref.load %arg5[%c1_45] : memref<4xf32, #tpu.memory_space<smem>>
    %465 = vector.broadcast %464 : f32 to vector<1x16xf32>
    %466 = arith.addf %463, %465 : vector<1x16xf32>
    %cst_46 = arith.constant 0.000000e+00 : f32
    %467 = vector.broadcast %cst_46 : f32 to vector<1x16xf32>
    %468 = arith.maximumf %466, %467 : vector<1x16xf32>
    %c2_47 = arith.constant 2 : index
    %469 = memref.load %arg4[%c2_47] : memref<4xf32, #tpu.memory_space<smem>>
    %470 = vector.broadcast %469 : f32 to vector<1x16xf32>
    %471 = arith.mulf %370, %470 : vector<1x16xf32>
    %c2_48 = arith.constant 2 : index
    %472 = memref.load %arg5[%c2_48] : memref<4xf32, #tpu.memory_space<smem>>
    %473 = vector.broadcast %472 : f32 to vector<1x16xf32>
    %474 = arith.addf %471, %473 : vector<1x16xf32>
    %cst_49 = arith.constant 0.000000e+00 : f32
    %475 = vector.broadcast %cst_49 : f32 to vector<1x16xf32>
    %476 = arith.maximumf %474, %475 : vector<1x16xf32>
    %c3_50 = arith.constant 3 : index
    %477 = memref.load %arg4[%c3_50] : memref<4xf32, #tpu.memory_space<smem>>
    %478 = vector.broadcast %477 : f32 to vector<1x16xf32>
    %479 = arith.mulf %452, %478 : vector<1x16xf32>
    %c3_51 = arith.constant 3 : index
    %480 = memref.load %arg5[%c3_51] : memref<4xf32, #tpu.memory_space<smem>>
    %481 = vector.broadcast %480 : f32 to vector<1x16xf32>
    %482 = arith.addf %479, %481 : vector<1x16xf32>
    %cst_52 = arith.constant 0.000000e+00 : f32
    %483 = vector.broadcast %cst_52 : f32 to vector<1x16xf32>
    %484 = arith.maximumf %482, %483 : vector<1x16xf32>
    %485 = vector.extract_strided_slice %460 {offsets = [0, 14], sizes = [1, 2], strides = [1, 1]} : vector<1x16xf32> to vector<1x2xf32>
    %486 = vector.extract_strided_slice %460 {offsets = [0, 0], sizes = [1, 14], strides = [1, 1]} : vector<1x16xf32> to vector<1x14xf32>
    %487 = tpu.concatenate %485, %486 in 1 : vector<1x2xf32>, vector<1x14xf32> -> vector<1x16xf32>
    %cst_53 = arith.constant 0.000000e+00 : f32
    %488 = vector.broadcast %cst_53 : f32 to vector<1x16xf32>
    %489 = arith.select %9, %487, %488 : vector<1x16xi1>, vector<1x16xf32>
    %490 = vector.extract_strided_slice %460 {offsets = [0, 15], sizes = [1, 1], strides = [1, 1]} : vector<1x16xf32> to vector<1x1xf32>
    %491 = vector.extract_strided_slice %460 {offsets = [0, 0], sizes = [1, 15], strides = [1, 1]} : vector<1x16xf32> to vector<1x15xf32>
    %492 = tpu.concatenate %490, %491 in 1 : vector<1x1xf32>, vector<1x15xf32> -> vector<1x16xf32>
    %cst_54 = arith.constant 0.000000e+00 : f32
    %493 = vector.broadcast %cst_54 : f32 to vector<1x16xf32>
    %494 = arith.select %18, %492, %493 : vector<1x16xi1>, vector<1x16xf32>
    %495 = vector.extract_strided_slice %460 {offsets = [0, 1], sizes = [1, 15], strides = [1, 1]} : vector<1x16xf32> to vector<1x15xf32>
    %496 = vector.extract_strided_slice %460 {offsets = [0, 0], sizes = [1, 1], strides = [1, 1]} : vector<1x16xf32> to vector<1x1xf32>
    %497 = tpu.concatenate %495, %496 in 1 : vector<1x15xf32>, vector<1x1xf32> -> vector<1x16xf32>
    %cst_55 = arith.constant 0.000000e+00 : f32
    %498 = vector.broadcast %cst_55 : f32 to vector<1x16xf32>
    %499 = arith.select %27, %497, %498 : vector<1x16xi1>, vector<1x16xf32>
    %500 = vector.extract_strided_slice %460 {offsets = [0, 2], sizes = [1, 14], strides = [1, 1]} : vector<1x16xf32> to vector<1x14xf32>
    %501 = vector.extract_strided_slice %460 {offsets = [0, 0], sizes = [1, 2], strides = [1, 1]} : vector<1x16xf32> to vector<1x2xf32>
    %502 = tpu.concatenate %500, %501 in 1 : vector<1x14xf32>, vector<1x2xf32> -> vector<1x16xf32>
    %cst_56 = arith.constant 0.000000e+00 : f32
    %503 = vector.broadcast %cst_56 : f32 to vector<1x16xf32>
    %504 = arith.select %36, %502, %503 : vector<1x16xi1>, vector<1x16xf32>
    %505 = vector.extract_strided_slice %468 {offsets = [0, 14], sizes = [1, 2], strides = [1, 1]} : vector<1x16xf32> to vector<1x2xf32>
    %506 = vector.extract_strided_slice %468 {offsets = [0, 0], sizes = [1, 14], strides = [1, 1]} : vector<1x16xf32> to vector<1x14xf32>
    %507 = tpu.concatenate %505, %506 in 1 : vector<1x2xf32>, vector<1x14xf32> -> vector<1x16xf32>
    %cst_57 = arith.constant 0.000000e+00 : f32
    %508 = vector.broadcast %cst_57 : f32 to vector<1x16xf32>
    %509 = arith.select %9, %507, %508 : vector<1x16xi1>, vector<1x16xf32>
    %510 = vector.extract_strided_slice %468 {offsets = [0, 15], sizes = [1, 1], strides = [1, 1]} : vector<1x16xf32> to vector<1x1xf32>
    %511 = vector.extract_strided_slice %468 {offsets = [0, 0], sizes = [1, 15], strides = [1, 1]} : vector<1x16xf32> to vector<1x15xf32>
    %512 = tpu.concatenate %510, %511 in 1 : vector<1x1xf32>, vector<1x15xf32> -> vector<1x16xf32>
    %cst_58 = arith.constant 0.000000e+00 : f32
    %513 = vector.broadcast %cst_58 : f32 to vector<1x16xf32>
    %514 = arith.select %18, %512, %513 : vector<1x16xi1>, vector<1x16xf32>
    %515 = vector.extract_strided_slice %468 {offsets = [0, 1], sizes = [1, 15], strides = [1, 1]} : vector<1x16xf32> to vector<1x15xf32>
    %516 = vector.extract_strided_slice %468 {offsets = [0, 0], sizes = [1, 1], strides = [1, 1]} : vector<1x16xf32> to vector<1x1xf32>
    %517 = tpu.concatenate %515, %516 in 1 : vector<1x15xf32>, vector<1x1xf32> -> vector<1x16xf32>
    %cst_59 = arith.constant 0.000000e+00 : f32
    %518 = vector.broadcast %cst_59 : f32 to vector<1x16xf32>
    %519 = arith.select %27, %517, %518 : vector<1x16xi1>, vector<1x16xf32>
    %520 = vector.extract_strided_slice %468 {offsets = [0, 2], sizes = [1, 14], strides = [1, 1]} : vector<1x16xf32> to vector<1x14xf32>
    %521 = vector.extract_strided_slice %468 {offsets = [0, 0], sizes = [1, 2], strides = [1, 1]} : vector<1x16xf32> to vector<1x2xf32>
    %522 = tpu.concatenate %520, %521 in 1 : vector<1x14xf32>, vector<1x2xf32> -> vector<1x16xf32>
    %cst_60 = arith.constant 0.000000e+00 : f32
    %523 = vector.broadcast %cst_60 : f32 to vector<1x16xf32>
    %524 = arith.select %36, %522, %523 : vector<1x16xi1>, vector<1x16xf32>
    %525 = vector.extract_strided_slice %476 {offsets = [0, 14], sizes = [1, 2], strides = [1, 1]} : vector<1x16xf32> to vector<1x2xf32>
    %526 = vector.extract_strided_slice %476 {offsets = [0, 0], sizes = [1, 14], strides = [1, 1]} : vector<1x16xf32> to vector<1x14xf32>
    %527 = tpu.concatenate %525, %526 in 1 : vector<1x2xf32>, vector<1x14xf32> -> vector<1x16xf32>
    %cst_61 = arith.constant 0.000000e+00 : f32
    %528 = vector.broadcast %cst_61 : f32 to vector<1x16xf32>
    %529 = arith.select %9, %527, %528 : vector<1x16xi1>, vector<1x16xf32>
    %530 = vector.extract_strided_slice %476 {offsets = [0, 15], sizes = [1, 1], strides = [1, 1]} : vector<1x16xf32> to vector<1x1xf32>
    %531 = vector.extract_strided_slice %476 {offsets = [0, 0], sizes = [1, 15], strides = [1, 1]} : vector<1x16xf32> to vector<1x15xf32>
    %532 = tpu.concatenate %530, %531 in 1 : vector<1x1xf32>, vector<1x15xf32> -> vector<1x16xf32>
    %cst_62 = arith.constant 0.000000e+00 : f32
    %533 = vector.broadcast %cst_62 : f32 to vector<1x16xf32>
    %534 = arith.select %18, %532, %533 : vector<1x16xi1>, vector<1x16xf32>
    %535 = vector.extract_strided_slice %476 {offsets = [0, 1], sizes = [1, 15], strides = [1, 1]} : vector<1x16xf32> to vector<1x15xf32>
    %536 = vector.extract_strided_slice %476 {offsets = [0, 0], sizes = [1, 1], strides = [1, 1]} : vector<1x16xf32> to vector<1x1xf32>
    %537 = tpu.concatenate %535, %536 in 1 : vector<1x15xf32>, vector<1x1xf32> -> vector<1x16xf32>
    %cst_63 = arith.constant 0.000000e+00 : f32
    %538 = vector.broadcast %cst_63 : f32 to vector<1x16xf32>
    %539 = arith.select %27, %537, %538 : vector<1x16xi1>, vector<1x16xf32>
    %540 = vector.extract_strided_slice %476 {offsets = [0, 2], sizes = [1, 14], strides = [1, 1]} : vector<1x16xf32> to vector<1x14xf32>
    %541 = vector.extract_strided_slice %476 {offsets = [0, 0], sizes = [1, 2], strides = [1, 1]} : vector<1x16xf32> to vector<1x2xf32>
    %542 = tpu.concatenate %540, %541 in 1 : vector<1x14xf32>, vector<1x2xf32> -> vector<1x16xf32>
    %cst_64 = arith.constant 0.000000e+00 : f32
    %543 = vector.broadcast %cst_64 : f32 to vector<1x16xf32>
    %544 = arith.select %36, %542, %543 : vector<1x16xi1>, vector<1x16xf32>
    %545 = vector.extract_strided_slice %484 {offsets = [0, 14], sizes = [1, 2], strides = [1, 1]} : vector<1x16xf32> to vector<1x2xf32>
    %546 = vector.extract_strided_slice %484 {offsets = [0, 0], sizes = [1, 14], strides = [1, 1]} : vector<1x16xf32> to vector<1x14xf32>
    %547 = tpu.concatenate %545, %546 in 1 : vector<1x2xf32>, vector<1x14xf32> -> vector<1x16xf32>
    %cst_65 = arith.constant 0.000000e+00 : f32
    %548 = vector.broadcast %cst_65 : f32 to vector<1x16xf32>
    %549 = arith.select %9, %547, %548 : vector<1x16xi1>, vector<1x16xf32>
    %550 = vector.extract_strided_slice %484 {offsets = [0, 15], sizes = [1, 1], strides = [1, 1]} : vector<1x16xf32> to vector<1x1xf32>
    %551 = vector.extract_strided_slice %484 {offsets = [0, 0], sizes = [1, 15], strides = [1, 1]} : vector<1x16xf32> to vector<1x15xf32>
    %552 = tpu.concatenate %550, %551 in 1 : vector<1x1xf32>, vector<1x15xf32> -> vector<1x16xf32>
    %cst_66 = arith.constant 0.000000e+00 : f32
    %553 = vector.broadcast %cst_66 : f32 to vector<1x16xf32>
    %554 = arith.select %18, %552, %553 : vector<1x16xi1>, vector<1x16xf32>
    %555 = vector.extract_strided_slice %484 {offsets = [0, 1], sizes = [1, 15], strides = [1, 1]} : vector<1x16xf32> to vector<1x15xf32>
    %556 = vector.extract_strided_slice %484 {offsets = [0, 0], sizes = [1, 1], strides = [1, 1]} : vector<1x16xf32> to vector<1x1xf32>
    %557 = tpu.concatenate %555, %556 in 1 : vector<1x15xf32>, vector<1x1xf32> -> vector<1x16xf32>
    %cst_67 = arith.constant 0.000000e+00 : f32
    %558 = vector.broadcast %cst_67 : f32 to vector<1x16xf32>
    %559 = arith.select %27, %557, %558 : vector<1x16xi1>, vector<1x16xf32>
    %560 = vector.extract_strided_slice %484 {offsets = [0, 2], sizes = [1, 14], strides = [1, 1]} : vector<1x16xf32> to vector<1x14xf32>
    %561 = vector.extract_strided_slice %484 {offsets = [0, 0], sizes = [1, 2], strides = [1, 1]} : vector<1x16xf32> to vector<1x2xf32>
    %562 = tpu.concatenate %560, %561 in 1 : vector<1x14xf32>, vector<1x2xf32> -> vector<1x16xf32>
    %cst_68 = arith.constant 0.000000e+00 : f32
    %563 = vector.broadcast %cst_68 : f32 to vector<1x16xf32>
    %564 = arith.select %36, %562, %563 : vector<1x16xi1>, vector<1x16xf32>
    %c0_69 = arith.constant 0 : index
    %565 = memref.load %arg6[%c0_69] : memref<80xf32, #tpu.memory_space<smem>>
    %566 = vector.broadcast %565 : f32 to vector<1x16xf32>
    %567 = arith.mulf %566, %489 : vector<1x16xf32>
    %c1_70 = arith.constant 1 : index
    %568 = memref.load %arg6[%c1_70] : memref<80xf32, #tpu.memory_space<smem>>
    %569 = vector.broadcast %568 : f32 to vector<1x16xf32>
    %570 = arith.mulf %569, %494 : vector<1x16xf32>
    %571 = arith.addf %567, %570 : vector<1x16xf32>
    %c2_71 = arith.constant 2 : index
    %572 = memref.load %arg6[%c2_71] : memref<80xf32, #tpu.memory_space<smem>>
    %573 = vector.broadcast %572 : f32 to vector<1x16xf32>
    %574 = arith.mulf %573, %460 : vector<1x16xf32>
    %575 = arith.addf %571, %574 : vector<1x16xf32>
    %c3_72 = arith.constant 3 : index
    %576 = memref.load %arg6[%c3_72] : memref<80xf32, #tpu.memory_space<smem>>
    %577 = vector.broadcast %576 : f32 to vector<1x16xf32>
    %578 = arith.mulf %577, %499 : vector<1x16xf32>
    %579 = arith.addf %575, %578 : vector<1x16xf32>
    %c4_73 = arith.constant 4 : index
    %580 = memref.load %arg6[%c4_73] : memref<80xf32, #tpu.memory_space<smem>>
    %581 = vector.broadcast %580 : f32 to vector<1x16xf32>
    %582 = arith.mulf %581, %504 : vector<1x16xf32>
    %583 = arith.addf %579, %582 : vector<1x16xf32>
    %c5_74 = arith.constant 5 : index
    %584 = memref.load %arg6[%c5_74] : memref<80xf32, #tpu.memory_space<smem>>
    %585 = vector.broadcast %584 : f32 to vector<1x16xf32>
    %586 = arith.mulf %585, %509 : vector<1x16xf32>
    %587 = arith.addf %583, %586 : vector<1x16xf32>
    %c6_75 = arith.constant 6 : index
    %588 = memref.load %arg6[%c6_75] : memref<80xf32, #tpu.memory_space<smem>>
    %589 = vector.broadcast %588 : f32 to vector<1x16xf32>
    %590 = arith.mulf %589, %514 : vector<1x16xf32>
    %591 = arith.addf %587, %590 : vector<1x16xf32>
    %c7_76 = arith.constant 7 : index
    %592 = memref.load %arg6[%c7_76] : memref<80xf32, #tpu.memory_space<smem>>
    %593 = vector.broadcast %592 : f32 to vector<1x16xf32>
    %594 = arith.mulf %593, %468 : vector<1x16xf32>
    %595 = arith.addf %591, %594 : vector<1x16xf32>
    %c8_77 = arith.constant 8 : index
    %596 = memref.load %arg6[%c8_77] : memref<80xf32, #tpu.memory_space<smem>>
    %597 = vector.broadcast %596 : f32 to vector<1x16xf32>
    %598 = arith.mulf %597, %519 : vector<1x16xf32>
    %599 = arith.addf %595, %598 : vector<1x16xf32>
    %c9_78 = arith.constant 9 : index
    %600 = memref.load %arg6[%c9_78] : memref<80xf32, #tpu.memory_space<smem>>
    %601 = vector.broadcast %600 : f32 to vector<1x16xf32>
    %602 = arith.mulf %601, %524 : vector<1x16xf32>
    %603 = arith.addf %599, %602 : vector<1x16xf32>
    %c10_79 = arith.constant 10 : index
    %604 = memref.load %arg6[%c10_79] : memref<80xf32, #tpu.memory_space<smem>>
    %605 = vector.broadcast %604 : f32 to vector<1x16xf32>
    %606 = arith.mulf %605, %529 : vector<1x16xf32>
    %607 = arith.addf %603, %606 : vector<1x16xf32>
    %c11_80 = arith.constant 11 : index
    %608 = memref.load %arg6[%c11_80] : memref<80xf32, #tpu.memory_space<smem>>
    %609 = vector.broadcast %608 : f32 to vector<1x16xf32>
    %610 = arith.mulf %609, %534 : vector<1x16xf32>
    %611 = arith.addf %607, %610 : vector<1x16xf32>
    %c12_81 = arith.constant 12 : index
    %612 = memref.load %arg6[%c12_81] : memref<80xf32, #tpu.memory_space<smem>>
    %613 = vector.broadcast %612 : f32 to vector<1x16xf32>
    %614 = arith.mulf %613, %476 : vector<1x16xf32>
    %615 = arith.addf %611, %614 : vector<1x16xf32>
    %c13_82 = arith.constant 13 : index
    %616 = memref.load %arg6[%c13_82] : memref<80xf32, #tpu.memory_space<smem>>
    %617 = vector.broadcast %616 : f32 to vector<1x16xf32>
    %618 = arith.mulf %617, %539 : vector<1x16xf32>
    %619 = arith.addf %615, %618 : vector<1x16xf32>
    %c14_83 = arith.constant 14 : index
    %620 = memref.load %arg6[%c14_83] : memref<80xf32, #tpu.memory_space<smem>>
    %621 = vector.broadcast %620 : f32 to vector<1x16xf32>
    %622 = arith.mulf %621, %544 : vector<1x16xf32>
    %623 = arith.addf %619, %622 : vector<1x16xf32>
    %c15_84 = arith.constant 15 : index
    %624 = memref.load %arg6[%c15_84] : memref<80xf32, #tpu.memory_space<smem>>
    %625 = vector.broadcast %624 : f32 to vector<1x16xf32>
    %626 = arith.mulf %625, %549 : vector<1x16xf32>
    %627 = arith.addf %623, %626 : vector<1x16xf32>
    %c16_85 = arith.constant 16 : index
    %628 = memref.load %arg6[%c16_85] : memref<80xf32, #tpu.memory_space<smem>>
    %629 = vector.broadcast %628 : f32 to vector<1x16xf32>
    %630 = arith.mulf %629, %554 : vector<1x16xf32>
    %631 = arith.addf %627, %630 : vector<1x16xf32>
    %c17_86 = arith.constant 17 : index
    %632 = memref.load %arg6[%c17_86] : memref<80xf32, #tpu.memory_space<smem>>
    %633 = vector.broadcast %632 : f32 to vector<1x16xf32>
    %634 = arith.mulf %633, %484 : vector<1x16xf32>
    %635 = arith.addf %631, %634 : vector<1x16xf32>
    %c18_87 = arith.constant 18 : index
    %636 = memref.load %arg6[%c18_87] : memref<80xf32, #tpu.memory_space<smem>>
    %637 = vector.broadcast %636 : f32 to vector<1x16xf32>
    %638 = arith.mulf %637, %559 : vector<1x16xf32>
    %639 = arith.addf %635, %638 : vector<1x16xf32>
    %c19_88 = arith.constant 19 : index
    %640 = memref.load %arg6[%c19_88] : memref<80xf32, #tpu.memory_space<smem>>
    %641 = vector.broadcast %640 : f32 to vector<1x16xf32>
    %642 = arith.mulf %641, %564 : vector<1x16xf32>
    %643 = arith.addf %639, %642 : vector<1x16xf32>
    %c0_89 = arith.constant 0 : index
    %644 = memref.load %arg7[%c0_89] : memref<4xf32, #tpu.memory_space<smem>>
    %645 = vector.broadcast %644 : f32 to vector<1x16xf32>
    %646 = arith.addf %643, %645 : vector<1x16xf32>
    %c20_90 = arith.constant 20 : index
    %647 = memref.load %arg6[%c20_90] : memref<80xf32, #tpu.memory_space<smem>>
    %648 = vector.broadcast %647 : f32 to vector<1x16xf32>
    %649 = arith.mulf %648, %489 : vector<1x16xf32>
    %c21_91 = arith.constant 21 : index
    %650 = memref.load %arg6[%c21_91] : memref<80xf32, #tpu.memory_space<smem>>
    %651 = vector.broadcast %650 : f32 to vector<1x16xf32>
    %652 = arith.mulf %651, %494 : vector<1x16xf32>
    %653 = arith.addf %649, %652 : vector<1x16xf32>
    %c22_92 = arith.constant 22 : index
    %654 = memref.load %arg6[%c22_92] : memref<80xf32, #tpu.memory_space<smem>>
    %655 = vector.broadcast %654 : f32 to vector<1x16xf32>
    %656 = arith.mulf %655, %460 : vector<1x16xf32>
    %657 = arith.addf %653, %656 : vector<1x16xf32>
    %c23_93 = arith.constant 23 : index
    %658 = memref.load %arg6[%c23_93] : memref<80xf32, #tpu.memory_space<smem>>
    %659 = vector.broadcast %658 : f32 to vector<1x16xf32>
    %660 = arith.mulf %659, %499 : vector<1x16xf32>
    %661 = arith.addf %657, %660 : vector<1x16xf32>
    %c24_94 = arith.constant 24 : index
    %662 = memref.load %arg6[%c24_94] : memref<80xf32, #tpu.memory_space<smem>>
    %663 = vector.broadcast %662 : f32 to vector<1x16xf32>
    %664 = arith.mulf %663, %504 : vector<1x16xf32>
    %665 = arith.addf %661, %664 : vector<1x16xf32>
    %c25_95 = arith.constant 25 : index
    %666 = memref.load %arg6[%c25_95] : memref<80xf32, #tpu.memory_space<smem>>
    %667 = vector.broadcast %666 : f32 to vector<1x16xf32>
    %668 = arith.mulf %667, %509 : vector<1x16xf32>
    %669 = arith.addf %665, %668 : vector<1x16xf32>
    %c26_96 = arith.constant 26 : index
    %670 = memref.load %arg6[%c26_96] : memref<80xf32, #tpu.memory_space<smem>>
    %671 = vector.broadcast %670 : f32 to vector<1x16xf32>
    %672 = arith.mulf %671, %514 : vector<1x16xf32>
    %673 = arith.addf %669, %672 : vector<1x16xf32>
    %c27_97 = arith.constant 27 : index
    %674 = memref.load %arg6[%c27_97] : memref<80xf32, #tpu.memory_space<smem>>
    %675 = vector.broadcast %674 : f32 to vector<1x16xf32>
    %676 = arith.mulf %675, %468 : vector<1x16xf32>
    %677 = arith.addf %673, %676 : vector<1x16xf32>
    %c28_98 = arith.constant 28 : index
    %678 = memref.load %arg6[%c28_98] : memref<80xf32, #tpu.memory_space<smem>>
    %679 = vector.broadcast %678 : f32 to vector<1x16xf32>
    %680 = arith.mulf %679, %519 : vector<1x16xf32>
    %681 = arith.addf %677, %680 : vector<1x16xf32>
    %c29_99 = arith.constant 29 : index
    %682 = memref.load %arg6[%c29_99] : memref<80xf32, #tpu.memory_space<smem>>
    %683 = vector.broadcast %682 : f32 to vector<1x16xf32>
    %684 = arith.mulf %683, %524 : vector<1x16xf32>
    %685 = arith.addf %681, %684 : vector<1x16xf32>
    %c30_100 = arith.constant 30 : index
    %686 = memref.load %arg6[%c30_100] : memref<80xf32, #tpu.memory_space<smem>>
    %687 = vector.broadcast %686 : f32 to vector<1x16xf32>
    %688 = arith.mulf %687, %529 : vector<1x16xf32>
    %689 = arith.addf %685, %688 : vector<1x16xf32>
    %c31_101 = arith.constant 31 : index
    %690 = memref.load %arg6[%c31_101] : memref<80xf32, #tpu.memory_space<smem>>
    %691 = vector.broadcast %690 : f32 to vector<1x16xf32>
    %692 = arith.mulf %691, %534 : vector<1x16xf32>
    %693 = arith.addf %689, %692 : vector<1x16xf32>
    %c32_102 = arith.constant 32 : index
    %694 = memref.load %arg6[%c32_102] : memref<80xf32, #tpu.memory_space<smem>>
    %695 = vector.broadcast %694 : f32 to vector<1x16xf32>
    %696 = arith.mulf %695, %476 : vector<1x16xf32>
    %697 = arith.addf %693, %696 : vector<1x16xf32>
    %c33_103 = arith.constant 33 : index
    %698 = memref.load %arg6[%c33_103] : memref<80xf32, #tpu.memory_space<smem>>
    %699 = vector.broadcast %698 : f32 to vector<1x16xf32>
    %700 = arith.mulf %699, %539 : vector<1x16xf32>
    %701 = arith.addf %697, %700 : vector<1x16xf32>
    %c34_104 = arith.constant 34 : index
    %702 = memref.load %arg6[%c34_104] : memref<80xf32, #tpu.memory_space<smem>>
    %703 = vector.broadcast %702 : f32 to vector<1x16xf32>
    %704 = arith.mulf %703, %544 : vector<1x16xf32>
    %705 = arith.addf %701, %704 : vector<1x16xf32>
    %c35_105 = arith.constant 35 : index
    %706 = memref.load %arg6[%c35_105] : memref<80xf32, #tpu.memory_space<smem>>
    %707 = vector.broadcast %706 : f32 to vector<1x16xf32>
    %708 = arith.mulf %707, %549 : vector<1x16xf32>
    %709 = arith.addf %705, %708 : vector<1x16xf32>
    %c36_106 = arith.constant 36 : index
    %710 = memref.load %arg6[%c36_106] : memref<80xf32, #tpu.memory_space<smem>>
    %711 = vector.broadcast %710 : f32 to vector<1x16xf32>
    %712 = arith.mulf %711, %554 : vector<1x16xf32>
    %713 = arith.addf %709, %712 : vector<1x16xf32>
    %c37_107 = arith.constant 37 : index
    %714 = memref.load %arg6[%c37_107] : memref<80xf32, #tpu.memory_space<smem>>
    %715 = vector.broadcast %714 : f32 to vector<1x16xf32>
    %716 = arith.mulf %715, %484 : vector<1x16xf32>
    %717 = arith.addf %713, %716 : vector<1x16xf32>
    %c38_108 = arith.constant 38 : index
    %718 = memref.load %arg6[%c38_108] : memref<80xf32, #tpu.memory_space<smem>>
    %719 = vector.broadcast %718 : f32 to vector<1x16xf32>
    %720 = arith.mulf %719, %559 : vector<1x16xf32>
    %721 = arith.addf %717, %720 : vector<1x16xf32>
    %c39_109 = arith.constant 39 : index
    %722 = memref.load %arg6[%c39_109] : memref<80xf32, #tpu.memory_space<smem>>
    %723 = vector.broadcast %722 : f32 to vector<1x16xf32>
    %724 = arith.mulf %723, %564 : vector<1x16xf32>
    %725 = arith.addf %721, %724 : vector<1x16xf32>
    %c1_110 = arith.constant 1 : index
    %726 = memref.load %arg7[%c1_110] : memref<4xf32, #tpu.memory_space<smem>>
    %727 = vector.broadcast %726 : f32 to vector<1x16xf32>
    %728 = arith.addf %725, %727 : vector<1x16xf32>
    %c40_111 = arith.constant 40 : index
    %729 = memref.load %arg6[%c40_111] : memref<80xf32, #tpu.memory_space<smem>>
    %730 = vector.broadcast %729 : f32 to vector<1x16xf32>
    %731 = arith.mulf %730, %489 : vector<1x16xf32>
    %c41_112 = arith.constant 41 : index
    %732 = memref.load %arg6[%c41_112] : memref<80xf32, #tpu.memory_space<smem>>
    %733 = vector.broadcast %732 : f32 to vector<1x16xf32>
    %734 = arith.mulf %733, %494 : vector<1x16xf32>
    %735 = arith.addf %731, %734 : vector<1x16xf32>
    %c42_113 = arith.constant 42 : index
    %736 = memref.load %arg6[%c42_113] : memref<80xf32, #tpu.memory_space<smem>>
    %737 = vector.broadcast %736 : f32 to vector<1x16xf32>
    %738 = arith.mulf %737, %460 : vector<1x16xf32>
    %739 = arith.addf %735, %738 : vector<1x16xf32>
    %c43_114 = arith.constant 43 : index
    %740 = memref.load %arg6[%c43_114] : memref<80xf32, #tpu.memory_space<smem>>
    %741 = vector.broadcast %740 : f32 to vector<1x16xf32>
    %742 = arith.mulf %741, %499 : vector<1x16xf32>
    %743 = arith.addf %739, %742 : vector<1x16xf32>
    %c44_115 = arith.constant 44 : index
    %744 = memref.load %arg6[%c44_115] : memref<80xf32, #tpu.memory_space<smem>>
    %745 = vector.broadcast %744 : f32 to vector<1x16xf32>
    %746 = arith.mulf %745, %504 : vector<1x16xf32>
    %747 = arith.addf %743, %746 : vector<1x16xf32>
    %c45_116 = arith.constant 45 : index
    %748 = memref.load %arg6[%c45_116] : memref<80xf32, #tpu.memory_space<smem>>
    %749 = vector.broadcast %748 : f32 to vector<1x16xf32>
    %750 = arith.mulf %749, %509 : vector<1x16xf32>
    %751 = arith.addf %747, %750 : vector<1x16xf32>
    %c46_117 = arith.constant 46 : index
    %752 = memref.load %arg6[%c46_117] : memref<80xf32, #tpu.memory_space<smem>>
    %753 = vector.broadcast %752 : f32 to vector<1x16xf32>
    %754 = arith.mulf %753, %514 : vector<1x16xf32>
    %755 = arith.addf %751, %754 : vector<1x16xf32>
    %c47_118 = arith.constant 47 : index
    %756 = memref.load %arg6[%c47_118] : memref<80xf32, #tpu.memory_space<smem>>
    %757 = vector.broadcast %756 : f32 to vector<1x16xf32>
    %758 = arith.mulf %757, %468 : vector<1x16xf32>
    %759 = arith.addf %755, %758 : vector<1x16xf32>
    %c48_119 = arith.constant 48 : index
    %760 = memref.load %arg6[%c48_119] : memref<80xf32, #tpu.memory_space<smem>>
    %761 = vector.broadcast %760 : f32 to vector<1x16xf32>
    %762 = arith.mulf %761, %519 : vector<1x16xf32>
    %763 = arith.addf %759, %762 : vector<1x16xf32>
    %c49_120 = arith.constant 49 : index
    %764 = memref.load %arg6[%c49_120] : memref<80xf32, #tpu.memory_space<smem>>
    %765 = vector.broadcast %764 : f32 to vector<1x16xf32>
    %766 = arith.mulf %765, %524 : vector<1x16xf32>
    %767 = arith.addf %763, %766 : vector<1x16xf32>
    %c50_121 = arith.constant 50 : index
    %768 = memref.load %arg6[%c50_121] : memref<80xf32, #tpu.memory_space<smem>>
    %769 = vector.broadcast %768 : f32 to vector<1x16xf32>
    %770 = arith.mulf %769, %529 : vector<1x16xf32>
    %771 = arith.addf %767, %770 : vector<1x16xf32>
    %c51_122 = arith.constant 51 : index
    %772 = memref.load %arg6[%c51_122] : memref<80xf32, #tpu.memory_space<smem>>
    %773 = vector.broadcast %772 : f32 to vector<1x16xf32>
    %774 = arith.mulf %773, %534 : vector<1x16xf32>
    %775 = arith.addf %771, %774 : vector<1x16xf32>
    %c52_123 = arith.constant 52 : index
    %776 = memref.load %arg6[%c52_123] : memref<80xf32, #tpu.memory_space<smem>>
    %777 = vector.broadcast %776 : f32 to vector<1x16xf32>
    %778 = arith.mulf %777, %476 : vector<1x16xf32>
    %779 = arith.addf %775, %778 : vector<1x16xf32>
    %c53_124 = arith.constant 53 : index
    %780 = memref.load %arg6[%c53_124] : memref<80xf32, #tpu.memory_space<smem>>
    %781 = vector.broadcast %780 : f32 to vector<1x16xf32>
    %782 = arith.mulf %781, %539 : vector<1x16xf32>
    %783 = arith.addf %779, %782 : vector<1x16xf32>
    %c54_125 = arith.constant 54 : index
    %784 = memref.load %arg6[%c54_125] : memref<80xf32, #tpu.memory_space<smem>>
    %785 = vector.broadcast %784 : f32 to vector<1x16xf32>
    %786 = arith.mulf %785, %544 : vector<1x16xf32>
    %787 = arith.addf %783, %786 : vector<1x16xf32>
    %c55_126 = arith.constant 55 : index
    %788 = memref.load %arg6[%c55_126] : memref<80xf32, #tpu.memory_space<smem>>
    %789 = vector.broadcast %788 : f32 to vector<1x16xf32>
    %790 = arith.mulf %789, %549 : vector<1x16xf32>
    %791 = arith.addf %787, %790 : vector<1x16xf32>
    %c56_127 = arith.constant 56 : index
    %792 = memref.load %arg6[%c56_127] : memref<80xf32, #tpu.memory_space<smem>>
    %793 = vector.broadcast %792 : f32 to vector<1x16xf32>
    %794 = arith.mulf %793, %554 : vector<1x16xf32>
    %795 = arith.addf %791, %794 : vector<1x16xf32>
    %c57_128 = arith.constant 57 : index
    %796 = memref.load %arg6[%c57_128] : memref<80xf32, #tpu.memory_space<smem>>
    %797 = vector.broadcast %796 : f32 to vector<1x16xf32>
    %798 = arith.mulf %797, %484 : vector<1x16xf32>
    %799 = arith.addf %795, %798 : vector<1x16xf32>
    %c58_129 = arith.constant 58 : index
    %800 = memref.load %arg6[%c58_129] : memref<80xf32, #tpu.memory_space<smem>>
    %801 = vector.broadcast %800 : f32 to vector<1x16xf32>
    %802 = arith.mulf %801, %559 : vector<1x16xf32>
    %803 = arith.addf %799, %802 : vector<1x16xf32>
    %c59_130 = arith.constant 59 : index
    %804 = memref.load %arg6[%c59_130] : memref<80xf32, #tpu.memory_space<smem>>
    %805 = vector.broadcast %804 : f32 to vector<1x16xf32>
    %806 = arith.mulf %805, %564 : vector<1x16xf32>
    %807 = arith.addf %803, %806 : vector<1x16xf32>
    %c2_131 = arith.constant 2 : index
    %808 = memref.load %arg7[%c2_131] : memref<4xf32, #tpu.memory_space<smem>>
    %809 = vector.broadcast %808 : f32 to vector<1x16xf32>
    %810 = arith.addf %807, %809 : vector<1x16xf32>
    %c60_132 = arith.constant 60 : index
    %811 = memref.load %arg6[%c60_132] : memref<80xf32, #tpu.memory_space<smem>>
    %812 = vector.broadcast %811 : f32 to vector<1x16xf32>
    %813 = arith.mulf %812, %489 : vector<1x16xf32>
    %c61_133 = arith.constant 61 : index
    %814 = memref.load %arg6[%c61_133] : memref<80xf32, #tpu.memory_space<smem>>
    %815 = vector.broadcast %814 : f32 to vector<1x16xf32>
    %816 = arith.mulf %815, %494 : vector<1x16xf32>
    %817 = arith.addf %813, %816 : vector<1x16xf32>
    %c62_134 = arith.constant 62 : index
    %818 = memref.load %arg6[%c62_134] : memref<80xf32, #tpu.memory_space<smem>>
    %819 = vector.broadcast %818 : f32 to vector<1x16xf32>
    %820 = arith.mulf %819, %460 : vector<1x16xf32>
    %821 = arith.addf %817, %820 : vector<1x16xf32>
    %c63_135 = arith.constant 63 : index
    %822 = memref.load %arg6[%c63_135] : memref<80xf32, #tpu.memory_space<smem>>
    %823 = vector.broadcast %822 : f32 to vector<1x16xf32>
    %824 = arith.mulf %823, %499 : vector<1x16xf32>
    %825 = arith.addf %821, %824 : vector<1x16xf32>
    %c64_136 = arith.constant 64 : index
    %826 = memref.load %arg6[%c64_136] : memref<80xf32, #tpu.memory_space<smem>>
    %827 = vector.broadcast %826 : f32 to vector<1x16xf32>
    %828 = arith.mulf %827, %504 : vector<1x16xf32>
    %829 = arith.addf %825, %828 : vector<1x16xf32>
    %c65_137 = arith.constant 65 : index
    %830 = memref.load %arg6[%c65_137] : memref<80xf32, #tpu.memory_space<smem>>
    %831 = vector.broadcast %830 : f32 to vector<1x16xf32>
    %832 = arith.mulf %831, %509 : vector<1x16xf32>
    %833 = arith.addf %829, %832 : vector<1x16xf32>
    %c66_138 = arith.constant 66 : index
    %834 = memref.load %arg6[%c66_138] : memref<80xf32, #tpu.memory_space<smem>>
    %835 = vector.broadcast %834 : f32 to vector<1x16xf32>
    %836 = arith.mulf %835, %514 : vector<1x16xf32>
    %837 = arith.addf %833, %836 : vector<1x16xf32>
    %c67_139 = arith.constant 67 : index
    %838 = memref.load %arg6[%c67_139] : memref<80xf32, #tpu.memory_space<smem>>
    %839 = vector.broadcast %838 : f32 to vector<1x16xf32>
    %840 = arith.mulf %839, %468 : vector<1x16xf32>
    %841 = arith.addf %837, %840 : vector<1x16xf32>
    %c68_140 = arith.constant 68 : index
    %842 = memref.load %arg6[%c68_140] : memref<80xf32, #tpu.memory_space<smem>>
    %843 = vector.broadcast %842 : f32 to vector<1x16xf32>
    %844 = arith.mulf %843, %519 : vector<1x16xf32>
    %845 = arith.addf %841, %844 : vector<1x16xf32>
    %c69_141 = arith.constant 69 : index
    %846 = memref.load %arg6[%c69_141] : memref<80xf32, #tpu.memory_space<smem>>
    %847 = vector.broadcast %846 : f32 to vector<1x16xf32>
    %848 = arith.mulf %847, %524 : vector<1x16xf32>
    %849 = arith.addf %845, %848 : vector<1x16xf32>
    %c70_142 = arith.constant 70 : index
    %850 = memref.load %arg6[%c70_142] : memref<80xf32, #tpu.memory_space<smem>>
    %851 = vector.broadcast %850 : f32 to vector<1x16xf32>
    %852 = arith.mulf %851, %529 : vector<1x16xf32>
    %853 = arith.addf %849, %852 : vector<1x16xf32>
    %c71_143 = arith.constant 71 : index
    %854 = memref.load %arg6[%c71_143] : memref<80xf32, #tpu.memory_space<smem>>
    %855 = vector.broadcast %854 : f32 to vector<1x16xf32>
    %856 = arith.mulf %855, %534 : vector<1x16xf32>
    %857 = arith.addf %853, %856 : vector<1x16xf32>
    %c72_144 = arith.constant 72 : index
    %858 = memref.load %arg6[%c72_144] : memref<80xf32, #tpu.memory_space<smem>>
    %859 = vector.broadcast %858 : f32 to vector<1x16xf32>
    %860 = arith.mulf %859, %476 : vector<1x16xf32>
    %861 = arith.addf %857, %860 : vector<1x16xf32>
    %c73_145 = arith.constant 73 : index
    %862 = memref.load %arg6[%c73_145] : memref<80xf32, #tpu.memory_space<smem>>
    %863 = vector.broadcast %862 : f32 to vector<1x16xf32>
    %864 = arith.mulf %863, %539 : vector<1x16xf32>
    %865 = arith.addf %861, %864 : vector<1x16xf32>
    %c74_146 = arith.constant 74 : index
    %866 = memref.load %arg6[%c74_146] : memref<80xf32, #tpu.memory_space<smem>>
    %867 = vector.broadcast %866 : f32 to vector<1x16xf32>
    %868 = arith.mulf %867, %544 : vector<1x16xf32>
    %869 = arith.addf %865, %868 : vector<1x16xf32>
    %c75_147 = arith.constant 75 : index
    %870 = memref.load %arg6[%c75_147] : memref<80xf32, #tpu.memory_space<smem>>
    %871 = vector.broadcast %870 : f32 to vector<1x16xf32>
    %872 = arith.mulf %871, %549 : vector<1x16xf32>
    %873 = arith.addf %869, %872 : vector<1x16xf32>
    %c76_148 = arith.constant 76 : index
    %874 = memref.load %arg6[%c76_148] : memref<80xf32, #tpu.memory_space<smem>>
    %875 = vector.broadcast %874 : f32 to vector<1x16xf32>
    %876 = arith.mulf %875, %554 : vector<1x16xf32>
    %877 = arith.addf %873, %876 : vector<1x16xf32>
    %c77_149 = arith.constant 77 : index
    %878 = memref.load %arg6[%c77_149] : memref<80xf32, #tpu.memory_space<smem>>
    %879 = vector.broadcast %878 : f32 to vector<1x16xf32>
    %880 = arith.mulf %879, %484 : vector<1x16xf32>
    %881 = arith.addf %877, %880 : vector<1x16xf32>
    %c78_150 = arith.constant 78 : index
    %882 = memref.load %arg6[%c78_150] : memref<80xf32, #tpu.memory_space<smem>>
    %883 = vector.broadcast %882 : f32 to vector<1x16xf32>
    %884 = arith.mulf %883, %559 : vector<1x16xf32>
    %885 = arith.addf %881, %884 : vector<1x16xf32>
    %c79_151 = arith.constant 79 : index
    %886 = memref.load %arg6[%c79_151] : memref<80xf32, #tpu.memory_space<smem>>
    %887 = vector.broadcast %886 : f32 to vector<1x16xf32>
    %888 = arith.mulf %887, %564 : vector<1x16xf32>
    %889 = arith.addf %885, %888 : vector<1x16xf32>
    %c3_152 = arith.constant 3 : index
    %890 = memref.load %arg7[%c3_152] : memref<4xf32, #tpu.memory_space<smem>>
    %891 = vector.broadcast %890 : f32 to vector<1x16xf32>
    %892 = arith.addf %889, %891 : vector<1x16xf32>
    %cst_153 = arith.constant dense<0.000000e+00> : vector<16xf32>
    %893 = vector.multi_reduction <add>, %646, %cst_153 [0] : vector<1x16xf32> to vector<16xf32>
    %894 = vector.shape_cast %893 : vector<16xf32> to vector<1x16xf32>
    %cst_154 = arith.constant dense<0.000000e+00> : vector<16xf32>
    %895 = vector.multi_reduction <add>, %728, %cst_154 [0] : vector<1x16xf32> to vector<16xf32>
    %896 = vector.shape_cast %895 : vector<16xf32> to vector<1x16xf32>
    %cst_155 = arith.constant dense<0.000000e+00> : vector<16xf32>
    %897 = vector.multi_reduction <add>, %810, %cst_155 [0] : vector<1x16xf32> to vector<16xf32>
    %898 = vector.shape_cast %897 : vector<16xf32> to vector<1x16xf32>
    %cst_156 = arith.constant dense<0.000000e+00> : vector<16xf32>
    %899 = vector.multi_reduction <add>, %892, %cst_156 [0] : vector<1x16xf32> to vector<16xf32>
    %900 = vector.shape_cast %899 : vector<16xf32> to vector<1x16xf32>
    %901 = arith.mulf %646, %646 : vector<1x16xf32>
    %cst_157 = arith.constant dense<0.000000e+00> : vector<16xf32>
    %902 = vector.multi_reduction <add>, %901, %cst_157 [0] : vector<1x16xf32> to vector<16xf32>
    %903 = vector.shape_cast %902 : vector<16xf32> to vector<1x16xf32>
    %904 = arith.mulf %728, %728 : vector<1x16xf32>
    %cst_158 = arith.constant dense<0.000000e+00> : vector<16xf32>
    %905 = vector.multi_reduction <add>, %904, %cst_158 [0] : vector<1x16xf32> to vector<16xf32>
    %906 = vector.shape_cast %905 : vector<16xf32> to vector<1x16xf32>
    %907 = arith.mulf %810, %810 : vector<1x16xf32>
    %cst_159 = arith.constant dense<0.000000e+00> : vector<16xf32>
    %908 = vector.multi_reduction <add>, %907, %cst_159 [0] : vector<1x16xf32> to vector<16xf32>
    %909 = vector.shape_cast %908 : vector<16xf32> to vector<1x16xf32>
    %910 = arith.mulf %892, %892 : vector<1x16xf32>
    %cst_160 = arith.constant dense<0.000000e+00> : vector<16xf32>
    %911 = vector.multi_reduction <add>, %910, %cst_160 [0] : vector<1x16xf32> to vector<16xf32>
    %912 = vector.shape_cast %911 : vector<16xf32> to vector<1x16xf32>
    %913 = tpu.concatenate %894, %896, %898, %900, %903, %906, %909, %912 in 0 : vector<1x16xf32>, vector<1x16xf32>, vector<1x16xf32>, vector<1x16xf32>, vector<1x16xf32>, vector<1x16xf32>, vector<1x16xf32>, vector<1x16xf32> -> vector<8x16xf32>
    %914 = vector.shape_cast %913 : vector<8x16xf32> to vector<1x8x16xf32>
    %c0_161 = arith.constant 0 : index
    %c0_162 = arith.constant 0 : index
    %c0_163 = arith.constant 0 : index
    %915 = vector.load %arg8[%c0_161, %c0_162, %c0_163] : memref<1x8x16xf32, #tpu.memory_space<vmem>>, vector<1x8x16xf32>
    tpu.vector_store %arg8[%c0_161, %c0_162, %c0_163], %914 {strides = array<i32>} : memref<1x8x16xf32, #tpu.memory_space<vmem>>, vector<1x8x16xf32>,
    return
  }
  func.func @transform_0(%arg0: i32) -> (i32, i32, i32) {
    %c0_i32 = arith.constant 0 : i32
    %c0_i32_0 = arith.constant 0 : i32
    %c0_i32_1 = arith.constant 0 : i32
    return %arg0, %c0_i32, %c0_i32_0 : i32, i32, i32
  }
  func.func @transform_1(%arg0: i32) -> i32 {
    %c0_i32 = arith.constant 0 : i32
    %c0_i32_0 = arith.constant 0 : i32
    return %c0_i32 : i32
  }
  func.func @transform_2(%arg0: i32) -> i32 {
    %c0_i32 = arith.constant 0 : i32
    %c0_i32_0 = arith.constant 0 : i32
    return %c0_i32 : i32
  }
  func.func @transform_3(%arg0: i32) -> i32 {
    %c0_i32 = arith.constant 0 : i32
    %c0_i32_0 = arith.constant 0 : i32
    return %c0_i32 : i32
  }
  func.func @transform_4(%arg0: i32) -> i32 {
    %c0_i32 = arith.constant 0 : i32
    %c0_i32_0 = arith.constant 0 : i32
    return %c0_i32 : i32
  }
  func.func @transform_5(%arg0: i32) -> i32 {
    %c0_i32 = arith.constant 0 : i32
    %c0_i32_0 = arith.constant 0 : i32
    return %c0_i32 : i32
  }
  func.func @transform_6(%arg0: i32) -> i32 {
    %c0_i32 = arith.constant 0 : i32
    %c0_i32_0 = arith.constant 0 : i32
    return %c0_i32 : i32
  }
  func.func @transform_7(%arg0: i32) -> (i32, i32, i32) {
    %c0_i32 = arith.constant 0 : i32
    %c0_i32_0 = arith.constant 0 : i32
    %c0_i32_1 = arith.constant 0 : i32
    return %arg0, %c0_i32, %c0_i32_0 : i32, i32, i32
  }
}

</mosaic_0001>

<llo_original>
// kernel: _resblock_forward_impl.3
$region0: #{_resblock_forward_impl.3}
  #allocation0 [shape = 'u32[]', space=smem, size = 0x4, offset = 0x4, fixed_abs, tag = 'smem constant byte address 0x4 - core index']
  #allocation1 [shape = 'u32[72,128]{1,0:T(1,128)}', space=vmem, size = 0x9000, scoped, tag = 'internal scratch']
  %s0 = inlined_call_operand.vmem [shape: f32[2,4,16], index: 0, kind: input, shape index: {}]
  %s1 = inlined_call_operand.vmem [shape: f32[80], index: 1, kind: input, shape index: {}]
  %s2 = inlined_call_operand.vmem [shape: f32[4], index: 2, kind: input, shape index: {}]
  %s3 = inlined_call_operand.vmem [shape: f32[2,8,16], index: 3, kind: output, shape index: {}]
  %s4 = sld [smem:[#allocation0]]
  $region53: #{_resblock_forward_impl.3} parent=0
    _
  %s6 = ssub.s32 1, %s4
  %s7 = scalar_select 0, %s6, %s4
  $region1: #{_resblock_forward_impl.3} parent=0
    #allocation2 [shape = 'u8[512]{0}', space=smem, size = 0x200, scoped, tag = 'input window, operand 1, single buffered']
    #allocation3 [shape = 's32[2]{0}', space=sflag, size = 0x8, scoped, tag = 'scoped memory for _resblock_forward_impl.3']
    #allocation4 [shape = 'u8[512]{0}', space=smem, size = 0x200, scoped, tag = 'input window, operand 2, single buffered']
    #allocation5 [shape = 's32[1]{0}', space=sflag, size = 0x4, scoped, tag = 'scoped memory for _resblock_forward_impl.3']
    %8 = vsyncpa [#allocation3], 0
    %9 = vsyncpa [#allocation5], 0
    loop: start=0, step=1, limit=4
    $region2: #{_resblock_forward_impl.3} parent=1 // loop_pre_header
      _
    $region3: #{_resblock_forward_impl.3} parent=1 // loop_header
      %s11 = sphi 0, %s15
      %p12 = scmp.ge.s32.totalorder %s11, 4
      %s21 = sphi 0, %s23
      %s24 = sphi 0, %s21
      %s25 = sphi 0, %s24
      %s41 = sphi 0, %s25
      %s45 = sphi 0, %s45
      %s47 = sphi 0, %s45
      %s48 = sphi 0, %s47
      %s62 = sphi 0, %s48
      %s66 = sphi 0, %s66
      %s68 = sphi 0, %s66
      %s69 = sphi 0, %s68
      %s83 = sphi 0, %s69
      %s89 = sphi 0, %s91
      %s92 = sphi 0, %s89
      %s93 = sphi 0, %s92
      %s109 = sphi 0, %s93
    $region4: #{_resblock_forward_impl.3} parent=1 // loop_header_branch
      %14 = sbr.rel (%p12) target = $region8
    $region5: #{_resblock_forward_impl.3} parent=1 // loop_body
      %s16 = ssub.s32 %s11, 1
      %s17 = ssub.s32 %s11, 2
      %s18 = sadd.s32 %s11, 1
      %s19 = ssub.s32 %s11, %s18
      %p20 = scmp.eq.s32.totalorder %s19, 0
      %s22 = sadd.s32 %s21, 1
      %s23 = scalar_select %p20, %s21, %s22
      %p26 = pneg %p20
      %p27 = scmp.eq.s32.totalorder %s11, 1
      %p28 = por %p26, %p27
      %p29 = scmp.ne.s32.totalorder %s21, %s24
      %p30 = scmp.eq.s32.totalorder %s11, 0
      %p31 = por %p29, %p30
      %p32 = scmp.ne.s32.totalorder %s21, %s24
      %p33 = scmp.eq.s32.totalorder %s16, 1
      %p34 = por %p32, %p33
      %p35 = scmp.ne.s32.totalorder %s24, %s25
      %p36 = scmp.eq.s32.totalorder %s16, 0
      %p37 = por %p35, %p36
      %p38 = scmp.ne.s32.totalorder %s24, %s25
      %p39 = scmp.eq.s32.totalorder %s17, 1
      %p40 = por %p38, %p39
      %p42 = scmp.ne.s32.totalorder %s25, %s41
      %p43 = scmp.eq.s32.totalorder %s17, 0
      %p44 = por %p42, %p43
      %s46 = sadd.s32 %s45, 1
      %p49 = scmp.eq.s32.totalorder %s11, 1
      %p50 = scmp.ne.s32.totalorder %s45, %s47
      %p51 = scmp.eq.s32.totalorder %s11, 0
      %p52 = por %p50, %p51
      %p53 = scmp.ne.s32.totalorder %s45, %s47
      %p54 = scmp.eq.s32.totalorder %s16, 1
      %p55 = por %p53, %p54
      %p56 = scmp.ne.s32.totalorder %s47, %s48
      %p57 = scmp.eq.s32.totalorder %s16, 0
      %p58 = por %p56, %p57
      %p59 = scmp.ne.s32.totalorder %s47, %s48
      %p60 = scmp.eq.s32.totalorder %s17, 1
      %p61 = por %p59, %p60
      %p63 = scmp.ne.s32.totalorder %s48, %s62
      %p64 = scmp.eq.s32.totalorder %s17, 0
      %p65 = por %p63, %p64
      %s67 = sadd.s32 %s66, 1
      %p70 = scmp.eq.s32.totalorder %s11, 1
      %p71 = scmp.ne.s32.totalorder %s66, %s68
      %p72 = scmp.eq.s32.totalorder %s11, 0
      %p73 = por %p71, %p72
      %p74 = scmp.ne.s32.totalorder %s66, %s68
      %p75 = scmp.eq.s32.totalorder %s16, 1
      %p76 = por %p74, %p75
      %p77 = scmp.ne.s32.totalorder %s68, %s69
      %p78 = scmp.eq.s32.totalorder %s16, 0
      %p79 = por %p77, %p78
      %p80 = scmp.ne.s32.totalorder %s68, %s69
      %p81 = scmp.eq.s32.totalorder %s17, 1
      %p82 = por %p80, %p81
      %p84 = scmp.ne.s32.totalorder %s69, %s83
      %p85 = scmp.eq.s32.totalorder %s17, 0
      %p86 = por %p84, %p85
      %s87 = ssub.s32 %s11, %s18
      %p88 = scmp.eq.s32.totalorder %s87, 0
      %s90 = sadd.s32 %s89, 1
      %s91 = scalar_select %p88, %s89, %s90
      %p94 = pneg %p88
      %p95 = scmp.eq.s32.totalorder %s11, 1
      %p96 = por %p94, %p95
      %p97 = scmp.ne.s32.totalorder %s89, %s92
      %p98 = scmp.eq.s32.totalorder %s11, 0
      %p99 = por %p97, %p98
      %p100 = scmp.ne.s32.totalorder %s89, %s92
      %p101 = scmp.eq.s32.totalorder %s16, 1
      %p102 = por %p100, %p101
      %p103 = scmp.ne.s32.totalorder %s92, %s93
      %p104 = scmp.eq.s32.totalorder %s16, 0
      %p105 = por %p103, %p104
      %p106 = scmp.ne.s32.totalorder %s92, %s93
      %p107 = scmp.eq.s32.totalorder %s17, 1
      %p108 = por %p106, %p107
      %p110 = scmp.ne.s32.totalorder %s93, %s109
      %p111 = scmp.eq.s32.totalorder %s17, 0
      %p112 = por %p110, %p111
      %p113 = scmp.le.s32.totalorder 1, %s11
      %p114 = scmp.lt.s32.totalorder %s11, 3
      %p115 = pnand %p113, %p114
      %p116 = pneg %p115
      // Predicated region
      $region9: #{_resblock_forward_impl.3} parent=5 // pred_check
        _
      $region10: #{_resblock_forward_impl.3} parent=5 // pred_check_branch
        %118 = sbr.rel (%p115) target = $region12
      $region11: #{_resblock_forward_impl.3} parent=5 // pred_region
        %s119 = ssub.s32 %s11, 1
        // Predicated region
        $region13: #{_resblock_forward_impl.3} parent=11 // pred_check
          %p120 = pneg %p58
        $region14: #{_resblock_forward_impl.3} parent=11 // pred_check_branch
          %122 = sbr.rel (%p120) target = $region16
        $region15: #{_resblock_forward_impl.3} parent=11 // pred_region
          %124 = vsyncadd [#allocation3], 0
          %s126 = sshll.u32 %s1, 4
          %s127 = int_to_ptr.vmem [resolvable:$true] %s126
          %129 = dma.vmem_to_smem %s127, 16, [#allocation2], [#allocation3]
        $region16: #{_resblock_forward_impl.3} parent=11 // pred_fallthru
          _
        // Predicated region
        $region17: #{_resblock_forward_impl.3} parent=11 // pred_check
          %p130 = pneg %p79
        $region18: #{_resblock_forward_impl.3} parent=11 // pred_check_branch
          %132 = sbr.rel (%p130) target = $region20
        $region19: #{_resblock_forward_impl.3} parent=11 // pred_region
          %134 = vsyncadd [#allocation5], 0
          %s136 = sshll.u32 %s2, 4
          %s137 = int_to_ptr.vmem [resolvable:$true] %s136
          %139 = dma.vmem_to_smem %s137, 16, [#allocation4], [#allocation5]
        $region20: #{_resblock_forward_impl.3} parent=11 // pred_fallthru
          _
      $region12: #{_resblock_forward_impl.3} parent=5 // pred_fallthru
        _
      %p140 = scmp.lt.s32.totalorder %s11, 2
      // Predicated region
      $region21: #{_resblock_forward_impl.3} parent=5 // pred_check
        %p141 = pneg %p140
      $region22: #{_resblock_forward_impl.3} parent=5 // pred_check_branch
        %143 = sbr.rel (%p141) target = $region24
      $region23: #{_resblock_forward_impl.3} parent=5 // pred_region
        // Predicated region
        $region25: #{_resblock_forward_impl.3} parent=23 // pred_check
          %p144 = pneg %p31
        $region26: #{_resblock_forward_impl.3} parent=23 // pred_check_branch
          %146 = sbr.rel (%p144) target = $region28
        $region27: #{_resblock_forward_impl.3} parent=23 // pred_region
          %p147 = scmp.lt.s32.totalorder %s11, 1
          %s148 = scalar_select %p147, %s11, 1
          %s149 = smul.addr %s148, 4
          %s150 = scalar_lea.vmem %s0, %s149
        $region28: #{_resblock_forward_impl.3} parent=23 // pred_fallthru
          _
      $region24: #{_resblock_forward_impl.3} parent=5 // pred_fallthru
        _
      %p151 = scmp.le.s32.totalorder 1, %s11
      %p152 = scmp.lt.s32.totalorder %s11, 3
      %p153 = pnand %p151, %p152
      %p154 = pneg %p153
      // Predicated region
      $region29: #{_resblock_forward_impl.3} parent=5 // pred_check
        _
      $region30: #{_resblock_forward_impl.3} parent=5 // pred_check_branch
        %156 = sbr.rel (%p153) target = $region32
      $region31: #{_resblock_forward_impl.3} parent=5 // pred_region
        %s157 = ssub.s32 %s11, 1
        // Predicated region
        $region33: #{_resblock_forward_impl.3} parent=31 // pred_check
          %p158 = pneg %p58
        $region34: #{_resblock_forward_impl.3} parent=31 // pred_check_branch
          %160 = sbr.rel (%p158) target = $region36
        $region35: #{_resblock_forward_impl.3} parent=31 // pred_region
          %162 = dma.done [#allocation3], 16
        $region36: #{_resblock_forward_impl.3} parent=31 // pred_fallthru
          _
        // Predicated region
        $region37: #{_resblock_forward_impl.3} parent=31 // pred_check
          %p163 = pneg %p79
        $region38: #{_resblock_forward_impl.3} parent=31 // pred_check_branch
          %165 = sbr.rel (%p163) target = $region40
        $region39: #{_resblock_forward_impl.3} parent=31 // pred_region
          %167 = dma.done [#allocation5], 16
        $region40: #{_resblock_forward_impl.3} parent=31 // pred_fallthru
          _
        %168 = sfence
        %p169 = scmp.lt.s32.totalorder %s16, 1
        %s170 = scalar_select %p169, %s16, 1
        %s171 = smul.addr %s170, 4
        %s172 = scalar_lea.vmem %s0, %s171
        %p173 = pneg %p37
        %p174 = pneg %p34
        %p175 = pneg %p58
        %p176 = pneg %p55
        %p177 = pneg %p79
        %p178 = pneg %p76
        %p179 = pneg %p105
        %p180 = pneg %p102
        %p181 = scmp.lt.s32.totalorder %s16, 1
        %s182 = scalar_select %p181, %s16, 1
        %s183 = smul.addr %s182, 8
        %s184 = scalar_lea.vmem %s3, %s183
        %p185 = scmp.lt.s32.totalorder %s16, 1
        %s186 = scalar_select %p185, %s16, 1
        %s187 = smul.addr %s186, 4
        %s188 = scalar_lea.vmem %s0, %s187
        %p189 = scmp.lt.s32.totalorder %s16, 1
        %s190 = scalar_select %p189, %s16, 1
        %s191 = smul.addr %s190, 8
        %s192 = scalar_lea.vmem %s3, %s191
        %v193 = vlaneseq
        %v194 = vand.u32 %v193, 127
        %v195 = vadd.s32 %v194, 4294967294
        %vm196 = vcmp.ge.s32.totalorder %v195, 0
        %vm197 = vcmp.lt.s32.totalorder %v195, 16
        %vm198 = vmand %vm196, %vm197
        %v199 = vadd.s32 %v194, 4294967295
        %vm200 = vcmp.ge.s32.totalorder %v199, 0
        %vm201 = vcmp.lt.s32.totalorder %v199, 16
        %vm202 = vmand %vm200, %vm201
        %v203 = vadd.s32 %v194, 1
        %vm204 = vcmp.ge.s32.totalorder %v203, 0
        %vm205 = vcmp.lt.s32.totalorder %v203, 16
        %vm206 = vmand %vm204, %vm205
        %v207 = vadd.s32 %v194, 2
        %vm208 = vcmp.ge.s32.totalorder %v207, 0
        %vm209 = vcmp.lt.s32.totalorder %v207, 16
        %vm210 = vmand %vm208, %vm209
        %v211 = vld [vmem:[%s188] sm:$0x1]
        %v212 = vld [vmem:[%s188 + $0x1] sm:$0x1]
        %v213 = vld [vmem:[%s188 + $0x2] sm:$0x1]
        %v214 = vld [vmem:[%s188 + $0x3] sm:$0x1]
        %216 = vrot.lane.b32.xlu0 %v211, 114
        %v217 = vpop.permute.xlu0 %216
        %219 = vrot.lane.b32.xlu0 %v211, 2
        %v220 = vpop.permute.xlu0 %219
        %vm222 = vcmask 15360
        %v223 = vsel %vm222, %v217, %v220
        %v224 = vsel %vm198, %v223, 0.0
        %225 = vrot.lane.b32.xlu0 %v211, 113
        %v226 = vpop.permute.xlu0 %225
        %228 = vrot.lane.b32.xlu0 %v211, 1
        %v229 = vpop.permute.xlu0 %228
        %vm231 = vcmask 7168
        %v232 = vsel %vm231, %v226, %v229
        %v233 = vsel %vm202, %v232, 0.0
        %234 = vrot.lane.b32.xlu0 %v211, 127
        %v235 = vpop.permute.xlu0 %234
        %237 = vrot.lane.b32.xlu0 %v211, 15
        %v238 = vpop.permute.xlu0 %237
        %vm240 = vcmask 121856
        %v241 = vsel %vm240, %v235, %v238
        %v242 = vsel %vm206, %v241, 0.0
        %243 = vrot.lane.b32.xlu0 %v211, 126
        %v244 = vpop.permute.xlu0 %243
        %246 = vrot.lane.b32.xlu0 %v211, 14
        %v247 = vpop.permute.xlu0 %246
        %vm249 = vcmask 113664
        %v250 = vsel %vm249, %v244, %v247
        %v251 = vsel %vm210, %v250, 0.0
        %253 = vrot.lane.b32.xlu0 %v212, 114
        %v254 = vpop.permute.xlu0 %253
        %256 = vrot.lane.b32.xlu0 %v212, 2
        %v257 = vpop.permute.xlu0 %256
        %v259 = vsel %vm222, %v254, %v257
        %v260 = vsel %vm198, %v259, 0.0
        %261 = vrot.lane.b32.xlu0 %v212, 113
        %v262 = vpop.permute.xlu0 %261
        %264 = vrot.lane.b32.xlu0 %v212, 1
        %v265 = vpop.permute.xlu0 %264
        %v267 = vsel %vm231, %v262, %v265
        %v268 = vsel %vm202, %v267, 0.0
        %269 = vrot.lane.b32.xlu0 %v212, 127
        %v270 = vpop.permute.xlu0 %269
        %272 = vrot.lane.b32.xlu0 %v212, 15
        %v273 = vpop.permute.xlu0 %272
        %v275 = vsel %vm240, %v270, %v273
        %v276 = vsel %vm206, %v275, 0.0
        %277 = vrot.lane.b32.xlu0 %v212, 126
        %v278 = vpop.permute.xlu0 %277
        %280 = vrot.lane.b32.xlu0 %v212, 14
        %v281 = vpop.permute.xlu0 %280
        %v283 = vsel %vm249, %v278, %v281
        %v284 = vsel %vm210, %v283, 0.0
        %286 = vrot.lane.b32.xlu0 %v213, 114
        %v287 = vpop.permute.xlu0 %286
        %289 = vrot.lane.b32.xlu0 %v213, 2
        %v290 = vpop.permute.xlu0 %289
        %v292 = vsel %vm222, %v287, %v290
        %v293 = vsel %vm198, %v292, 0.0
        %294 = vrot.lane.b32.xlu0 %v213, 113
        %v295 = vpop.permute.xlu0 %294
        %297 = vrot.lane.b32.xlu0 %v213, 1
        %v298 = vpop.permute.xlu0 %297
        %v300 = vsel %vm231, %v295, %v298
        %v301 = vsel %vm202, %v300, 0.0
        %302 = vrot.lane.b32.xlu0 %v213, 127
        %v303 = vpop.permute.xlu0 %302
        %305 = vrot.lane.b32.xlu0 %v213, 15
        %v306 = vpop.permute.xlu0 %305
        %v308 = vsel %vm240, %v303, %v306
        %v309 = vsel %vm206, %v308, 0.0
        %310 = vrot.lane.b32.xlu0 %v213, 126
        %v311 = vpop.permute.xlu0 %310
        %313 = vrot.lane.b32.xlu0 %v213, 14
        %v314 = vpop.permute.xlu0 %313
        %v316 = vsel %vm249, %v311, %v314
        %v317 = vsel %vm210, %v316, 0.0
        %319 = vrot.lane.b32.xlu0 %v214, 114
        %v320 = vpop.permute.xlu0 %319
        %322 = vrot.lane.b32.xlu0 %v214, 2
        %v323 = vpop.permute.xlu0 %322
        %v325 = vsel %vm222, %v320, %v323
        %v326 = vsel %vm198, %v325, 0.0
        %327 = vrot.lane.b32.xlu0 %v214, 113
        %v328 = vpop.permute.xlu0 %327
        %330 = vrot.lane.b32.xlu0 %v214, 1
        %v331 = vpop.permute.xlu0 %330
        %v333 = vsel %vm231, %v328, %v331
        %v334 = vsel %vm202, %v333, 0.0
        %335 = vrot.lane.b32.xlu0 %v214, 127
        %v336 = vpop.permute.xlu0 %335
        %338 = vrot.lane.b32.xlu0 %v214, 15
        %v339 = vpop.permute.xlu0 %338
        %v341 = vsel %vm240, %v336, %v339
        %v342 = vsel %vm206, %v341, 0.0
        %343 = vrot.lane.b32.xlu0 %v214, 126
        %v344 = vpop.permute.xlu0 %343
        %346 = vrot.lane.b32.xlu0 %v214, 14
        %v347 = vpop.permute.xlu0 %346
        %v349 = vsel %vm249, %v344, %v347
        %v350 = vsel %vm210, %v349, 0.0
        %s351 = sld [smem:[#allocation2]]
        %v352 = vstv %s351
        %v353 = vmul.f32 %v352, %v224
        %s354 = sld [smem:[#allocation2 + $0x1]]
        %v355 = vstv %s354
        %v356 = vmul.f32 %v355, %v233
        %v357 = vadd.f32 %v353, %v356
        %s358 = sld [smem:[#allocation2 + $0x2]]
        %v359 = vstv %s358
        %v360 = vmul.f32 %v359, %v211
        %v361 = vadd.f32 %v357, %v360
        %s362 = sld [smem:[#allocation2 + $0x3]]
        %v363 = vstv %s362
        %v364 = vmul.f32 %v363, %v242
        %v365 = vadd.f32 %v361, %v364
        %s366 = sld [smem:[#allocation2 + $0x4]]
        %v367 = vstv %s366
        %v368 = vmul.f32 %v367, %v251
        %v369 = vadd.f32 %v365, %v368
        %s370 = sld [smem:[#allocation2 + $0x5]]
        %v371 = vstv %s370
        %v372 = vmul.f32 %v371, %v260
        %v373 = vadd.f32 %v369, %v372
        %s374 = sld [smem:[#allocation2 + $0x6]]
        %v375 = vstv %s374
        %v376 = vmul.f32 %v375, %v268
        %v377 = vadd.f32 %v373, %v376
        %s378 = sld [smem:[#allocation2 + $0x7]]
        %v379 = vstv %s378
        %v380 = vmul.f32 %v379, %v212
        %v381 = vadd.f32 %v377, %v380
        %s382 = sld [smem:[#allocation2 + $0x8]]
        %v383 = vstv %s382
        %v384 = vmul.f32 %v383, %v276
        %v385 = vadd.f32 %v381, %v384
        %s386 = sld [smem:[#allocation2 + $0x9]]
        %v387 = vstv %s386
        %v388 = vmul.f32 %v387, %v284
        %v389 = vadd.f32 %v385, %v388
        %s390 = sld [smem:[#allocation2 + $0xa]]
        %v391 = vstv %s390
        %v392 = vmul.f32 %v391, %v293
        %v393 = vadd.f32 %v389, %v392
        %s394 = sld [smem:[#allocation2 + $0xb]]
        %v395 = vstv %s394
        %v396 = vmul.f32 %v395, %v301
        %v397 = vadd.f32 %v393, %v396
        %s398 = sld [smem:[#allocation2 + $0xc]]
        %v399 = vstv %s398
        %v400 = vmul.f32 %v399, %v213
        %v401 = vadd.f32 %v397, %v400
        %s402 = sld [smem:[#allocation2 + $0xd]]
        %v403 = vstv %s402
        %v404 = vmul.f32 %v403, %v309
        %v405 = vadd.f32 %v401, %v404
        %s406 = sld [smem:[#allocation2 + $0xe]]
        %v407 = vstv %s406
        %v408 = vmul.f32 %v407, %v317
        %v409 = vadd.f32 %v405, %v408
        %s410 = sld [smem:[#allocation2 + $0xf]]
        %v411 = vstv %s410
        %v412 = vmul.f32 %v411, %v326
        %v413 = vadd.f32 %v409, %v412
        %s414 = sld [smem:[#allocation2 + $0x10]]
        %v415 = vstv %s414
        %v416 = vmul.f32 %v415, %v334
        %v417 = vadd.f32 %v413, %v416
        %s418 = sld [smem:[#allocation2 + $0x11]]
        %v419 = vstv %s418
        %v420 = vmul.f32 %v419, %v214
        %v421 = vadd.f32 %v417, %v420
        %s422 = sld [smem:[#allocation2 + $0x12]]
        %v423 = vstv %s422
        %v424 = vmul.f32 %v423, %v342
        %v425 = vadd.f32 %v421, %v424
        %s426 = sld [smem:[#allocation2 + $0x13]]
        %v427 = vstv %s426
        %v428 = vmul.f32 %v427, %v350
        %v429 = vadd.f32 %v425, %v428
        %s430 = sld [smem:[#allocation4]]
        %v431 = vstv %s430
        %v432 = vadd.f32 %v429, %v431
        %s433 = sld [smem:[#allocation2 + $0x14]]
        %v434 = vstv %s433
        %v435 = vmul.f32 %v434, %v224
        %s436 = sld [smem:[#allocation2 + $0x15]]
        %v437 = vstv %s436
        %v438 = vmul.f32 %v437, %v233
        %v439 = vadd.f32 %v435, %v438
        %s440 = sld [smem:[#allocation2 + $0x16]]
        %v441 = vstv %s440
        %v442 = vmul.f32 %v441, %v211
        %v443 = vadd.f32 %v439, %v442
        %s444 = sld [smem:[#allocation2 + $0x17]]
        %v445 = vstv %s444
        %v446 = vmul.f32 %v445, %v242
        %v447 = vadd.f32 %v443, %v446
        %s448 = sld [smem:[#allocation2 + $0x18]]
        %v449 = vstv %s448
        %v450 = vmul.f32 %v449, %v251
        %v451 = vadd.f32 %v447, %v450
        %s452 = sld [smem:[#allocation2 + $0x19]]
        %v453 = vstv %s452
        %v454 = vmul.f32 %v453, %v260
        %v455 = vadd.f32 %v451, %v454
        %s456 = sld [smem:[#allocation2 + $0x1a]]
        %v457 = vstv %s456
        %v458 = vmul.f32 %v457, %v268
        %v459 = vadd.f32 %v455, %v458
        %s460 = sld [smem:[#allocation2 + $0x1b]]
        %v461 = vstv %s460
        %v462 = vmul.f32 %v461, %v212
        %v463 = vadd.f32 %v459, %v462
        %s464 = sld [smem:[#allocation2 + $0x1c]]
        %v465 = vstv %s464
        %v466 = vmul.f32 %v465, %v276
        %v467 = vadd.f32 %v463, %v466
        %s468 = sld [smem:[#allocation2 + $0x1d]]
        %v469 = vstv %s468
        %v470 = vmul.f32 %v469, %v284
        %v471 = vadd.f32 %v467, %v470
        %s472 = sld [smem:[#allocation2 + $0x1e]]
        %v473 = vstv %s472
        %v474 = vmul.f32 %v473, %v293
        %v475 = vadd.f32 %v471, %v474
        %s476 = sld [smem:[#allocation2 + $0x1f]]
        %v477 = vstv %s476
        %v478 = vmul.f32 %v477, %v301
        %v479 = vadd.f32 %v475, %v478
        %s480 = sld [smem:[#allocation2 + $0x20]]
        %v481 = vstv %s480
        %v482 = vmul.f32 %v481, %v213
        %v483 = vadd.f32 %v479, %v482
        %s484 = sld [smem:[#allocation2 + $0x21]]
        %v485 = vstv %s484
        %v486 = vmul.f32 %v485, %v309
        %v487 = vadd.f32 %v483, %v486
        %s488 = sld [smem:[#allocation2 + $0x22]]
        %v489 = vstv %s488
        %v490 = vmul.f32 %v489, %v317
        %v491 = vadd.f32 %v487, %v490
        %s492 = sld [smem:[#allocation2 + $0x23]]
        %v493 = vstv %s492
        %v494 = vmul.f32 %v493, %v326
        %v495 = vadd.f32 %v491, %v494
        %s496 = sld [smem:[#allocation2 + $0x24]]
        %v497 = vstv %s496
        %v498 = vmul.f32 %v497, %v334
        %v499 = vadd.f32 %v495, %v498
        %s500 = sld [smem:[#allocation2 + $0x25]]
        %v501 = vstv %s500
        %v502 = vmul.f32 %v501, %v214
        %v503 = vadd.f32 %v499, %v502
        %s504 = sld [smem:[#allocation2 + $0x26]]
        %v505 = vstv %s504
        %v506 = vmul.f32 %v505, %v342
        %v507 = vadd.f32 %v503, %v506
        %s508 = sld [smem:[#allocation2 + $0x27]]
        %v509 = vstv %s508
        %v510 = vmul.f32 %v509, %v350
        %v511 = vadd.f32 %v507, %v510
        %s512 = sld [smem:[#allocation4 + $0x1]]
        %v513 = vstv %s512
        %v514 = vadd.f32 %v511, %v513
        %s515 = sld [smem:[#allocation2 + $0x28]]
        %v516 = vstv %s515
        %v517 = vmul.f32 %v516, %v224
        %s518 = sld [smem:[#allocation2 + $0x29]]
        %v519 = vstv %s518
        %v520 = vmul.f32 %v519, %v233
        %v521 = vadd.f32 %v517, %v520
        %s522 = sld [smem:[#allocation2 + $0x2a]]
        %v523 = vstv %s522
        %v524 = vmul.f32 %v523, %v211
        %v525 = vadd.f32 %v521, %v524
        %s526 = sld [smem:[#allocation2 + $0x2b]]
        %v527 = vstv %s526
        %v528 = vmul.f32 %v527, %v242
        %v529 = vadd.f32 %v525, %v528
        %s530 = sld [smem:[#allocation2 + $0x2c]]
        %v531 = vstv %s530
        %v532 = vmul.f32 %v531, %v251
        %v533 = vadd.f32 %v529, %v532
        %s534 = sld [smem:[#allocation2 + $0x2d]]
        %v535 = vstv %s534
        %v536 = vmul.f32 %v535, %v260
        %v537 = vadd.f32 %v533, %v536
        %s538 = sld [smem:[#allocation2 + $0x2e]]
        %v539 = vstv %s538
        %v540 = vmul.f32 %v539, %v268
        %v541 = vadd.f32 %v537, %v540
        %s542 = sld [smem:[#allocation2 + $0x2f]]
        %v543 = vstv %s542
        %v544 = vmul.f32 %v543, %v212
        %v545 = vadd.f32 %v541, %v544
        %s546 = sld [smem:[#allocation2 + $0x30]]
        %v547 = vstv %s546
        %v548 = vmul.f32 %v547, %v276
        %v549 = vadd.f32 %v545, %v548
        %s550 = sld [smem:[#allocation2 + $0x31]]
        %v551 = vstv %s550
        %v552 = vmul.f32 %v551, %v284
        %v553 = vadd.f32 %v549, %v552
        %s554 = sld [smem:[#allocation2 + $0x32]]
        %v555 = vstv %s554
        %v556 = vmul.f32 %v555, %v293
        %v557 = vadd.f32 %v553, %v556
        %s558 = sld [smem:[#allocation2 + $0x33]]
        %v559 = vstv %s558
        %v560 = vmul.f32 %v559, %v301
        %v561 = vadd.f32 %v557, %v560
        %s562 = sld [smem:[#allocation2 + $0x34]]
        %v563 = vstv %s562
        %v564 = vmul.f32 %v563, %v213
        %v565 = vadd.f32 %v561, %v564
        %s566 = sld [smem:[#allocation2 + $0x35]]
        %v567 = vstv %s566
        %v568 = vmul.f32 %v567, %v309
        %v569 = vadd.f32 %v565, %v568
        %s570 = sld [smem:[#allocation2 + $0x36]]
        %v571 = vstv %s570
        %v572 = vmul.f32 %v571, %v317
        %v573 = vadd.f32 %v569, %v572
        %s574 = sld [smem:[#allocation2 + $0x37]]
        %v575 = vstv %s574
        %v576 = vmul.f32 %v575, %v326
        %v577 = vadd.f32 %v573, %v576
        %s578 = sld [smem:[#allocation2 + $0x38]]
        %v579 = vstv %s578
        %v580 = vmul.f32 %v579, %v334
        %v581 = vadd.f32 %v577, %v580
        %s582 = sld [smem:[#allocation2 + $0x39]]
        %v583 = vstv %s582
        %v584 = vmul.f32 %v583, %v214
        %v585 = vadd.f32 %v581, %v584
        %s586 = sld [smem:[#allocation2 + $0x3a]]
        %v587 = vstv %s586
        %v588 = vmul.f32 %v587, %v342
        %v589 = vadd.f32 %v585, %v588
        %s590 = sld [smem:[#allocation2 + $0x3b]]
        %v591 = vstv %s590
        %v592 = vmul.f32 %v591, %v350
        %v593 = vadd.f32 %v589, %v592
        %s594 = sld [smem:[#allocation4 + $0x2]]
        %v595 = vstv %s594
        %v596 = vadd.f32 %v593, %v595
        %s597 = sld [smem:[#allocation2 + $0x3c]]
        %v598 = vstv %s597
        %v599 = vmul.f32 %v598, %v224
        %s600 = sld [smem:[#allocation2 + $0x3d]]
        %v601 = vstv %s600
        %v602 = vmul.f32 %v601, %v233
        %v603 = vadd.f32 %v599, %v602
        %s604 = sld [smem:[#allocation2 + $0x3e]]
        %v605 = vstv %s604
        %v606 = vmul.f32 %v605, %v211
        %v607 = vadd.f32 %v603, %v606
        %s608 = sld [smem:[#allocation2 + $0x3f]]
        %v609 = vstv %s608
        %v610 = vmul.f32 %v609, %v242
        %v611 = vadd.f32 %v607, %v610
        %s612 = sld [smem:[#allocation2 + $0x40]]
        %v613 = vstv %s612
        %v614 = vmul.f32 %v613, %v251
        %v615 = vadd.f32 %v611, %v614
        %s616 = sld [smem:[#allocation2 + $0x41]]
        %v617 = vstv %s616
        %v618 = vmul.f32 %v617, %v260
        %v619 = vadd.f32 %v615, %v618
        %s620 = sld [smem:[#allocation2 + $0x42]]
        %v621 = vstv %s620
        %v622 = vmul.f32 %v621, %v268
        %v623 = vadd.f32 %v619, %v622
        %s624 = sld [smem:[#allocation2 + $0x43]]
        %v625 = vstv %s624
        %v626 = vmul.f32 %v625, %v212
        %v627 = vadd.f32 %v623, %v626
        %s628 = sld [smem:[#allocation2 + $0x44]]
        %v629 = vstv %s628
        %v630 = vmul.f32 %v629, %v276
        %v631 = vadd.f32 %v627, %v630
        %s632 = sld [smem:[#allocation2 + $0x45]]
        %v633 = vstv %s632
        %v634 = vmul.f32 %v633, %v284
        %v635 = vadd.f32 %v631, %v634
        %s636 = sld [smem:[#allocation2 + $0x46]]
        %v637 = vstv %s636
        %v638 = vmul.f32 %v637, %v293
        %v639 = vadd.f32 %v635, %v638
        %s640 = sld [smem:[#allocation2 + $0x47]]
        %v641 = vstv %s640
        %v642 = vmul.f32 %v641, %v301
        %v643 = vadd.f32 %v639, %v642
        %s644 = sld [smem:[#allocation2 + $0x48]]
        %v645 = vstv %s644
        %v646 = vmul.f32 %v645, %v213
        %v647 = vadd.f32 %v643, %v646
        %s648 = sld [smem:[#allocation2 + $0x49]]
        %v649 = vstv %s648
        %v650 = vmul.f32 %v649, %v309
        %v651 = vadd.f32 %v647, %v650
        %s652 = sld [smem:[#allocation2 + $0x4a]]
        %v653 = vstv %s652
        %v654 = vmul.f32 %v653, %v317
        %v655 = vadd.f32 %v651, %v654
        %s656 = sld [smem:[#allocation2 + $0x4b]]
        %v657 = vstv %s656
        %v658 = vmul.f32 %v657, %v326
        %v659 = vadd.f32 %v655, %v658
        %s660 = sld [smem:[#allocation2 + $0x4c]]
        %v661 = vstv %s660
        %v662 = vmul.f32 %v661, %v334
        %v663 = vadd.f32 %v659, %v662
        %s664 = sld [smem:[#allocation2 + $0x4d]]
        %v665 = vstv %s664
        %v666 = vmul.f32 %v665, %v214
        %v667 = vadd.f32 %v663, %v666
        %s668 = sld [smem:[#allocation2 + $0x4e]]
        %v669 = vstv %s668
        %v670 = vmul.f32 %v669, %v342
        %v671 = vadd.f32 %v667, %v670
        %s672 = sld [smem:[#allocation2 + $0x4f]]
        %v673 = vstv %s672
        %v674 = vmul.f32 %v673, %v350
        %v675 = vadd.f32 %v671, %v674
        %s676 = sld [smem:[#allocation4 + $0x3]]
        %v677 = vstv %s676
        %v678 = vadd.f32 %v675, %v677
        %v679 = vadd.f32 %v432, 0.0
        %v680 = vadd.f32 %v514, 0.0
        %v681 = vadd.f32 %v596, 0.0
        %v682 = vadd.f32 %v678, 0.0
        %v683 = vmul.f32 %v432, %v432
        %v684 = vadd.f32 %v683, 0.0
        %v685 = vmul.f32 %v514, %v514
        %v686 = vadd.f32 %v685, 0.0
        %v687 = vmul.f32 %v596, %v596
        %v688 = vadd.f32 %v687, 0.0
        %v689 = vmul.f32 %v678, %v678
        %v690 = vadd.f32 %v689, 0.0
        %v692 = vrot.slane %v680, 7
        %v695 = vrot.slane %v681, 6
        %v698 = vrot.slane %v682, 5
        %v701 = vrot.slane %v684, 4
        %v704 = vrot.slane %v686, 3
        %v707 = vrot.slane %v688, 2
        %v710 = vrot.slane %v690, 1
        %vm712 = vcmask 1040384
        %v713 = vsel %vm712, %v679, %v692
        %vm714 = vcmask 1041408
        %v715 = vsel %vm714, %v713, %v695
        %vm716 = vcmask 1042432
        %v717 = vsel %vm716, %v715, %v698
        %vm718 = vcmask 1043456
        %v719 = vsel %vm718, %v717, %v701
        %vm720 = vcmask 1044480
        %v721 = vsel %vm720, %v719, %v704
        %vm722 = vcmask 1045504
        %v723 = vsel %vm722, %v721, %v707
        %vm724 = vcmask 1046528
        %v725 = vsel %vm724, %v723, %v710
        %vm726 = vcmask 130048
        %727 = vst.msk [vmem:[%s192] sm:$0xff] %vm726, %v725
        %p728 = scmp.lt.s32.totalorder %s16, 1
        %s729 = scalar_select %p728, %s16, 1
        %s730 = smul.addr %s729, 8
        %s731 = scalar_lea.vmem %s3, %s730
        // Predicated region
        $region41: #{_resblock_forward_impl.3} parent=31 // pred_check
          %p732 = pneg %p102
        $region42: #{_resblock_forward_impl.3} parent=31 // pred_check_branch
          %734 = sbr.rel (%p732) target = $region44
        $region43: #{_resblock_forward_impl.3} parent=31 // pred_region
          _
        $region44: #{_resblock_forward_impl.3} parent=31 // pred_fallthru
          _
      $region32: #{_resblock_forward_impl.3} parent=5 // pred_fallthru
        _
      %p735 = scmp.le.s32.totalorder 2, %s11
      // Predicated region
      $region45: #{_resblock_forward_impl.3} parent=5 // pred_check
        %p736 = pneg %p735
      $region46: #{_resblock_forward_impl.3} parent=5 // pred_check_branch
        %738 = sbr.rel (%p736) target = $region48
      $region47: #{_resblock_forward_impl.3} parent=5 // pred_region
        %s739 = ssub.s32 %s11, 2
        // Predicated region
        $region49: #{_resblock_forward_impl.3} parent=47 // pred_check
          %p740 = pneg %p108
        $region50: #{_resblock_forward_impl.3} parent=47 // pred_check_branch
          %742 = sbr.rel (%p740) target = $region52
        $region51: #{_resblock_forward_impl.3} parent=47 // pred_region
          %p743 = scmp.lt.s32.totalorder %s17, 1
          %s744 = scalar_select %p743, %s17, 1
          %s745 = smul.addr %s744, 8
          %s746 = scalar_lea.vmem %s3, %s745
        $region52: #{_resblock_forward_impl.3} parent=47 // pred_fallthru
          _
      $region48: #{_resblock_forward_impl.3} parent=5 // pred_fallthru
        _
    $region6: #{_resblock_forward_impl.3} parent=1 // loop_footer
      %s15 = sadd.s32 1, %s11
    $region7: #{_resblock_forward_impl.3} parent=1 // loop_footer_branch
      %10 = sbr.rel target = $region3
    $region8: #{_resblock_forward_impl.3} parent=1 // loop_exit
      _
    %747 = vsyncpa [#allocation3], 1
    %s748 = scalar_lea.sflag [#allocation3], 1
    %749 = vsyncpa %s748, 1
    %750 = vsyncpa [#allocation5], 1

// kernel: _resblock_forward_impl.4
$region0: #{_resblock_forward_impl.4}
  #allocation0 [shape = 'u32[]', space=smem, size = 0x4, offset = 0x4, fixed_abs, tag = 'smem constant byte address 0x4 - core index']
  #allocation1 [shape = 'u32[72,128]{1,0:T(1,128)}', space=vmem, size = 0x9000, scoped, tag = 'internal scratch']
  %s0 = inlined_call_operand.vmem [shape: f32[2,4,16], index: 0, kind: input, shape index: {}]
  %s1 = inlined_call_operand.vmem [shape: f32[80], index: 1, kind: input, shape index: {}]
  %s2 = inlined_call_operand.vmem [shape: f32[4], index: 2, kind: input, shape index: {}]
  %s3 = inlined_call_operand.vmem [shape: f32[4], index: 3, kind: input, shape index: {}]
  %s4 = inlined_call_operand.vmem [shape: f32[4], index: 4, kind: input, shape index: {}]
  %s5 = inlined_call_operand.vmem [shape: f32[80], index: 5, kind: input, shape index: {}]
  %s6 = inlined_call_operand.vmem [shape: f32[4], index: 6, kind: input, shape index: {}]
  %s7 = inlined_call_operand.vmem [shape: f32[2,8,16], index: 7, kind: output, shape index: {}]
  %s8 = sld [smem:[#allocation0]]
  $region85: #{_resblock_forward_impl.4} parent=0
    _
  %s10 = ssub.s32 1, %s8
  %s11 = scalar_select 0, %s10, %s8
  $region1: #{_resblock_forward_impl.4} parent=0
    #allocation2 [shape = 'u8[512]{0}', space=smem, size = 0x200, scoped, tag = 'input window, operand 1, single buffered']
    #allocation3 [shape = 's32[2]{0}', space=sflag, size = 0x8, scoped, tag = 'scoped memory for _resblock_forward_impl.4']
    #allocation4 [shape = 'u8[512]{0}', space=smem, size = 0x200, scoped, tag = 'input window, operand 2, single buffered']
    #allocation5 [shape = 's32[1]{0}', space=sflag, size = 0x4, scoped, tag = 'scoped memory for _resblock_forward_impl.4']
    #allocation6 [shape = 'u8[512]{0}', space=smem, size = 0x200, scoped, tag = 'input window, operand 3, single buffered']
    #allocation7 [shape = 'u8[512]{0}', space=smem, size = 0x200, scoped, tag = 'input window, operand 4, single buffered']
    #allocation8 [shape = 's32[1]{0}', space=sflag, size = 0x4, scoped, tag = 'scoped memory for _resblock_forward_impl.4']
    #allocation9 [shape = 'u8[512]{0}', space=smem, size = 0x200, scoped, tag = 'input window, operand 5, single buffered']
    #allocation10 [shape = 'u8[512]{0}', space=smem, size = 0x200, scoped, tag = 'input window, operand 6, single buffered']
    #allocation11 [shape = 's32[1]{0}', space=sflag, size = 0x4, scoped, tag = 'scoped memory for _resblock_forward_impl.4']
    %12 = vsyncpa [#allocation3], 0
    %13 = vsyncpa [#allocation5], 0
    %14 = vsyncpa [#allocation8], 0
    %15 = vsyncpa [#allocation11], 0
    loop: start=0, step=1, limit=4
    $region2: #{_resblock_forward_impl.4} parent=1 // loop_pre_header
      _
    $region3: #{_resblock_forward_impl.4} parent=1 // loop_header
      %s17 = sphi 0, %s21
      %p18 = scmp.ge.s32.totalorder %s17, 4
      %s27 = sphi 0, %s29
      %s30 = sphi 0, %s27
      %s31 = sphi 0, %s30
      %s47 = sphi 0, %s31
      %s51 = sphi 0, %s51
      %s53 = sphi 0, %s51
      %s54 = sphi 0, %s53
      %s68 = sphi 0, %s54
      %s72 = sphi 0, %s72
      %s74 = sphi 0, %s72
      %s75 = sphi 0, %s74
      %s89 = sphi 0, %s75
      %s93 = sphi 0, %s93
      %s95 = sphi 0, %s93
      %s96 = sphi 0, %s95
      %s110 = sphi 0, %s96
      %s114 = sphi 0, %s114
      %s116 = sphi 0, %s114
      %s117 = sphi 0, %s116
      %s131 = sphi 0, %s117
      %s135 = sphi 0, %s135
      %s137 = sphi 0, %s135
      %s138 = sphi 0, %s137
      %s152 = sphi 0, %s138
      %s156 = sphi 0, %s156
      %s158 = sphi 0, %s156
      %s159 = sphi 0, %s158
      %s173 = sphi 0, %s159
      %s179 = sphi 0, %s181
      %s182 = sphi 0, %s179
      %s183 = sphi 0, %s182
      %s199 = sphi 0, %s183
    $region4: #{_resblock_forward_impl.4} parent=1 // loop_header_branch
      %20 = sbr.rel (%p18) target = $region8
    $region5: #{_resblock_forward_impl.4} parent=1 // loop_body
      %s22 = ssub.s32 %s17, 1
      %s23 = ssub.s32 %s17, 2
      %s24 = sadd.s32 %s17, 1
      %s25 = ssub.s32 %s17, %s24
      %p26 = scmp.eq.s32.totalorder %s25, 0
      %s28 = sadd.s32 %s27, 1
      %s29 = scalar_select %p26, %s27, %s28
      %p32 = pneg %p26
      %p33 = scmp.eq.s32.totalorder %s17, 1
      %p34 = por %p32, %p33
      %p35 = scmp.ne.s32.totalorder %s27, %s30
      %p36 = scmp.eq.s32.totalorder %s17, 0
      %p37 = por %p35, %p36
      %p38 = scmp.ne.s32.totalorder %s27, %s30
      %p39 = scmp.eq.s32.totalorder %s22, 1
      %p40 = por %p38, %p39
      %p41 = scmp.ne.s32.totalorder %s30, %s31
      %p42 = scmp.eq.s32.totalorder %s22, 0
      %p43 = por %p41, %p42
      %p44 = scmp.ne.s32.totalorder %s30, %s31
      %p45 = scmp.eq.s32.totalorder %s23, 1
      %p46 = por %p44, %p45
      %p48 = scmp.ne.s32.totalorder %s31, %s47
      %p49 = scmp.eq.s32.totalorder %s23, 0
      %p50 = por %p48, %p49
      %s52 = sadd.s32 %s51, 1
      %p55 = scmp.eq.s32.totalorder %s17, 1
      %p56 = scmp.ne.s32.totalorder %s51, %s53
      %p57 = scmp.eq.s32.totalorder %s17, 0
      %p58 = por %p56, %p57
      %p59 = scmp.ne.s32.totalorder %s51, %s53
      %p60 = scmp.eq.s32.totalorder %s22, 1
      %p61 = por %p59, %p60
      %p62 = scmp.ne.s32.totalorder %s53, %s54
      %p63 = scmp.eq.s32.totalorder %s22, 0
      %p64 = por %p62, %p63
      %p65 = scmp.ne.s32.totalorder %s53, %s54
      %p66 = scmp.eq.s32.totalorder %s23, 1
      %p67 = por %p65, %p66
      %p69 = scmp.ne.s32.totalorder %s54, %s68
      %p70 = scmp.eq.s32.totalorder %s23, 0
      %p71 = por %p69, %p70
      %s73 = sadd.s32 %s72, 1
      %p76 = scmp.eq.s32.totalorder %s17, 1
      %p77 = scmp.ne.s32.totalorder %s72, %s74
      %p78 = scmp.eq.s32.totalorder %s17, 0
      %p79 = por %p77, %p78
      %p80 = scmp.ne.s32.totalorder %s72, %s74
      %p81 = scmp.eq.s32.totalorder %s22, 1
      %p82 = por %p80, %p81
      %p83 = scmp.ne.s32.totalorder %s74, %s75
      %p84 = scmp.eq.s32.totalorder %s22, 0
      %p85 = por %p83, %p84
      %p86 = scmp.ne.s32.totalorder %s74, %s75
      %p87 = scmp.eq.s32.totalorder %s23, 1
      %p88 = por %p86, %p87
      %p90 = scmp.ne.s32.totalorder %s75, %s89
      %p91 = scmp.eq.s32.totalorder %s23, 0
      %p92 = por %p90, %p91
      %s94 = sadd.s32 %s93, 1
      %p97 = scmp.eq.s32.totalorder %s17, 1
      %p98 = scmp.ne.s32.totalorder %s93, %s95
      %p99 = scmp.eq.s32.totalorder %s17, 0
      %p100 = por %p98, %p99
      %p101 = scmp.ne.s32.totalorder %s93, %s95
      %p102 = scmp.eq.s32.totalorder %s22, 1
      %p103 = por %p101, %p102
      %p104 = scmp.ne.s32.totalorder %s95, %s96
      %p105 = scmp.eq.s32.totalorder %s22, 0
      %p106 = por %p104, %p105
      %p107 = scmp.ne.s32.totalorder %s95, %s96
      %p108 = scmp.eq.s32.totalorder %s23, 1
      %p109 = por %p107, %p108
      %p111 = scmp.ne.s32.totalorder %s96, %s110
      %p112 = scmp.eq.s32.totalorder %s23, 0
      %p113 = por %p111, %p112
      %s115 = sadd.s32 %s114, 1
      %p118 = scmp.eq.s32.totalorder %s17, 1
      %p119 = scmp.ne.s32.totalorder %s114, %s116
      %p120 = scmp.eq.s32.totalorder %s17, 0
      %p121 = por %p119, %p120
      %p122 = scmp.ne.s32.totalorder %s114, %s116
      %p123 = scmp.eq.s32.totalorder %s22, 1
      %p124 = por %p122, %p123
      %p125 = scmp.ne.s32.totalorder %s116, %s117
      %p126 = scmp.eq.s32.totalorder %s22, 0
      %p127 = por %p125, %p126
      %p128 = scmp.ne.s32.totalorder %s116, %s117
      %p129 = scmp.eq.s32.totalorder %s23, 1
      %p130 = por %p128, %p129
      %p132 = scmp.ne.s32.totalorder %s117, %s131
      %p133 = scmp.eq.s32.totalorder %s23, 0
      %p134 = por %p132, %p133
      %s136 = sadd.s32 %s135, 1
      %p139 = scmp.eq.s32.totalorder %s17, 1
      %p140 = scmp.ne.s32.totalorder %s135, %s137
      %p141 = scmp.eq.s32.totalorder %s17, 0
      %p142 = por %p140, %p141
      %p143 = scmp.ne.s32.totalorder %s135, %s137
      %p144 = scmp.eq.s32.totalorder %s22, 1
      %p145 = por %p143, %p144
      %p146 = scmp.ne.s32.totalorder %s137, %s138
      %p147 = scmp.eq.s32.totalorder %s22, 0
      %p148 = por %p146, %p147
      %p149 = scmp.ne.s32.totalorder %s137, %s138
      %p150 = scmp.eq.s32.totalorder %s23, 1
      %p151 = por %p149, %p150
      %p153 = scmp.ne.s32.totalorder %s138, %s152
      %p154 = scmp.eq.s32.totalorder %s23, 0
      %p155 = por %p153, %p154
      %s157 = sadd.s32 %s156, 1
      %p160 = scmp.eq.s32.totalorder %s17, 1
      %p161 = scmp.ne.s32.totalorder %s156, %s158
      %p162 = scmp.eq.s32.totalorder %s17, 0
      %p163 = por %p161, %p162
      %p164 = scmp.ne.s32.totalorder %s156, %s158
      %p165 = scmp.eq.s32.totalorder %s22, 1
      %p166 = por %p164, %p165
      %p167 = scmp.ne.s32.totalorder %s158, %s159
      %p168 = scmp.eq.s32.totalorder %s22, 0
      %p169 = por %p167, %p168
      %p170 = scmp.ne.s32.totalorder %s158, %s159
      %p171 = scmp.eq.s32.totalorder %s23, 1
      %p172 = por %p170, %p171
      %p174 = scmp.ne.s32.totalorder %s159, %s173
      %p175 = scmp.eq.s32.totalorder %s23, 0
      %p176 = por %p174, %p175
      %s177 = ssub.s32 %s17, %s24
      %p178 = scmp.eq.s32.totalorder %s177, 0
      %s180 = sadd.s32 %s179, 1
      %s181 = scalar_select %p178, %s179, %s180
      %p184 = pneg %p178
      %p185 = scmp.eq.s32.totalorder %s17, 1
      %p186 = por %p184, %p185
      %p187 = scmp.ne.s32.totalorder %s179, %s182
      %p188 = scmp.eq.s32.totalorder %s17, 0
      %p189 = por %p187, %p188
      %p190 = scmp.ne.s32.totalorder %s179, %s182
      %p191 = scmp.eq.s32.totalorder %s22, 1
      %p192 = por %p190, %p191
      %p193 = scmp.ne.s32.totalorder %s182, %s183
      %p194 = scmp.eq.s32.totalorder %s22, 0
      %p195 = por %p193, %p194
      %p196 = scmp.ne.s32.totalorder %s182, %s183
      %p197 = scmp.eq.s32.totalorder %s23, 1
      %p198 = por %p196, %p197
      %p200 = scmp.ne.s32.totalorder %s183, %s199
      %p201 = scmp.eq.s32.totalorder %s23, 0
      %p202 = por %p200, %p201
      %p203 = scmp.le.s32.totalorder 1, %s17
      %p204 = scmp.lt.s32.totalorder %s17, 3
      %p205 = pnand %p203, %p204
      %p206 = pneg %p205
      // Predicated region
      $region9: #{_resblock_forward_impl.4} parent=5 // pred_check
        _
      $region10: #{_resblock_forward_impl.4} parent=5 // pred_check_branch
        %208 = sbr.rel (%p205) target = $region12
      $region11: #{_resblock_forward_impl.4} parent=5 // pred_region
        %s209 = ssub.s32 %s17, 1
        // Predicated region
        $region13: #{_resblock_forward_impl.4} parent=11 // pred_check
          %p210 = pneg %p64
        $region14: #{_resblock_forward_impl.4} parent=11 // pred_check_branch
          %212 = sbr.rel (%p210) target = $region16
        $region15: #{_resblock_forward_impl.4} parent=11 // pred_region
          %214 = vsyncadd [#allocation3], 0
          %s216 = sshll.u32 %s1, 4
          %s217 = int_to_ptr.vmem [resolvable:$true] %s216
          %219 = dma.vmem_to_smem %s217, 16, [#allocation2], [#allocation3]
        $region16: #{_resblock_forward_impl.4} parent=11 // pred_fallthru
          _
        // Predicated region
        $region17: #{_resblock_forward_impl.4} parent=11 // pred_check
          %p220 = pneg %p85
        $region18: #{_resblock_forward_impl.4} parent=11 // pred_check_branch
          %222 = sbr.rel (%p220) target = $region20
        $region19: #{_resblock_forward_impl.4} parent=11 // pred_region
          %224 = vsyncadd [#allocation5], 0
          %s226 = sshll.u32 %s2, 4
          %s227 = int_to_ptr.vmem [resolvable:$true] %s226
          %229 = dma.vmem_to_smem %s227, 16, [#allocation4], [#allocation5]
        $region20: #{_resblock_forward_impl.4} parent=11 // pred_fallthru
          _
        // Predicated region
        $region21: #{_resblock_forward_impl.4} parent=11 // pred_check
          %p230 = pneg %p106
        $region22: #{_resblock_forward_impl.4} parent=11 // pred_check_branch
          %232 = sbr.rel (%p230) target = $region24
        $region23: #{_resblock_forward_impl.4} parent=11 // pred_region
          %234 = vsyncadd [#allocation5], 0
          %s236 = sshll.u32 %s3, 4
          %s237 = int_to_ptr.vmem [resolvable:$true] %s236
          %239 = dma.vmem_to_smem %s237, 16, [#allocation6], [#allocation5]
        $region24: #{_resblock_forward_impl.4} parent=11 // pred_fallthru
          _
        // Predicated region
        $region25: #{_resblock_forward_impl.4} parent=11 // pred_check
          %p240 = pneg %p127
        $region26: #{_resblock_forward_impl.4} parent=11 // pred_check_branch
          %242 = sbr.rel (%p240) target = $region28
        $region27: #{_resblock_forward_impl.4} parent=11 // pred_region
          %244 = vsyncadd [#allocation8], 0
          %s246 = sshll.u32 %s4, 4
          %s247 = int_to_ptr.vmem [resolvable:$true] %s246
          %249 = dma.vmem_to_smem %s247, 16, [#allocation7], [#allocation8]
        $region28: #{_resblock_forward_impl.4} parent=11 // pred_fallthru
          _
        // Predicated region
        $region29: #{_resblock_forward_impl.4} parent=11 // pred_check
          %p250 = pneg %p148
        $region30: #{_resblock_forward_impl.4} parent=11 // pred_check_branch
          %252 = sbr.rel (%p250) target = $region32
        $region31: #{_resblock_forward_impl.4} parent=11 // pred_region
          %254 = vsyncadd [#allocation8], 0
          %s256 = sshll.u32 %s5, 4
          %s257 = int_to_ptr.vmem [resolvable:$true] %s256
          %259 = dma.vmem_to_smem %s257, 16, [#allocation9], [#allocation8]
        $region32: #{_resblock_forward_impl.4} parent=11 // pred_fallthru
          _
        // Predicated region
        $region33: #{_resblock_forward_impl.4} parent=11 // pred_check
          %p260 = pneg %p169
        $region34: #{_resblock_forward_impl.4} parent=11 // pred_check_branch
          %262 = sbr.rel (%p260) target = $region36
        $region35: #{_resblock_forward_impl.4} parent=11 // pred_region
          %264 = vsyncadd [#allocation11], 0
          %s266 = sshll.u32 %s6, 4
          %s267 = int_to_ptr.vmem [resolvable:$true] %s266
          %269 = dma.vmem_to_smem %s267, 16, [#allocation10], [#allocation11]
        $region36: #{_resblock_forward_impl.4} parent=11 // pred_fallthru
          _
      $region12: #{_resblock_forward_impl.4} parent=5 // pred_fallthru
        _
      %p270 = scmp.lt.s32.totalorder %s17, 2
      // Predicated region
      $region37: #{_resblock_forward_impl.4} parent=5 // pred_check
        %p271 = pneg %p270
      $region38: #{_resblock_forward_impl.4} parent=5 // pred_check_branch
        %273 = sbr.rel (%p271) target = $region40
      $region39: #{_resblock_forward_impl.4} parent=5 // pred_region
        // Predicated region
        $region41: #{_resblock_forward_impl.4} parent=39 // pred_check
          %p274 = pneg %p37
        $region42: #{_resblock_forward_impl.4} parent=39 // pred_check_branch
          %276 = sbr.rel (%p274) target = $region44
        $region43: #{_resblock_forward_impl.4} parent=39 // pred_region
          %p277 = scmp.lt.s32.totalorder %s17, 1
          %s278 = scalar_select %p277, %s17, 1
          %s279 = smul.addr %s278, 4
          %s280 = scalar_lea.vmem %s0, %s279
        $region44: #{_resblock_forward_impl.4} parent=39 // pred_fallthru
          _
      $region40: #{_resblock_forward_impl.4} parent=5 // pred_fallthru
        _
      %p281 = scmp.le.s32.totalorder 1, %s17
      %p282 = scmp.lt.s32.totalorder %s17, 3
      %p283 = pnand %p281, %p282
      %p284 = pneg %p283
      // Predicated region
      $region45: #{_resblock_forward_impl.4} parent=5 // pred_check
        _
      $region46: #{_resblock_forward_impl.4} parent=5 // pred_check_branch
        %286 = sbr.rel (%p283) target = $region48
      $region47: #{_resblock_forward_impl.4} parent=5 // pred_region
        %s287 = ssub.s32 %s17, 1
        // Predicated region
        $region49: #{_resblock_forward_impl.4} parent=47 // pred_check
          %p288 = pneg %p64
        $region50: #{_resblock_forward_impl.4} parent=47 // pred_check_branch
          %290 = sbr.rel (%p288) target = $region52
        $region51: #{_resblock_forward_impl.4} parent=47 // pred_region
          %292 = dma.done [#allocation3], 16
        $region52: #{_resblock_forward_impl.4} parent=47 // pred_fallthru
          _
        // Predicated region
        $region53: #{_resblock_forward_impl.4} parent=47 // pred_check
          %p293 = pneg %p85
        $region54: #{_resblock_forward_impl.4} parent=47 // pred_check_branch
          %295 = sbr.rel (%p293) target = $region56
        $region55: #{_resblock_forward_impl.4} parent=47 // pred_region
          %297 = dma.done [#allocation5], 16
        $region56: #{_resblock_forward_impl.4} parent=47 // pred_fallthru
          _
        // Predicated region
        $region57: #{_resblock_forward_impl.4} parent=47 // pred_check
          %p298 = pneg %p106
        $region58: #{_resblock_forward_impl.4} parent=47 // pred_check_branch
          %300 = sbr.rel (%p298) target = $region60
        $region59: #{_resblock_forward_impl.4} parent=47 // pred_region
          %302 = dma.done [#allocation5], 16
        $region60: #{_resblock_forward_impl.4} parent=47 // pred_fallthru
          _
        // Predicated region
        $region61: #{_resblock_forward_impl.4} parent=47 // pred_check
          %p303 = pneg %p127
        $region62: #{_resblock_forward_impl.4} parent=47 // pred_check_branch
          %305 = sbr.rel (%p303) target = $region64
        $region63: #{_resblock_forward_impl.4} parent=47 // pred_region
          %307 = dma.done [#allocation8], 16
        $region64: #{_resblock_forward_impl.4} parent=47 // pred_fallthru
          _
        // Predicated region
        $region65: #{_resblock_forward_impl.4} parent=47 // pred_check
          %p308 = pneg %p148
        $region66: #{_resblock_forward_impl.4} parent=47 // pred_check_branch
          %310 = sbr.rel (%p308) target = $region68
        $region67: #{_resblock_forward_impl.4} parent=47 // pred_region
          %312 = dma.done [#allocation8], 16
        $region68: #{_resblock_forward_impl.4} parent=47 // pred_fallthru
          _
        // Predicated region
        $region69: #{_resblock_forward_impl.4} parent=47 // pred_check
          %p313 = pneg %p169
        $region70: #{_resblock_forward_impl.4} parent=47 // pred_check_branch
          %315 = sbr.rel (%p313) target = $region72
        $region71: #{_resblock_forward_impl.4} parent=47 // pred_region
          %317 = dma.done [#allocation11], 16
        $region72: #{_resblock_forward_impl.4} parent=47 // pred_fallthru
          _
        %318 = sfence
        %p319 = scmp.lt.s32.totalorder %s22, 1
        %s320 = scalar_select %p319, %s22, 1
        %s321 = smul.addr %s320, 4
        %s322 = scalar_lea.vmem %s0, %s321
        %p323 = pneg %p43
        %p324 = pneg %p40
        %p325 = pneg %p64
        %p326 = pneg %p61
        %p327 = pneg %p85
        %p328 = pneg %p82
        %p329 = pneg %p106
        %p330 = pneg %p103
        %p331 = pneg %p127
        %p332 = pneg %p124
        %p333 = pneg %p148
        %p334 = pneg %p145
        %p335 = pneg %p169
        %p336 = pneg %p166
        %p337 = pneg %p195
        %p338 = pneg %p192
        %p339 = scmp.lt.s32.totalorder %s22, 1
        %s340 = scalar_select %p339, %s22, 1
        %s341 = smul.addr %s340, 8
        %s342 = scalar_lea.vmem %s7, %s341
        %p343 = scmp.lt.s32.totalorder %s22, 1
        %s344 = scalar_select %p343, %s22, 1
        %s345 = smul.addr %s344, 4
        %s346 = scalar_lea.vmem %s0, %s345
        %p347 = scmp.lt.s32.totalorder %s22, 1
        %s348 = scalar_select %p347, %s22, 1
        %s349 = smul.addr %s348, 8
        %s350 = scalar_lea.vmem %s7, %s349
        %v351 = vlaneseq
        %v352 = vand.u32 %v351, 127
        %v353 = vadd.s32 %v352, 4294967294
        %vm354 = vcmp.ge.s32.totalorder %v353, 0
        %vm355 = vcmp.lt.s32.totalorder %v353, 16
        %vm356 = vmand %vm354, %vm355
        %v357 = vadd.s32 %v352, 4294967295
        %vm358 = vcmp.ge.s32.totalorder %v357, 0
        %vm359 = vcmp.lt.s32.totalorder %v357, 16
        %vm360 = vmand %vm358, %vm359
        %v361 = vadd.s32 %v352, 1
        %vm362 = vcmp.ge.s32.totalorder %v361, 0
        %vm363 = vcmp.lt.s32.totalorder %v361, 16
        %vm364 = vmand %vm362, %vm363
        %v365 = vadd.s32 %v352, 2
        %vm366 = vcmp.ge.s32.totalorder %v365, 0
        %vm367 = vcmp.lt.s32.totalorder %v365, 16
        %vm368 = vmand %vm366, %vm367
        %v369 = vld [vmem:[%s346] sm:$0x1]
        %v370 = vld [vmem:[%s346 + $0x1] sm:$0x1]
        %v371 = vld [vmem:[%s346 + $0x2] sm:$0x1]
        %v372 = vld [vmem:[%s346 + $0x3] sm:$0x1]
        %374 = vrot.lane.b32.xlu0 %v369, 114
        %v375 = vpop.permute.xlu0 %374
        %377 = vrot.lane.b32.xlu0 %v369, 2
        %v378 = vpop.permute.xlu0 %377
        %vm380 = vcmask 15360
        %v381 = vsel %vm380, %v375, %v378
        %v382 = vsel %vm356, %v381, 0.0
        %383 = vrot.lane.b32.xlu0 %v369, 113
        %v384 = vpop.permute.xlu0 %383
        %386 = vrot.lane.b32.xlu0 %v369, 1
        %v387 = vpop.permute.xlu0 %386
        %vm389 = vcmask 7168
        %v390 = vsel %vm389, %v384, %v387
        %v391 = vsel %vm360, %v390, 0.0
        %392 = vrot.lane.b32.xlu0 %v369, 127
        %v393 = vpop.permute.xlu0 %392
        %395 = vrot.lane.b32.xlu0 %v369, 15
        %v396 = vpop.permute.xlu0 %395
        %vm398 = vcmask 121856
        %v399 = vsel %vm398, %v393, %v396
        %v400 = vsel %vm364, %v399, 0.0
        %401 = vrot.lane.b32.xlu0 %v369, 126
        %v402 = vpop.permute.xlu0 %401
        %404 = vrot.lane.b32.xlu0 %v369, 14
        %v405 = vpop.permute.xlu0 %404
        %vm407 = vcmask 113664
        %v408 = vsel %vm407, %v402, %v405
        %v409 = vsel %vm368, %v408, 0.0
        %411 = vrot.lane.b32.xlu0 %v370, 114
        %v412 = vpop.permute.xlu0 %411
        %414 = vrot.lane.b32.xlu0 %v370, 2
        %v415 = vpop.permute.xlu0 %414
        %v417 = vsel %vm380, %v412, %v415
        %v418 = vsel %vm356, %v417, 0.0
        %419 = vrot.lane.b32.xlu0 %v370, 113
        %v420 = vpop.permute.xlu0 %419
        %422 = vrot.lane.b32.xlu0 %v370, 1
        %v423 = vpop.permute.xlu0 %422
        %v425 = vsel %vm389, %v420, %v423
        %v426 = vsel %vm360, %v425, 0.0
        %427 = vrot.lane.b32.xlu0 %v370, 127
        %v428 = vpop.permute.xlu0 %427
        %430 = vrot.lane.b32.xlu0 %v370, 15
        %v431 = vpop.permute.xlu0 %430
        %v433 = vsel %vm398, %v428, %v431
        %v434 = vsel %vm364, %v433, 0.0
        %435 = vrot.lane.b32.xlu0 %v370, 126
        %v436 = vpop.permute.xlu0 %435
        %438 = vrot.lane.b32.xlu0 %v370, 14
        %v439 = vpop.permute.xlu0 %438
        %v441 = vsel %vm407, %v436, %v439
        %v442 = vsel %vm368, %v441, 0.0
        %444 = vrot.lane.b32.xlu0 %v371, 114
        %v445 = vpop.permute.xlu0 %444
        %447 = vrot.lane.b32.xlu0 %v371, 2
        %v448 = vpop.permute.xlu0 %447
        %v450 = vsel %vm380, %v445, %v448
        %v451 = vsel %vm356, %v450, 0.0
        %452 = vrot.lane.b32.xlu0 %v371, 113
        %v453 = vpop.permute.xlu0 %452
        %455 = vrot.lane.b32.xlu0 %v371, 1
        %v456 = vpop.permute.xlu0 %455
        %v458 = vsel %vm389, %v453, %v456
        %v459 = vsel %vm360, %v458, 0.0
        %460 = vrot.lane.b32.xlu0 %v371, 127
        %v461 = vpop.permute.xlu0 %460
        %463 = vrot.lane.b32.xlu0 %v371, 15
        %v464 = vpop.permute.xlu0 %463
        %v466 = vsel %vm398, %v461, %v464
        %v467 = vsel %vm364, %v466, 0.0
        %468 = vrot.lane.b32.xlu0 %v371, 126
        %v469 = vpop.permute.xlu0 %468
        %471 = vrot.lane.b32.xlu0 %v371, 14
        %v472 = vpop.permute.xlu0 %471
        %v474 = vsel %vm407, %v469, %v472
        %v475 = vsel %vm368, %v474, 0.0
        %477 = vrot.lane.b32.xlu0 %v372, 114
        %v478 = vpop.permute.xlu0 %477
        %480 = vrot.lane.b32.xlu0 %v372, 2
        %v481 = vpop.permute.xlu0 %480
        %v483 = vsel %vm380, %v478, %v481
        %v484 = vsel %vm356, %v483, 0.0
        %485 = vrot.lane.b32.xlu0 %v372, 113
        %v486 = vpop.permute.xlu0 %485
        %488 = vrot.lane.b32.xlu0 %v372, 1
        %v489 = vpop.permute.xlu0 %488
        %v491 = vsel %vm389, %v486, %v489
        %v492 = vsel %vm360, %v491, 0.0
        %493 = vrot.lane.b32.xlu0 %v372, 127
        %v494 = vpop.permute.xlu0 %493
        %496 = vrot.lane.b32.xlu0 %v372, 15
        %v497 = vpop.permute.xlu0 %496
        %v499 = vsel %vm398, %v494, %v497
        %v500 = vsel %vm364, %v499, 0.0
        %501 = vrot.lane.b32.xlu0 %v372, 126
        %v502 = vpop.permute.xlu0 %501
        %504 = vrot.lane.b32.xlu0 %v372, 14
        %v505 = vpop.permute.xlu0 %504
        %v507 = vsel %vm407, %v502, %v505
        %v508 = vsel %vm368, %v507, 0.0
        %s509 = sld [smem:[#allocation2]]
        %v510 = vstv %s509
        %v511 = vmul.f32 %v510, %v382
        %s512 = sld [smem:[#allocation2 + $0x1]]
        %v513 = vstv %s512
        %v514 = vmul.f32 %v513, %v391
        %v515 = vadd.f32 %v511, %v514
        %s516 = sld [smem:[#allocation2 + $0x2]]
        %v517 = vstv %s516
        %v518 = vmul.f32 %v517, %v369
        %v519 = vadd.f32 %v515, %v518
        %s520 = sld [smem:[#allocation2 + $0x3]]
        %v521 = vstv %s520
        %v522 = vmul.f32 %v521, %v400
        %v523 = vadd.f32 %v519, %v522
        %s524 = sld [smem:[#allocation2 + $0x4]]
        %v525 = vstv %s524
        %v526 = vmul.f32 %v525, %v409
        %v527 = vadd.f32 %v523, %v526
        %s528 = sld [smem:[#allocation2 + $0x5]]
        %v529 = vstv %s528
        %v530 = vmul.f32 %v529, %v418
        %v531 = vadd.f32 %v527, %v530
        %s532 = sld [smem:[#allocation2 + $0x6]]
        %v533 = vstv %s532
        %v534 = vmul.f32 %v533, %v426
        %v535 = vadd.f32 %v531, %v534
        %s536 = sld [smem:[#allocation2 + $0x7]]
        %v537 = vstv %s536
        %v538 = vmul.f32 %v537, %v370
        %v539 = vadd.f32 %v535, %v538
        %s540 = sld [smem:[#allocation2 + $0x8]]
        %v541 = vstv %s540
        %v542 = vmul.f32 %v541, %v434
        %v543 = vadd.f32 %v539, %v542
        %s544 = sld [smem:[#allocation2 + $0x9]]
        %v545 = vstv %s544
        %v546 = vmul.f32 %v545, %v442
        %v547 = vadd.f32 %v543, %v546
        %s548 = sld [smem:[#allocation2 + $0xa]]
        %v549 = vstv %s548
        %v550 = vmul.f32 %v549, %v451
        %v551 = vadd.f32 %v547, %v550
        %s552 = sld [smem:[#allocation2 + $0xb]]
        %v553 = vstv %s552
        %v554 = vmul.f32 %v553, %v459
        %v555 = vadd.f32 %v551, %v554
        %s556 = sld [smem:[#allocation2 + $0xc]]
        %v557 = vstv %s556
        %v558 = vmul.f32 %v557, %v371
        %v559 = vadd.f32 %v555, %v558
        %s560 = sld [smem:[#allocation2 + $0xd]]
        %v561 = vstv %s560
        %v562 = vmul.f32 %v561, %v467
        %v563 = vadd.f32 %v559, %v562
        %s564 = sld [smem:[#allocation2 + $0xe]]
        %v565 = vstv %s564
        %v566 = vmul.f32 %v565, %v475
        %v567 = vadd.f32 %v563, %v566
        %s568 = sld [smem:[#allocation2 + $0xf]]
        %v569 = vstv %s568
        %v570 = vmul.f32 %v569, %v484
        %v571 = vadd.f32 %v567, %v570
        %s572 = sld [smem:[#allocation2 + $0x10]]
        %v573 = vstv %s572
        %v574 = vmul.f32 %v573, %v492
        %v575 = vadd.f32 %v571, %v574
        %s576 = sld [smem:[#allocation2 + $0x11]]
        %v577 = vstv %s576
        %v578 = vmul.f32 %v577, %v372
        %v579 = vadd.f32 %v575, %v578
        %s580 = sld [smem:[#allocation2 + $0x12]]
        %v581 = vstv %s580
        %v582 = vmul.f32 %v581, %v500
        %v583 = vadd.f32 %v579, %v582
        %s584 = sld [smem:[#allocation2 + $0x13]]
        %v585 = vstv %s584
        %v586 = vmul.f32 %v585, %v508
        %v587 = vadd.f32 %v583, %v586
        %s588 = sld [smem:[#allocation4]]
        %v589 = vstv %s588
        %v590 = vadd.f32 %v587, %v589
        %s591 = sld [smem:[#allocation2 + $0x14]]
        %v592 = vstv %s591
        %v593 = vmul.f32 %v592, %v382
        %s594 = sld [smem:[#allocation2 + $0x15]]
        %v595 = vstv %s594
        %v596 = vmul.f32 %v595, %v391
        %v597 = vadd.f32 %v593, %v596
        %s598 = sld [smem:[#allocation2 + $0x16]]
        %v599 = vstv %s598
        %v600 = vmul.f32 %v599, %v369
        %v601 = vadd.f32 %v597, %v600
        %s602 = sld [smem:[#allocation2 + $0x17]]
        %v603 = vstv %s602
        %v604 = vmul.f32 %v603, %v400
        %v605 = vadd.f32 %v601, %v604
        %s606 = sld [smem:[#allocation2 + $0x18]]
        %v607 = vstv %s606
        %v608 = vmul.f32 %v607, %v409
        %v609 = vadd.f32 %v605, %v608
        %s610 = sld [smem:[#allocation2 + $0x19]]
        %v611 = vstv %s610
        %v612 = vmul.f32 %v611, %v418
        %v613 = vadd.f32 %v609, %v612
        %s614 = sld [smem:[#allocation2 + $0x1a]]
        %v615 = vstv %s614
        %v616 = vmul.f32 %v615, %v426
        %v617 = vadd.f32 %v613, %v616
        %s618 = sld [smem:[#allocation2 + $0x1b]]
        %v619 = vstv %s618
        %v620 = vmul.f32 %v619, %v370
        %v621 = vadd.f32 %v617, %v620
        %s622 = sld [smem:[#allocation2 + $0x1c]]
        %v623 = vstv %s622
        %v624 = vmul.f32 %v623, %v434
        %v625 = vadd.f32 %v621, %v624
        %s626 = sld [smem:[#allocation2 + $0x1d]]
        %v627 = vstv %s626
        %v628 = vmul.f32 %v627, %v442
        %v629 = vadd.f32 %v625, %v628
        %s630 = sld [smem:[#allocation2 + $0x1e]]
        %v631 = vstv %s630
        %v632 = vmul.f32 %v631, %v451
        %v633 = vadd.f32 %v629, %v632
        %s634 = sld [smem:[#allocation2 + $0x1f]]
        %v635 = vstv %s634
        %v636 = vmul.f32 %v635, %v459
        %v637 = vadd.f32 %v633, %v636
        %s638 = sld [smem:[#allocation2 + $0x20]]
        %v639 = vstv %s638
        %v640 = vmul.f32 %v639, %v371
        %v641 = vadd.f32 %v637, %v640
        %s642 = sld [smem:[#allocation2 + $0x21]]
        %v643 = vstv %s642
        %v644 = vmul.f32 %v643, %v467
        %v645 = vadd.f32 %v641, %v644
        %s646 = sld [smem:[#allocation2 + $0x22]]
        %v647 = vstv %s646
        %v648 = vmul.f32 %v647, %v475
        %v649 = vadd.f32 %v645, %v648
        %s650 = sld [smem:[#allocation2 + $0x23]]
        %v651 = vstv %s650
        %v652 = vmul.f32 %v651, %v484
        %v653 = vadd.f32 %v649, %v652
        %s654 = sld [smem:[#allocation2 + $0x24]]
        %v655 = vstv %s654
        %v656 = vmul.f32 %v655, %v492
        %v657 = vadd.f32 %v653, %v656
        %s658 = sld [smem:[#allocation2 + $0x25]]
        %v659 = vstv %s658
        %v660 = vmul.f32 %v659, %v372
        %v661 = vadd.f32 %v657, %v660
        %s662 = sld [smem:[#allocation2 + $0x26]]
        %v663 = vstv %s662
        %v664 = vmul.f32 %v663, %v500
        %v665 = vadd.f32 %v661, %v664
        %s666 = sld [smem:[#allocation2 + $0x27]]
        %v667 = vstv %s666
        %v668 = vmul.f32 %v667, %v508
        %v669 = vadd.f32 %v665, %v668
        %s670 = sld [smem:[#allocation4 + $0x1]]
        %v671 = vstv %s670
        %v672 = vadd.f32 %v669, %v671
        %s673 = sld [smem:[#allocation2 + $0x28]]
        %v674 = vstv %s673
        %v675 = vmul.f32 %v674, %v382
        %s676 = sld [smem:[#allocation2 + $0x29]]
        %v677 = vstv %s676
        %v678 = vmul.f32 %v677, %v391
        %v679 = vadd.f32 %v675, %v678
        %s680 = sld [smem:[#allocation2 + $0x2a]]
        %v681 = vstv %s680
        %v682 = vmul.f32 %v681, %v369
        %v683 = vadd.f32 %v679, %v682
        %s684 = sld [smem:[#allocation2 + $0x2b]]
        %v685 = vstv %s684
        %v686 = vmul.f32 %v685, %v400
        %v687 = vadd.f32 %v683, %v686
        %s688 = sld [smem:[#allocation2 + $0x2c]]
        %v689 = vstv %s688
        %v690 = vmul.f32 %v689, %v409
        %v691 = vadd.f32 %v687, %v690
        %s692 = sld [smem:[#allocation2 + $0x2d]]
        %v693 = vstv %s692
        %v694 = vmul.f32 %v693, %v418
        %v695 = vadd.f32 %v691, %v694
        %s696 = sld [smem:[#allocation2 + $0x2e]]
        %v697 = vstv %s696
        %v698 = vmul.f32 %v697, %v426
        %v699 = vadd.f32 %v695, %v698
        %s700 = sld [smem:[#allocation2 + $0x2f]]
        %v701 = vstv %s700
        %v702 = vmul.f32 %v701, %v370
        %v703 = vadd.f32 %v699, %v702
        %s704 = sld [smem:[#allocation2 + $0x30]]
        %v705 = vstv %s704
        %v706 = vmul.f32 %v705, %v434
        %v707 = vadd.f32 %v703, %v706
        %s708 = sld [smem:[#allocation2 + $0x31]]
        %v709 = vstv %s708
        %v710 = vmul.f32 %v709, %v442
        %v711 = vadd.f32 %v707, %v710
        %s712 = sld [smem:[#allocation2 + $0x32]]
        %v713 = vstv %s712
        %v714 = vmul.f32 %v713, %v451
        %v715 = vadd.f32 %v711, %v714
        %s716 = sld [smem:[#allocation2 + $0x33]]
        %v717 = vstv %s716
        %v718 = vmul.f32 %v717, %v459
        %v719 = vadd.f32 %v715, %v718
        %s720 = sld [smem:[#allocation2 + $0x34]]
        %v721 = vstv %s720
        %v722 = vmul.f32 %v721, %v371
        %v723 = vadd.f32 %v719, %v722
        %s724 = sld [smem:[#allocation2 + $0x35]]
        %v725 = vstv %s724
        %v726 = vmul.f32 %v725, %v467
        %v727 = vadd.f32 %v723, %v726
        %s728 = sld [smem:[#allocation2 + $0x36]]
        %v729 = vstv %s728
        %v730 = vmul.f32 %v729, %v475
        %v731 = vadd.f32 %v727, %v730
        %s732 = sld [smem:[#allocation2 + $0x37]]
        %v733 = vstv %s732
        %v734 = vmul.f32 %v733, %v484
        %v735 = vadd.f32 %v731, %v734
        %s736 = sld [smem:[#allocation2 + $0x38]]
        %v737 = vstv %s736
        %v738 = vmul.f32 %v737, %v492
        %v739 = vadd.f32 %v735, %v738
        %s740 = sld [smem:[#allocation2 + $0x39]]
        %v741 = vstv %s740
        %v742 = vmul.f32 %v741, %v372
        %v743 = vadd.f32 %v739, %v742
        %s744 = sld [smem:[#allocation2 + $0x3a]]
        %v745 = vstv %s744
        %v746 = vmul.f32 %v745, %v500
        %v747 = vadd.f32 %v743, %v746
        %s748 = sld [smem:[#allocation2 + $0x3b]]
        %v749 = vstv %s748
        %v750 = vmul.f32 %v749, %v508
        %v751 = vadd.f32 %v747, %v750
        %s752 = sld [smem:[#allocation4 + $0x2]]
        %v753 = vstv %s752
        %v754 = vadd.f32 %v751, %v753
        %s755 = sld [smem:[#allocation2 + $0x3c]]
        %v756 = vstv %s755
        %v757 = vmul.f32 %v756, %v382
        %s758 = sld [smem:[#allocation2 + $0x3d]]
        %v759 = vstv %s758
        %v760 = vmul.f32 %v759, %v391
        %v761 = vadd.f32 %v757, %v760
        %s762 = sld [smem:[#allocation2 + $0x3e]]
        %v763 = vstv %s762
        %v764 = vmul.f32 %v763, %v369
        %v765 = vadd.f32 %v761, %v764
        %s766 = sld [smem:[#allocation2 + $0x3f]]
        %v767 = vstv %s766
        %v768 = vmul.f32 %v767, %v400
        %v769 = vadd.f32 %v765, %v768
        %s770 = sld [smem:[#allocation2 + $0x40]]
        %v771 = vstv %s770
        %v772 = vmul.f32 %v771, %v409
        %v773 = vadd.f32 %v769, %v772
        %s774 = sld [smem:[#allocation2 + $0x41]]
        %v775 = vstv %s774
        %v776 = vmul.f32 %v775, %v418
        %v777 = vadd.f32 %v773, %v776
        %s778 = sld [smem:[#allocation2 + $0x42]]
        %v779 = vstv %s778
        %v780 = vmul.f32 %v779, %v426
        %v781 = vadd.f32 %v777, %v780
        %s782 = sld [smem:[#allocation2 + $0x43]]
        %v783 = vstv %s782
        %v784 = vmul.f32 %v783, %v370
        %v785 = vadd.f32 %v781, %v784
        %s786 = sld [smem:[#allocation2 + $0x44]]
        %v787 = vstv %s786
        %v788 = vmul.f32 %v787, %v434
        %v789 = vadd.f32 %v785, %v788
        %s790 = sld [smem:[#allocation2 + $0x45]]
        %v791 = vstv %s790
        %v792 = vmul.f32 %v791, %v442
        %v793 = vadd.f32 %v789, %v792
        %s794 = sld [smem:[#allocation2 + $0x46]]
        %v795 = vstv %s794
        %v796 = vmul.f32 %v795, %v451
        %v797 = vadd.f32 %v793, %v796
        %s798 = sld [smem:[#allocation2 + $0x47]]
        %v799 = vstv %s798
        %v800 = vmul.f32 %v799, %v459
        %v801 = vadd.f32 %v797, %v800
        %s802 = sld [smem:[#allocation2 + $0x48]]
        %v803 = vstv %s802
        %v804 = vmul.f32 %v803, %v371
        %v805 = vadd.f32 %v801, %v804
        %s806 = sld [smem:[#allocation2 + $0x49]]
        %v807 = vstv %s806
        %v808 = vmul.f32 %v807, %v467
        %v809 = vadd.f32 %v805, %v808
        %s810 = sld [smem:[#allocation2 + $0x4a]]
        %v811 = vstv %s810
        %v812 = vmul.f32 %v811, %v475
        %v813 = vadd.f32 %v809, %v812
        %s814 = sld [smem:[#allocation2 + $0x4b]]
        %v815 = vstv %s814
        %v816 = vmul.f32 %v815, %v484
        %v817 = vadd.f32 %v813, %v816
        %s818 = sld [smem:[#allocation2 + $0x4c]]
        %v819 = vstv %s818
        %v820 = vmul.f32 %v819, %v492
        %v821 = vadd.f32 %v817, %v820
        %s822 = sld [smem:[#allocation2 + $0x4d]]
        %v823 = vstv %s822
        %v824 = vmul.f32 %v823, %v372
        %v825 = vadd.f32 %v821, %v824
        %s826 = sld [smem:[#allocation2 + $0x4e]]
        %v827 = vstv %s826
        %v828 = vmul.f32 %v827, %v500
        %v829 = vadd.f32 %v825, %v828
        %s830 = sld [smem:[#allocation2 + $0x4f]]
        %v831 = vstv %s830
        %v832 = vmul.f32 %v831, %v508
        %v833 = vadd.f32 %v829, %v832
        %s834 = sld [smem:[#allocation4 + $0x3]]
        %v835 = vstv %s834
        %v836 = vadd.f32 %v833, %v835
        %s837 = sld [smem:[#allocation6]]
        %v838 = vstv %s837
        %v839 = vmul.f32 %v590, %v838
        %s840 = sld [smem:[#allocation7]]
        %v841 = vstv %s840
        %v842 = vadd.f32 %v839, %v841
        %v843 = vmax.f32 %v842, 0.0
        %s844 = sld [smem:[#allocation6 + $0x1]]
        %v845 = vstv %s844
        %v846 = vmul.f32 %v672, %v845
        %s847 = sld [smem:[#allocation7 + $0x1]]
        %v848 = vstv %s847
        %v849 = vadd.f32 %v846, %v848
        %v850 = vmax.f32 %v849, 0.0
        %s851 = sld [smem:[#allocation6 + $0x2]]
        %v852 = vstv %s851
        %v853 = vmul.f32 %v754, %v852
        %s854 = sld [smem:[#allocation7 + $0x2]]
        %v855 = vstv %s854
        %v856 = vadd.f32 %v853, %v855
        %v857 = vmax.f32 %v856, 0.0
        %s858 = sld [smem:[#allocation6 + $0x3]]
        %v859 = vstv %s858
        %v860 = vmul.f32 %v836, %v859
        %s861 = sld [smem:[#allocation7 + $0x3]]
        %v862 = vstv %s861
        %v863 = vadd.f32 %v860, %v862
        %v864 = vmax.f32 %v863, 0.0
        %866 = vrot.lane.b32.xlu0 %v843, 114
        %v867 = vpop.permute.xlu0 %866
        %869 = vrot.lane.b32.xlu0 %v843, 2
        %v870 = vpop.permute.xlu0 %869
        %v872 = vsel %vm380, %v867, %v870
        %v873 = vsel %vm356, %v872, 0.0
        %874 = vrot.lane.b32.xlu0 %v843, 113
        %v875 = vpop.permute.xlu0 %874
        %877 = vrot.lane.b32.xlu0 %v843, 1
        %v878 = vpop.permute.xlu0 %877
        %v880 = vsel %vm389, %v875, %v878
        %v881 = vsel %vm360, %v880, 0.0
        %882 = vrot.lane.b32.xlu0 %v843, 127
        %v883 = vpop.permute.xlu0 %882
        %885 = vrot.lane.b32.xlu0 %v843, 15
        %v886 = vpop.permute.xlu0 %885
        %v888 = vsel %vm398, %v883, %v886
        %v889 = vsel %vm364, %v888, 0.0
        %890 = vrot.lane.b32.xlu0 %v843, 126
        %v891 = vpop.permute.xlu0 %890
        %893 = vrot.lane.b32.xlu0 %v843, 14
        %v894 = vpop.permute.xlu0 %893
        %v896 = vsel %vm407, %v891, %v894
        %v897 = vsel %vm368, %v896, 0.0
        %899 = vrot.lane.b32.xlu0 %v850, 114
        %v900 = vpop.permute.xlu0 %899
        %902 = vrot.lane.b32.xlu0 %v850, 2
        %v903 = vpop.permute.xlu0 %902
        %v905 = vsel %vm380, %v900, %v903
        %v906 = vsel %vm356, %v905, 0.0
        %907 = vrot.lane.b32.xlu0 %v850, 113
        %v908 = vpop.permute.xlu0 %907
        %910 = vrot.lane.b32.xlu0 %v850, 1
        %v911 = vpop.permute.xlu0 %910
        %v913 = vsel %vm389, %v908, %v911
        %v914 = vsel %vm360, %v913, 0.0
        %915 = vrot.lane.b32.xlu0 %v850, 127
        %v916 = vpop.permute.xlu0 %915
        %918 = vrot.lane.b32.xlu0 %v850, 15
        %v919 = vpop.permute.xlu0 %918
        %v921 = vsel %vm398, %v916, %v919
        %v922 = vsel %vm364, %v921, 0.0
        %923 = vrot.lane.b32.xlu0 %v850, 126
        %v924 = vpop.permute.xlu0 %923
        %926 = vrot.lane.b32.xlu0 %v850, 14
        %v927 = vpop.permute.xlu0 %926
        %v929 = vsel %vm407, %v924, %v927
        %v930 = vsel %vm368, %v929, 0.0
        %932 = vrot.lane.b32.xlu0 %v857, 114
        %v933 = vpop.permute.xlu0 %932
        %935 = vrot.lane.b32.xlu0 %v857, 2
        %v936 = vpop.permute.xlu0 %935
        %v938 = vsel %vm380, %v933, %v936
        %v939 = vsel %vm356, %v938, 0.0
        %940 = vrot.lane.b32.xlu0 %v857, 113
        %v941 = vpop.permute.xlu0 %940
        %943 = vrot.lane.b32.xlu0 %v857, 1
        %v944 = vpop.permute.xlu0 %943
        %v946 = vsel %vm389, %v941, %v944
        %v947 = vsel %vm360, %v946, 0.0
        %948 = vrot.lane.b32.xlu0 %v857, 127
        %v949 = vpop.permute.xlu0 %948
        %951 = vrot.lane.b32.xlu0 %v857, 15
        %v952 = vpop.permute.xlu0 %951
        %v954 = vsel %vm398, %v949, %v952
        %v955 = vsel %vm364, %v954, 0.0
        %956 = vrot.lane.b32.xlu0 %v857, 126
        %v957 = vpop.permute.xlu0 %956
        %959 = vrot.lane.b32.xlu0 %v857, 14
        %v960 = vpop.permute.xlu0 %959
        %v962 = vsel %vm407, %v957, %v960
        %v963 = vsel %vm368, %v962, 0.0
        %965 = vrot.lane.b32.xlu0 %v864, 114
        %v966 = vpop.permute.xlu0 %965
        %968 = vrot.lane.b32.xlu0 %v864, 2
        %v969 = vpop.permute.xlu0 %968
        %v971 = vsel %vm380, %v966, %v969
        %v972 = vsel %vm356, %v971, 0.0
        %973 = vrot.lane.b32.xlu0 %v864, 113
        %v974 = vpop.permute.xlu0 %973
        %976 = vrot.lane.b32.xlu0 %v864, 1
        %v977 = vpop.permute.xlu0 %976
        %v979 = vsel %vm389, %v974, %v977
        %v980 = vsel %vm360, %v979, 0.0
        %981 = vrot.lane.b32.xlu0 %v864, 127
        %v982 = vpop.permute.xlu0 %981
        %984 = vrot.lane.b32.xlu0 %v864, 15
        %v985 = vpop.permute.xlu0 %984
        %v987 = vsel %vm398, %v982, %v985
        %v988 = vsel %vm364, %v987, 0.0
        %989 = vrot.lane.b32.xlu0 %v864, 126
        %v990 = vpop.permute.xlu0 %989
        %992 = vrot.lane.b32.xlu0 %v864, 14
        %v993 = vpop.permute.xlu0 %992
        %v995 = vsel %vm407, %v990, %v993
        %v996 = vsel %vm368, %v995, 0.0
        %s997 = sld [smem:[#allocation9]]
        %v998 = vstv %s997
        %v999 = vmul.f32 %v998, %v873
        %s1000 = sld [smem:[#allocation9 + $0x1]]
        %v1001 = vstv %s1000
        %v1002 = vmul.f32 %v1001, %v881
        %v1003 = vadd.f32 %v999, %v1002
        %s1004 = sld [smem:[#allocation9 + $0x2]]
        %v1005 = vstv %s1004
        %v1006 = vmul.f32 %v1005, %v843
        %v1007 = vadd.f32 %v1003, %v1006
        %s1008 = sld [smem:[#allocation9 + $0x3]]
        %v1009 = vstv %s1008
        %v1010 = vmul.f32 %v1009, %v889
        %v1011 = vadd.f32 %v1007, %v1010
        %s1012 = sld [smem:[#allocation9 + $0x4]]
        %v1013 = vstv %s1012
        %v1014 = vmul.f32 %v1013, %v897
        %v1015 = vadd.f32 %v1011, %v1014
        %s1016 = sld [smem:[#allocation9 + $0x5]]
        %v1017 = vstv %s1016
        %v1018 = vmul.f32 %v1017, %v906
        %v1019 = vadd.f32 %v1015, %v1018
        %s1020 = sld [smem:[#allocation9 + $0x6]]
        %v1021 = vstv %s1020
        %v1022 = vmul.f32 %v1021, %v914
        %v1023 = vadd.f32 %v1019, %v1022
        %s1024 = sld [smem:[#allocation9 + $0x7]]
        %v1025 = vstv %s1024
        %v1026 = vmul.f32 %v1025, %v850
        %v1027 = vadd.f32 %v1023, %v1026
        %s1028 = sld [smem:[#allocation9 + $0x8]]
        %v1029 = vstv %s1028
        %v1030 = vmul.f32 %v1029, %v922
        %v1031 = vadd.f32 %v1027, %v1030
        %s1032 = sld [smem:[#allocation9 + $0x9]]
        %v1033 = vstv %s1032
        %v1034 = vmul.f32 %v1033, %v930
        %v1035 = vadd.f32 %v1031, %v1034
        %s1036 = sld [smem:[#allocation9 + $0xa]]
        %v1037 = vstv %s1036
        %v1038 = vmul.f32 %v1037, %v939
        %v1039 = vadd.f32 %v1035, %v1038
        %s1040 = sld [smem:[#allocation9 + $0xb]]
        %v1041 = vstv %s1040
        %v1042 = vmul.f32 %v1041, %v947
        %v1043 = vadd.f32 %v1039, %v1042
        %s1044 = sld [smem:[#allocation9 + $0xc]]
        %v1045 = vstv %s1044
        %v1046 = vmul.f32 %v1045, %v857
        %v1047 = vadd.f32 %v1043, %v1046
        %s1048 = sld [smem:[#allocation9 + $0xd]]
        %v1049 = vstv %s1048
        %v1050 = vmul.f32 %v1049, %v955
        %v1051 = vadd.f32 %v1047, %v1050
        %s1052 = sld [smem:[#allocation9 + $0xe]]
        %v1053 = vstv %s1052
        %v1054 = vmul.f32 %v1053, %v963
        %v1055 = vadd.f32 %v1051, %v1054
        %s1056 = sld [smem:[#allocation9 + $0xf]]
        %v1057 = vstv %s1056
        %v1058 = vmul.f32 %v1057, %v972
        %v1059 = vadd.f32 %v1055, %v1058
        %s1060 = sld [smem:[#allocation9 + $0x10]]
        %v1061 = vstv %s1060
        %v1062 = vmul.f32 %v1061, %v980
        %v1063 = vadd.f32 %v1059, %v1062
        %s1064 = sld [smem:[#allocation9 + $0x11]]
        %v1065 = vstv %s1064
        %v1066 = vmul.f32 %v1065, %v864
        %v1067 = vadd.f32 %v1063, %v1066
        %s1068 = sld [smem:[#allocation9 + $0x12]]
        %v1069 = vstv %s1068
        %v1070 = vmul.f32 %v1069, %v988
        %v1071 = vadd.f32 %v1067, %v1070
        %s1072 = sld [smem:[#allocation9 + $0x13]]
        %v1073 = vstv %s1072
        %v1074 = vmul.f32 %v1073, %v996
        %v1075 = vadd.f32 %v1071, %v1074
        %s1076 = sld [smem:[#allocation10]]
        %v1077 = vstv %s1076
        %v1078 = vadd.f32 %v1075, %v1077
        %s1079 = sld [smem:[#allocation9 + $0x14]]
        %v1080 = vstv %s1079
        %v1081 = vmul.f32 %v1080, %v873
        %s1082 = sld [smem:[#allocation9 + $0x15]]
        %v1083 = vstv %s1082
        %v1084 = vmul.f32 %v1083, %v881
        %v1085 = vadd.f32 %v1081, %v1084
        %s1086 = sld [smem:[#allocation9 + $0x16]]
        %v1087 = vstv %s1086
        %v1088 = vmul.f32 %v1087, %v843
        %v1089 = vadd.f32 %v1085, %v1088
        %s1090 = sld [smem:[#allocation9 + $0x17]]
        %v1091 = vstv %s1090
        %v1092 = vmul.f32 %v1091, %v889
        %v1093 = vadd.f32 %v1089, %v1092
        %s1094 = sld [smem:[#allocation9 + $0x18]]
        %v1095 = vstv %s1094
        %v1096 = vmul.f32 %v1095, %v897
        %v1097 = vadd.f32 %v1093, %v1096
        %s1098 = sld [smem:[#allocation9 + $0x19]]
        %v1099 = vstv %s1098
        %v1100 = vmul.f32 %v1099, %v906
        %v1101 = vadd.f32 %v1097, %v1100
        %s1102 = sld [smem:[#allocation9 + $0x1a]]
        %v1103 = vstv %s1102
        %v1104 = vmul.f32 %v1103, %v914
        %v1105 = vadd.f32 %v1101, %v1104
        %s1106 = sld [smem:[#allocation9 + $0x1b]]
        %v1107 = vstv %s1106
        %v1108 = vmul.f32 %v1107, %v850
        %v1109 = vadd.f32 %v1105, %v1108
        %s1110 = sld [smem:[#allocation9 + $0x1c]]
        %v1111 = vstv %s1110
        %v1112 = vmul.f32 %v1111, %v922
        %v1113 = vadd.f32 %v1109, %v1112
        %s1114 = sld [smem:[#allocation9 + $0x1d]]
        %v1115 = vstv %s1114
        %v1116 = vmul.f32 %v1115, %v930
        %v1117 = vadd.f32 %v1113, %v1116
        %s1118 = sld [smem:[#allocation9 + $0x1e]]
        %v1119 = vstv %s1118
        %v1120 = vmul.f32 %v1119, %v939
        %v1121 = vadd.f32 %v1117, %v1120
        %s1122 = sld [smem:[#allocation9 + $0x1f]]
        %v1123 = vstv %s1122
        %v1124 = vmul.f32 %v1123, %v947
        %v1125 = vadd.f32 %v1121, %v1124
        %s1126 = sld [smem:[#allocation9 + $0x20]]
        %v1127 = vstv %s1126
        %v1128 = vmul.f32 %v1127, %v857
        %v1129 = vadd.f32 %v1125, %v1128
        %s1130 = sld [smem:[#allocation9 + $0x21]]
        %v1131 = vstv %s1130
        %v1132 = vmul.f32 %v1131, %v955
        %v1133 = vadd.f32 %v1129, %v1132
        %s1134 = sld [smem:[#allocation9 + $0x22]]
        %v1135 = vstv %s1134
        %v1136 = vmul.f32 %v1135, %v963
        %v1137 = vadd.f32 %v1133, %v1136
        %s1138 = sld [smem:[#allocation9 + $0x23]]
        %v1139 = vstv %s1138
        %v1140 = vmul.f32 %v1139, %v972
        %v1141 = vadd.f32 %v1137, %v1140
        %s1142 = sld [smem:[#allocation9 + $0x24]]
        %v1143 = vstv %s1142
        %v1144 = vmul.f32 %v1143, %v980
        %v1145 = vadd.f32 %v1141, %v1144
        %s1146 = sld [smem:[#allocation9 + $0x25]]
        %v1147 = vstv %s1146
        %v1148 = vmul.f32 %v1147, %v864
        %v1149 = vadd.f32 %v1145, %v1148
        %s1150 = sld [smem:[#allocation9 + $0x26]]
        %v1151 = vstv %s1150
        %v1152 = vmul.f32 %v1151, %v988
        %v1153 = vadd.f32 %v1149, %v1152
        %s1154 = sld [smem:[#allocation9 + $0x27]]
        %v1155 = vstv %s1154
        %v1156 = vmul.f32 %v1155, %v996
        %v1157 = vadd.f32 %v1153, %v1156
        %s1158 = sld [smem:[#allocation10 + $0x1]]
        %v1159 = vstv %s1158
        %v1160 = vadd.f32 %v1157, %v1159
        %s1161 = sld [smem:[#allocation9 + $0x28]]
        %v1162 = vstv %s1161
        %v1163 = vmul.f32 %v1162, %v873
        %s1164 = sld [smem:[#allocation9 + $0x29]]
        %v1165 = vstv %s1164
        %v1166 = vmul.f32 %v1165, %v881
        %v1167 = vadd.f32 %v1163, %v1166
        %s1168 = sld [smem:[#allocation9 + $0x2a]]
        %v1169 = vstv %s1168
        %v1170 = vmul.f32 %v1169, %v843
        %v1171 = vadd.f32 %v1167, %v1170
        %s1172 = sld [smem:[#allocation9 + $0x2b]]
        %v1173 = vstv %s1172
        %v1174 = vmul.f32 %v1173, %v889
        %v1175 = vadd.f32 %v1171, %v1174
        %s1176 = sld [smem:[#allocation9 + $0x2c]]
        %v1177 = vstv %s1176
        %v1178 = vmul.f32 %v1177, %v897
        %v1179 = vadd.f32 %v1175, %v1178
        %s1180 = sld [smem:[#allocation9 + $0x2d]]
        %v1181 = vstv %s1180
        %v1182 = vmul.f32 %v1181, %v906
        %v1183 = vadd.f32 %v1179, %v1182
        %s1184 = sld [smem:[#allocation9 + $0x2e]]
        %v1185 = vstv %s1184
        %v1186 = vmul.f32 %v1185, %v914
        %v1187 = vadd.f32 %v1183, %v1186
        %s1188 = sld [smem:[#allocation9 + $0x2f]]
        %v1189 = vstv %s1188
        %v1190 = vmul.f32 %v1189, %v850
        %v1191 = vadd.f32 %v1187, %v1190
        %s1192 = sld [smem:[#allocation9 + $0x30]]
        %v1193 = vstv %s1192
        %v1194 = vmul.f32 %v1193, %v922
        %v1195 = vadd.f32 %v1191, %v1194
        %s1196 = sld [smem:[#allocation9 + $0x31]]
        %v1197 = vstv %s1196
        %v1198 = vmul.f32 %v1197, %v930
        %v1199 = vadd.f32 %v1195, %v1198
        %s1200 = sld [smem:[#allocation9 + $0x32]]
        %v1201 = vstv %s1200
        %v1202 = vmul.f32 %v1201, %v939
        %v1203 = vadd.f32 %v1199, %v1202
        %s1204 = sld [smem:[#allocation9 + $0x33]]
        %v1205 = vstv %s1204
        %v1206 = vmul.f32 %v1205, %v947
        %v1207 = vadd.f32 %v1203, %v1206
        %s1208 = sld [smem:[#allocation9 + $0x34]]
        %v1209 = vstv %s1208
        %v1210 = vmul.f32 %v1209, %v857
        %v1211 = vadd.f32 %v1207, %v1210
        %s1212 = sld [smem:[#allocation9 + $0x35]]
        %v1213 = vstv %s1212
        %v1214 = vmul.f32 %v1213, %v955
        %v1215 = vadd.f32 %v1211, %v1214
        %s1216 = sld [smem:[#allocation9 + $0x36]]
        %v1217 = vstv %s1216
        %v1218 = vmul.f32 %v1217, %v963
        %v1219 = vadd.f32 %v1215, %v1218
        %s1220 = sld [smem:[#allocation9 + $0x37]]
        %v1221 = vstv %s1220
        %v1222 = vmul.f32 %v1221, %v972
        %v1223 = vadd.f32 %v1219, %v1222
        %s1224 = sld [smem:[#allocation9 + $0x38]]
        %v1225 = vstv %s1224
        %v1226 = vmul.f32 %v1225, %v980
        %v1227 = vadd.f32 %v1223, %v1226
        %s1228 = sld [smem:[#allocation9 + $0x39]]
        %v1229 = vstv %s1228
        %v1230 = vmul.f32 %v1229, %v864
        %v1231 = vadd.f32 %v1227, %v1230
        %s1232 = sld [smem:[#allocation9 + $0x3a]]
        %v1233 = vstv %s1232
        %v1234 = vmul.f32 %v1233, %v988
        %v1235 = vadd.f32 %v1231, %v1234
        %s1236 = sld [smem:[#allocation9 + $0x3b]]
        %v1237 = vstv %s1236
        %v1238 = vmul.f32 %v1237, %v996
        %v1239 = vadd.f32 %v1235, %v1238
        %s1240 = sld [smem:[#allocation10 + $0x2]]
        %v1241 = vstv %s1240
        %v1242 = vadd.f32 %v1239, %v1241
        %s1243 = sld [smem:[#allocation9 + $0x3c]]
        %v1244 = vstv %s1243
        %v1245 = vmul.f32 %v1244, %v873
        %s1246 = sld [smem:[#allocation9 + $0x3d]]
        %v1247 = vstv %s1246
        %v1248 = vmul.f32 %v1247, %v881
        %v1249 = vadd.f32 %v1245, %v1248
        %s1250 = sld [smem:[#allocation9 + $0x3e]]
        %v1251 = vstv %s1250
        %v1252 = vmul.f32 %v1251, %v843
        %v1253 = vadd.f32 %v1249, %v1252
        %s1254 = sld [smem:[#allocation9 + $0x3f]]
        %v1255 = vstv %s1254
        %v1256 = vmul.f32 %v1255, %v889
        %v1257 = vadd.f32 %v1253, %v1256
        %s1258 = sld [smem:[#allocation9 + $0x40]]
        %v1259 = vstv %s1258
        %v1260 = vmul.f32 %v1259, %v897
        %v1261 = vadd.f32 %v1257, %v1260
        %s1262 = sld [smem:[#allocation9 + $0x41]]
        %v1263 = vstv %s1262
        %v1264 = vmul.f32 %v1263, %v906
        %v1265 = vadd.f32 %v1261, %v1264
        %s1266 = sld [smem:[#allocation9 + $0x42]]
        %v1267 = vstv %s1266
        %v1268 = vmul.f32 %v1267, %v914
        %v1269 = vadd.f32 %v1265, %v1268
        %s1270 = sld [smem:[#allocation9 + $0x43]]
        %v1271 = vstv %s1270
        %v1272 = vmul.f32 %v1271, %v850
        %v1273 = vadd.f32 %v1269, %v1272
        %s1274 = sld [smem:[#allocation9 + $0x44]]
        %v1275 = vstv %s1274
        %v1276 = vmul.f32 %v1275, %v922
        %v1277 = vadd.f32 %v1273, %v1276
        %s1278 = sld [smem:[#allocation9 + $0x45]]
        %v1279 = vstv %s1278
        %v1280 = vmul.f32 %v1279, %v930
        %v1281 = vadd.f32 %v1277, %v1280
        %s1282 = sld [smem:[#allocation9 + $0x46]]
        %v1283 = vstv %s1282
        %v1284 = vmul.f32 %v1283, %v939
        %v1285 = vadd.f32 %v1281, %v1284
        %s1286 = sld [smem:[#allocation9 + $0x47]]
        %v1287 = vstv %s1286
        %v1288 = vmul.f32 %v1287, %v947
        %v1289 = vadd.f32 %v1285, %v1288
        %s1290 = sld [smem:[#allocation9 + $0x48]]
        %v1291 = vstv %s1290
        %v1292 = vmul.f32 %v1291, %v857
        %v1293 = vadd.f32 %v1289, %v1292
        %s1294 = sld [smem:[#allocation9 + $0x49]]
        %v1295 = vstv %s1294
        %v1296 = vmul.f32 %v1295, %v955
        %v1297 = vadd.f32 %v1293, %v1296
        %s1298 = sld [smem:[#allocation9 + $0x4a]]
        %v1299 = vstv %s1298
        %v1300 = vmul.f32 %v1299, %v963
        %v1301 = vadd.f32 %v1297, %v1300
        %s1302 = sld [smem:[#allocation9 + $0x4b]]
        %v1303 = vstv %s1302
        %v1304 = vmul.f32 %v1303, %v972
        %v1305 = vadd.f32 %v1301, %v1304
        %s1306 = sld [smem:[#allocation9 + $0x4c]]
        %v1307 = vstv %s1306
        %v1308 = vmul.f32 %v1307, %v980
        %v1309 = vadd.f32 %v1305, %v1308
        %s1310 = sld [smem:[#allocation9 + $0x4d]]
        %v1311 = vstv %s1310
        %v1312 = vmul.f32 %v1311, %v864
        %v1313 = vadd.f32 %v1309, %v1312
        %s1314 = sld [smem:[#allocation9 + $0x4e]]
        %v1315 = vstv %s1314
        %v1316 = vmul.f32 %v1315, %v988
        %v1317 = vadd.f32 %v1313, %v1316
        %s1318 = sld [smem:[#allocation9 + $0x4f]]
        %v1319 = vstv %s1318
        %v1320 = vmul.f32 %v1319, %v996
        %v1321 = vadd.f32 %v1317, %v1320
        %s1322 = sld [smem:[#allocation10 + $0x3]]
        %v1323 = vstv %s1322
        %v1324 = vadd.f32 %v1321, %v1323
        %v1325 = vadd.f32 %v1078, 0.0
        %v1326 = vadd.f32 %v1160, 0.0
        %v1327 = vadd.f32 %v1242, 0.0
        %v1328 = vadd.f32 %v1324, 0.0
        %v1329 = vmul.f32 %v1078, %v1078
        %v1330 = vadd.f32 %v1329, 0.0
        %v1331 = vmul.f32 %v1160, %v1160
        %v1332 = vadd.f32 %v1331, 0.0
        %v1333 = vmul.f32 %v1242, %v1242
        %v1334 = vadd.f32 %v1333, 0.0
        %v1335 = vmul.f32 %v1324, %v1324
        %v1336 = vadd.f32 %v1335, 0.0
        %v1338 = vrot.slane %v1326, 7
        %v1341 = vrot.slane %v1327, 6
        %v1344 = vrot.slane %v1328, 5
        %v1347 = vrot.slane %v1330, 4
        %v1350 = vrot.slane %v1332, 3
        %v1353 = vrot.slane %v1334, 2
        %v1356 = vrot.slane %v1336, 1
        %vm1358 = vcmask 1040384
        %v1359 = vsel %vm1358, %v1325, %v1338
        %vm1360 = vcmask 1041408
        %v1361 = vsel %vm1360, %v1359, %v1341
        %vm1362 = vcmask 1042432
        %v1363 = vsel %vm1362, %v1361, %v1344
        %vm1364 = vcmask 1043456
        %v1365 = vsel %vm1364, %v1363, %v1347
        %vm1366 = vcmask 1044480
        %v1367 = vsel %vm1366, %v1365, %v1350
        %vm1368 = vcmask 1045504
        %v1369 = vsel %vm1368, %v1367, %v1353
        %vm1370 = vcmask 1046528
        %v1371 = vsel %vm1370, %v1369, %v1356
        %vm1372 = vcmask 130048
        %1373 = vst.msk [vmem:[%s350] sm:$0xff] %vm1372, %v1371
        %p1374 = scmp.lt.s32.totalorder %s22, 1
        %s1375 = scalar_select %p1374, %s22, 1
        %s1376 = smul.addr %s1375, 8
        %s1377 = scalar_lea.vmem %s7, %s1376
        // Predicated region
        $region73: #{_resblock_forward_impl.4} parent=47 // pred_check
          %p1378 = pneg %p192
        $region74: #{_resblock_forward_impl.4} parent=47 // pred_check_branch
          %1380 = sbr.rel (%p1378) target = $region76
        $region75: #{_resblock_forward_impl.4} parent=47 // pred_region
          _
        $region76: #{_resblock_forward_impl.4} parent=47 // pred_fallthru
          _
      $region48: #{_resblock_forward_impl.4} parent=5 // pred_fallthru
        _
      %p1381 = scmp.le.s32.totalorder 2, %s17
      // Predicated region
      $region77: #{_resblock_forward_impl.4} parent=5 // pred_check
        %p1382 = pneg %p1381
      $region78: #{_resblock_forward_impl.4} parent=5 // pred_check_branch
        %1384 = sbr.rel (%p1382) target = $region80
      $region79: #{_resblock_forward_impl.4} parent=5 // pred_region
        %s1385 = ssub.s32 %s17, 2
        // Predicated region
        $region81: #{_resblock_forward_impl.4} parent=79 // pred_check
          %p1386 = pneg %p198
        $region82: #{_resblock_forward_impl.4} parent=79 // pred_check_branch
          %1388 = sbr.rel (%p1386) target = $region84
        $region83: #{_resblock_forward_impl.4} parent=79 // pred_region
          %p1389 = scmp.lt.s32.totalorder %s23, 1
          %s1390 = scalar_select %p1389, %s23, 1
          %s1391 = smul.addr %s1390, 8
          %s1392 = scalar_lea.vmem %s7, %s1391
        $region84: #{_resblock_forward_impl.4} parent=79 // pred_fallthru
          _
      $region80: #{_resblock_forward_impl.4} parent=5 // pred_fallthru
        _
    $region6: #{_resblock_forward_impl.4} parent=1 // loop_footer
      %s21 = sadd.s32 1, %s17
    $region7: #{_resblock_forward_impl.4} parent=1 // loop_footer_branch
      %16 = sbr.rel target = $region3
    $region8: #{_resblock_forward_impl.4} parent=1 // loop_exit
      _
    %1393 = vsyncpa [#allocation3], 1
    %s1394 = scalar_lea.sflag [#allocation3], 1
    %1395 = vsyncpa %s1394, 1
    %1396 = vsyncpa [#allocation5], 1
    %1397 = vsyncpa [#allocation8], 1
    %1398 = vsyncpa [#allocation11], 1

// kernel: _resblock_forward_impl.5
$region0: #{_resblock_forward_impl.5}
  #allocation0 [shape = 'u32[]', space=smem, size = 0x4, offset = 0x4, fixed_abs, tag = 'smem constant byte address 0x4 - core index']
  #allocation1 [shape = 'u32[72,128]{1,0:T(1,128)}', space=vmem, size = 0x9000, scoped, tag = 'internal scratch']
  %s0 = inlined_call_operand.vmem [shape: f32[2,4,16], index: 0, kind: input, shape index: {}]
  %s1 = inlined_call_operand.vmem [shape: f32[80], index: 1, kind: input, shape index: {}]
  %s2 = inlined_call_operand.vmem [shape: f32[4], index: 2, kind: input, shape index: {}]
  %s3 = inlined_call_operand.vmem [shape: f32[4], index: 3, kind: input, shape index: {}]
  %s4 = inlined_call_operand.vmem [shape: f32[4], index: 4, kind: input, shape index: {}]
  %s5 = inlined_call_operand.vmem [shape: f32[80], index: 5, kind: input, shape index: {}]
  %s6 = inlined_call_operand.vmem [shape: f32[4], index: 6, kind: input, shape index: {}]
  %s7 = inlined_call_operand.vmem [shape: f32[4], index: 7, kind: input, shape index: {}]
  %s8 = inlined_call_operand.vmem [shape: f32[4], index: 8, kind: input, shape index: {}]
  %s9 = inlined_call_operand.hbm [shape: f32[2,4,16], index: 9, kind: output, shape index: {}]
  %s10 = sld [smem:[#allocation0]]
  $region101: #{_resblock_forward_impl.5} parent=0
    _
  %s12 = ssub.s32 1, %s10
  %s13 = scalar_select 0, %s12, %s10
  $region1: #{_resblock_forward_impl.5} parent=0
    #allocation2 [shape = 'u8[512]{0}', space=smem, size = 0x200, scoped, tag = 'input window, operand 1, single buffered']
    #allocation3 [shape = 's32[2]{0}', space=sflag, size = 0x8, scoped, tag = 'scoped memory for _resblock_forward_impl.5']
    #allocation4 [shape = 's32[2]{0}', space=sflag, size = 0x8, scoped, tag = 'scoped memory for _resblock_forward_impl.5']
    #allocation5 [shape = 'u8[512]{0}', space=smem, size = 0x200, scoped, tag = 'input window, operand 2, single buffered']
    #allocation6 [shape = 's32[1]{0}', space=sflag, size = 0x4, scoped, tag = 'scoped memory for _resblock_forward_impl.5']
    #allocation7 [shape = 'u8[512]{0}', space=smem, size = 0x200, scoped, tag = 'input window, operand 3, single buffered']
    #allocation8 [shape = 'u8[512]{0}', space=smem, size = 0x200, scoped, tag = 'input window, operand 4, single buffered']
    #allocation9 [shape = 's32[1]{0}', space=sflag, size = 0x4, scoped, tag = 'scoped memory for _resblock_forward_impl.5']
    #allocation10 [shape = 'u8[512]{0}', space=smem, size = 0x200, scoped, tag = 'input window, operand 5, single buffered']
    #allocation11 [shape = 'u8[512]{0}', space=smem, size = 0x200, scoped, tag = 'input window, operand 6, single buffered']
    #allocation12 [shape = 's32[1]{0}', space=sflag, size = 0x4, scoped, tag = 'scoped memory for _resblock_forward_impl.5']
    #allocation13 [shape = 'u8[512]{0}', space=smem, size = 0x200, scoped, tag = 'input window, operand 7, single buffered']
    #allocation14 [shape = 'u8[512]{0}', space=smem, size = 0x200, scoped, tag = 'input window, operand 8, single buffered']
    #allocation15 [shape = 's32[1]{0}', space=sflag, size = 0x4, scoped, tag = 'scoped memory for _resblock_forward_impl.5']
    #allocation16 [shape = 'u8[4096]{0}', space=vmem, size = 0x1000, scoped, tag = 'output window, operand 0']
    %14 = vsyncpa [#allocation4], 0
    %15 = vsyncpa [#allocation6], 0
    %16 = vsyncpa [#allocation9], 0
    %17 = vsyncpa [#allocation12], 0
    %18 = vsyncpa [#allocation15], 0
    %19 = vsyncpa [#allocation3], 0
    %s20 = scalar_lea.sflag [#allocation3], 1
    %21 = vsyncpa %s20, 0
    loop: start=0, step=1, limit=4
    $region2: #{_resblock_forward_impl.5} parent=1 // loop_pre_header
      _
    $region3: #{_resblock_forward_impl.5} parent=1 // loop_header
      %s23 = sphi 0, %s27
      %p24 = scmp.ge.s32.totalorder %s23, 4
      %s33 = sphi 0, %s35
      %s36 = sphi 0, %s33
      %s37 = sphi 0, %s36
      %s53 = sphi 0, %s37
      %s57 = sphi 0, %s57
      %s59 = sphi 0, %s57
      %s60 = sphi 0, %s59
      %s74 = sphi 0, %s60
      %s78 = sphi 0, %s78
      %s80 = sphi 0, %s78
      %s81 = sphi 0, %s80
      %s95 = sphi 0, %s81
      %s99 = sphi 0, %s99
      %s101 = sphi 0, %s99
      %s102 = sphi 0, %s101
      %s116 = sphi 0, %s102
      %s120 = sphi 0, %s120
      %s122 = sphi 0, %s120
      %s123 = sphi 0, %s122
      %s137 = sphi 0, %s123
      %s141 = sphi 0, %s141
      %s143 = sphi 0, %s141
      %s144 = sphi 0, %s143
      %s158 = sphi 0, %s144
      %s162 = sphi 0, %s162
      %s164 = sphi 0, %s162
      %s165 = sphi 0, %s164
      %s179 = sphi 0, %s165
      %s183 = sphi 0, %s183
      %s185 = sphi 0, %s183
      %s186 = sphi 0, %s185
      %s200 = sphi 0, %s186
      %s204 = sphi 0, %s204
      %s206 = sphi 0, %s204
      %s207 = sphi 0, %s206
      %s221 = sphi 0, %s207
      %s227 = sphi 0, %s229
      %s230 = sphi 0, %s227
      %s231 = sphi 0, %s230
      %s247 = sphi 0, %s231
    $region4: #{_resblock_forward_impl.5} parent=1 // loop_header_branch
      %26 = sbr.rel (%p24) target = $region8
    $region5: #{_resblock_forward_impl.5} parent=1 // loop_body
      %s28 = ssub.s32 %s23, 1
      %s29 = ssub.s32 %s23, 2
      %s30 = sadd.s32 %s23, 1
      %s31 = ssub.s32 %s23, %s30
      %p32 = scmp.eq.s32.totalorder %s31, 0
      %s34 = sadd.s32 %s33, 1
      %s35 = scalar_select %p32, %s33, %s34
      %p38 = pneg %p32
      %p39 = scmp.eq.s32.totalorder %s23, 1
      %p40 = por %p38, %p39
      %p41 = scmp.ne.s32.totalorder %s33, %s36
      %p42 = scmp.eq.s32.totalorder %s23, 0
      %p43 = por %p41, %p42
      %p44 = scmp.ne.s32.totalorder %s33, %s36
      %p45 = scmp.eq.s32.totalorder %s28, 1
      %p46 = por %p44, %p45
      %p47 = scmp.ne.s32.totalorder %s36, %s37
      %p48 = scmp.eq.s32.totalorder %s28, 0
      %p49 = por %p47, %p48
      %p50 = scmp.ne.s32.totalorder %s36, %s37
      %p51 = scmp.eq.s32.totalorder %s29, 1
      %p52 = por %p50, %p51
      %p54 = scmp.ne.s32.totalorder %s37, %s53
      %p55 = scmp.eq.s32.totalorder %s29, 0
      %p56 = por %p54, %p55
      %s58 = sadd.s32 %s57, 1
      %p61 = scmp.eq.s32.totalorder %s23, 1
      %p62 = scmp.ne.s32.totalorder %s57, %s59
      %p63 = scmp.eq.s32.totalorder %s23, 0
      %p64 = por %p62, %p63
      %p65 = scmp.ne.s32.totalorder %s57, %s59
      %p66 = scmp.eq.s32.totalorder %s28, 1
      %p67 = por %p65, %p66
      %p68 = scmp.ne.s32.totalorder %s59, %s60
      %p69 = scmp.eq.s32.totalorder %s28, 0
      %p70 = por %p68, %p69
      %p71 = scmp.ne.s32.totalorder %s59, %s60
      %p72 = scmp.eq.s32.totalorder %s29, 1
      %p73 = por %p71, %p72
      %p75 = scmp.ne.s32.totalorder %s60, %s74
      %p76 = scmp.eq.s32.totalorder %s29, 0
      %p77 = por %p75, %p76
      %s79 = sadd.s32 %s78, 1
      %p82 = scmp.eq.s32.totalorder %s23, 1
      %p83 = scmp.ne.s32.totalorder %s78, %s80
      %p84 = scmp.eq.s32.totalorder %s23, 0
      %p85 = por %p83, %p84
      %p86 = scmp.ne.s32.totalorder %s78, %s80
      %p87 = scmp.eq.s32.totalorder %s28, 1
      %p88 = por %p86, %p87
      %p89 = scmp.ne.s32.totalorder %s80, %s81
      %p90 = scmp.eq.s32.totalorder %s28, 0
      %p91 = por %p89, %p90
      %p92 = scmp.ne.s32.totalorder %s80, %s81
      %p93 = scmp.eq.s32.totalorder %s29, 1
      %p94 = por %p92, %p93
      %p96 = scmp.ne.s32.totalorder %s81, %s95
      %p97 = scmp.eq.s32.totalorder %s29, 0
      %p98 = por %p96, %p97
      %s100 = sadd.s32 %s99, 1
      %p103 = scmp.eq.s32.totalorder %s23, 1
      %p104 = scmp.ne.s32.totalorder %s99, %s101
      %p105 = scmp.eq.s32.totalorder %s23, 0
      %p106 = por %p104, %p105
      %p107 = scmp.ne.s32.totalorder %s99, %s101
      %p108 = scmp.eq.s32.totalorder %s28, 1
      %p109 = por %p107, %p108
      %p110 = scmp.ne.s32.totalorder %s101, %s102
      %p111 = scmp.eq.s32.totalorder %s28, 0
      %p112 = por %p110, %p111
      %p113 = scmp.ne.s32.totalorder %s101, %s102
      %p114 = scmp.eq.s32.totalorder %s29, 1
      %p115 = por %p113, %p114
      %p117 = scmp.ne.s32.totalorder %s102, %s116
      %p118 = scmp.eq.s32.totalorder %s29, 0
      %p119 = por %p117, %p118
      %s121 = sadd.s32 %s120, 1
      %p124 = scmp.eq.s32.totalorder %s23, 1
      %p125 = scmp.ne.s32.totalorder %s120, %s122
      %p126 = scmp.eq.s32.totalorder %s23, 0
      %p127 = por %p125, %p126
      %p128 = scmp.ne.s32.totalorder %s120, %s122
      %p129 = scmp.eq.s32.totalorder %s28, 1
      %p130 = por %p128, %p129
      %p131 = scmp.ne.s32.totalorder %s122, %s123
      %p132 = scmp.eq.s32.totalorder %s28, 0
      %p133 = por %p131, %p132
      %p134 = scmp.ne.s32.totalorder %s122, %s123
      %p135 = scmp.eq.s32.totalorder %s29, 1
      %p136 = por %p134, %p135
      %p138 = scmp.ne.s32.totalorder %s123, %s137
      %p139 = scmp.eq.s32.totalorder %s29, 0
      %p140 = por %p138, %p139
      %s142 = sadd.s32 %s141, 1
      %p145 = scmp.eq.s32.totalorder %s23, 1
      %p146 = scmp.ne.s32.totalorder %s141, %s143
      %p147 = scmp.eq.s32.totalorder %s23, 0
      %p148 = por %p146, %p147
      %p149 = scmp.ne.s32.totalorder %s141, %s143
      %p150 = scmp.eq.s32.totalorder %s28, 1
      %p151 = por %p149, %p150
      %p152 = scmp.ne.s32.totalorder %s143, %s144
      %p153 = scmp.eq.s32.totalorder %s28, 0
      %p154 = por %p152, %p153
      %p155 = scmp.ne.s32.totalorder %s143, %s144
      %p156 = scmp.eq.s32.totalorder %s29, 1
      %p157 = por %p155, %p156
      %p159 = scmp.ne.s32.totalorder %s144, %s158
      %p160 = scmp.eq.s32.totalorder %s29, 0
      %p161 = por %p159, %p160
      %s163 = sadd.s32 %s162, 1
      %p166 = scmp.eq.s32.totalorder %s23, 1
      %p167 = scmp.ne.s32.totalorder %s162, %s164
      %p168 = scmp.eq.s32.totalorder %s23, 0
      %p169 = por %p167, %p168
      %p170 = scmp.ne.s32.totalorder %s162, %s164
      %p171 = scmp.eq.s32.totalorder %s28, 1
      %p172 = por %p170, %p171
      %p173 = scmp.ne.s32.totalorder %s164, %s165
      %p174 = scmp.eq.s32.totalorder %s28, 0
      %p175 = por %p173, %p174
      %p176 = scmp.ne.s32.totalorder %s164, %s165
      %p177 = scmp.eq.s32.totalorder %s29, 1
      %p178 = por %p176, %p177
      %p180 = scmp.ne.s32.totalorder %s165, %s179
      %p181 = scmp.eq.s32.totalorder %s29, 0
      %p182 = por %p180, %p181
      %s184 = sadd.s32 %s183, 1
      %p187 = scmp.eq.s32.totalorder %s23, 1
      %p188 = scmp.ne.s32.totalorder %s183, %s185
      %p189 = scmp.eq.s32.totalorder %s23, 0
      %p190 = por %p188, %p189
      %p191 = scmp.ne.s32.totalorder %s183, %s185
      %p192 = scmp.eq.s32.totalorder %s28, 1
      %p193 = por %p191, %p192
      %p194 = scmp.ne.s32.totalorder %s185, %s186
      %p195 = scmp.eq.s32.totalorder %s28, 0
      %p196 = por %p194, %p195
      %p197 = scmp.ne.s32.totalorder %s185, %s186
      %p198 = scmp.eq.s32.totalorder %s29, 1
      %p199 = por %p197, %p198
      %p201 = scmp.ne.s32.totalorder %s186, %s200
      %p202 = scmp.eq.s32.totalorder %s29, 0
      %p203 = por %p201, %p202
      %s205 = sadd.s32 %s204, 1
      %p208 = scmp.eq.s32.totalorder %s23, 1
      %p209 = scmp.ne.s32.totalorder %s204, %s206
      %p210 = scmp.eq.s32.totalorder %s23, 0
      %p211 = por %p209, %p210
      %p212 = scmp.ne.s32.totalorder %s204, %s206
      %p213 = scmp.eq.s32.totalorder %s28, 1
      %p214 = por %p212, %p213
      %p215 = scmp.ne.s32.totalorder %s206, %s207
      %p216 = scmp.eq.s32.totalorder %s28, 0
      %p217 = por %p215, %p216
      %p218 = scmp.ne.s32.totalorder %s206, %s207
      %p219 = scmp.eq.s32.totalorder %s29, 1
      %p220 = por %p218, %p219
      %p222 = scmp.ne.s32.totalorder %s207, %s221
      %p223 = scmp.eq.s32.totalorder %s29, 0
      %p224 = por %p222, %p223
      %s225 = ssub.s32 %s23, %s30
      %p226 = scmp.eq.s32.totalorder %s225, 0
      %s228 = sadd.s32 %s227, 1
      %s229 = scalar_select %p226, %s227, %s228
      %p232 = pneg %p226
      %p233 = scmp.eq.s32.totalorder %s23, 1
      %p234 = por %p232, %p233
      %p235 = scmp.ne.s32.totalorder %s227, %s230
      %p236 = scmp.eq.s32.totalorder %s23, 0
      %p237 = por %p235, %p236
      %p238 = scmp.ne.s32.totalorder %s227, %s230
      %p239 = scmp.eq.s32.totalorder %s28, 1
      %p240 = por %p238, %p239
      %p241 = scmp.ne.s32.totalorder %s230, %s231
      %p242 = scmp.eq.s32.totalorder %s28, 0
      %p243 = por %p241, %p242
      %p244 = scmp.ne.s32.totalorder %s230, %s231
      %p245 = scmp.eq.s32.totalorder %s29, 1
      %p246 = por %p244, %p245
      %p248 = scmp.ne.s32.totalorder %s231, %s247
      %p249 = scmp.eq.s32.totalorder %s29, 0
      %p250 = por %p248, %p249
      %p251 = scmp.le.s32.totalorder 1, %s23
      %p252 = scmp.lt.s32.totalorder %s23, 3
      %p253 = pnand %p251, %p252
      %p254 = pneg %p253
      // Predicated region
      $region9: #{_resblock_forward_impl.5} parent=5 // pred_check
        _
      $region10: #{_resblock_forward_impl.5} parent=5 // pred_check_branch
        %256 = sbr.rel (%p253) target = $region12
      $region11: #{_resblock_forward_impl.5} parent=5 // pred_region
        %s257 = ssub.s32 %s23, 1
        // Predicated region
        $region13: #{_resblock_forward_impl.5} parent=11 // pred_check
          %p258 = pneg %p70
        $region14: #{_resblock_forward_impl.5} parent=11 // pred_check_branch
          %260 = sbr.rel (%p258) target = $region16
        $region15: #{_resblock_forward_impl.5} parent=11 // pred_region
          %262 = vsyncadd [#allocation4], 0
          %s264 = sshll.u32 %s1, 4
          %s265 = int_to_ptr.vmem [resolvable:$true] %s264
          %267 = dma.vmem_to_smem %s265, 16, [#allocation2], [#allocation4]
        $region16: #{_resblock_forward_impl.5} parent=11 // pred_fallthru
          _
        // Predicated region
        $region17: #{_resblock_forward_impl.5} parent=11 // pred_check
          %p268 = pneg %p91
        $region18: #{_resblock_forward_impl.5} parent=11 // pred_check_branch
          %270 = sbr.rel (%p268) target = $region20
        $region19: #{_resblock_forward_impl.5} parent=11 // pred_region
          %272 = vsyncadd [#allocation6], 0
          %s274 = sshll.u32 %s2, 4
          %s275 = int_to_ptr.vmem [resolvable:$true] %s274
          %277 = dma.vmem_to_smem %s275, 16, [#allocation5], [#allocation6]
        $region20: #{_resblock_forward_impl.5} parent=11 // pred_fallthru
          _
        // Predicated region
        $region21: #{_resblock_forward_impl.5} parent=11 // pred_check
          %p278 = pneg %p112
        $region22: #{_resblock_forward_impl.5} parent=11 // pred_check_branch
          %280 = sbr.rel (%p278) target = $region24
        $region23: #{_resblock_forward_impl.5} parent=11 // pred_region
          %282 = vsyncadd [#allocation6], 0
          %s284 = sshll.u32 %s3, 4
          %s285 = int_to_ptr.vmem [resolvable:$true] %s284
          %287 = dma.vmem_to_smem %s285, 16, [#allocation7], [#allocation6]
        $region24: #{_resblock_forward_impl.5} parent=11 // pred_fallthru
          _
        // Predicated region
        $region25: #{_resblock_forward_impl.5} parent=11 // pred_check
          %p288 = pneg %p133
        $region26: #{_resblock_forward_impl.5} parent=11 // pred_check_branch
          %290 = sbr.rel (%p288) target = $region28
        $region27: #{_resblock_forward_impl.5} parent=11 // pred_region
          %292 = vsyncadd [#allocation9], 0
          %s294 = sshll.u32 %s4, 4
          %s295 = int_to_ptr.vmem [resolvable:$true] %s294
          %297 = dma.vmem_to_smem %s295, 16, [#allocation8], [#allocation9]
        $region28: #{_resblock_forward_impl.5} parent=11 // pred_fallthru
          _
        // Predicated region
        $region29: #{_resblock_forward_impl.5} parent=11 // pred_check
          %p298 = pneg %p154
        $region30: #{_resblock_forward_impl.5} parent=11 // pred_check_branch
          %300 = sbr.rel (%p298) target = $region32
        $region31: #{_resblock_forward_impl.5} parent=11 // pred_region
          %302 = vsyncadd [#allocation9], 0
          %s304 = sshll.u32 %s5, 4
          %s305 = int_to_ptr.vmem [resolvable:$true] %s304
          %307 = dma.vmem_to_smem %s305, 16, [#allocation10], [#allocation9]
        $region32: #{_resblock_forward_impl.5} parent=11 // pred_fallthru
          _
        // Predicated region
        $region33: #{_resblock_forward_impl.5} parent=11 // pred_check
          %p308 = pneg %p175
        $region34: #{_resblock_forward_impl.5} parent=11 // pred_check_branch
          %310 = sbr.rel (%p308) target = $region36
        $region35: #{_resblock_forward_impl.5} parent=11 // pred_region
          %312 = vsyncadd [#allocation12], 0
          %s314 = sshll.u32 %s6, 4
          %s315 = int_to_ptr.vmem [resolvable:$true] %s314
          %317 = dma.vmem_to_smem %s315, 16, [#allocation11], [#allocation12]
        $region36: #{_resblock_forward_impl.5} parent=11 // pred_fallthru
          _
        // Predicated region
        $region37: #{_resblock_forward_impl.5} parent=11 // pred_check
          %p318 = pneg %p196
        $region38: #{_resblock_forward_impl.5} parent=11 // pred_check_branch
          %320 = sbr.rel (%p318) target = $region40
        $region39: #{_resblock_forward_impl.5} parent=11 // pred_region
          %322 = vsyncadd [#allocation12], 0
          %s324 = sshll.u32 %s7, 4
          %s325 = int_to_ptr.vmem [resolvable:$true] %s324
          %327 = dma.vmem_to_smem %s325, 16, [#allocation13], [#allocation12]
        $region40: #{_resblock_forward_impl.5} parent=11 // pred_fallthru
          _
        // Predicated region
        $region41: #{_resblock_forward_impl.5} parent=11 // pred_check
          %p328 = pneg %p217
        $region42: #{_resblock_forward_impl.5} parent=11 // pred_check_branch
          %330 = sbr.rel (%p328) target = $region44
        $region43: #{_resblock_forward_impl.5} parent=11 // pred_region
          %332 = vsyncadd [#allocation15], 0
          %s334 = sshll.u32 %s8, 4
          %s335 = int_to_ptr.vmem [resolvable:$true] %s334
          %337 = dma.vmem_to_smem %s335, 16, [#allocation14], [#allocation15]
        $region44: #{_resblock_forward_impl.5} parent=11 // pred_fallthru
          _
      $region12: #{_resblock_forward_impl.5} parent=5 // pred_fallthru
        _
      %p338 = scmp.lt.s32.totalorder %s23, 2
      // Predicated region
      $region45: #{_resblock_forward_impl.5} parent=5 // pred_check
        %p339 = pneg %p338
      $region46: #{_resblock_forward_impl.5} parent=5 // pred_check_branch
        %341 = sbr.rel (%p339) target = $region48
      $region47: #{_resblock_forward_impl.5} parent=5 // pred_region
        // Predicated region
        $region49: #{_resblock_forward_impl.5} parent=47 // pred_check
          %p342 = pneg %p43
        $region50: #{_resblock_forward_impl.5} parent=47 // pred_check_branch
          %344 = sbr.rel (%p342) target = $region52
        $region51: #{_resblock_forward_impl.5} parent=47 // pred_region
          %p345 = scmp.lt.s32.totalorder %s23, 1
          %s346 = scalar_select %p345, %s23, 1
          %s347 = smul.addr %s346, 4
          %s348 = scalar_lea.vmem %s0, %s347
        $region52: #{_resblock_forward_impl.5} parent=47 // pred_fallthru
          _
      $region48: #{_resblock_forward_impl.5} parent=5 // pred_fallthru
        _
      %p349 = scmp.le.s32.totalorder 1, %s23
      %p350 = scmp.lt.s32.totalorder %s23, 3
      %p351 = pnand %p349, %p350
      %p352 = pneg %p351
      // Predicated region
      $region53: #{_resblock_forward_impl.5} parent=5 // pred_check
        _
      $region54: #{_resblock_forward_impl.5} parent=5 // pred_check_branch
        %354 = sbr.rel (%p351) target = $region56
      $region55: #{_resblock_forward_impl.5} parent=5 // pred_region
        %s355 = ssub.s32 %s23, 1
        // Predicated region
        $region57: #{_resblock_forward_impl.5} parent=55 // pred_check
          %p356 = pneg %p70
        $region58: #{_resblock_forward_impl.5} parent=55 // pred_check_branch
          %358 = sbr.rel (%p356) target = $region60
        $region59: #{_resblock_forward_impl.5} parent=55 // pred_region
          %360 = dma.done [#allocation4], 16
        $region60: #{_resblock_forward_impl.5} parent=55 // pred_fallthru
          _
        // Predicated region
        $region61: #{_resblock_forward_impl.5} parent=55 // pred_check
          %p361 = pneg %p91
        $region62: #{_resblock_forward_impl.5} parent=55 // pred_check_branch
          %363 = sbr.rel (%p361) target = $region64
        $region63: #{_resblock_forward_impl.5} parent=55 // pred_region
          %365 = dma.done [#allocation6], 16
        $region64: #{_resblock_forward_impl.5} parent=55 // pred_fallthru
          _
        // Predicated region
        $region65: #{_resblock_forward_impl.5} parent=55 // pred_check
          %p366 = pneg %p112
        $region66: #{_resblock_forward_impl.5} parent=55 // pred_check_branch
          %368 = sbr.rel (%p366) target = $region68
        $region67: #{_resblock_forward_impl.5} parent=55 // pred_region
          %370 = dma.done [#allocation6], 16
        $region68: #{_resblock_forward_impl.5} parent=55 // pred_fallthru
          _
        // Predicated region
        $region69: #{_resblock_forward_impl.5} parent=55 // pred_check
          %p371 = pneg %p133
        $region70: #{_resblock_forward_impl.5} parent=55 // pred_check_branch
          %373 = sbr.rel (%p371) target = $region72
        $region71: #{_resblock_forward_impl.5} parent=55 // pred_region
          %375 = dma.done [#allocation9], 16
        $region72: #{_resblock_forward_impl.5} parent=55 // pred_fallthru
          _
        // Predicated region
        $region73: #{_resblock_forward_impl.5} parent=55 // pred_check
          %p376 = pneg %p154
        $region74: #{_resblock_forward_impl.5} parent=55 // pred_check_branch
          %378 = sbr.rel (%p376) target = $region76
        $region75: #{_resblock_forward_impl.5} parent=55 // pred_region
          %380 = dma.done [#allocation9], 16
        $region76: #{_resblock_forward_impl.5} parent=55 // pred_fallthru
          _
        // Predicated region
        $region77: #{_resblock_forward_impl.5} parent=55 // pred_check
          %p381 = pneg %p175
        $region78: #{_resblock_forward_impl.5} parent=55 // pred_check_branch
          %383 = sbr.rel (%p381) target = $region80
        $region79: #{_resblock_forward_impl.5} parent=55 // pred_region
          %385 = dma.done [#allocation12], 16
        $region80: #{_resblock_forward_impl.5} parent=55 // pred_fallthru
          _
        // Predicated region
        $region81: #{_resblock_forward_impl.5} parent=55 // pred_check
          %p386 = pneg %p196
        $region82: #{_resblock_forward_impl.5} parent=55 // pred_check_branch
          %388 = sbr.rel (%p386) target = $region84
        $region83: #{_resblock_forward_impl.5} parent=55 // pred_region
          %390 = dma.done [#allocation12], 16
        $region84: #{_resblock_forward_impl.5} parent=55 // pred_fallthru
          _
        // Predicated region
        $region85: #{_resblock_forward_impl.5} parent=55 // pred_check
          %p391 = pneg %p217
        $region86: #{_resblock_forward_impl.5} parent=55 // pred_check_branch
          %393 = sbr.rel (%p391) target = $region88
        $region87: #{_resblock_forward_impl.5} parent=55 // pred_region
          %395 = dma.done [#allocation15], 16
        $region88: #{_resblock_forward_impl.5} parent=55 // pred_fallthru
          _
        %396 = sfence
        %p397 = scmp.lt.s32.totalorder %s28, 1
        %s398 = scalar_select %p397, %s28, 1
        %s399 = smul.addr %s398, 4
        %s400 = scalar_lea.vmem %s0, %s399
        %p401 = pneg %p49
        %p402 = pneg %p46
        %p403 = pneg %p70
        %p404 = pneg %p67
        %p405 = pneg %p91
        %p406 = pneg %p88
        %p407 = pneg %p112
        %p408 = pneg %p109
        %p409 = pneg %p133
        %p410 = pneg %p130
        %p411 = pneg %p154
        %p412 = pneg %p151
        %p413 = pneg %p175
        %p414 = pneg %p172
        %p415 = pneg %p196
        %p416 = pneg %p193
        %p417 = pneg %p217
        %p418 = pneg %p214
        %p419 = pneg %p243
        %p420 = pneg %p240
        %s421 = sand.u32 %s230, 1
        %s422 = scalar_lea.sflag [#allocation3], %s421
        %s423 = sand.u32 %s230, 1
        %s424 = smul.addr %s423, 4
        %s425 = scalar_lea.vmem [#allocation16], %s424
        %p426 = scmp.lt.s32.totalorder %s28, 1
        %s427 = scalar_select %p426, %s28, 1
        %s428 = smul.addr %s427, 4
        %s429 = scalar_lea.vmem %s0, %s428
        %v430 = vlaneseq
        %v431 = vand.u32 %v430, 127
        %v432 = vadd.s32 %v431, 4294967294
        %vm433 = vcmp.ge.s32.totalorder %v432, 0
        %vm434 = vcmp.lt.s32.totalorder %v432, 16
        %vm435 = vmand %vm433, %vm434
        %v436 = vadd.s32 %v431, 4294967295
        %vm437 = vcmp.ge.s32.totalorder %v436, 0
        %vm438 = vcmp.lt.s32.totalorder %v436, 16
        %vm439 = vmand %vm437, %vm438
        %v440 = vadd.s32 %v431, 1
        %vm441 = vcmp.ge.s32.totalorder %v440, 0
        %vm442 = vcmp.lt.s32.totalorder %v440, 16
        %vm443 = vmand %vm441, %vm442
        %v444 = vadd.s32 %v431, 2
        %vm445 = vcmp.ge.s32.totalorder %v444, 0
        %vm446 = vcmp.lt.s32.totalorder %v444, 16
        %vm447 = vmand %vm445, %vm446
        %v448 = vld [vmem:[%s429] sm:$0x1]
        %v449 = vld [vmem:[%s429 + $0x1] sm:$0x1]
        %v450 = vld [vmem:[%s429 + $0x2] sm:$0x1]
        %v451 = vld [vmem:[%s429 + $0x3] sm:$0x1]
        %453 = vrot.lane.b32.xlu0 %v448, 114
        %v454 = vpop.permute.xlu0 %453
        %456 = vrot.lane.b32.xlu0 %v448, 2
        %v457 = vpop.permute.xlu0 %456
        %vm459 = vcmask 15360
        %v460 = vsel %vm459, %v454, %v457
        %v461 = vsel %vm435, %v460, 0.0
        %462 = vrot.lane.b32.xlu0 %v448, 113
        %v463 = vpop.permute.xlu0 %462
        %465 = vrot.lane.b32.xlu0 %v448, 1
        %v466 = vpop.permute.xlu0 %465
        %vm468 = vcmask 7168
        %v469 = vsel %vm468, %v463, %v466
        %v470 = vsel %vm439, %v469, 0.0
        %471 = vrot.lane.b32.xlu0 %v448, 127
        %v472 = vpop.permute.xlu0 %471
        %474 = vrot.lane.b32.xlu0 %v448, 15
        %v475 = vpop.permute.xlu0 %474
        %vm477 = vcmask 121856
        %v478 = vsel %vm477, %v472, %v475
        %v479 = vsel %vm443, %v478, 0.0
        %480 = vrot.lane.b32.xlu0 %v448, 126
        %v481 = vpop.permute.xlu0 %480
        %483 = vrot.lane.b32.xlu0 %v448, 14
        %v484 = vpop.permute.xlu0 %483
        %vm486 = vcmask 113664
        %v487 = vsel %vm486, %v481, %v484
        %v488 = vsel %vm447, %v487, 0.0
        %490 = vrot.lane.b32.xlu0 %v449, 114
        %v491 = vpop.permute.xlu0 %490
        %493 = vrot.lane.b32.xlu0 %v449, 2
        %v494 = vpop.permute.xlu0 %493
        %v496 = vsel %vm459, %v491, %v494
        %v497 = vsel %vm435, %v496, 0.0
        %498 = vrot.lane.b32.xlu0 %v449, 113
        %v499 = vpop.permute.xlu0 %498
        %501 = vrot.lane.b32.xlu0 %v449, 1
        %v502 = vpop.permute.xlu0 %501
        %v504 = vsel %vm468, %v499, %v502
        %v505 = vsel %vm439, %v504, 0.0
        %506 = vrot.lane.b32.xlu0 %v449, 127
        %v507 = vpop.permute.xlu0 %506
        %509 = vrot.lane.b32.xlu0 %v449, 15
        %v510 = vpop.permute.xlu0 %509
        %v512 = vsel %vm477, %v507, %v510
        %v513 = vsel %vm443, %v512, 0.0
        %514 = vrot.lane.b32.xlu0 %v449, 126
        %v515 = vpop.permute.xlu0 %514
        %517 = vrot.lane.b32.xlu0 %v449, 14
        %v518 = vpop.permute.xlu0 %517
        %v520 = vsel %vm486, %v515, %v518
        %v521 = vsel %vm447, %v520, 0.0
        %523 = vrot.lane.b32.xlu0 %v450, 114
        %v524 = vpop.permute.xlu0 %523
        %526 = vrot.lane.b32.xlu0 %v450, 2
        %v527 = vpop.permute.xlu0 %526
        %v529 = vsel %vm459, %v524, %v527
        %v530 = vsel %vm435, %v529, 0.0
        %531 = vrot.lane.b32.xlu0 %v450, 113
        %v532 = vpop.permute.xlu0 %531
        %534 = vrot.lane.b32.xlu0 %v450, 1
        %v535 = vpop.permute.xlu0 %534
        %v537 = vsel %vm468, %v532, %v535
        %v538 = vsel %vm439, %v537, 0.0
        %539 = vrot.lane.b32.xlu0 %v450, 127
        %v540 = vpop.permute.xlu0 %539
        %542 = vrot.lane.b32.xlu0 %v450, 15
        %v543 = vpop.permute.xlu0 %542
        %v545 = vsel %vm477, %v540, %v543
        %v546 = vsel %vm443, %v545, 0.0
        %547 = vrot.lane.b32.xlu0 %v450, 126
        %v548 = vpop.permute.xlu0 %547
        %550 = vrot.lane.b32.xlu0 %v450, 14
        %v551 = vpop.permute.xlu0 %550
        %v553 = vsel %vm486, %v548, %v551
        %v554 = vsel %vm447, %v553, 0.0
        %556 = vrot.lane.b32.xlu0 %v451, 114
        %v557 = vpop.permute.xlu0 %556
        %559 = vrot.lane.b32.xlu0 %v451, 2
        %v560 = vpop.permute.xlu0 %559
        %v562 = vsel %vm459, %v557, %v560
        %v563 = vsel %vm435, %v562, 0.0
        %564 = vrot.lane.b32.xlu0 %v451, 113
        %v565 = vpop.permute.xlu0 %564
        %567 = vrot.lane.b32.xlu0 %v451, 1
        %v568 = vpop.permute.xlu0 %567
        %v570 = vsel %vm468, %v565, %v568
        %v571 = vsel %vm439, %v570, 0.0
        %572 = vrot.lane.b32.xlu0 %v451, 127
        %v573 = vpop.permute.xlu0 %572
        %575 = vrot.lane.b32.xlu0 %v451, 15
        %v576 = vpop.permute.xlu0 %575
        %v578 = vsel %vm477, %v573, %v576
        %v579 = vsel %vm443, %v578, 0.0
        %580 = vrot.lane.b32.xlu0 %v451, 126
        %v581 = vpop.permute.xlu0 %580
        %583 = vrot.lane.b32.xlu0 %v451, 14
        %v584 = vpop.permute.xlu0 %583
        %v586 = vsel %vm486, %v581, %v584
        %v587 = vsel %vm447, %v586, 0.0
        %s588 = sld [smem:[#allocation2]]
        %v589 = vstv %s588
        %v590 = vmul.f32 %v589, %v461
        %s591 = sld [smem:[#allocation2 + $0x1]]
        %v592 = vstv %s591
        %v593 = vmul.f32 %v592, %v470
        %v594 = vadd.f32 %v590, %v593
        %s595 = sld [smem:[#allocation2 + $0x2]]
        %v596 = vstv %s595
        %v597 = vmul.f32 %v596, %v448
        %v598 = vadd.f32 %v594, %v597
        %s599 = sld [smem:[#allocation2 + $0x3]]
        %v600 = vstv %s599
        %v601 = vmul.f32 %v600, %v479
        %v602 = vadd.f32 %v598, %v601
        %s603 = sld [smem:[#allocation2 + $0x4]]
        %v604 = vstv %s603
        %v605 = vmul.f32 %v604, %v488
        %v606 = vadd.f32 %v602, %v605
        %s607 = sld [smem:[#allocation2 + $0x5]]
        %v608 = vstv %s607
        %v609 = vmul.f32 %v608, %v497
        %v610 = vadd.f32 %v606, %v609
        %s611 = sld [smem:[#allocation2 + $0x6]]
        %v612 = vstv %s611
        %v613 = vmul.f32 %v612, %v505
        %v614 = vadd.f32 %v610, %v613
        %s615 = sld [smem:[#allocation2 + $0x7]]
        %v616 = vstv %s615
        %v617 = vmul.f32 %v616, %v449
        %v618 = vadd.f32 %v614, %v617
        %s619 = sld [smem:[#allocation2 + $0x8]]
        %v620 = vstv %s619
        %v621 = vmul.f32 %v620, %v513
        %v622 = vadd.f32 %v618, %v621
        %s623 = sld [smem:[#allocation2 + $0x9]]
        %v624 = vstv %s623
        %v625 = vmul.f32 %v624, %v521
        %v626 = vadd.f32 %v622, %v625
        %s627 = sld [smem:[#allocation2 + $0xa]]
        %v628 = vstv %s627
        %v629 = vmul.f32 %v628, %v530
        %v630 = vadd.f32 %v626, %v629
        %s631 = sld [smem:[#allocation2 + $0xb]]
        %v632 = vstv %s631
        %v633 = vmul.f32 %v632, %v538
        %v634 = vadd.f32 %v630, %v633
        %s635 = sld [smem:[#allocation2 + $0xc]]
        %v636 = vstv %s635
        %v637 = vmul.f32 %v636, %v450
        %v638 = vadd.f32 %v634, %v637
        %s639 = sld [smem:[#allocation2 + $0xd]]
        %v640 = vstv %s639
        %v641 = vmul.f32 %v640, %v546
        %v642 = vadd.f32 %v638, %v641
        %s643 = sld [smem:[#allocation2 + $0xe]]
        %v644 = vstv %s643
        %v645 = vmul.f32 %v644, %v554
        %v646 = vadd.f32 %v642, %v645
        %s647 = sld [smem:[#allocation2 + $0xf]]
        %v648 = vstv %s647
        %v649 = vmul.f32 %v648, %v563
        %v650 = vadd.f32 %v646, %v649
        %s651 = sld [smem:[#allocation2 + $0x10]]
        %v652 = vstv %s651
        %v653 = vmul.f32 %v652, %v571
        %v654 = vadd.f32 %v650, %v653
        %s655 = sld [smem:[#allocation2 + $0x11]]
        %v656 = vstv %s655
        %v657 = vmul.f32 %v656, %v451
        %v658 = vadd.f32 %v654, %v657
        %s659 = sld [smem:[#allocation2 + $0x12]]
        %v660 = vstv %s659
        %v661 = vmul.f32 %v660, %v579
        %v662 = vadd.f32 %v658, %v661
        %s663 = sld [smem:[#allocation2 + $0x13]]
        %v664 = vstv %s663
        %v665 = vmul.f32 %v664, %v587
        %v666 = vadd.f32 %v662, %v665
        %s667 = sld [smem:[#allocation5]]
        %v668 = vstv %s667
        %v669 = vadd.f32 %v666, %v668
        %s670 = sld [smem:[#allocation2 + $0x14]]
        %v671 = vstv %s670
        %v672 = vmul.f32 %v671, %v461
        %s673 = sld [smem:[#allocation2 + $0x15]]
        %v674 = vstv %s673
        %v675 = vmul.f32 %v674, %v470
        %v676 = vadd.f32 %v672, %v675
        %s677 = sld [smem:[#allocation2 + $0x16]]
        %v678 = vstv %s677
        %v679 = vmul.f32 %v678, %v448
        %v680 = vadd.f32 %v676, %v679
        %s681 = sld [smem:[#allocation2 + $0x17]]
        %v682 = vstv %s681
        %v683 = vmul.f32 %v682, %v479
        %v684 = vadd.f32 %v680, %v683
        %s685 = sld [smem:[#allocation2 + $0x18]]
        %v686 = vstv %s685
        %v687 = vmul.f32 %v686, %v488
        %v688 = vadd.f32 %v684, %v687
        %s689 = sld [smem:[#allocation2 + $0x19]]
        %v690 = vstv %s689
        %v691 = vmul.f32 %v690, %v497
        %v692 = vadd.f32 %v688, %v691
        %s693 = sld [smem:[#allocation2 + $0x1a]]
        %v694 = vstv %s693
        %v695 = vmul.f32 %v694, %v505
        %v696 = vadd.f32 %v692, %v695
        %s697 = sld [smem:[#allocation2 + $0x1b]]
        %v698 = vstv %s697
        %v699 = vmul.f32 %v698, %v449
        %v700 = vadd.f32 %v696, %v699
        %s701 = sld [smem:[#allocation2 + $0x1c]]
        %v702 = vstv %s701
        %v703 = vmul.f32 %v702, %v513
        %v704 = vadd.f32 %v700, %v703
        %s705 = sld [smem:[#allocation2 + $0x1d]]
        %v706 = vstv %s705
        %v707 = vmul.f32 %v706, %v521
        %v708 = vadd.f32 %v704, %v707
        %s709 = sld [smem:[#allocation2 + $0x1e]]
        %v710 = vstv %s709
        %v711 = vmul.f32 %v710, %v530
        %v712 = vadd.f32 %v708, %v711
        %s713 = sld [smem:[#allocation2 + $0x1f]]
        %v714 = vstv %s713
        %v715 = vmul.f32 %v714, %v538
        %v716 = vadd.f32 %v712, %v715
        %s717 = sld [smem:[#allocation2 + $0x20]]
        %v718 = vstv %s717
        %v719 = vmul.f32 %v718, %v450
        %v720 = vadd.f32 %v716, %v719
        %s721 = sld [smem:[#allocation2 + $0x21]]
        %v722 = vstv %s721
        %v723 = vmul.f32 %v722, %v546
        %v724 = vadd.f32 %v720, %v723
        %s725 = sld [smem:[#allocation2 + $0x22]]
        %v726 = vstv %s725
        %v727 = vmul.f32 %v726, %v554
        %v728 = vadd.f32 %v724, %v727
        %s729 = sld [smem:[#allocation2 + $0x23]]
        %v730 = vstv %s729
        %v731 = vmul.f32 %v730, %v563
        %v732 = vadd.f32 %v728, %v731
        %s733 = sld [smem:[#allocation2 + $0x24]]
        %v734 = vstv %s733
        %v735 = vmul.f32 %v734, %v571
        %v736 = vadd.f32 %v732, %v735
        %s737 = sld [smem:[#allocation2 + $0x25]]
        %v738 = vstv %s737
        %v739 = vmul.f32 %v738, %v451
        %v740 = vadd.f32 %v736, %v739
        %s741 = sld [smem:[#allocation2 + $0x26]]
        %v742 = vstv %s741
        %v743 = vmul.f32 %v742, %v579
        %v744 = vadd.f32 %v740, %v743
        %s745 = sld [smem:[#allocation2 + $0x27]]
        %v746 = vstv %s745
        %v747 = vmul.f32 %v746, %v587
        %v748 = vadd.f32 %v744, %v747
        %s749 = sld [smem:[#allocation5 + $0x1]]
        %v750 = vstv %s749
        %v751 = vadd.f32 %v748, %v750
        %s752 = sld [smem:[#allocation2 + $0x28]]
        %v753 = vstv %s752
        %v754 = vmul.f32 %v753, %v461
        %s755 = sld [smem:[#allocation2 + $0x29]]
        %v756 = vstv %s755
        %v757 = vmul.f32 %v756, %v470
        %v758 = vadd.f32 %v754, %v757
        %s759 = sld [smem:[#allocation2 + $0x2a]]
        %v760 = vstv %s759
        %v761 = vmul.f32 %v760, %v448
        %v762 = vadd.f32 %v758, %v761
        %s763 = sld [smem:[#allocation2 + $0x2b]]
        %v764 = vstv %s763
        %v765 = vmul.f32 %v764, %v479
        %v766 = vadd.f32 %v762, %v765
        %s767 = sld [smem:[#allocation2 + $0x2c]]
        %v768 = vstv %s767
        %v769 = vmul.f32 %v768, %v488
        %v770 = vadd.f32 %v766, %v769
        %s771 = sld [smem:[#allocation2 + $0x2d]]
        %v772 = vstv %s771
        %v773 = vmul.f32 %v772, %v497
        %v774 = vadd.f32 %v770, %v773
        %s775 = sld [smem:[#allocation2 + $0x2e]]
        %v776 = vstv %s775
        %v777 = vmul.f32 %v776, %v505
        %v778 = vadd.f32 %v774, %v777
        %s779 = sld [smem:[#allocation2 + $0x2f]]
        %v780 = vstv %s779
        %v781 = vmul.f32 %v780, %v449
        %v782 = vadd.f32 %v778, %v781
        %s783 = sld [smem:[#allocation2 + $0x30]]
        %v784 = vstv %s783
        %v785 = vmul.f32 %v784, %v513
        %v786 = vadd.f32 %v782, %v785
        %s787 = sld [smem:[#allocation2 + $0x31]]
        %v788 = vstv %s787
        %v789 = vmul.f32 %v788, %v521
        %v790 = vadd.f32 %v786, %v789
        %s791 = sld [smem:[#allocation2 + $0x32]]
        %v792 = vstv %s791
        %v793 = vmul.f32 %v792, %v530
        %v794 = vadd.f32 %v790, %v793
        %s795 = sld [smem:[#allocation2 + $0x33]]
        %v796 = vstv %s795
        %v797 = vmul.f32 %v796, %v538
        %v798 = vadd.f32 %v794, %v797
        %s799 = sld [smem:[#allocation2 + $0x34]]
        %v800 = vstv %s799
        %v801 = vmul.f32 %v800, %v450
        %v802 = vadd.f32 %v798, %v801
        %s803 = sld [smem:[#allocation2 + $0x35]]
        %v804 = vstv %s803
        %v805 = vmul.f32 %v804, %v546
        %v806 = vadd.f32 %v802, %v805
        %s807 = sld [smem:[#allocation2 + $0x36]]
        %v808 = vstv %s807
        %v809 = vmul.f32 %v808, %v554
        %v810 = vadd.f32 %v806, %v809
        %s811 = sld [smem:[#allocation2 + $0x37]]
        %v812 = vstv %s811
        %v813 = vmul.f32 %v812, %v563
        %v814 = vadd.f32 %v810, %v813
        %s815 = sld [smem:[#allocation2 + $0x38]]
        %v816 = vstv %s815
        %v817 = vmul.f32 %v816, %v571
        %v818 = vadd.f32 %v814, %v817
        %s819 = sld [smem:[#allocation2 + $0x39]]
        %v820 = vstv %s819
        %v821 = vmul.f32 %v820, %v451
        %v822 = vadd.f32 %v818, %v821
        %s823 = sld [smem:[#allocation2 + $0x3a]]
        %v824 = vstv %s823
        %v825 = vmul.f32 %v824, %v579
        %v826 = vadd.f32 %v822, %v825
        %s827 = sld [smem:[#allocation2 + $0x3b]]
        %v828 = vstv %s827
        %v829 = vmul.f32 %v828, %v587
        %v830 = vadd.f32 %v826, %v829
        %s831 = sld [smem:[#allocation5 + $0x2]]
        %v832 = vstv %s831
        %v833 = vadd.f32 %v830, %v832
        %s834 = sld [smem:[#allocation2 + $0x3c]]
        %v835 = vstv %s834
        %v836 = vmul.f32 %v835, %v461
        %s837 = sld [smem:[#allocation2 + $0x3d]]
        %v838 = vstv %s837
        %v839 = vmul.f32 %v838, %v470
        %v840 = vadd.f32 %v836, %v839
        %s841 = sld [smem:[#allocation2 + $0x3e]]
        %v842 = vstv %s841
        %v843 = vmul.f32 %v842, %v448
        %v844 = vadd.f32 %v840, %v843
        %s845 = sld [smem:[#allocation2 + $0x3f]]
        %v846 = vstv %s845
        %v847 = vmul.f32 %v846, %v479
        %v848 = vadd.f32 %v844, %v847
        %s849 = sld [smem:[#allocation2 + $0x40]]
        %v850 = vstv %s849
        %v851 = vmul.f32 %v850, %v488
        %v852 = vadd.f32 %v848, %v851
        %s853 = sld [smem:[#allocation2 + $0x41]]
        %v854 = vstv %s853
        %v855 = vmul.f32 %v854, %v497
        %v856 = vadd.f32 %v852, %v855
        %s857 = sld [smem:[#allocation2 + $0x42]]
        %v858 = vstv %s857
        %v859 = vmul.f32 %v858, %v505
        %v860 = vadd.f32 %v856, %v859
        %s861 = sld [smem:[#allocation2 + $0x43]]
        %v862 = vstv %s861
        %v863 = vmul.f32 %v862, %v449
        %v864 = vadd.f32 %v860, %v863
        %s865 = sld [smem:[#allocation2 + $0x44]]
        %v866 = vstv %s865
        %v867 = vmul.f32 %v866, %v513
        %v868 = vadd.f32 %v864, %v867
        %s869 = sld [smem:[#allocation2 + $0x45]]
        %v870 = vstv %s869
        %v871 = vmul.f32 %v870, %v521
        %v872 = vadd.f32 %v868, %v871
        %s873 = sld [smem:[#allocation2 + $0x46]]
        %v874 = vstv %s873
        %v875 = vmul.f32 %v874, %v530
        %v876 = vadd.f32 %v872, %v875
        %s877 = sld [smem:[#allocation2 + $0x47]]
        %v878 = vstv %s877
        %v879 = vmul.f32 %v878, %v538
        %v880 = vadd.f32 %v876, %v879
        %s881 = sld [smem:[#allocation2 + $0x48]]
        %v882 = vstv %s881
        %v883 = vmul.f32 %v882, %v450
        %v884 = vadd.f32 %v880, %v883
        %s885 = sld [smem:[#allocation2 + $0x49]]
        %v886 = vstv %s885
        %v887 = vmul.f32 %v886, %v546
        %v888 = vadd.f32 %v884, %v887
        %s889 = sld [smem:[#allocation2 + $0x4a]]
        %v890 = vstv %s889
        %v891 = vmul.f32 %v890, %v554
        %v892 = vadd.f32 %v888, %v891
        %s893 = sld [smem:[#allocation2 + $0x4b]]
        %v894 = vstv %s893
        %v895 = vmul.f32 %v894, %v563
        %v896 = vadd.f32 %v892, %v895
        %s897 = sld [smem:[#allocation2 + $0x4c]]
        %v898 = vstv %s897
        %v899 = vmul.f32 %v898, %v571
        %v900 = vadd.f32 %v896, %v899
        %s901 = sld [smem:[#allocation2 + $0x4d]]
        %v902 = vstv %s901
        %v903 = vmul.f32 %v902, %v451
        %v904 = vadd.f32 %v900, %v903
        %s905 = sld [smem:[#allocation2 + $0x4e]]
        %v906 = vstv %s905
        %v907 = vmul.f32 %v906, %v579
        %v908 = vadd.f32 %v904, %v907
        %s909 = sld [smem:[#allocation2 + $0x4f]]
        %v910 = vstv %s909
        %v911 = vmul.f32 %v910, %v587
        %v912 = vadd.f32 %v908, %v911
        %s913 = sld [smem:[#allocation5 + $0x3]]
        %v914 = vstv %s913
        %v915 = vadd.f32 %v912, %v914
        %s916 = sld [smem:[#allocation7]]
        %v917 = vstv %s916
        %v918 = vmul.f32 %v669, %v917
        %s919 = sld [smem:[#allocation8]]
        %v920 = vstv %s919
        %v921 = vadd.f32 %v918, %v920
        %v922 = vmax.f32 %v921, 0.0
        %s923 = sld [smem:[#allocation7 + $0x1]]
        %v924 = vstv %s923
        %v925 = vmul.f32 %v751, %v924
        %s926 = sld [smem:[#allocation8 + $0x1]]
        %v927 = vstv %s926
        %v928 = vadd.f32 %v925, %v927
        %v929 = vmax.f32 %v928, 0.0
        %s930 = sld [smem:[#allocation7 + $0x2]]
        %v931 = vstv %s930
        %v932 = vmul.f32 %v833, %v931
        %s933 = sld [smem:[#allocation8 + $0x2]]
        %v934 = vstv %s933
        %v935 = vadd.f32 %v932, %v934
        %v936 = vmax.f32 %v935, 0.0
        %s937 = sld [smem:[#allocation7 + $0x3]]
        %v938 = vstv %s937
        %v939 = vmul.f32 %v915, %v938
        %s940 = sld [smem:[#allocation8 + $0x3]]
        %v941 = vstv %s940
        %v942 = vadd.f32 %v939, %v941
        %v943 = vmax.f32 %v942, 0.0
        %945 = vrot.lane.b32.xlu0 %v922, 114
        %v946 = vpop.permute.xlu0 %945
        %948 = vrot.lane.b32.xlu0 %v922, 2
        %v949 = vpop.permute.xlu0 %948
        %v951 = vsel %vm459, %v946, %v949
        %v952 = vsel %vm435, %v951, 0.0
        %953 = vrot.lane.b32.xlu0 %v922, 113
        %v954 = vpop.permute.xlu0 %953
        %956 = vrot.lane.b32.xlu0 %v922, 1
        %v957 = vpop.permute.xlu0 %956
        %v959 = vsel %vm468, %v954, %v957
        %v960 = vsel %vm439, %v959, 0.0
        %961 = vrot.lane.b32.xlu0 %v922, 127
        %v962 = vpop.permute.xlu0 %961
        %964 = vrot.lane.b32.xlu0 %v922, 15
        %v965 = vpop.permute.xlu0 %964
        %v967 = vsel %vm477, %v962, %v965
        %v968 = vsel %vm443, %v967, 0.0
        %969 = vrot.lane.b32.xlu0 %v922, 126
        %v970 = vpop.permute.xlu0 %969
        %972 = vrot.lane.b32.xlu0 %v922, 14
        %v973 = vpop.permute.xlu0 %972
        %v975 = vsel %vm486, %v970, %v973
        %v976 = vsel %vm447, %v975, 0.0
        %978 = vrot.lane.b32.xlu0 %v929, 114
        %v979 = vpop.permute.xlu0 %978
        %981 = vrot.lane.b32.xlu0 %v929, 2
        %v982 = vpop.permute.xlu0 %981
        %v984 = vsel %vm459, %v979, %v982
        %v985 = vsel %vm435, %v984, 0.0
        %986 = vrot.lane.b32.xlu0 %v929, 113
        %v987 = vpop.permute.xlu0 %986
        %989 = vrot.lane.b32.xlu0 %v929, 1
        %v990 = vpop.permute.xlu0 %989
        %v992 = vsel %vm468, %v987, %v990
        %v993 = vsel %vm439, %v992, 0.0
        %994 = vrot.lane.b32.xlu0 %v929, 127
        %v995 = vpop.permute.xlu0 %994
        %997 = vrot.lane.b32.xlu0 %v929, 15
        %v998 = vpop.permute.xlu0 %997
        %v1000 = vsel %vm477, %v995, %v998
        %v1001 = vsel %vm443, %v1000, 0.0
        %1002 = vrot.lane.b32.xlu0 %v929, 126
        %v1003 = vpop.permute.xlu0 %1002
        %1005 = vrot.lane.b32.xlu0 %v929, 14
        %v1006 = vpop.permute.xlu0 %1005
        %v1008 = vsel %vm486, %v1003, %v1006
        %v1009 = vsel %vm447, %v1008, 0.0
        %1011 = vrot.lane.b32.xlu0 %v936, 114
        %v1012 = vpop.permute.xlu0 %1011
        %1014 = vrot.lane.b32.xlu0 %v936, 2
        %v1015 = vpop.permute.xlu0 %1014
        %v1017 = vsel %vm459, %v1012, %v1015
        %v1018 = vsel %vm435, %v1017, 0.0
        %1019 = vrot.lane.b32.xlu0 %v936, 113
        %v1020 = vpop.permute.xlu0 %1019
        %1022 = vrot.lane.b32.xlu0 %v936, 1
        %v1023 = vpop.permute.xlu0 %1022
        %v1025 = vsel %vm468, %v1020, %v1023
        %v1026 = vsel %vm439, %v1025, 0.0
        %1027 = vrot.lane.b32.xlu0 %v936, 127
        %v1028 = vpop.permute.xlu0 %1027
        %1030 = vrot.lane.b32.xlu0 %v936, 15
        %v1031 = vpop.permute.xlu0 %1030
        %v1033 = vsel %vm477, %v1028, %v1031
        %v1034 = vsel %vm443, %v1033, 0.0
        %1035 = vrot.lane.b32.xlu0 %v936, 126
        %v1036 = vpop.permute.xlu0 %1035
        %1038 = vrot.lane.b32.xlu0 %v936, 14
        %v1039 = vpop.permute.xlu0 %1038
        %v1041 = vsel %vm486, %v1036, %v1039
        %v1042 = vsel %vm447, %v1041, 0.0
        %1044 = vrot.lane.b32.xlu0 %v943, 114
        %v1045 = vpop.permute.xlu0 %1044
        %1047 = vrot.lane.b32.xlu0 %v943, 2
        %v1048 = vpop.permute.xlu0 %1047
        %v1050 = vsel %vm459, %v1045, %v1048
        %v1051 = vsel %vm435, %v1050, 0.0
        %1052 = vrot.lane.b32.xlu0 %v943, 113
        %v1053 = vpop.permute.xlu0 %1052
        %1055 = vrot.lane.b32.xlu0 %v943, 1
        %v1056 = vpop.permute.xlu0 %1055
        %v1058 = vsel %vm468, %v1053, %v1056
        %v1059 = vsel %vm439, %v1058, 0.0
        %1060 = vrot.lane.b32.xlu0 %v943, 127
        %v1061 = vpop.permute.xlu0 %1060
        %1063 = vrot.lane.b32.xlu0 %v943, 15
        %v1064 = vpop.permute.xlu0 %1063
        %v1066 = vsel %vm477, %v1061, %v1064
        %v1067 = vsel %vm443, %v1066, 0.0
        %1068 = vrot.lane.b32.xlu0 %v943, 126
        %v1069 = vpop.permute.xlu0 %1068
        %1071 = vrot.lane.b32.xlu0 %v943, 14
        %v1072 = vpop.permute.xlu0 %1071
        %v1074 = vsel %vm486, %v1069, %v1072
        %v1075 = vsel %vm447, %v1074, 0.0
        %s1076 = sld [smem:[#allocation10]]
        %v1077 = vstv %s1076
        %v1078 = vmul.f32 %v1077, %v952
        %s1079 = sld [smem:[#allocation10 + $0x1]]
        %v1080 = vstv %s1079
        %v1081 = vmul.f32 %v1080, %v960
        %v1082 = vadd.f32 %v1078, %v1081
        %s1083 = sld [smem:[#allocation10 + $0x2]]
        %v1084 = vstv %s1083
        %v1085 = vmul.f32 %v1084, %v922
        %v1086 = vadd.f32 %v1082, %v1085
        %s1087 = sld [smem:[#allocation10 + $0x3]]
        %v1088 = vstv %s1087
        %v1089 = vmul.f32 %v1088, %v968
        %v1090 = vadd.f32 %v1086, %v1089
        %s1091 = sld [smem:[#allocation10 + $0x4]]
        %v1092 = vstv %s1091
        %v1093 = vmul.f32 %v1092, %v976
        %v1094 = vadd.f32 %v1090, %v1093
        %s1095 = sld [smem:[#allocation10 + $0x5]]
        %v1096 = vstv %s1095
        %v1097 = vmul.f32 %v1096, %v985
        %v1098 = vadd.f32 %v1094, %v1097
        %s1099 = sld [smem:[#allocation10 + $0x6]]
        %v1100 = vstv %s1099
        %v1101 = vmul.f32 %v1100, %v993
        %v1102 = vadd.f32 %v1098, %v1101
        %s1103 = sld [smem:[#allocation10 + $0x7]]
        %v1104 = vstv %s1103
        %v1105 = vmul.f32 %v1104, %v929
        %v1106 = vadd.f32 %v1102, %v1105
        %s1107 = sld [smem:[#allocation10 + $0x8]]
        %v1108 = vstv %s1107
        %v1109 = vmul.f32 %v1108, %v1001
        %v1110 = vadd.f32 %v1106, %v1109
        %s1111 = sld [smem:[#allocation10 + $0x9]]
        %v1112 = vstv %s1111
        %v1113 = vmul.f32 %v1112, %v1009
        %v1114 = vadd.f32 %v1110, %v1113
        %s1115 = sld [smem:[#allocation10 + $0xa]]
        %v1116 = vstv %s1115
        %v1117 = vmul.f32 %v1116, %v1018
        %v1118 = vadd.f32 %v1114, %v1117
        %s1119 = sld [smem:[#allocation10 + $0xb]]
        %v1120 = vstv %s1119
        %v1121 = vmul.f32 %v1120, %v1026
        %v1122 = vadd.f32 %v1118, %v1121
        %s1123 = sld [smem:[#allocation10 + $0xc]]
        %v1124 = vstv %s1123
        %v1125 = vmul.f32 %v1124, %v936
        %v1126 = vadd.f32 %v1122, %v1125
        %s1127 = sld [smem:[#allocation10 + $0xd]]
        %v1128 = vstv %s1127
        %v1129 = vmul.f32 %v1128, %v1034
        %v1130 = vadd.f32 %v1126, %v1129
        %s1131 = sld [smem:[#allocation10 + $0xe]]
        %v1132 = vstv %s1131
        %v1133 = vmul.f32 %v1132, %v1042
        %v1134 = vadd.f32 %v1130, %v1133
        %s1135 = sld [smem:[#allocation10 + $0xf]]
        %v1136 = vstv %s1135
        %v1137 = vmul.f32 %v1136, %v1051
        %v1138 = vadd.f32 %v1134, %v1137
        %s1139 = sld [smem:[#allocation10 + $0x10]]
        %v1140 = vstv %s1139
        %v1141 = vmul.f32 %v1140, %v1059
        %v1142 = vadd.f32 %v1138, %v1141
        %s1143 = sld [smem:[#allocation10 + $0x11]]
        %v1144 = vstv %s1143
        %v1145 = vmul.f32 %v1144, %v943
        %v1146 = vadd.f32 %v1142, %v1145
        %s1147 = sld [smem:[#allocation10 + $0x12]]
        %v1148 = vstv %s1147
        %v1149 = vmul.f32 %v1148, %v1067
        %v1150 = vadd.f32 %v1146, %v1149
        %s1151 = sld [smem:[#allocation10 + $0x13]]
        %v1152 = vstv %s1151
        %v1153 = vmul.f32 %v1152, %v1075
        %v1154 = vadd.f32 %v1150, %v1153
        %s1155 = sld [smem:[#allocation11]]
        %v1156 = vstv %s1155
        %v1157 = vadd.f32 %v1154, %v1156
        %s1158 = sld [smem:[#allocation10 + $0x14]]
        %v1159 = vstv %s1158
        %v1160 = vmul.f32 %v1159, %v952
        %s1161 = sld [smem:[#allocation10 + $0x15]]
        %v1162 = vstv %s1161
        %v1163 = vmul.f32 %v1162, %v960
        %v1164 = vadd.f32 %v1160, %v1163
        %s1165 = sld [smem:[#allocation10 + $0x16]]
        %v1166 = vstv %s1165
        %v1167 = vmul.f32 %v1166, %v922
        %v1168 = vadd.f32 %v1164, %v1167
        %s1169 = sld [smem:[#allocation10 + $0x17]]
        %v1170 = vstv %s1169
        %v1171 = vmul.f32 %v1170, %v968
        %v1172 = vadd.f32 %v1168, %v1171
        %s1173 = sld [smem:[#allocation10 + $0x18]]
        %v1174 = vstv %s1173
        %v1175 = vmul.f32 %v1174, %v976
        %v1176 = vadd.f32 %v1172, %v1175
        %s1177 = sld [smem:[#allocation10 + $0x19]]
        %v1178 = vstv %s1177
        %v1179 = vmul.f32 %v1178, %v985
        %v1180 = vadd.f32 %v1176, %v1179
        %s1181 = sld [smem:[#allocation10 + $0x1a]]
        %v1182 = vstv %s1181
        %v1183 = vmul.f32 %v1182, %v993
        %v1184 = vadd.f32 %v1180, %v1183
        %s1185 = sld [smem:[#allocation10 + $0x1b]]
        %v1186 = vstv %s1185
        %v1187 = vmul.f32 %v1186, %v929
        %v1188 = vadd.f32 %v1184, %v1187
        %s1189 = sld [smem:[#allocation10 + $0x1c]]
        %v1190 = vstv %s1189
        %v1191 = vmul.f32 %v1190, %v1001
        %v1192 = vadd.f32 %v1188, %v1191
        %s1193 = sld [smem:[#allocation10 + $0x1d]]
        %v1194 = vstv %s1193
        %v1195 = vmul.f32 %v1194, %v1009
        %v1196 = vadd.f32 %v1192, %v1195
        %s1197 = sld [smem:[#allocation10 + $0x1e]]
        %v1198 = vstv %s1197
        %v1199 = vmul.f32 %v1198, %v1018
        %v1200 = vadd.f32 %v1196, %v1199
        %s1201 = sld [smem:[#allocation10 + $0x1f]]
        %v1202 = vstv %s1201
        %v1203 = vmul.f32 %v1202, %v1026
        %v1204 = vadd.f32 %v1200, %v1203
        %s1205 = sld [smem:[#allocation10 + $0x20]]
        %v1206 = vstv %s1205
        %v1207 = vmul.f32 %v1206, %v936
        %v1208 = vadd.f32 %v1204, %v1207
        %s1209 = sld [smem:[#allocation10 + $0x21]]
        %v1210 = vstv %s1209
        %v1211 = vmul.f32 %v1210, %v1034
        %v1212 = vadd.f32 %v1208, %v1211
        %s1213 = sld [smem:[#allocation10 + $0x22]]
        %v1214 = vstv %s1213
        %v1215 = vmul.f32 %v1214, %v1042
        %v1216 = vadd.f32 %v1212, %v1215
        %s1217 = sld [smem:[#allocation10 + $0x23]]
        %v1218 = vstv %s1217
        %v1219 = vmul.f32 %v1218, %v1051
        %v1220 = vadd.f32 %v1216, %v1219
        %s1221 = sld [smem:[#allocation10 + $0x24]]
        %v1222 = vstv %s1221
        %v1223 = vmul.f32 %v1222, %v1059
        %v1224 = vadd.f32 %v1220, %v1223
        %s1225 = sld [smem:[#allocation10 + $0x25]]
        %v1226 = vstv %s1225
        %v1227 = vmul.f32 %v1226, %v943
        %v1228 = vadd.f32 %v1224, %v1227
        %s1229 = sld [smem:[#allocation10 + $0x26]]
        %v1230 = vstv %s1229
        %v1231 = vmul.f32 %v1230, %v1067
        %v1232 = vadd.f32 %v1228, %v1231
        %s1233 = sld [smem:[#allocation10 + $0x27]]
        %v1234 = vstv %s1233
        %v1235 = vmul.f32 %v1234, %v1075
        %v1236 = vadd.f32 %v1232, %v1235
        %s1237 = sld [smem:[#allocation11 + $0x1]]
        %v1238 = vstv %s1237
        %v1239 = vadd.f32 %v1236, %v1238
        %s1240 = sld [smem:[#allocation10 + $0x28]]
        %v1241 = vstv %s1240
        %v1242 = vmul.f32 %v1241, %v952
        %s1243 = sld [smem:[#allocation10 + $0x29]]
        %v1244 = vstv %s1243
        %v1245 = vmul.f32 %v1244, %v960
        %v1246 = vadd.f32 %v1242, %v1245
        %s1247 = sld [smem:[#allocation10 + $0x2a]]
        %v1248 = vstv %s1247
        %v1249 = vmul.f32 %v1248, %v922
        %v1250 = vadd.f32 %v1246, %v1249
        %s1251 = sld [smem:[#allocation10 + $0x2b]]
        %v1252 = vstv %s1251
        %v1253 = vmul.f32 %v1252, %v968
        %v1254 = vadd.f32 %v1250, %v1253
        %s1255 = sld [smem:[#allocation10 + $0x2c]]
        %v1256 = vstv %s1255
        %v1257 = vmul.f32 %v1256, %v976
        %v1258 = vadd.f32 %v1254, %v1257
        %s1259 = sld [smem:[#allocation10 + $0x2d]]
        %v1260 = vstv %s1259
        %v1261 = vmul.f32 %v1260, %v985
        %v1262 = vadd.f32 %v1258, %v1261
        %s1263 = sld [smem:[#allocation10 + $0x2e]]
        %v1264 = vstv %s1263
        %v1265 = vmul.f32 %v1264, %v993
        %v1266 = vadd.f32 %v1262, %v1265
        %s1267 = sld [smem:[#allocation10 + $0x2f]]
        %v1268 = vstv %s1267
        %v1269 = vmul.f32 %v1268, %v929
        %v1270 = vadd.f32 %v1266, %v1269
        %s1271 = sld [smem:[#allocation10 + $0x30]]
        %v1272 = vstv %s1271
        %v1273 = vmul.f32 %v1272, %v1001
        %v1274 = vadd.f32 %v1270, %v1273
        %s1275 = sld [smem:[#allocation10 + $0x31]]
        %v1276 = vstv %s1275
        %v1277 = vmul.f32 %v1276, %v1009
        %v1278 = vadd.f32 %v1274, %v1277
        %s1279 = sld [smem:[#allocation10 + $0x32]]
        %v1280 = vstv %s1279
        %v1281 = vmul.f32 %v1280, %v1018
        %v1282 = vadd.f32 %v1278, %v1281
        %s1283 = sld [smem:[#allocation10 + $0x33]]
        %v1284 = vstv %s1283
        %v1285 = vmul.f32 %v1284, %v1026
        %v1286 = vadd.f32 %v1282, %v1285
        %s1287 = sld [smem:[#allocation10 + $0x34]]
        %v1288 = vstv %s1287
        %v1289 = vmul.f32 %v1288, %v936
        %v1290 = vadd.f32 %v1286, %v1289
        %s1291 = sld [smem:[#allocation10 + $0x35]]
        %v1292 = vstv %s1291
        %v1293 = vmul.f32 %v1292, %v1034
        %v1294 = vadd.f32 %v1290, %v1293
        %s1295 = sld [smem:[#allocation10 + $0x36]]
        %v1296 = vstv %s1295
        %v1297 = vmul.f32 %v1296, %v1042
        %v1298 = vadd.f32 %v1294, %v1297
        %s1299 = sld [smem:[#allocation10 + $0x37]]
        %v1300 = vstv %s1299
        %v1301 = vmul.f32 %v1300, %v1051
        %v1302 = vadd.f32 %v1298, %v1301
        %s1303 = sld [smem:[#allocation10 + $0x38]]
        %v1304 = vstv %s1303
        %v1305 = vmul.f32 %v1304, %v1059
        %v1306 = vadd.f32 %v1302, %v1305
        %s1307 = sld [smem:[#allocation10 + $0x39]]
        %v1308 = vstv %s1307
        %v1309 = vmul.f32 %v1308, %v943
        %v1310 = vadd.f32 %v1306, %v1309
        %s1311 = sld [smem:[#allocation10 + $0x3a]]
        %v1312 = vstv %s1311
        %v1313 = vmul.f32 %v1312, %v1067
        %v1314 = vadd.f32 %v1310, %v1313
        %s1315 = sld [smem:[#allocation10 + $0x3b]]
        %v1316 = vstv %s1315
        %v1317 = vmul.f32 %v1316, %v1075
        %v1318 = vadd.f32 %v1314, %v1317
        %s1319 = sld [smem:[#allocation11 + $0x2]]
        %v1320 = vstv %s1319
        %v1321 = vadd.f32 %v1318, %v1320
        %s1322 = sld [smem:[#allocation10 + $0x3c]]
        %v1323 = vstv %s1322
        %v1324 = vmul.f32 %v1323, %v952
        %s1325 = sld [smem:[#allocation10 + $0x3d]]
        %v1326 = vstv %s1325
        %v1327 = vmul.f32 %v1326, %v960
        %v1328 = vadd.f32 %v1324, %v1327
        %s1329 = sld [smem:[#allocation10 + $0x3e]]
        %v1330 = vstv %s1329
        %v1331 = vmul.f32 %v1330, %v922
        %v1332 = vadd.f32 %v1328, %v1331
        %s1333 = sld [smem:[#allocation10 + $0x3f]]
        %v1334 = vstv %s1333
        %v1335 = vmul.f32 %v1334, %v968
        %v1336 = vadd.f32 %v1332, %v1335
        %s1337 = sld [smem:[#allocation10 + $0x40]]
        %v1338 = vstv %s1337
        %v1339 = vmul.f32 %v1338, %v976
        %v1340 = vadd.f32 %v1336, %v1339
        %s1341 = sld [smem:[#allocation10 + $0x41]]
        %v1342 = vstv %s1341
        %v1343 = vmul.f32 %v1342, %v985
        %v1344 = vadd.f32 %v1340, %v1343
        %s1345 = sld [smem:[#allocation10 + $0x42]]
        %v1346 = vstv %s1345
        %v1347 = vmul.f32 %v1346, %v993
        %v1348 = vadd.f32 %v1344, %v1347
        %s1349 = sld [smem:[#allocation10 + $0x43]]
        %v1350 = vstv %s1349
        %v1351 = vmul.f32 %v1350, %v929
        %v1352 = vadd.f32 %v1348, %v1351
        %s1353 = sld [smem:[#allocation10 + $0x44]]
        %v1354 = vstv %s1353
        %v1355 = vmul.f32 %v1354, %v1001
        %v1356 = vadd.f32 %v1352, %v1355
        %s1357 = sld [smem:[#allocation10 + $0x45]]
        %v1358 = vstv %s1357
        %v1359 = vmul.f32 %v1358, %v1009
        %v1360 = vadd.f32 %v1356, %v1359
        %s1361 = sld [smem:[#allocation10 + $0x46]]
        %v1362 = vstv %s1361
        %v1363 = vmul.f32 %v1362, %v1018
        %v1364 = vadd.f32 %v1360, %v1363
        %s1365 = sld [smem:[#allocation10 + $0x47]]
        %v1366 = vstv %s1365
        %v1367 = vmul.f32 %v1366, %v1026
        %v1368 = vadd.f32 %v1364, %v1367
        %s1369 = sld [smem:[#allocation10 + $0x48]]
        %v1370 = vstv %s1369
        %v1371 = vmul.f32 %v1370, %v936
        %v1372 = vadd.f32 %v1368, %v1371
        %s1373 = sld [smem:[#allocation10 + $0x49]]
        %v1374 = vstv %s1373
        %v1375 = vmul.f32 %v1374, %v1034
        %v1376 = vadd.f32 %v1372, %v1375
        %s1377 = sld [smem:[#allocation10 + $0x4a]]
        %v1378 = vstv %s1377
        %v1379 = vmul.f32 %v1378, %v1042
        %v1380 = vadd.f32 %v1376, %v1379
        %s1381 = sld [smem:[#allocation10 + $0x4b]]
        %v1382 = vstv %s1381
        %v1383 = vmul.f32 %v1382, %v1051
        %v1384 = vadd.f32 %v1380, %v1383
        %s1385 = sld [smem:[#allocation10 + $0x4c]]
        %v1386 = vstv %s1385
        %v1387 = vmul.f32 %v1386, %v1059
        %v1388 = vadd.f32 %v1384, %v1387
        %s1389 = sld [smem:[#allocation10 + $0x4d]]
        %v1390 = vstv %s1389
        %v1391 = vmul.f32 %v1390, %v943
        %v1392 = vadd.f32 %v1388, %v1391
        %s1393 = sld [smem:[#allocation10 + $0x4e]]
        %v1394 = vstv %s1393
        %v1395 = vmul.f32 %v1394, %v1067
        %v1396 = vadd.f32 %v1392, %v1395
        %s1397 = sld [smem:[#allocation10 + $0x4f]]
        %v1398 = vstv %s1397
        %v1399 = vmul.f32 %v1398, %v1075
        %v1400 = vadd.f32 %v1396, %v1399
        %s1401 = sld [smem:[#allocation11 + $0x3]]
        %v1402 = vstv %s1401
        %v1403 = vadd.f32 %v1400, %v1402
        %s1404 = sld [smem:[#allocation13]]
        %v1405 = vstv %s1404
        %v1406 = vmul.f32 %v1157, %v1405
        %s1407 = sld [smem:[#allocation14]]
        %v1408 = vstv %s1407
        %v1409 = vadd.f32 %v1406, %v1408
        %vm1410 = vcmask 122880
        %1411 = vst.msk [vmem:[%s425] sm:$0x1] %vm1410, %v1409
        %s1412 = sld [smem:[#allocation13 + $0x1]]
        %v1413 = vstv %s1412
        %v1414 = vmul.f32 %v1239, %v1413
        %s1415 = sld [smem:[#allocation14 + $0x1]]
        %v1416 = vstv %s1415
        %v1417 = vadd.f32 %v1414, %v1416
        %1418 = vst.msk [vmem:[%s425 + $0x1] sm:$0x1] %vm1410, %v1417
        %s1419 = sld [smem:[#allocation13 + $0x2]]
        %v1420 = vstv %s1419
        %v1421 = vmul.f32 %v1321, %v1420
        %s1422 = sld [smem:[#allocation14 + $0x2]]
        %v1423 = vstv %s1422
        %v1424 = vadd.f32 %v1421, %v1423
        %1425 = vst.msk [vmem:[%s425 + $0x2] sm:$0x1] %vm1410, %v1424
        %s1426 = sld [smem:[#allocation13 + $0x3]]
        %v1427 = vstv %s1426
        %v1428 = vmul.f32 %v1403, %v1427
        %s1429 = sld [smem:[#allocation14 + $0x3]]
        %v1430 = vstv %s1429
        %v1431 = vadd.f32 %v1428, %v1430
        %1432 = vst.msk [vmem:[%s425 + $0x3] sm:$0x1] %vm1410, %v1431
        %s1433 = sand.u32 %s230, 1
        %s1434 = scalar_lea.sflag [#allocation3], %s1433
        %s1435 = sand.u32 %s230, 1
        %s1436 = smul.addr %s1435, 4
        %s1437 = scalar_lea.vmem [#allocation16], %s1436
        // Predicated region
        $region89: #{_resblock_forward_impl.5} parent=55 // pred_check
          %p1438 = pneg %p240
        $region90: #{_resblock_forward_impl.5} parent=55 // pred_check_branch
          %1440 = sbr.rel (%p1438) target = $region92
        $region91: #{_resblock_forward_impl.5} parent=55 // pred_region
          %1442 = vsyncadd %s1434, 0
          %s1443 = smul.addr %s28, 4
          %s1444 = scalar_lea.hbm %s9, %s1443
          %s1446 = sshll.u32 %s1437, 4
          %s1447 = int_to_ptr.vmem [resolvable:$true] %s1446
          %s1448 = sshll.u32 %s1444, 4
          %s1449 = int_to_ptr.hbm [resolvable:$true] %s1448
          %1451 = dma.vmem_to_hbm [thread:$0]  %s1447, 64, %s1449, %s1434
        $region92: #{_resblock_forward_impl.5} parent=55 // pred_fallthru
          _
      $region56: #{_resblock_forward_impl.5} parent=5 // pred_fallthru
        _
      %p1452 = scmp.le.s32.totalorder 2, %s23
      // Predicated region
      $region93: #{_resblock_forward_impl.5} parent=5 // pred_check
        %p1453 = pneg %p1452
      $region94: #{_resblock_forward_impl.5} parent=5 // pred_check_branch
        %1455 = sbr.rel (%p1453) target = $region96
      $region95: #{_resblock_forward_impl.5} parent=5 // pred_region
        %s1456 = ssub.s32 %s23, 2
        // Predicated region
        $region97: #{_resblock_forward_impl.5} parent=95 // pred_check
          %p1457 = pneg %p246
        $region98: #{_resblock_forward_impl.5} parent=95 // pred_check_branch
          %1459 = sbr.rel (%p1457) target = $region100
        $region99: #{_resblock_forward_impl.5} parent=95 // pred_region
          %s1460 = sand.u32 %s231, 1
          %s1461 = scalar_lea.sflag [#allocation3], %s1460
          %s1462 = sand.u32 %s231, 1
          %s1463 = smul.addr %s1462, 4
          %s1464 = scalar_lea.vmem [#allocation16], %s1463
          %1466 = dma.done %s1461, 64
        $region100: #{_resblock_forward_impl.5} parent=95 // pred_fallthru
          _
      $region96: #{_resblock_forward_impl.5} parent=5 // pred_fallthru
        _
    $region6: #{_resblock_forward_impl.5} parent=1 // loop_footer
      %s27 = sadd.s32 1, %s23
    $region7: #{_resblock_forward_impl.5} parent=1 // loop_footer_branch
      %22 = sbr.rel target = $region3
    $region8: #{_resblock_forward_impl.5} parent=1 // loop_exit
      _
    %1467 = vsyncpa [#allocation3], 1
    %s1468 = scalar_lea.sflag [#allocation3], 1
    %1469 = vsyncpa %s1468, 1
    %1470 = vsyncpa [#allocation4], 1
    %s1471 = scalar_lea.sflag [#allocation4], 1
    %1472 = vsyncpa %s1471, 1
    %1473 = vsyncpa [#allocation6], 1
    %1474 = vsyncpa [#allocation9], 1
    %1475 = vsyncpa [#allocation12], 1
    %1476 = vsyncpa [#allocation15], 1

</llo_original>
